<compile_context>
chip_gen: v7x
topology: tpu7x:2x2x1
jax: 0.10.0
libtpu: 0.0.40
codegen_flags: <defaults>
</compile_context>

<pallas_src>
import functools

import numpy as np
import jax
import jax.numpy as jnp
from jax.experimental import pallas as pl
from jax.experimental.pallas import tpu as pltpu

# ------------------------- small synthetic config ---------------------------
NJOINTS     = 6
NFEATS      = 4
NFRAMES     = 8            # num_frames / seq length
BS          = 2            # batch
LATENT      = 32           # latent_dim
FF          = 64           # ff_size
LAYERS      = 2            # num_layers
HEADS       = 4            # num_heads
HEAD_DIM    = LATENT // HEADS
INPUT_FEATS = NJOINTS * NFEATS
N_TOK       = BS * NFRAMES # residual-stream rows, ordered (b, t)
OUT_PAD     = 128          # lane-dense padded output width (multiple of 128)
LN_EPS      = 1e-5
NEG_INF     = -1e30
PREC        = jax.lax.Precision.HIGHEST   # reference only


# --------------------------- in-kernel helpers -------------------------------
def _layernorm(x, g, b):
    mu = jnp.mean(x, axis=-1, keepdims=True)
    var = jnp.mean(jnp.square(x - mu), axis=-1, keepdims=True)
    return (x - mu) * jax.lax.rsqrt(var + LN_EPS) * g + b


def _softmax_last(s):
    m = jnp.max(s, axis=-1, keepdims=True)
    e = jnp.exp(s - m)
    return e * pl.reciprocal(jnp.sum(e, axis=-1, keepdims=True), approx=True)


def _gelu_tanh(x):
    # tanh-approx GELU (hits the EUP tanh instead of a long VPU erf polynomial);
    # max abs error vs exact erf-GELU ~3e-4, well inside test tolerance.
    c = 0.7978845608028654  # sqrt(2/pi)
    return 0.5 * x * (1.0 + jnp.tanh(c * (x + 0.044715 * x * x * x)))


def _mm(a_bf16, w_bf16):
    # bf16 operands on the MXU, f32 accumulation.
    return jnp.dot(a_bf16, w_bf16, preferred_element_type=jnp.float32)


# ------------------------------- the kernel ----------------------------------
def decoder_kernel(
    tq_ref, mem_ref, madd_ref, mout_ref,
    sa_wq_ref, sa_wk_ref, sa_wv_ref, sa_bq_ref, sa_bk_ref, sa_bv_ref,
    sa_ow_ref, sa_ob_ref,
    ca_wv_ref, ca_bv_ref, ca_ow_ref, ca_ob_ref,
    l1_w_ref, l1_b_ref, l2_w_ref, l2_b_ref,
    n1_g_ref, n1_b_ref, n2_g_ref, n2_b_ref, n3_g_ref, n3_b_ref,
    f_w_ref, f_b_ref,
    out_ref,
):
    x = tq_ref[...]          # (N_TOK, D) f32 residual stream, rows ordered (b, t)
    mem_bf = mem_ref[...].astype(jnp.bfloat16)   # (B, D) single memory token per batch (z)
    madd = madd_ref[...]     # (B, T, T) additive key-padding mask (0 valid / -1e30 pad)
    mout = mout_ref[...]     # (N_TOK,1) 1.0 = valid frame, 0.0 = padded

    for l in range(LAYERS):              # static unroll over decoder layers
        # ------------ masked multi-head self-attention (post-norm) ------------
        x_bf = x.astype(jnp.bfloat16)    # one cast per block, reused by every head
        sa = jnp.zeros((N_TOK, LATENT), jnp.float32)
        for h in range(HEADS):           # static unroll; per-head packed weights;
            # Q scale (1/sqrt(head_dim)) already folded into sa_wq / sa_bq.
            q = (_mm(x_bf, sa_wq_ref[l, h]) + sa_bq_ref[l, h]).reshape(BS, NFRAMES, HEAD_DIM)
            k = (_mm(x_bf, sa_wk_ref[l, h]) + sa_bk_ref[l, h]).reshape(BS, NFRAMES, HEAD_DIM)
            v = (_mm(x_bf, sa_wv_ref[l, h]) + sa_bv_ref[l, h]).reshape(BS, NFRAMES, HEAD_DIM)
            s = jnp.einsum('bqd,bkd->bqk',
                           q.astype(jnp.bfloat16), k.astype(jnp.bfloat16),
                           preferred_element_type=jnp.float32) + madd
            p = _softmax_last(s)
            o = jnp.einsum('bqk,bkd->bqd',
                           p.astype(jnp.bfloat16), v.astype(jnp.bfloat16),
                           preferred_element_type=jnp.float32)
            # accumulate through the per-head rows of the out-projection (no concat)
            sa = sa + _mm(o.reshape(N_TOK, HEAD_DIM).astype(jnp.bfloat16), sa_ow_ref[l, h])
        x = _layernorm(x + sa + sa_ob_ref[l], n1_g_ref[l], n1_b_ref[l])

        # -------- cross-attention over the single memory token (M == 1) -------
        # softmax over one key is identically 1 -> block reduces to
        # out_proj(V(mem)) + bias, broadcast over the T frames of each batch row.
        v_mem = _mm(mem_bf, ca_wv_ref[l]) + ca_bv_ref[l]                    # (B, D)
        ca_tok = _mm(v_mem.astype(jnp.bfloat16), ca_ow_ref[l]) + ca_ob_ref[l]   # (B, D)
        ca = jnp.broadcast_to(ca_tok[:, None, :],
                              (BS, NFRAMES, LATENT)).reshape(N_TOK, LATENT)
        x = _layernorm(x + ca, n2_g_ref[l], n2_b_ref[l])

        # --------------------------- feed-forward -----------------------------
        hdn = _gelu_tanh(_mm(x.astype(jnp.bfloat16), l1_w_ref[l]) + l1_b_ref[l])  # (N_TOK, FF)
        ffo = _mm(hdn.astype(jnp.bfloat16), l2_w_ref[l]) + l2_b_ref[l]            # (N_TOK, D)
        x = _layernorm(x + ffo, n3_g_ref[l], n3_b_ref[l])

    # ------ final projection (lane-dense, zero-padded to OUT_PAD columns) -----
    y = _mm(x.astype(jnp.bfloat16), f_w_ref[...]) + f_b_ref[...]            # (N_TOK, OUT_PAD)
    out_ref[...] = y * mout                                                  # output[~mask.T] = 0


# ------------------------------ JAX glue --------------------------------------
def build_positional_encoding(max_len, d_model):
    position = np.arange(max_len, dtype=np.float32)[:, None]
    div_term = np.exp(np.arange(0, d_model, 2, dtype=np.float32) * (-np.log(10000.0) / d_model))
    pe = np.zeros((max_len, d_model), dtype=np.float32)
    pe[:, 0::2] = np.sin(position * div_term)
    pe[:, 1::2] = np.cos(position * div_term)
    return jnp.asarray(pe)


def init_params(key):
    keys = jax.random.split(key, 16)

    def w(k, shape, scale=0.05):
        return scale * jax.random.normal(k, shape, dtype=jnp.float32)

    ones = lambda s: jnp.ones(s, jnp.float32)
    zeros = lambda s: jnp.zeros(s, jnp.float32)
    return {
        # PyTorch convention: Linear weight is (out_features, in_features)
        'sa_w': w(keys[0], (LAYERS, 3 * LATENT, LATENT)),
        'sa_b': w(keys[1], (LAYERS, 3 * LATENT)),
        'sa_ow': w(keys[2], (LAYERS, LATENT, LATENT)),
        'sa_ob': w(keys[3], (LAYERS, LATENT)),
        'ca_w': w(keys[4], (LAYERS, 3 * LATENT, LATENT)),
        'ca_b': w(keys[5], (LAYERS, 3 * LATENT)),
        'ca_ow': w(keys[6], (LAYERS, LATENT, LATENT)),
        'ca_ob': w(keys[7], (LAYERS, LATENT)),
        'l1_w': w(keys[8], (LAYERS, FF, LATENT)),
        'l1_b': w(keys[9], (LAYERS, FF)),
        'l2_w': w(keys[10], (LAYERS, LATENT, FF)),
        'l2_b': w(keys[11], (LAYERS, LATENT)),
        'n1_g': ones((LAYERS, LATENT)), 'n1_b': zeros((LAYERS, LATENT)),
        'n2_g': ones((LAYERS, LATENT)), 'n2_b': zeros((LAYERS, LATENT)),
        'n3_g': ones((LAYERS, LATENT)), 'n3_b': zeros((LAYERS, LATENT)),
        'f_w': w(keys[12], (INPUT_FEATS, LATENT)),
        'f_b': w(keys[13], (1, INPUT_FEATS)),
        # actionBiases parameter exists in the module but is unused when ablation=None
        'action_biases': w(keys[14], (1, LATENT)),
    }


def pack_params(params):
    """One-time repack of PyTorch-convention weights into the kernel layout:
       pre-transposed to (in, out), split per attention head, the 1/sqrt(head_dim)
       scale folded into the self-attention Q projection, matmul weights cast to
       bf16 (biases / LN params stay f32)."""
    scale = 1.0 / float(np.sqrt(HEAD_DIM))
    D = LATENT
    bf = lambda a: a.astype(jnp.bfloat16)
    f32 = lambda a: a.astype(jnp.float32)

    def split_w(w_out_in):                                   # (D, D), PyTorch (out, in)
        # -> (H, D_in, Hd): per-head (in, out) projection matrices
        return jnp.transpose(w_out_in.T.reshape(D, HEADS, HEAD_DIM), (1, 0, 2))

    def split_b(b):                                          # (D,) -> (H, 1, Hd)
        return b.reshape(HEADS, 1, HEAD_DIM)

    sa_wq, sa_wk, sa_wv, sa_bq, sa_bk, sa_bv, sa_ow, sa_ob = [], [], [], [], [], [], [], []
    ca_wv, ca_bv, ca_ow, ca_ob = [], [], [], []
    l1_w, l1_b, l2_w, l2_b = [], [], [], []
    for l in range(LAYERS):
        w, b = params['sa_w'][l], params['sa_b'][l]
        sa_wq.append(split_w(w[:D]) * scale)                 # fold attention scale
        sa_wk.append(split_w(w[D:2 * D]))
        sa_wv.append(split_w(w[2 * D:]))
        sa_bq.append(split_b(b[:D]) * scale)
        sa_bk.append(split_b(b[D:2 * D]))
        sa_bv.append(split_b(b[2 * D:]))
        sa_ow.append(params['sa_ow'][l].T.reshape(HEADS, HEAD_DIM, D))
        sa_ob.append(params['sa_ob'][l][None, :])
        # cross-attn with a single memory token only needs V and the out-proj
        ca_wv.append(params['ca_w'][l][2 * D:].T)
        ca_bv.append(params['ca_b'][l][2 * D:][None, :])
        ca_ow.append(params['ca_ow'][l].T)
        ca_ob.append(params['ca_ob'][l][None, :])
        l1_w.append(params['l1_w'][l].T)
        l1_b.append(params['l1_b'][l][None, :])
        l2_w.append(params['l2_w'][l].T)
        l2_b.append(params['l2_b'][l][None, :])

    stack = lambda xs: jnp.stack(xs, axis=0)
    # final layer padded to a lane-dense (multiple-of-128) output width
    f_w = jnp.zeros((D, OUT_PAD), jnp.float32).at[:, :INPUT_FEATS].set(params['f_w'].T)
    f_b = jnp.zeros((1, OUT_PAD), jnp.float32).at[:, :INPUT_FEATS].set(params['f_b'][0])
    ln = lambda name: f32(params[name][:, None, :])          # (L, 1, D)

    return (
        bf(stack(sa_wq)), bf(stack(sa_wk)), bf(stack(sa_wv)),
        f32(stack(sa_bq)), f32(stack(sa_bk)), f32(stack(sa_bv)),
        bf(stack(sa_ow)), f32(stack(sa_ob)),
        bf(stack(ca_wv)), f32(stack(ca_bv)), bf(stack(ca_ow)), f32(stack(ca_ob)),
        bf(stack(l1_w)), f32(stack(l1_b)), bf(stack(l2_w)), f32(stack(l2_b)),
        ln('n1_g'), ln('n1_b'), ln('n2_g'), ln('n2_b'), ln('n3_g'), ln('n3_b'),
        bf(f_w), f32(f_b),
    )


@functools.partial(jax.jit, static_argnames=())
def decoder_forward_pallas(z, mask_bool, packed):
    # timequeries = zeros + positional encoding (dropout = identity, eval mode)
    pe = build_positional_encoding(NFRAMES, LATENT)                          # (T, D)
    tq = jnp.broadcast_to(pe[None], (BS, NFRAMES, LATENT)).reshape(N_TOK, LATENT)
    mem = z.astype(jnp.float32)                                              # z[None] -> 1 token / batch
    maskf = mask_bool.astype(jnp.float32)
    madd = jnp.broadcast_to(                                                 # additive key-padding mask
        jnp.where(mask_bool, 0.0, NEG_INF).astype(jnp.float32)[:, None, :],
        (BS, NFRAMES, NFRAMES))
    mout = maskf.reshape(N_TOK, 1)

    vmem = pl.BlockSpec(memory_space=pltpu.MemorySpace.VMEM)
    args = (tq, mem, madd, mout) + tuple(packed)
    y = pl.pallas_call(
        decoder_kernel,
        out_shape=jax.ShapeDtypeStruct((N_TOK, OUT_PAD), jnp.float32),
        in_specs=[vmem] * len(args),
        out_specs=vmem,
        compiler_params=pltpu.CompilerParams(vmem_limit_bytes=32 * 1024 * 1024),
    )(*args)
    # un-pad, (B, T, nj*nf) -> (B, njoints, nfeats, nframes)  == output.permute(1, 2, 3, 0)
    y = y[:, :INPUT_FEATS].reshape(BS, NFRAMES, NJOINTS, NFEATS)
    return y.transpose(0, 2, 3, 1)


# ---------------------- pure-JAX reference for validation --------------------
def decoder_forward_ref(z, mask_bool, params):
    pe = build_positional_encoding(NFRAMES, LATENT)
    x = jnp.broadcast_to(pe[None, :, :], (BS, NFRAMES, LATENT)).astype(jnp.float32)
    mem = z[:, None, :].astype(jnp.float32)
    maskf = mask_bool.astype(jnp.float32)
    B, T, D = x.shape

    def ln(v, g, b):
        mu = jnp.mean(v, -1, keepdims=True)
        var = jnp.mean(jnp.square(v - mu), -1, keepdims=True)
        return (v - mu) / jnp.sqrt(var + LN_EPS) * g + b

    def mha(q_in, kv_in, wT, b, owT, ob, key_mask=None):
        Tq, Tk = q_in.shape[1], kv_in.shape[1]
        q = jnp.einsum('btd,de->bte', q_in, wT[:, :D], precision=PREC) + b[:D]
        k = jnp.einsum('btd,de->bte', kv_in, wT[:, D:2 * D], precision=PREC) + b[D:2 * D]
        v = jnp.einsum('btd,de->bte', kv_in, wT[:, 2 * D:], precision=PREC) + b[2 * D:]
        q = q.reshape(B, Tq, HEADS, HEAD_DIM)
        k = k.reshape(B, Tk, HEADS, HEAD_DIM)
        v = v.reshape(B, Tk, HEADS, HEAD_DIM)
        s = jnp.einsum('bqhd,bkhd->bhqk', q, k, precision=PREC) / np.sqrt(HEAD_DIM)
        if key_mask is not None:
            s = jnp.where(key_mask[:, None, None, :] > 0.5, s, -jnp.inf)
        p = jax.nn.softmax(s, axis=-1)
        o = jnp.einsum('bhqk,bkhd->bqhd', p, v, precision=PREC).reshape(B, Tq, D)
        return jnp.einsum('btd,de->bte', o, owT, precision=PREC) + ob

    for l in range(LAYERS):
        sa = mha(x, x, params['sa_w'][l].T, params['sa_b'][l],
                 params['sa_ow'][l].T, params['sa_ob'][l], key_mask=maskf)
        x = ln(x + sa, params['n1_g'][l], params['n1_b'][l])
        ca = mha(x, mem, params['ca_w'][l].T, params['ca_b'][l],
                 params['ca_ow'][l].T, params['ca_ob'][l], key_mask=None)
        x = ln(x + ca, params['n2_g'][l], params['n2_b'][l])
        h = jnp.einsum('btd,df->btf', x, params['l1_w'][l].T, precision=PREC) + params['l1_b'][l]
        h = jax.nn.gelu(h, approximate=False)
        f = jnp.einsum('btf,fd->btd', h, params['l2_w'][l].T, precision=PREC) + params['l2_b'][l]
        x = ln(x + f, params['n3_g'][l], params['n3_b'][l])

    y = jnp.einsum('btd,df->btf', x, params['f_w'].T, precision=PREC) + params['f_b'][0]
    y = y * maskf[:, :, None]
    return y.reshape(BS, NFRAMES, NJOINTS, NFEATS).transpose(0, 2, 3, 1)


# --------------------------------- main ---------------------------------------
if __name__ == "__main__":
    key = jax.random.PRNGKey(0)
    pkey, zkey = jax.random.split(key)
    params = init_params(pkey)
    packed = pack_params(params)        # one-time weight repack (pre-transposed, per-head, bf16)

    # batch['clip_text_emb'] and batch['mask'] (lengths implied by mask)
    z = jax.random.normal(zkey, (BS, LATENT), dtype=jnp.float32)
    lengths = np.array([NFRAMES, NFRAMES - 3], dtype=np.int32)
    mask = jnp.asarray(np.arange(NFRAMES)[None, :] < lengths[:, None])   # (B, T) bool

    out = decoder_forward_pallas(z, mask, packed)
    out = jax.block_until_ready(out)

    ref = decoder_forward_ref(z, mask, params)
    assert out.shape == (BS, NJOINTS, NFEATS, NFRAMES), out.shape
    # kernel uses bf16 MXU operands / tanh-GELU / approx reciprocal; reference is exact f32
    np.testing.assert_allclose(np.asarray(out), np.asarray(ref), rtol=2e-2, atol=2e-2)

    print("KERNEL_OK")
</pallas_src>

<mosaic_0001>
module attributes {stable_mosaic.version = 11 : i64} {
  func.func @decoder_kernel(%arg0: memref<16x32xf32, #tpu.memory_space<vmem>>, %arg1: memref<2x32xf32, #tpu.memory_space<vmem>>, %arg2: memref<2x8x8xf32, #tpu.memory_space<vmem>>, %arg3: memref<16x1xf32, #tpu.memory_space<vmem>>, %arg4: memref<2x4x32x8xbf16, #tpu.memory_space<vmem>>, %arg5: memref<2x4x32x8xbf16, #tpu.memory_space<vmem>>, %arg6: memref<2x4x32x8xbf16, #tpu.memory_space<vmem>>, %arg7: memref<2x4x1x8xf32, #tpu.memory_space<vmem>>, %arg8: memref<2x4x1x8xf32, #tpu.memory_space<vmem>>, %arg9: memref<2x4x1x8xf32, #tpu.memory_space<vmem>>, %arg10: memref<2x4x8x32xbf16, #tpu.memory_space<vmem>>, %arg11: memref<2x1x32xf32, #tpu.memory_space<vmem>>, %arg12: memref<2x32x32xbf16, #tpu.memory_space<vmem>>, %arg13: memref<2x1x32xf32, #tpu.memory_space<vmem>>, %arg14: memref<2x32x32xbf16, #tpu.memory_space<vmem>>, %arg15: memref<2x1x32xf32, #tpu.memory_space<vmem>>, %arg16: memref<2x32x64xbf16, #tpu.memory_space<vmem>>, %arg17: memref<2x1x64xf32, #tpu.memory_space<vmem>>, %arg18: memref<2x64x32xbf16, #tpu.memory_space<vmem>>, %arg19: memref<2x1x32xf32, #tpu.memory_space<vmem>>, %arg20: memref<2x1x32xf32, #tpu.memory_space<vmem>>, %arg21: memref<2x1x32xf32, #tpu.memory_space<vmem>>, %arg22: memref<2x1x32xf32, #tpu.memory_space<vmem>>, %arg23: memref<2x1x32xf32, #tpu.memory_space<vmem>>, %arg24: memref<2x1x32xf32, #tpu.memory_space<vmem>>, %arg25: memref<2x1x32xf32, #tpu.memory_space<vmem>>, %arg26: memref<32x128xbf16, #tpu.memory_space<vmem>>, %arg27: memref<1x128xf32, #tpu.memory_space<vmem>>, %arg28: memref<16x128xf32, #tpu.memory_space<vmem>>) attributes {dimension_semantics = [], scalar_prefetch = 0 : i64, scratch_operands = 0 : i64, tpu.core_type = #tpu.core_type<tc>} {
    %c0 = arith.constant 0 : index
    %c0_0 = arith.constant 0 : index
    %0 = vector.load %arg0[%c0, %c0_0] : memref<16x32xf32, #tpu.memory_space<vmem>>, vector<16x32xf32>
    %c0_1 = arith.constant 0 : index
    %c0_2 = arith.constant 0 : index
    %1 = vector.load %arg1[%c0_1, %c0_2] : memref<2x32xf32, #tpu.memory_space<vmem>>, vector<2x32xf32>
    %2 = arith.truncf %1 : vector<2x32xf32> to vector<2x32xbf16>
    %c0_3 = arith.constant 0 : index
    %c0_4 = arith.constant 0 : index
    %c0_5 = arith.constant 0 : index
    %3 = vector.load %arg2[%c0_3, %c0_4, %c0_5] : memref<2x8x8xf32, #tpu.memory_space<vmem>>, vector<2x8x8xf32>
    %c0_6 = arith.constant 0 : index
    %c0_7 = arith.constant 0 : index
    %4 = vector.load %arg3[%c0_6, %c0_7] : memref<16x1xf32, #tpu.memory_space<vmem>>, vector<16x1xf32>
    %5 = arith.truncf %0 : vector<16x32xf32> to vector<16x32xbf16>
    %cst = arith.constant 0.000000e+00 : f32
    %6 = vector.broadcast %cst : f32 to vector<16x32xf32>
    %c0_8 = arith.constant 0 : index
    %c0_9 = arith.constant 0 : index
    %c0_10 = arith.constant 0 : index
    %c0_11 = arith.constant 0 : index
    %7 = vector.load %arg4[%c0_8, %c0_9, %c0_10, %c0_11] : memref<2x4x32x8xbf16, #tpu.memory_space<vmem>>, vector<1x1x32x8xbf16>
    %8 = vector.shape_cast %7 : vector<1x1x32x8xbf16> to vector<32x8xbf16>
    %cst_12 = arith.constant dense<0.000000e+00> : vector<16x8xf32>
    %9 = tpu.matmul %5, %8, %cst_12 {dimension_numbers = #tpu.dot_dimension_numbers<[1], [0], [0], [1], [0, 0, 1, 1], [], []>} : vector<16x32xbf16>, vector<32x8xbf16>, vector<16x8xf32> -> vector<16x8xf32>
    %c0_13 = arith.constant 0 : index
    %c0_14 = arith.constant 0 : index
    %c0_15 = arith.constant 0 : index
    %c0_16 = arith.constant 0 : index
    %10 = vector.load %arg7[%c0_13, %c0_14, %c0_15, %c0_16] : memref<2x4x1x8xf32, #tpu.memory_space<vmem>>, vector<1x1x1x8xf32>
    %11 = vector.shape_cast %10 : vector<1x1x1x8xf32> to vector<1x8xf32>
    %12 = vector.broadcast %11 : vector<1x8xf32> to vector<16x8xf32>
    %13 = arith.addf %9, %12 : vector<16x8xf32>
    %14 = vector.shape_cast %13 : vector<16x8xf32> to vector<2x8x8xf32>
    %c0_17 = arith.constant 0 : index
    %c0_18 = arith.constant 0 : index
    %c0_19 = arith.constant 0 : index
    %c0_20 = arith.constant 0 : index
    %15 = vector.load %arg5[%c0_17, %c0_18, %c0_19, %c0_20] : memref<2x4x32x8xbf16, #tpu.memory_space<vmem>>, vector<1x1x32x8xbf16>
    %16 = vector.shape_cast %15 : vector<1x1x32x8xbf16> to vector<32x8xbf16>
    %cst_21 = arith.constant dense<0.000000e+00> : vector<16x8xf32>
    %17 = tpu.matmul %5, %16, %cst_21 {dimension_numbers = #tpu.dot_dimension_numbers<[1], [0], [0], [1], [0, 0, 1, 1], [], []>} : vector<16x32xbf16>, vector<32x8xbf16>, vector<16x8xf32> -> vector<16x8xf32>
    %c0_22 = arith.constant 0 : index
    %c0_23 = arith.constant 0 : index
    %c0_24 = arith.constant 0 : index
    %c0_25 = arith.constant 0 : index
    %18 = vector.load %arg8[%c0_22, %c0_23, %c0_24, %c0_25] : memref<2x4x1x8xf32, #tpu.memory_space<vmem>>, vector<1x1x1x8xf32>
    %19 = vector.shape_cast %18 : vector<1x1x1x8xf32> to vector<1x8xf32>
    %20 = vector.broadcast %19 : vector<1x8xf32> to vector<16x8xf32>
    %21 = arith.addf %17, %20 : vector<16x8xf32>
    %22 = vector.shape_cast %21 : vector<16x8xf32> to vector<2x8x8xf32>
    %c0_26 = arith.constant 0 : index
    %c0_27 = arith.constant 0 : index
    %c0_28 = arith.constant 0 : index
    %c0_29 = arith.constant 0 : index
    %23 = vector.load %arg6[%c0_26, %c0_27, %c0_28, %c0_29] : memref<2x4x32x8xbf16, #tpu.memory_space<vmem>>, vector<1x1x32x8xbf16>
    %24 = vector.shape_cast %23 : vector<1x1x32x8xbf16> to vector<32x8xbf16>
    %cst_30 = arith.constant dense<0.000000e+00> : vector<16x8xf32>
    %25 = tpu.matmul %5, %24, %cst_30 {dimension_numbers = #tpu.dot_dimension_numbers<[1], [0], [0], [1], [0, 0, 1, 1], [], []>} : vector<16x32xbf16>, vector<32x8xbf16>, vector<16x8xf32> -> vector<16x8xf32>
    %c0_31 = arith.constant 0 : index
    %c0_32 = arith.constant 0 : index
    %c0_33 = arith.constant 0 : index
    %c0_34 = arith.constant 0 : index
    %26 = vector.load %arg9[%c0_31, %c0_32, %c0_33, %c0_34] : memref<2x4x1x8xf32, #tpu.memory_space<vmem>>, vector<1x1x1x8xf32>
    %27 = vector.shape_cast %26 : vector<1x1x1x8xf32> to vector<1x8xf32>
    %28 = vector.broadcast %27 : vector<1x8xf32> to vector<16x8xf32>
    %29 = arith.addf %25, %28 : vector<16x8xf32>
    %30 = vector.shape_cast %29 : vector<16x8xf32> to vector<2x8x8xf32>
    %31 = arith.truncf %14 : vector<2x8x8xf32> to vector<2x8x8xbf16>
    %32 = arith.truncf %22 : vector<2x8x8xf32> to vector<2x8x8xbf16>
    "tpu.trace_start"() <{level = 10 : i32, message = "bqd,bkd->bqk"}> : () -> ()
    %cst_35 = arith.constant dense<0.000000e+00> : vector<2x8x8xf32>
    %33 = tpu.matmul %31, %32, %cst_35 {dimension_numbers = #tpu.dot_dimension_numbers<[2], [2], [1], [1], [0, 0, 0, 1, 1, 1], [0], [0]>} : vector<2x8x8xbf16>, vector<2x8x8xbf16>, vector<2x8x8xf32> -> vector<2x8x8xf32>
    "tpu.trace_stop"() : () -> ()
    %34 = arith.addf %33, %3 : vector<2x8x8xf32>
    %cst_36 = arith.constant dense<0xFF800000> : vector<2x8xf32>
    %35 = vector.multi_reduction <maximumf>, %34, %cst_36 [2] : vector<2x8x8xf32> to vector<2x8xf32>
    %36 = vector.shape_cast %35 : vector<2x8xf32> to vector<2x8x1xf32>
    %37 = vector.broadcast %36 : vector<2x8x1xf32> to vector<2x8x8xf32>
    %38 = arith.subf %34, %37 : vector<2x8x8xf32>
    %39 = math.exp %38 : vector<2x8x8xf32>
    %cst_37 = arith.constant dense<0.000000e+00> : vector<2x8xf32>
    %40 = vector.multi_reduction <add>, %39, %cst_37 [2] : vector<2x8x8xf32> to vector<2x8xf32>
    %41 = vector.shape_cast %40 : vector<2x8xf32> to vector<2x8x1xf32>
    %42 = tpu.reciprocal %41 {approx = true} : vector<2x8x1xf32> -> vector<2x8x1xf32>
    %43 = vector.broadcast %42 : vector<2x8x1xf32> to vector<2x8x8xf32>
    %44 = arith.mulf %39, %43 : vector<2x8x8xf32>
    %45 = arith.truncf %44 : vector<2x8x8xf32> to vector<2x8x8xbf16>
    %46 = arith.truncf %30 : vector<2x8x8xf32> to vector<2x8x8xbf16>
    "tpu.trace_start"() <{level = 10 : i32, message = "bqk,bkd->bqd"}> : () -> ()
    %cst_38 = arith.constant dense<0.000000e+00> : vector<2x8x8xf32>
    %47 = tpu.matmul %45, %46, %cst_38 {dimension_numbers = #tpu.dot_dimension_numbers<[2], [1], [1], [2], [0, 0, 0, 1, 1, 2], [0], [0]>} : vector<2x8x8xbf16>, vector<2x8x8xbf16>, vector<2x8x8xf32> -> vector<2x8x8xf32>
    "tpu.trace_stop"() : () -> ()
    %48 = vector.shape_cast %47 : vector<2x8x8xf32> to vector<16x8xf32>
    %49 = arith.truncf %48 : vector<16x8xf32> to vector<16x8xbf16>
    %c0_39 = arith.constant 0 : index
    %c0_40 = arith.constant 0 : index
    %c0_41 = arith.constant 0 : index
    %c0_42 = arith.constant 0 : index
    %50 = vector.load %arg10[%c0_39, %c0_40, %c0_41, %c0_42] : memref<2x4x8x32xbf16, #tpu.memory_space<vmem>>, vector<1x1x8x32xbf16>
    %51 = vector.shape_cast %50 : vector<1x1x8x32xbf16> to vector<8x32xbf16>
    %cst_43 = arith.constant dense<0.000000e+00> : vector<16x32xf32>
    %52 = tpu.matmul %49, %51, %cst_43 {dimension_numbers = #tpu.dot_dimension_numbers<[1], [0], [0], [1], [0, 0, 1, 1], [], []>} : vector<16x8xbf16>, vector<8x32xbf16>, vector<16x32xf32> -> vector<16x32xf32>
    %53 = arith.addf %6, %52 : vector<16x32xf32>
    %c0_44 = arith.constant 0 : index
    %c1 = arith.constant 1 : index
    %c0_45 = arith.constant 0 : index
    %c0_46 = arith.constant 0 : index
    %54 = vector.load %arg4[%c0_44, %c1, %c0_45, %c0_46] : memref<2x4x32x8xbf16, #tpu.memory_space<vmem>>, vector<1x1x32x8xbf16>
    %55 = vector.shape_cast %54 : vector<1x1x32x8xbf16> to vector<32x8xbf16>
    %cst_47 = arith.constant dense<0.000000e+00> : vector<16x8xf32>
    %56 = tpu.matmul %5, %55, %cst_47 {dimension_numbers = #tpu.dot_dimension_numbers<[1], [0], [0], [1], [0, 0, 1, 1], [], []>} : vector<16x32xbf16>, vector<32x8xbf16>, vector<16x8xf32> -> vector<16x8xf32>
    %c0_48 = arith.constant 0 : index
    %c1_49 = arith.constant 1 : index
    %c0_50 = arith.constant 0 : index
    %c0_51 = arith.constant 0 : index
    %57 = vector.load %arg7[%c0_48, %c1_49, %c0_50, %c0_51] : memref<2x4x1x8xf32, #tpu.memory_space<vmem>>, vector<1x1x1x8xf32>
    %58 = vector.shape_cast %57 : vector<1x1x1x8xf32> to vector<1x8xf32>
    %59 = vector.broadcast %58 : vector<1x8xf32> to vector<16x8xf32>
    %60 = arith.addf %56, %59 : vector<16x8xf32>
    %61 = vector.shape_cast %60 : vector<16x8xf32> to vector<2x8x8xf32>
    %c0_52 = arith.constant 0 : index
    %c1_53 = arith.constant 1 : index
    %c0_54 = arith.constant 0 : index
    %c0_55 = arith.constant 0 : index
    %62 = vector.load %arg5[%c0_52, %c1_53, %c0_54, %c0_55] : memref<2x4x32x8xbf16, #tpu.memory_space<vmem>>, vector<1x1x32x8xbf16>
    %63 = vector.shape_cast %62 : vector<1x1x32x8xbf16> to vector<32x8xbf16>
    %cst_56 = arith.constant dense<0.000000e+00> : vector<16x8xf32>
    %64 = tpu.matmul %5, %63, %cst_56 {dimension_numbers = #tpu.dot_dimension_numbers<[1], [0], [0], [1], [0, 0, 1, 1], [], []>} : vector<16x32xbf16>, vector<32x8xbf16>, vector<16x8xf32> -> vector<16x8xf32>
    %c0_57 = arith.constant 0 : index
    %c1_58 = arith.constant 1 : index
    %c0_59 = arith.constant 0 : index
    %c0_60 = arith.constant 0 : index
    %65 = vector.load %arg8[%c0_57, %c1_58, %c0_59, %c0_60] : memref<2x4x1x8xf32, #tpu.memory_space<vmem>>, vector<1x1x1x8xf32>
    %66 = vector.shape_cast %65 : vector<1x1x1x8xf32> to vector<1x8xf32>
    %67 = vector.broadcast %66 : vector<1x8xf32> to vector<16x8xf32>
    %68 = arith.addf %64, %67 : vector<16x8xf32>
    %69 = vector.shape_cast %68 : vector<16x8xf32> to vector<2x8x8xf32>
    %c0_61 = arith.constant 0 : index
    %c1_62 = arith.constant 1 : index
    %c0_63 = arith.constant 0 : index
    %c0_64 = arith.constant 0 : index
    %70 = vector.load %arg6[%c0_61, %c1_62, %c0_63, %c0_64] : memref<2x4x32x8xbf16, #tpu.memory_space<vmem>>, vector<1x1x32x8xbf16>
    %71 = vector.shape_cast %70 : vector<1x1x32x8xbf16> to vector<32x8xbf16>
    %cst_65 = arith.constant dense<0.000000e+00> : vector<16x8xf32>
    %72 = tpu.matmul %5, %71, %cst_65 {dimension_numbers = #tpu.dot_dimension_numbers<[1], [0], [0], [1], [0, 0, 1, 1], [], []>} : vector<16x32xbf16>, vector<32x8xbf16>, vector<16x8xf32> -> vector<16x8xf32>
    %c0_66 = arith.constant 0 : index
    %c1_67 = arith.constant 1 : index
    %c0_68 = arith.constant 0 : index
    %c0_69 = arith.constant 0 : index
    %73 = vector.load %arg9[%c0_66, %c1_67, %c0_68, %c0_69] : memref<2x4x1x8xf32, #tpu.memory_space<vmem>>, vector<1x1x1x8xf32>
    %74 = vector.shape_cast %73 : vector<1x1x1x8xf32> to vector<1x8xf32>
    %75 = vector.broadcast %74 : vector<1x8xf32> to vector<16x8xf32>
    %76 = arith.addf %72, %75 : vector<16x8xf32>
    %77 = vector.shape_cast %76 : vector<16x8xf32> to vector<2x8x8xf32>
    %78 = arith.truncf %61 : vector<2x8x8xf32> to vector<2x8x8xbf16>
    %79 = arith.truncf %69 : vector<2x8x8xf32> to vector<2x8x8xbf16>
    "tpu.trace_start"() <{level = 10 : i32, message = "bqd,bkd->bqk"}> : () -> ()
    %cst_70 = arith.constant dense<0.000000e+00> : vector<2x8x8xf32>
    %80 = tpu.matmul %78, %79, %cst_70 {dimension_numbers = #tpu.dot_dimension_numbers<[2], [2], [1], [1], [0, 0, 0, 1, 1, 1], [0], [0]>} : vector<2x8x8xbf16>, vector<2x8x8xbf16>, vector<2x8x8xf32> -> vector<2x8x8xf32>
    "tpu.trace_stop"() : () -> ()
    %81 = arith.addf %80, %3 : vector<2x8x8xf32>
    %cst_71 = arith.constant dense<0xFF800000> : vector<2x8xf32>
    %82 = vector.multi_reduction <maximumf>, %81, %cst_71 [2] : vector<2x8x8xf32> to vector<2x8xf32>
    %83 = vector.shape_cast %82 : vector<2x8xf32> to vector<2x8x1xf32>
    %84 = vector.broadcast %83 : vector<2x8x1xf32> to vector<2x8x8xf32>
    %85 = arith.subf %81, %84 : vector<2x8x8xf32>
    %86 = math.exp %85 : vector<2x8x8xf32>
    %cst_72 = arith.constant dense<0.000000e+00> : vector<2x8xf32>
    %87 = vector.multi_reduction <add>, %86, %cst_72 [2] : vector<2x8x8xf32> to vector<2x8xf32>
    %88 = vector.shape_cast %87 : vector<2x8xf32> to vector<2x8x1xf32>
    %89 = tpu.reciprocal %88 {approx = true} : vector<2x8x1xf32> -> vector<2x8x1xf32>
    %90 = vector.broadcast %89 : vector<2x8x1xf32> to vector<2x8x8xf32>
    %91 = arith.mulf %86, %90 : vector<2x8x8xf32>
    %92 = arith.truncf %91 : vector<2x8x8xf32> to vector<2x8x8xbf16>
    %93 = arith.truncf %77 : vector<2x8x8xf32> to vector<2x8x8xbf16>
    "tpu.trace_start"() <{level = 10 : i32, message = "bqk,bkd->bqd"}> : () -> ()
    %cst_73 = arith.constant dense<0.000000e+00> : vector<2x8x8xf32>
    %94 = tpu.matmul %92, %93, %cst_73 {dimension_numbers = #tpu.dot_dimension_numbers<[2], [1], [1], [2], [0, 0, 0, 1, 1, 2], [0], [0]>} : vector<2x8x8xbf16>, vector<2x8x8xbf16>, vector<2x8x8xf32> -> vector<2x8x8xf32>
    "tpu.trace_stop"() : () -> ()
    %95 = vector.shape_cast %94 : vector<2x8x8xf32> to vector<16x8xf32>
    %96 = arith.truncf %95 : vector<16x8xf32> to vector<16x8xbf16>
    %c0_74 = arith.constant 0 : index
    %c1_75 = arith.constant 1 : index
    %c0_76 = arith.constant 0 : index
    %c0_77 = arith.constant 0 : index
    %97 = vector.load %arg10[%c0_74, %c1_75, %c0_76, %c0_77] : memref<2x4x8x32xbf16, #tpu.memory_space<vmem>>, vector<1x1x8x32xbf16>
    %98 = vector.shape_cast %97 : vector<1x1x8x32xbf16> to vector<8x32xbf16>
    %cst_78 = arith.constant dense<0.000000e+00> : vector<16x32xf32>
    %99 = tpu.matmul %96, %98, %cst_78 {dimension_numbers = #tpu.dot_dimension_numbers<[1], [0], [0], [1], [0, 0, 1, 1], [], []>} : vector<16x8xbf16>, vector<8x32xbf16>, vector<16x32xf32> -> vector<16x32xf32>
    %100 = arith.addf %53, %99 : vector<16x32xf32>
    %c0_79 = arith.constant 0 : index
    %c2 = arith.constant 2 : index
    %c0_80 = arith.constant 0 : index
    %c0_81 = arith.constant 0 : index
    %101 = vector.load %arg4[%c0_79, %c2, %c0_80, %c0_81] : memref<2x4x32x8xbf16, #tpu.memory_space<vmem>>, vector<1x1x32x8xbf16>
    %102 = vector.shape_cast %101 : vector<1x1x32x8xbf16> to vector<32x8xbf16>
    %cst_82 = arith.constant dense<0.000000e+00> : vector<16x8xf32>
    %103 = tpu.matmul %5, %102, %cst_82 {dimension_numbers = #tpu.dot_dimension_numbers<[1], [0], [0], [1], [0, 0, 1, 1], [], []>} : vector<16x32xbf16>, vector<32x8xbf16>, vector<16x8xf32> -> vector<16x8xf32>
    %c0_83 = arith.constant 0 : index
    %c2_84 = arith.constant 2 : index
    %c0_85 = arith.constant 0 : index
    %c0_86 = arith.constant 0 : index
    %104 = vector.load %arg7[%c0_83, %c2_84, %c0_85, %c0_86] : memref<2x4x1x8xf32, #tpu.memory_space<vmem>>, vector<1x1x1x8xf32>
    %105 = vector.shape_cast %104 : vector<1x1x1x8xf32> to vector<1x8xf32>
    %106 = vector.broadcast %105 : vector<1x8xf32> to vector<16x8xf32>
    %107 = arith.addf %103, %106 : vector<16x8xf32>
    %108 = vector.shape_cast %107 : vector<16x8xf32> to vector<2x8x8xf32>
    %c0_87 = arith.constant 0 : index
    %c2_88 = arith.constant 2 : index
    %c0_89 = arith.constant 0 : index
    %c0_90 = arith.constant 0 : index
    %109 = vector.load %arg5[%c0_87, %c2_88, %c0_89, %c0_90] : memref<2x4x32x8xbf16, #tpu.memory_space<vmem>>, vector<1x1x32x8xbf16>
    %110 = vector.shape_cast %109 : vector<1x1x32x8xbf16> to vector<32x8xbf16>
    %cst_91 = arith.constant dense<0.000000e+00> : vector<16x8xf32>
    %111 = tpu.matmul %5, %110, %cst_91 {dimension_numbers = #tpu.dot_dimension_numbers<[1], [0], [0], [1], [0, 0, 1, 1], [], []>} : vector<16x32xbf16>, vector<32x8xbf16>, vector<16x8xf32> -> vector<16x8xf32>
    %c0_92 = arith.constant 0 : index
    %c2_93 = arith.constant 2 : index
    %c0_94 = arith.constant 0 : index
    %c0_95 = arith.constant 0 : index
    %112 = vector.load %arg8[%c0_92, %c2_93, %c0_94, %c0_95] : memref<2x4x1x8xf32, #tpu.memory_space<vmem>>, vector<1x1x1x8xf32>
    %113 = vector.shape_cast %112 : vector<1x1x1x8xf32> to vector<1x8xf32>
    %114 = vector.broadcast %113 : vector<1x8xf32> to vector<16x8xf32>
    %115 = arith.addf %111, %114 : vector<16x8xf32>
    %116 = vector.shape_cast %115 : vector<16x8xf32> to vector<2x8x8xf32>
    %c0_96 = arith.constant 0 : index
    %c2_97 = arith.constant 2 : index
    %c0_98 = arith.constant 0 : index
    %c0_99 = arith.constant 0 : index
    %117 = vector.load %arg6[%c0_96, %c2_97, %c0_98, %c0_99] : memref<2x4x32x8xbf16, #tpu.memory_space<vmem>>, vector<1x1x32x8xbf16>
    %118 = vector.shape_cast %117 : vector<1x1x32x8xbf16> to vector<32x8xbf16>
    %cst_100 = arith.constant dense<0.000000e+00> : vector<16x8xf32>
    %119 = tpu.matmul %5, %118, %cst_100 {dimension_numbers = #tpu.dot_dimension_numbers<[1], [0], [0], [1], [0, 0, 1, 1], [], []>} : vector<16x32xbf16>, vector<32x8xbf16>, vector<16x8xf32> -> vector<16x8xf32>
    %c0_101 = arith.constant 0 : index
    %c2_102 = arith.constant 2 : index
    %c0_103 = arith.constant 0 : index
    %c0_104 = arith.constant 0 : index
    %120 = vector.load %arg9[%c0_101, %c2_102, %c0_103, %c0_104] : memref<2x4x1x8xf32, #tpu.memory_space<vmem>>, vector<1x1x1x8xf32>
    %121 = vector.shape_cast %120 : vector<1x1x1x8xf32> to vector<1x8xf32>
    %122 = vector.broadcast %121 : vector<1x8xf32> to vector<16x8xf32>
    %123 = arith.addf %119, %122 : vector<16x8xf32>
    %124 = vector.shape_cast %123 : vector<16x8xf32> to vector<2x8x8xf32>
    %125 = arith.truncf %108 : vector<2x8x8xf32> to vector<2x8x8xbf16>
    %126 = arith.truncf %116 : vector<2x8x8xf32> to vector<2x8x8xbf16>
    "tpu.trace_start"() <{level = 10 : i32, message = "bqd,bkd->bqk"}> : () -> ()
    %cst_105 = arith.constant dense<0.000000e+00> : vector<2x8x8xf32>
    %127 = tpu.matmul %125, %126, %cst_105 {dimension_numbers = #tpu.dot_dimension_numbers<[2], [2], [1], [1], [0, 0, 0, 1, 1, 1], [0], [0]>} : vector<2x8x8xbf16>, vector<2x8x8xbf16>, vector<2x8x8xf32> -> vector<2x8x8xf32>
    "tpu.trace_stop"() : () -> ()
    %128 = arith.addf %127, %3 : vector<2x8x8xf32>
    %cst_106 = arith.constant dense<0xFF800000> : vector<2x8xf32>
    %129 = vector.multi_reduction <maximumf>, %128, %cst_106 [2] : vector<2x8x8xf32> to vector<2x8xf32>
    %130 = vector.shape_cast %129 : vector<2x8xf32> to vector<2x8x1xf32>
    %131 = vector.broadcast %130 : vector<2x8x1xf32> to vector<2x8x8xf32>
    %132 = arith.subf %128, %131 : vector<2x8x8xf32>
    %133 = math.exp %132 : vector<2x8x8xf32>
    %cst_107 = arith.constant dense<0.000000e+00> : vector<2x8xf32>
    %134 = vector.multi_reduction <add>, %133, %cst_107 [2] : vector<2x8x8xf32> to vector<2x8xf32>
    %135 = vector.shape_cast %134 : vector<2x8xf32> to vector<2x8x1xf32>
    %136 = tpu.reciprocal %135 {approx = true} : vector<2x8x1xf32> -> vector<2x8x1xf32>
    %137 = vector.broadcast %136 : vector<2x8x1xf32> to vector<2x8x8xf32>
    %138 = arith.mulf %133, %137 : vector<2x8x8xf32>
    %139 = arith.truncf %138 : vector<2x8x8xf32> to vector<2x8x8xbf16>
    %140 = arith.truncf %124 : vector<2x8x8xf32> to vector<2x8x8xbf16>
    "tpu.trace_start"() <{level = 10 : i32, message = "bqk,bkd->bqd"}> : () -> ()
    %cst_108 = arith.constant dense<0.000000e+00> : vector<2x8x8xf32>
    %141 = tpu.matmul %139, %140, %cst_108 {dimension_numbers = #tpu.dot_dimension_numbers<[2], [1], [1], [2], [0, 0, 0, 1, 1, 2], [0], [0]>} : vector<2x8x8xbf16>, vector<2x8x8xbf16>, vector<2x8x8xf32> -> vector<2x8x8xf32>
    "tpu.trace_stop"() : () -> ()
    %142 = vector.shape_cast %141 : vector<2x8x8xf32> to vector<16x8xf32>
    %143 = arith.truncf %142 : vector<16x8xf32> to vector<16x8xbf16>
    %c0_109 = arith.constant 0 : index
    %c2_110 = arith.constant 2 : index
    %c0_111 = arith.constant 0 : index
    %c0_112 = arith.constant 0 : index
    %144 = vector.load %arg10[%c0_109, %c2_110, %c0_111, %c0_112] : memref<2x4x8x32xbf16, #tpu.memory_space<vmem>>, vector<1x1x8x32xbf16>
    %145 = vector.shape_cast %144 : vector<1x1x8x32xbf16> to vector<8x32xbf16>
    %cst_113 = arith.constant dense<0.000000e+00> : vector<16x32xf32>
    %146 = tpu.matmul %143, %145, %cst_113 {dimension_numbers = #tpu.dot_dimension_numbers<[1], [0], [0], [1], [0, 0, 1, 1], [], []>} : vector<16x8xbf16>, vector<8x32xbf16>, vector<16x32xf32> -> vector<16x32xf32>
    %147 = arith.addf %100, %146 : vector<16x32xf32>
    %c0_114 = arith.constant 0 : index
    %c3 = arith.constant 3 : index
    %c0_115 = arith.constant 0 : index
    %c0_116 = arith.constant 0 : index
    %148 = vector.load %arg4[%c0_114, %c3, %c0_115, %c0_116] : memref<2x4x32x8xbf16, #tpu.memory_space<vmem>>, vector<1x1x32x8xbf16>
    %149 = vector.shape_cast %148 : vector<1x1x32x8xbf16> to vector<32x8xbf16>
    %cst_117 = arith.constant dense<0.000000e+00> : vector<16x8xf32>
    %150 = tpu.matmul %5, %149, %cst_117 {dimension_numbers = #tpu.dot_dimension_numbers<[1], [0], [0], [1], [0, 0, 1, 1], [], []>} : vector<16x32xbf16>, vector<32x8xbf16>, vector<16x8xf32> -> vector<16x8xf32>
    %c0_118 = arith.constant 0 : index
    %c3_119 = arith.constant 3 : index
    %c0_120 = arith.constant 0 : index
    %c0_121 = arith.constant 0 : index
    %151 = vector.load %arg7[%c0_118, %c3_119, %c0_120, %c0_121] : memref<2x4x1x8xf32, #tpu.memory_space<vmem>>, vector<1x1x1x8xf32>
    %152 = vector.shape_cast %151 : vector<1x1x1x8xf32> to vector<1x8xf32>
    %153 = vector.broadcast %152 : vector<1x8xf32> to vector<16x8xf32>
    %154 = arith.addf %150, %153 : vector<16x8xf32>
    %155 = vector.shape_cast %154 : vector<16x8xf32> to vector<2x8x8xf32>
    %c0_122 = arith.constant 0 : index
    %c3_123 = arith.constant 3 : index
    %c0_124 = arith.constant 0 : index
    %c0_125 = arith.constant 0 : index
    %156 = vector.load %arg5[%c0_122, %c3_123, %c0_124, %c0_125] : memref<2x4x32x8xbf16, #tpu.memory_space<vmem>>, vector<1x1x32x8xbf16>
    %157 = vector.shape_cast %156 : vector<1x1x32x8xbf16> to vector<32x8xbf16>
    %cst_126 = arith.constant dense<0.000000e+00> : vector<16x8xf32>
    %158 = tpu.matmul %5, %157, %cst_126 {dimension_numbers = #tpu.dot_dimension_numbers<[1], [0], [0], [1], [0, 0, 1, 1], [], []>} : vector<16x32xbf16>, vector<32x8xbf16>, vector<16x8xf32> -> vector<16x8xf32>
    %c0_127 = arith.constant 0 : index
    %c3_128 = arith.constant 3 : index
    %c0_129 = arith.constant 0 : index
    %c0_130 = arith.constant 0 : index
    %159 = vector.load %arg8[%c0_127, %c3_128, %c0_129, %c0_130] : memref<2x4x1x8xf32, #tpu.memory_space<vmem>>, vector<1x1x1x8xf32>
    %160 = vector.shape_cast %159 : vector<1x1x1x8xf32> to vector<1x8xf32>
    %161 = vector.broadcast %160 : vector<1x8xf32> to vector<16x8xf32>
    %162 = arith.addf %158, %161 : vector<16x8xf32>
    %163 = vector.shape_cast %162 : vector<16x8xf32> to vector<2x8x8xf32>
    %c0_131 = arith.constant 0 : index
    %c3_132 = arith.constant 3 : index
    %c0_133 = arith.constant 0 : index
    %c0_134 = arith.constant 0 : index
    %164 = vector.load %arg6[%c0_131, %c3_132, %c0_133, %c0_134] : memref<2x4x32x8xbf16, #tpu.memory_space<vmem>>, vector<1x1x32x8xbf16>
    %165 = vector.shape_cast %164 : vector<1x1x32x8xbf16> to vector<32x8xbf16>
    %cst_135 = arith.constant dense<0.000000e+00> : vector<16x8xf32>
    %166 = tpu.matmul %5, %165, %cst_135 {dimension_numbers = #tpu.dot_dimension_numbers<[1], [0], [0], [1], [0, 0, 1, 1], [], []>} : vector<16x32xbf16>, vector<32x8xbf16>, vector<16x8xf32> -> vector<16x8xf32>
    %c0_136 = arith.constant 0 : index
    %c3_137 = arith.constant 3 : index
    %c0_138 = arith.constant 0 : index
    %c0_139 = arith.constant 0 : index
    %167 = vector.load %arg9[%c0_136, %c3_137, %c0_138, %c0_139] : memref<2x4x1x8xf32, #tpu.memory_space<vmem>>, vector<1x1x1x8xf32>
    %168 = vector.shape_cast %167 : vector<1x1x1x8xf32> to vector<1x8xf32>
    %169 = vector.broadcast %168 : vector<1x8xf32> to vector<16x8xf32>
    %170 = arith.addf %166, %169 : vector<16x8xf32>
    %171 = vector.shape_cast %170 : vector<16x8xf32> to vector<2x8x8xf32>
    %172 = arith.truncf %155 : vector<2x8x8xf32> to vector<2x8x8xbf16>
    %173 = arith.truncf %163 : vector<2x8x8xf32> to vector<2x8x8xbf16>
    "tpu.trace_start"() <{level = 10 : i32, message = "bqd,bkd->bqk"}> : () -> ()
    %cst_140 = arith.constant dense<0.000000e+00> : vector<2x8x8xf32>
    %174 = tpu.matmul %172, %173, %cst_140 {dimension_numbers = #tpu.dot_dimension_numbers<[2], [2], [1], [1], [0, 0, 0, 1, 1, 1], [0], [0]>} : vector<2x8x8xbf16>, vector<2x8x8xbf16>, vector<2x8x8xf32> -> vector<2x8x8xf32>
    "tpu.trace_stop"() : () -> ()
    %175 = arith.addf %174, %3 : vector<2x8x8xf32>
    %cst_141 = arith.constant dense<0xFF800000> : vector<2x8xf32>
    %176 = vector.multi_reduction <maximumf>, %175, %cst_141 [2] : vector<2x8x8xf32> to vector<2x8xf32>
    %177 = vector.shape_cast %176 : vector<2x8xf32> to vector<2x8x1xf32>
    %178 = vector.broadcast %177 : vector<2x8x1xf32> to vector<2x8x8xf32>
    %179 = arith.subf %175, %178 : vector<2x8x8xf32>
    %180 = math.exp %179 : vector<2x8x8xf32>
    %cst_142 = arith.constant dense<0.000000e+00> : vector<2x8xf32>
    %181 = vector.multi_reduction <add>, %180, %cst_142 [2] : vector<2x8x8xf32> to vector<2x8xf32>
    %182 = vector.shape_cast %181 : vector<2x8xf32> to vector<2x8x1xf32>
    %183 = tpu.reciprocal %182 {approx = true} : vector<2x8x1xf32> -> vector<2x8x1xf32>
    %184 = vector.broadcast %183 : vector<2x8x1xf32> to vector<2x8x8xf32>
    %185 = arith.mulf %180, %184 : vector<2x8x8xf32>
    %186 = arith.truncf %185 : vector<2x8x8xf32> to vector<2x8x8xbf16>
    %187 = arith.truncf %171 : vector<2x8x8xf32> to vector<2x8x8xbf16>
    "tpu.trace_start"() <{level = 10 : i32, message = "bqk,bkd->bqd"}> : () -> ()
    %cst_143 = arith.constant dense<0.000000e+00> : vector<2x8x8xf32>
    %188 = tpu.matmul %186, %187, %cst_143 {dimension_numbers = #tpu.dot_dimension_numbers<[2], [1], [1], [2], [0, 0, 0, 1, 1, 2], [0], [0]>} : vector<2x8x8xbf16>, vector<2x8x8xbf16>, vector<2x8x8xf32> -> vector<2x8x8xf32>
    "tpu.trace_stop"() : () -> ()
    %189 = vector.shape_cast %188 : vector<2x8x8xf32> to vector<16x8xf32>
    %190 = arith.truncf %189 : vector<16x8xf32> to vector<16x8xbf16>
    %c0_144 = arith.constant 0 : index
    %c3_145 = arith.constant 3 : index
    %c0_146 = arith.constant 0 : index
    %c0_147 = arith.constant 0 : index
    %191 = vector.load %arg10[%c0_144, %c3_145, %c0_146, %c0_147] : memref<2x4x8x32xbf16, #tpu.memory_space<vmem>>, vector<1x1x8x32xbf16>
    %192 = vector.shape_cast %191 : vector<1x1x8x32xbf16> to vector<8x32xbf16>
    %cst_148 = arith.constant dense<0.000000e+00> : vector<16x32xf32>
    %193 = tpu.matmul %190, %192, %cst_148 {dimension_numbers = #tpu.dot_dimension_numbers<[1], [0], [0], [1], [0, 0, 1, 1], [], []>} : vector<16x8xbf16>, vector<8x32xbf16>, vector<16x32xf32> -> vector<16x32xf32>
    %194 = arith.addf %147, %193 : vector<16x32xf32>
    %195 = arith.addf %0, %194 : vector<16x32xf32>
    %c0_149 = arith.constant 0 : index
    %c0_150 = arith.constant 0 : index
    %c0_151 = arith.constant 0 : index
    %196 = vector.load %arg11[%c0_149, %c0_150, %c0_151] : memref<2x1x32xf32, #tpu.memory_space<vmem>>, vector<1x1x32xf32>
    %197 = vector.shape_cast %196 : vector<1x1x32xf32> to vector<1x32xf32>
    %198 = vector.broadcast %197 : vector<1x32xf32> to vector<16x32xf32>
    %199 = arith.addf %195, %198 : vector<16x32xf32>
    %c0_152 = arith.constant 0 : index
    %c0_153 = arith.constant 0 : index
    %c0_154 = arith.constant 0 : index
    %200 = vector.load %arg20[%c0_152, %c0_153, %c0_154] : memref<2x1x32xf32, #tpu.memory_space<vmem>>, vector<1x1x32xf32>
    %201 = vector.shape_cast %200 : vector<1x1x32xf32> to vector<1x32xf32>
    %c0_155 = arith.constant 0 : index
    %c0_156 = arith.constant 0 : index
    %c0_157 = arith.constant 0 : index
    %202 = vector.load %arg21[%c0_155, %c0_156, %c0_157] : memref<2x1x32xf32, #tpu.memory_space<vmem>>, vector<1x1x32xf32>
    %203 = vector.shape_cast %202 : vector<1x1x32xf32> to vector<1x32xf32>
    %cst_158 = arith.constant dense<0.000000e+00> : vector<16xf32>
    %204 = vector.multi_reduction <add>, %199, %cst_158 [1] : vector<16x32xf32> to vector<16xf32>
    %205 = vector.shape_cast %204 : vector<16xf32> to vector<16x1xf32>
    %cst_159 = arith.constant 3.200000e+01 : f32
    %206 = vector.broadcast %cst_159 : f32 to vector<16x1xf32>
    %207 = arith.divf %205, %206 : vector<16x1xf32>
    %208 = vector.broadcast %207 : vector<16x1xf32> to vector<16x32xf32>
    %209 = arith.subf %199, %208 : vector<16x32xf32>
    %210 = arith.mulf %209, %209 : vector<16x32xf32>
    %cst_160 = arith.constant dense<0.000000e+00> : vector<16xf32>
    %211 = vector.multi_reduction <add>, %210, %cst_160 [1] : vector<16x32xf32> to vector<16xf32>
    %212 = vector.shape_cast %211 : vector<16xf32> to vector<16x1xf32>
    %cst_161 = arith.constant 3.200000e+01 : f32
    %213 = vector.broadcast %cst_161 : f32 to vector<16x1xf32>
    %214 = arith.divf %212, %213 : vector<16x1xf32>
    %215 = vector.broadcast %207 : vector<16x1xf32> to vector<16x32xf32>
    %216 = arith.subf %199, %215 : vector<16x32xf32>
    %cst_162 = arith.constant 9.99999974E-6 : f32
    %217 = vector.broadcast %cst_162 : f32 to vector<16x1xf32>
    %218 = arith.addf %214, %217 : vector<16x1xf32>
    %219 = math.rsqrt %218 : vector<16x1xf32>
    %220 = vector.broadcast %219 : vector<16x1xf32> to vector<16x32xf32>
    %221 = arith.mulf %216, %220 : vector<16x32xf32>
    %222 = vector.broadcast %201 : vector<1x32xf32> to vector<16x32xf32>
    %223 = arith.mulf %221, %222 : vector<16x32xf32>
    %224 = vector.broadcast %203 : vector<1x32xf32> to vector<16x32xf32>
    %225 = arith.addf %223, %224 : vector<16x32xf32>
    %c0_163 = arith.constant 0 : index
    %c0_164 = arith.constant 0 : index
    %c0_165 = arith.constant 0 : index
    %226 = vector.load %arg12[%c0_163, %c0_164, %c0_165] : memref<2x32x32xbf16, #tpu.memory_space<vmem>>, vector<1x32x32xbf16>
    %227 = vector.shape_cast %226 : vector<1x32x32xbf16> to vector<32x32xbf16>
    %cst_166 = arith.constant dense<0.000000e+00> : vector<2x32xf32>
    %228 = tpu.matmul %2, %227, %cst_166 {dimension_numbers = #tpu.dot_dimension_numbers<[1], [0], [0], [1], [0, 0, 1, 1], [], []>} : vector<2x32xbf16>, vector<32x32xbf16>, vector<2x32xf32> -> vector<2x32xf32>
    %c0_167 = arith.constant 0 : index
    %c0_168 = arith.constant 0 : index
    %c0_169 = arith.constant 0 : index
    %229 = vector.load %arg13[%c0_167, %c0_168, %c0_169] : memref<2x1x32xf32, #tpu.memory_space<vmem>>, vector<1x1x32xf32>
    %230 = vector.shape_cast %229 : vector<1x1x32xf32> to vector<1x32xf32>
    %231 = vector.broadcast %230 : vector<1x32xf32> to vector<2x32xf32>
    %232 = arith.addf %228, %231 : vector<2x32xf32>
    %233 = arith.truncf %232 : vector<2x32xf32> to vector<2x32xbf16>
    %c0_170 = arith.constant 0 : index
    %c0_171 = arith.constant 0 : index
    %c0_172 = arith.constant 0 : index
    %234 = vector.load %arg14[%c0_170, %c0_171, %c0_172] : memref<2x32x32xbf16, #tpu.memory_space<vmem>>, vector<1x32x32xbf16>
    %235 = vector.shape_cast %234 : vector<1x32x32xbf16> to vector<32x32xbf16>
    %cst_173 = arith.constant dense<0.000000e+00> : vector<2x32xf32>
    %236 = tpu.matmul %233, %235, %cst_173 {dimension_numbers = #tpu.dot_dimension_numbers<[1], [0], [0], [1], [0, 0, 1, 1], [], []>} : vector<2x32xbf16>, vector<32x32xbf16>, vector<2x32xf32> -> vector<2x32xf32>
    %c0_174 = arith.constant 0 : index
    %c0_175 = arith.constant 0 : index
    %c0_176 = arith.constant 0 : index
    %237 = vector.load %arg15[%c0_174, %c0_175, %c0_176] : memref<2x1x32xf32, #tpu.memory_space<vmem>>, vector<1x1x32xf32>
    %238 = vector.shape_cast %237 : vector<1x1x32xf32> to vector<1x32xf32>
    %239 = vector.broadcast %238 : vector<1x32xf32> to vector<2x32xf32>
    %240 = arith.addf %236, %239 : vector<2x32xf32>
    %241 = vector.shape_cast %240 : vector<2x32xf32> to vector<2x1x32xf32>
    %242 = vector.shape_cast %241 : vector<2x1x32xf32> to vector<2x1x32xf32>
    %243 = vector.broadcast %242 : vector<2x1x32xf32> to vector<2x8x32xf32>
    %244 = vector.shape_cast %243 : vector<2x8x32xf32> to vector<16x32xf32>
    %245 = arith.addf %225, %244 : vector<16x32xf32>
    %c0_177 = arith.constant 0 : index
    %c0_178 = arith.constant 0 : index
    %c0_179 = arith.constant 0 : index
    %246 = vector.load %arg22[%c0_177, %c0_178, %c0_179] : memref<2x1x32xf32, #tpu.memory_space<vmem>>, vector<1x1x32xf32>
    %247 = vector.shape_cast %246 : vector<1x1x32xf32> to vector<1x32xf32>
    %c0_180 = arith.constant 0 : index
    %c0_181 = arith.constant 0 : index
    %c0_182 = arith.constant 0 : index
    %248 = vector.load %arg23[%c0_180, %c0_181, %c0_182] : memref<2x1x32xf32, #tpu.memory_space<vmem>>, vector<1x1x32xf32>
    %249 = vector.shape_cast %248 : vector<1x1x32xf32> to vector<1x32xf32>
    %cst_183 = arith.constant dense<0.000000e+00> : vector<16xf32>
    %250 = vector.multi_reduction <add>, %245, %cst_183 [1] : vector<16x32xf32> to vector<16xf32>
    %251 = vector.shape_cast %250 : vector<16xf32> to vector<16x1xf32>
    %cst_184 = arith.constant 3.200000e+01 : f32
    %252 = vector.broadcast %cst_184 : f32 to vector<16x1xf32>
    %253 = arith.divf %251, %252 : vector<16x1xf32>
    %254 = vector.broadcast %253 : vector<16x1xf32> to vector<16x32xf32>
    %255 = arith.subf %245, %254 : vector<16x32xf32>
    %256 = arith.mulf %255, %255 : vector<16x32xf32>
    %cst_185 = arith.constant dense<0.000000e+00> : vector<16xf32>
    %257 = vector.multi_reduction <add>, %256, %cst_185 [1] : vector<16x32xf32> to vector<16xf32>
    %258 = vector.shape_cast %257 : vector<16xf32> to vector<16x1xf32>
    %cst_186 = arith.constant 3.200000e+01 : f32
    %259 = vector.broadcast %cst_186 : f32 to vector<16x1xf32>
    %260 = arith.divf %258, %259 : vector<16x1xf32>
    %261 = vector.broadcast %253 : vector<16x1xf32> to vector<16x32xf32>
    %262 = arith.subf %245, %261 : vector<16x32xf32>
    %cst_187 = arith.constant 9.99999974E-6 : f32
    %263 = vector.broadcast %cst_187 : f32 to vector<16x1xf32>
    %264 = arith.addf %260, %263 : vector<16x1xf32>
    %265 = math.rsqrt %264 : vector<16x1xf32>
    %266 = vector.broadcast %265 : vector<16x1xf32> to vector<16x32xf32>
    %267 = arith.mulf %262, %266 : vector<16x32xf32>
    %268 = vector.broadcast %247 : vector<1x32xf32> to vector<16x32xf32>
    %269 = arith.mulf %267, %268 : vector<16x32xf32>
    %270 = vector.broadcast %249 : vector<1x32xf32> to vector<16x32xf32>
    %271 = arith.addf %269, %270 : vector<16x32xf32>
    %272 = arith.truncf %271 : vector<16x32xf32> to vector<16x32xbf16>
    %c0_188 = arith.constant 0 : index
    %c0_189 = arith.constant 0 : index
    %c0_190 = arith.constant 0 : index
    %273 = vector.load %arg16[%c0_188, %c0_189, %c0_190] : memref<2x32x64xbf16, #tpu.memory_space<vmem>>, vector<1x32x64xbf16>
    %274 = vector.shape_cast %273 : vector<1x32x64xbf16> to vector<32x64xbf16>
    %cst_191 = arith.constant dense<0.000000e+00> : vector<16x64xf32>
    %275 = tpu.matmul %272, %274, %cst_191 {dimension_numbers = #tpu.dot_dimension_numbers<[1], [0], [0], [1], [0, 0, 1, 1], [], []>} : vector<16x32xbf16>, vector<32x64xbf16>, vector<16x64xf32> -> vector<16x64xf32>
    %c0_192 = arith.constant 0 : index
    %c0_193 = arith.constant 0 : index
    %c0_194 = arith.constant 0 : index
    %276 = vector.load %arg17[%c0_192, %c0_193, %c0_194] : memref<2x1x64xf32, #tpu.memory_space<vmem>>, vector<1x1x64xf32>
    %277 = vector.shape_cast %276 : vector<1x1x64xf32> to vector<1x64xf32>
    %278 = vector.broadcast %277 : vector<1x64xf32> to vector<16x64xf32>
    %279 = arith.addf %275, %278 : vector<16x64xf32>
    %cst_195 = arith.constant 5.000000e-01 : f32
    %280 = vector.broadcast %cst_195 : f32 to vector<16x64xf32>
    %281 = arith.mulf %280, %279 : vector<16x64xf32>
    %cst_196 = arith.constant 4.471500e-02 : f32
    %282 = vector.broadcast %cst_196 : f32 to vector<16x64xf32>
    %283 = arith.mulf %282, %279 : vector<16x64xf32>
    %284 = arith.mulf %283, %279 : vector<16x64xf32>
    %285 = arith.mulf %284, %279 : vector<16x64xf32>
    %286 = arith.addf %279, %285 : vector<16x64xf32>
    %cst_197 = arith.constant 0.797884583 : f32
    %287 = vector.broadcast %cst_197 : f32 to vector<16x64xf32>
    %288 = arith.mulf %287, %286 : vector<16x64xf32>
    %289 = math.tanh %288 : vector<16x64xf32>
    %cst_198 = arith.constant 1.000000e+00 : f32
    %290 = vector.broadcast %cst_198 : f32 to vector<16x64xf32>
    %291 = arith.addf %290, %289 : vector<16x64xf32>
    %292 = arith.mulf %281, %291 : vector<16x64xf32>
    %293 = arith.truncf %292 : vector<16x64xf32> to vector<16x64xbf16>
    %c0_199 = arith.constant 0 : index
    %c0_200 = arith.constant 0 : index
    %c0_201 = arith.constant 0 : index
    %294 = vector.load %arg18[%c0_199, %c0_200, %c0_201] : memref<2x64x32xbf16, #tpu.memory_space<vmem>>, vector<1x64x32xbf16>
    %295 = vector.shape_cast %294 : vector<1x64x32xbf16> to vector<64x32xbf16>
    %cst_202 = arith.constant dense<0.000000e+00> : vector<16x32xf32>
    %296 = tpu.matmul %293, %295, %cst_202 {dimension_numbers = #tpu.dot_dimension_numbers<[1], [0], [0], [1], [0, 0, 1, 1], [], []>} : vector<16x64xbf16>, vector<64x32xbf16>, vector<16x32xf32> -> vector<16x32xf32>
    %c0_203 = arith.constant 0 : index
    %c0_204 = arith.constant 0 : index
    %c0_205 = arith.constant 0 : index
    %297 = vector.load %arg19[%c0_203, %c0_204, %c0_205] : memref<2x1x32xf32, #tpu.memory_space<vmem>>, vector<1x1x32xf32>
    %298 = vector.shape_cast %297 : vector<1x1x32xf32> to vector<1x32xf32>
    %299 = vector.broadcast %298 : vector<1x32xf32> to vector<16x32xf32>
    %300 = arith.addf %296, %299 : vector<16x32xf32>
    %301 = arith.addf %271, %300 : vector<16x32xf32>
    %c0_206 = arith.constant 0 : index
    %c0_207 = arith.constant 0 : index
    %c0_208 = arith.constant 0 : index
    %302 = vector.load %arg24[%c0_206, %c0_207, %c0_208] : memref<2x1x32xf32, #tpu.memory_space<vmem>>, vector<1x1x32xf32>
    %303 = vector.shape_cast %302 : vector<1x1x32xf32> to vector<1x32xf32>
    %c0_209 = arith.constant 0 : index
    %c0_210 = arith.constant 0 : index
    %c0_211 = arith.constant 0 : index
    %304 = vector.load %arg25[%c0_209, %c0_210, %c0_211] : memref<2x1x32xf32, #tpu.memory_space<vmem>>, vector<1x1x32xf32>
    %305 = vector.shape_cast %304 : vector<1x1x32xf32> to vector<1x32xf32>
    %cst_212 = arith.constant dense<0.000000e+00> : vector<16xf32>
    %306 = vector.multi_reduction <add>, %301, %cst_212 [1] : vector<16x32xf32> to vector<16xf32>
    %307 = vector.shape_cast %306 : vector<16xf32> to vector<16x1xf32>
    %cst_213 = arith.constant 3.200000e+01 : f32
    %308 = vector.broadcast %cst_213 : f32 to vector<16x1xf32>
    %309 = arith.divf %307, %308 : vector<16x1xf32>
    %310 = vector.broadcast %309 : vector<16x1xf32> to vector<16x32xf32>
    %311 = arith.subf %301, %310 : vector<16x32xf32>
    %312 = arith.mulf %311, %311 : vector<16x32xf32>
    %cst_214 = arith.constant dense<0.000000e+00> : vector<16xf32>
    %313 = vector.multi_reduction <add>, %312, %cst_214 [1] : vector<16x32xf32> to vector<16xf32>
    %314 = vector.shape_cast %313 : vector<16xf32> to vector<16x1xf32>
    %cst_215 = arith.constant 3.200000e+01 : f32
    %315 = vector.broadcast %cst_215 : f32 to vector<16x1xf32>
    %316 = arith.divf %314, %315 : vector<16x1xf32>
    %317 = vector.broadcast %309 : vector<16x1xf32> to vector<16x32xf32>
    %318 = arith.subf %301, %317 : vector<16x32xf32>
    %cst_216 = arith.constant 9.99999974E-6 : f32
    %319 = vector.broadcast %cst_216 : f32 to vector<16x1xf32>
    %320 = arith.addf %316, %319 : vector<16x1xf32>
    %321 = math.rsqrt %320 : vector<16x1xf32>
    %322 = vector.broadcast %321 : vector<16x1xf32> to vector<16x32xf32>
    %323 = arith.mulf %318, %322 : vector<16x32xf32>
    %324 = vector.broadcast %303 : vector<1x32xf32> to vector<16x32xf32>
    %325 = arith.mulf %323, %324 : vector<16x32xf32>
    %326 = vector.broadcast %305 : vector<1x32xf32> to vector<16x32xf32>
    %327 = arith.addf %325, %326 : vector<16x32xf32>
    %328 = arith.truncf %327 : vector<16x32xf32> to vector<16x32xbf16>
    %cst_217 = arith.constant 0.000000e+00 : f32
    %329 = vector.broadcast %cst_217 : f32 to vector<16x32xf32>
    %c1_218 = arith.constant 1 : index
    %c0_219 = arith.constant 0 : index
    %c0_220 = arith.constant 0 : index
    %c0_221 = arith.constant 0 : index
    %330 = vector.load %arg4[%c1_218, %c0_219, %c0_220, %c0_221] : memref<2x4x32x8xbf16, #tpu.memory_space<vmem>>, vector<1x1x32x8xbf16>
    %331 = vector.shape_cast %330 : vector<1x1x32x8xbf16> to vector<32x8xbf16>
    %cst_222 = arith.constant dense<0.000000e+00> : vector<16x8xf32>
    %332 = tpu.matmul %328, %331, %cst_222 {dimension_numbers = #tpu.dot_dimension_numbers<[1], [0], [0], [1], [0, 0, 1, 1], [], []>} : vector<16x32xbf16>, vector<32x8xbf16>, vector<16x8xf32> -> vector<16x8xf32>
    %c1_223 = arith.constant 1 : index
    %c0_224 = arith.constant 0 : index
    %c0_225 = arith.constant 0 : index
    %c0_226 = arith.constant 0 : index
    %333 = vector.load %arg7[%c1_223, %c0_224, %c0_225, %c0_226] : memref<2x4x1x8xf32, #tpu.memory_space<vmem>>, vector<1x1x1x8xf32>
    %334 = vector.shape_cast %333 : vector<1x1x1x8xf32> to vector<1x8xf32>
    %335 = vector.broadcast %334 : vector<1x8xf32> to vector<16x8xf32>
    %336 = arith.addf %332, %335 : vector<16x8xf32>
    %337 = vector.shape_cast %336 : vector<16x8xf32> to vector<2x8x8xf32>
    %c1_227 = arith.constant 1 : index
    %c0_228 = arith.constant 0 : index
    %c0_229 = arith.constant 0 : index
    %c0_230 = arith.constant 0 : index
    %338 = vector.load %arg5[%c1_227, %c0_228, %c0_229, %c0_230] : memref<2x4x32x8xbf16, #tpu.memory_space<vmem>>, vector<1x1x32x8xbf16>
    %339 = vector.shape_cast %338 : vector<1x1x32x8xbf16> to vector<32x8xbf16>
    %cst_231 = arith.constant dense<0.000000e+00> : vector<16x8xf32>
    %340 = tpu.matmul %328, %339, %cst_231 {dimension_numbers = #tpu.dot_dimension_numbers<[1], [0], [0], [1], [0, 0, 1, 1], [], []>} : vector<16x32xbf16>, vector<32x8xbf16>, vector<16x8xf32> -> vector<16x8xf32>
    %c1_232 = arith.constant 1 : index
    %c0_233 = arith.constant 0 : index
    %c0_234 = arith.constant 0 : index
    %c0_235 = arith.constant 0 : index
    %341 = vector.load %arg8[%c1_232, %c0_233, %c0_234, %c0_235] : memref<2x4x1x8xf32, #tpu.memory_space<vmem>>, vector<1x1x1x8xf32>
    %342 = vector.shape_cast %341 : vector<1x1x1x8xf32> to vector<1x8xf32>
    %343 = vector.broadcast %342 : vector<1x8xf32> to vector<16x8xf32>
    %344 = arith.addf %340, %343 : vector<16x8xf32>
    %345 = vector.shape_cast %344 : vector<16x8xf32> to vector<2x8x8xf32>
    %c1_236 = arith.constant 1 : index
    %c0_237 = arith.constant 0 : index
    %c0_238 = arith.constant 0 : index
    %c0_239 = arith.constant 0 : index
    %346 = vector.load %arg6[%c1_236, %c0_237, %c0_238, %c0_239] : memref<2x4x32x8xbf16, #tpu.memory_space<vmem>>, vector<1x1x32x8xbf16>
    %347 = vector.shape_cast %346 : vector<1x1x32x8xbf16> to vector<32x8xbf16>
    %cst_240 = arith.constant dense<0.000000e+00> : vector<16x8xf32>
    %348 = tpu.matmul %328, %347, %cst_240 {dimension_numbers = #tpu.dot_dimension_numbers<[1], [0], [0], [1], [0, 0, 1, 1], [], []>} : vector<16x32xbf16>, vector<32x8xbf16>, vector<16x8xf32> -> vector<16x8xf32>
    %c1_241 = arith.constant 1 : index
    %c0_242 = arith.constant 0 : index
    %c0_243 = arith.constant 0 : index
    %c0_244 = arith.constant 0 : index
    %349 = vector.load %arg9[%c1_241, %c0_242, %c0_243, %c0_244] : memref<2x4x1x8xf32, #tpu.memory_space<vmem>>, vector<1x1x1x8xf32>
    %350 = vector.shape_cast %349 : vector<1x1x1x8xf32> to vector<1x8xf32>
    %351 = vector.broadcast %350 : vector<1x8xf32> to vector<16x8xf32>
    %352 = arith.addf %348, %351 : vector<16x8xf32>
    %353 = vector.shape_cast %352 : vector<16x8xf32> to vector<2x8x8xf32>
    %354 = arith.truncf %337 : vector<2x8x8xf32> to vector<2x8x8xbf16>
    %355 = arith.truncf %345 : vector<2x8x8xf32> to vector<2x8x8xbf16>
    "tpu.trace_start"() <{level = 10 : i32, message = "bqd,bkd->bqk"}> : () -> ()
    %cst_245 = arith.constant dense<0.000000e+00> : vector<2x8x8xf32>
    %356 = tpu.matmul %354, %355, %cst_245 {dimension_numbers = #tpu.dot_dimension_numbers<[2], [2], [1], [1], [0, 0, 0, 1, 1, 1], [0], [0]>} : vector<2x8x8xbf16>, vector<2x8x8xbf16>, vector<2x8x8xf32> -> vector<2x8x8xf32>
    "tpu.trace_stop"() : () -> ()
    %357 = arith.addf %356, %3 : vector<2x8x8xf32>
    %cst_246 = arith.constant dense<0xFF800000> : vector<2x8xf32>
    %358 = vector.multi_reduction <maximumf>, %357, %cst_246 [2] : vector<2x8x8xf32> to vector<2x8xf32>
    %359 = vector.shape_cast %358 : vector<2x8xf32> to vector<2x8x1xf32>
    %360 = vector.broadcast %359 : vector<2x8x1xf32> to vector<2x8x8xf32>
    %361 = arith.subf %357, %360 : vector<2x8x8xf32>
    %362 = math.exp %361 : vector<2x8x8xf32>
    %cst_247 = arith.constant dense<0.000000e+00> : vector<2x8xf32>
    %363 = vector.multi_reduction <add>, %362, %cst_247 [2] : vector<2x8x8xf32> to vector<2x8xf32>
    %364 = vector.shape_cast %363 : vector<2x8xf32> to vector<2x8x1xf32>
    %365 = tpu.reciprocal %364 {approx = true} : vector<2x8x1xf32> -> vector<2x8x1xf32>
    %366 = vector.broadcast %365 : vector<2x8x1xf32> to vector<2x8x8xf32>
    %367 = arith.mulf %362, %366 : vector<2x8x8xf32>
    %368 = arith.truncf %367 : vector<2x8x8xf32> to vector<2x8x8xbf16>
    %369 = arith.truncf %353 : vector<2x8x8xf32> to vector<2x8x8xbf16>
    "tpu.trace_start"() <{level = 10 : i32, message = "bqk,bkd->bqd"}> : () -> ()
    %cst_248 = arith.constant dense<0.000000e+00> : vector<2x8x8xf32>
    %370 = tpu.matmul %368, %369, %cst_248 {dimension_numbers = #tpu.dot_dimension_numbers<[2], [1], [1], [2], [0, 0, 0, 1, 1, 2], [0], [0]>} : vector<2x8x8xbf16>, vector<2x8x8xbf16>, vector<2x8x8xf32> -> vector<2x8x8xf32>
    "tpu.trace_stop"() : () -> ()
    %371 = vector.shape_cast %370 : vector<2x8x8xf32> to vector<16x8xf32>
    %372 = arith.truncf %371 : vector<16x8xf32> to vector<16x8xbf16>
    %c1_249 = arith.constant 1 : index
    %c0_250 = arith.constant 0 : index
    %c0_251 = arith.constant 0 : index
    %c0_252 = arith.constant 0 : index
    %373 = vector.load %arg10[%c1_249, %c0_250, %c0_251, %c0_252] : memref<2x4x8x32xbf16, #tpu.memory_space<vmem>>, vector<1x1x8x32xbf16>
    %374 = vector.shape_cast %373 : vector<1x1x8x32xbf16> to vector<8x32xbf16>
    %cst_253 = arith.constant dense<0.000000e+00> : vector<16x32xf32>
    %375 = tpu.matmul %372, %374, %cst_253 {dimension_numbers = #tpu.dot_dimension_numbers<[1], [0], [0], [1], [0, 0, 1, 1], [], []>} : vector<16x8xbf16>, vector<8x32xbf16>, vector<16x32xf32> -> vector<16x32xf32>
    %376 = arith.addf %329, %375 : vector<16x32xf32>
    %c1_254 = arith.constant 1 : index
    %c1_255 = arith.constant 1 : index
    %c0_256 = arith.constant 0 : index
    %c0_257 = arith.constant 0 : index
    %377 = vector.load %arg4[%c1_254, %c1_255, %c0_256, %c0_257] : memref<2x4x32x8xbf16, #tpu.memory_space<vmem>>, vector<1x1x32x8xbf16>
    %378 = vector.shape_cast %377 : vector<1x1x32x8xbf16> to vector<32x8xbf16>
    %cst_258 = arith.constant dense<0.000000e+00> : vector<16x8xf32>
    %379 = tpu.matmul %328, %378, %cst_258 {dimension_numbers = #tpu.dot_dimension_numbers<[1], [0], [0], [1], [0, 0, 1, 1], [], []>} : vector<16x32xbf16>, vector<32x8xbf16>, vector<16x8xf32> -> vector<16x8xf32>
    %c1_259 = arith.constant 1 : index
    %c1_260 = arith.constant 1 : index
    %c0_261 = arith.constant 0 : index
    %c0_262 = arith.constant 0 : index
    %380 = vector.load %arg7[%c1_259, %c1_260, %c0_261, %c0_262] : memref<2x4x1x8xf32, #tpu.memory_space<vmem>>, vector<1x1x1x8xf32>
    %381 = vector.shape_cast %380 : vector<1x1x1x8xf32> to vector<1x8xf32>
    %382 = vector.broadcast %381 : vector<1x8xf32> to vector<16x8xf32>
    %383 = arith.addf %379, %382 : vector<16x8xf32>
    %384 = vector.shape_cast %383 : vector<16x8xf32> to vector<2x8x8xf32>
    %c1_263 = arith.constant 1 : index
    %c1_264 = arith.constant 1 : index
    %c0_265 = arith.constant 0 : index
    %c0_266 = arith.constant 0 : index
    %385 = vector.load %arg5[%c1_263, %c1_264, %c0_265, %c0_266] : memref<2x4x32x8xbf16, #tpu.memory_space<vmem>>, vector<1x1x32x8xbf16>
    %386 = vector.shape_cast %385 : vector<1x1x32x8xbf16> to vector<32x8xbf16>
    %cst_267 = arith.constant dense<0.000000e+00> : vector<16x8xf32>
    %387 = tpu.matmul %328, %386, %cst_267 {dimension_numbers = #tpu.dot_dimension_numbers<[1], [0], [0], [1], [0, 0, 1, 1], [], []>} : vector<16x32xbf16>, vector<32x8xbf16>, vector<16x8xf32> -> vector<16x8xf32>
    %c1_268 = arith.constant 1 : index
    %c1_269 = arith.constant 1 : index
    %c0_270 = arith.constant 0 : index
    %c0_271 = arith.constant 0 : index
    %388 = vector.load %arg8[%c1_268, %c1_269, %c0_270, %c0_271] : memref<2x4x1x8xf32, #tpu.memory_space<vmem>>, vector<1x1x1x8xf32>
    %389 = vector.shape_cast %388 : vector<1x1x1x8xf32> to vector<1x8xf32>
    %390 = vector.broadcast %389 : vector<1x8xf32> to vector<16x8xf32>
    %391 = arith.addf %387, %390 : vector<16x8xf32>
    %392 = vector.shape_cast %391 : vector<16x8xf32> to vector<2x8x8xf32>
    %c1_272 = arith.constant 1 : index
    %c1_273 = arith.constant 1 : index
    %c0_274 = arith.constant 0 : index
    %c0_275 = arith.constant 0 : index
    %393 = vector.load %arg6[%c1_272, %c1_273, %c0_274, %c0_275] : memref<2x4x32x8xbf16, #tpu.memory_space<vmem>>, vector<1x1x32x8xbf16>
    %394 = vector.shape_cast %393 : vector<1x1x32x8xbf16> to vector<32x8xbf16>
    %cst_276 = arith.constant dense<0.000000e+00> : vector<16x8xf32>
    %395 = tpu.matmul %328, %394, %cst_276 {dimension_numbers = #tpu.dot_dimension_numbers<[1], [0], [0], [1], [0, 0, 1, 1], [], []>} : vector<16x32xbf16>, vector<32x8xbf16>, vector<16x8xf32> -> vector<16x8xf32>
    %c1_277 = arith.constant 1 : index
    %c1_278 = arith.constant 1 : index
    %c0_279 = arith.constant 0 : index
    %c0_280 = arith.constant 0 : index
    %396 = vector.load %arg9[%c1_277, %c1_278, %c0_279, %c0_280] : memref<2x4x1x8xf32, #tpu.memory_space<vmem>>, vector<1x1x1x8xf32>
    %397 = vector.shape_cast %396 : vector<1x1x1x8xf32> to vector<1x8xf32>
    %398 = vector.broadcast %397 : vector<1x8xf32> to vector<16x8xf32>
    %399 = arith.addf %395, %398 : vector<16x8xf32>
    %400 = vector.shape_cast %399 : vector<16x8xf32> to vector<2x8x8xf32>
    %401 = arith.truncf %384 : vector<2x8x8xf32> to vector<2x8x8xbf16>
    %402 = arith.truncf %392 : vector<2x8x8xf32> to vector<2x8x8xbf16>
    "tpu.trace_start"() <{level = 10 : i32, message = "bqd,bkd->bqk"}> : () -> ()
    %cst_281 = arith.constant dense<0.000000e+00> : vector<2x8x8xf32>
    %403 = tpu.matmul %401, %402, %cst_281 {dimension_numbers = #tpu.dot_dimension_numbers<[2], [2], [1], [1], [0, 0, 0, 1, 1, 1], [0], [0]>} : vector<2x8x8xbf16>, vector<2x8x8xbf16>, vector<2x8x8xf32> -> vector<2x8x8xf32>
    "tpu.trace_stop"() : () -> ()
    %404 = arith.addf %403, %3 : vector<2x8x8xf32>
    %cst_282 = arith.constant dense<0xFF800000> : vector<2x8xf32>
    %405 = vector.multi_reduction <maximumf>, %404, %cst_282 [2] : vector<2x8x8xf32> to vector<2x8xf32>
    %406 = vector.shape_cast %405 : vector<2x8xf32> to vector<2x8x1xf32>
    %407 = vector.broadcast %406 : vector<2x8x1xf32> to vector<2x8x8xf32>
    %408 = arith.subf %404, %407 : vector<2x8x8xf32>
    %409 = math.exp %408 : vector<2x8x8xf32>
    %cst_283 = arith.constant dense<0.000000e+00> : vector<2x8xf32>
    %410 = vector.multi_reduction <add>, %409, %cst_283 [2] : vector<2x8x8xf32> to vector<2x8xf32>
    %411 = vector.shape_cast %410 : vector<2x8xf32> to vector<2x8x1xf32>
    %412 = tpu.reciprocal %411 {approx = true} : vector<2x8x1xf32> -> vector<2x8x1xf32>
    %413 = vector.broadcast %412 : vector<2x8x1xf32> to vector<2x8x8xf32>
    %414 = arith.mulf %409, %413 : vector<2x8x8xf32>
    %415 = arith.truncf %414 : vector<2x8x8xf32> to vector<2x8x8xbf16>
    %416 = arith.truncf %400 : vector<2x8x8xf32> to vector<2x8x8xbf16>
    "tpu.trace_start"() <{level = 10 : i32, message = "bqk,bkd->bqd"}> : () -> ()
    %cst_284 = arith.constant dense<0.000000e+00> : vector<2x8x8xf32>
    %417 = tpu.matmul %415, %416, %cst_284 {dimension_numbers = #tpu.dot_dimension_numbers<[2], [1], [1], [2], [0, 0, 0, 1, 1, 2], [0], [0]>} : vector<2x8x8xbf16>, vector<2x8x8xbf16>, vector<2x8x8xf32> -> vector<2x8x8xf32>
    "tpu.trace_stop"() : () -> ()
    %418 = vector.shape_cast %417 : vector<2x8x8xf32> to vector<16x8xf32>
    %419 = arith.truncf %418 : vector<16x8xf32> to vector<16x8xbf16>
    %c1_285 = arith.constant 1 : index
    %c1_286 = arith.constant 1 : index
    %c0_287 = arith.constant 0 : index
    %c0_288 = arith.constant 0 : index
    %420 = vector.load %arg10[%c1_285, %c1_286, %c0_287, %c0_288] : memref<2x4x8x32xbf16, #tpu.memory_space<vmem>>, vector<1x1x8x32xbf16>
    %421 = vector.shape_cast %420 : vector<1x1x8x32xbf16> to vector<8x32xbf16>
    %cst_289 = arith.constant dense<0.000000e+00> : vector<16x32xf32>
    %422 = tpu.matmul %419, %421, %cst_289 {dimension_numbers = #tpu.dot_dimension_numbers<[1], [0], [0], [1], [0, 0, 1, 1], [], []>} : vector<16x8xbf16>, vector<8x32xbf16>, vector<16x32xf32> -> vector<16x32xf32>
    %423 = arith.addf %376, %422 : vector<16x32xf32>
    %c1_290 = arith.constant 1 : index
    %c2_291 = arith.constant 2 : index
    %c0_292 = arith.constant 0 : index
    %c0_293 = arith.constant 0 : index
    %424 = vector.load %arg4[%c1_290, %c2_291, %c0_292, %c0_293] : memref<2x4x32x8xbf16, #tpu.memory_space<vmem>>, vector<1x1x32x8xbf16>
    %425 = vector.shape_cast %424 : vector<1x1x32x8xbf16> to vector<32x8xbf16>
    %cst_294 = arith.constant dense<0.000000e+00> : vector<16x8xf32>
    %426 = tpu.matmul %328, %425, %cst_294 {dimension_numbers = #tpu.dot_dimension_numbers<[1], [0], [0], [1], [0, 0, 1, 1], [], []>} : vector<16x32xbf16>, vector<32x8xbf16>, vector<16x8xf32> -> vector<16x8xf32>
    %c1_295 = arith.constant 1 : index
    %c2_296 = arith.constant 2 : index
    %c0_297 = arith.constant 0 : index
    %c0_298 = arith.constant 0 : index
    %427 = vector.load %arg7[%c1_295, %c2_296, %c0_297, %c0_298] : memref<2x4x1x8xf32, #tpu.memory_space<vmem>>, vector<1x1x1x8xf32>
    %428 = vector.shape_cast %427 : vector<1x1x1x8xf32> to vector<1x8xf32>
    %429 = vector.broadcast %428 : vector<1x8xf32> to vector<16x8xf32>
    %430 = arith.addf %426, %429 : vector<16x8xf32>
    %431 = vector.shape_cast %430 : vector<16x8xf32> to vector<2x8x8xf32>
    %c1_299 = arith.constant 1 : index
    %c2_300 = arith.constant 2 : index
    %c0_301 = arith.constant 0 : index
    %c0_302 = arith.constant 0 : index
    %432 = vector.load %arg5[%c1_299, %c2_300, %c0_301, %c0_302] : memref<2x4x32x8xbf16, #tpu.memory_space<vmem>>, vector<1x1x32x8xbf16>
    %433 = vector.shape_cast %432 : vector<1x1x32x8xbf16> to vector<32x8xbf16>
    %cst_303 = arith.constant dense<0.000000e+00> : vector<16x8xf32>
    %434 = tpu.matmul %328, %433, %cst_303 {dimension_numbers = #tpu.dot_dimension_numbers<[1], [0], [0], [1], [0, 0, 1, 1], [], []>} : vector<16x32xbf16>, vector<32x8xbf16>, vector<16x8xf32> -> vector<16x8xf32>
    %c1_304 = arith.constant 1 : index
    %c2_305 = arith.constant 2 : index
    %c0_306 = arith.constant 0 : index
    %c0_307 = arith.constant 0 : index
    %435 = vector.load %arg8[%c1_304, %c2_305, %c0_306, %c0_307] : memref<2x4x1x8xf32, #tpu.memory_space<vmem>>, vector<1x1x1x8xf32>
    %436 = vector.shape_cast %435 : vector<1x1x1x8xf32> to vector<1x8xf32>
    %437 = vector.broadcast %436 : vector<1x8xf32> to vector<16x8xf32>
    %438 = arith.addf %434, %437 : vector<16x8xf32>
    %439 = vector.shape_cast %438 : vector<16x8xf32> to vector<2x8x8xf32>
    %c1_308 = arith.constant 1 : index
    %c2_309 = arith.constant 2 : index
    %c0_310 = arith.constant 0 : index
    %c0_311 = arith.constant 0 : index
    %440 = vector.load %arg6[%c1_308, %c2_309, %c0_310, %c0_311] : memref<2x4x32x8xbf16, #tpu.memory_space<vmem>>, vector<1x1x32x8xbf16>
    %441 = vector.shape_cast %440 : vector<1x1x32x8xbf16> to vector<32x8xbf16>
    %cst_312 = arith.constant dense<0.000000e+00> : vector<16x8xf32>
    %442 = tpu.matmul %328, %441, %cst_312 {dimension_numbers = #tpu.dot_dimension_numbers<[1], [0], [0], [1], [0, 0, 1, 1], [], []>} : vector<16x32xbf16>, vector<32x8xbf16>, vector<16x8xf32> -> vector<16x8xf32>
    %c1_313 = arith.constant 1 : index
    %c2_314 = arith.constant 2 : index
    %c0_315 = arith.constant 0 : index
    %c0_316 = arith.constant 0 : index
    %443 = vector.load %arg9[%c1_313, %c2_314, %c0_315, %c0_316] : memref<2x4x1x8xf32, #tpu.memory_space<vmem>>, vector<1x1x1x8xf32>
    %444 = vector.shape_cast %443 : vector<1x1x1x8xf32> to vector<1x8xf32>
    %445 = vector.broadcast %444 : vector<1x8xf32> to vector<16x8xf32>
    %446 = arith.addf %442, %445 : vector<16x8xf32>
    %447 = vector.shape_cast %446 : vector<16x8xf32> to vector<2x8x8xf32>
    %448 = arith.truncf %431 : vector<2x8x8xf32> to vector<2x8x8xbf16>
    %449 = arith.truncf %439 : vector<2x8x8xf32> to vector<2x8x8xbf16>
    "tpu.trace_start"() <{level = 10 : i32, message = "bqd,bkd->bqk"}> : () -> ()
    %cst_317 = arith.constant dense<0.000000e+00> : vector<2x8x8xf32>
    %450 = tpu.matmul %448, %449, %cst_317 {dimension_numbers = #tpu.dot_dimension_numbers<[2], [2], [1], [1], [0, 0, 0, 1, 1, 1], [0], [0]>} : vector<2x8x8xbf16>, vector<2x8x8xbf16>, vector<2x8x8xf32> -> vector<2x8x8xf32>
    "tpu.trace_stop"() : () -> ()
    %451 = arith.addf %450, %3 : vector<2x8x8xf32>
    %cst_318 = arith.constant dense<0xFF800000> : vector<2x8xf32>
    %452 = vector.multi_reduction <maximumf>, %451, %cst_318 [2] : vector<2x8x8xf32> to vector<2x8xf32>
    %453 = vector.shape_cast %452 : vector<2x8xf32> to vector<2x8x1xf32>
    %454 = vector.broadcast %453 : vector<2x8x1xf32> to vector<2x8x8xf32>
    %455 = arith.subf %451, %454 : vector<2x8x8xf32>
    %456 = math.exp %455 : vector<2x8x8xf32>
    %cst_319 = arith.constant dense<0.000000e+00> : vector<2x8xf32>
    %457 = vector.multi_reduction <add>, %456, %cst_319 [2] : vector<2x8x8xf32> to vector<2x8xf32>
    %458 = vector.shape_cast %457 : vector<2x8xf32> to vector<2x8x1xf32>
    %459 = tpu.reciprocal %458 {approx = true} : vector<2x8x1xf32> -> vector<2x8x1xf32>
    %460 = vector.broadcast %459 : vector<2x8x1xf32> to vector<2x8x8xf32>
    %461 = arith.mulf %456, %460 : vector<2x8x8xf32>
    %462 = arith.truncf %461 : vector<2x8x8xf32> to vector<2x8x8xbf16>
    %463 = arith.truncf %447 : vector<2x8x8xf32> to vector<2x8x8xbf16>
    "tpu.trace_start"() <{level = 10 : i32, message = "bqk,bkd->bqd"}> : () -> ()
    %cst_320 = arith.constant dense<0.000000e+00> : vector<2x8x8xf32>
    %464 = tpu.matmul %462, %463, %cst_320 {dimension_numbers = #tpu.dot_dimension_numbers<[2], [1], [1], [2], [0, 0, 0, 1, 1, 2], [0], [0]>} : vector<2x8x8xbf16>, vector<2x8x8xbf16>, vector<2x8x8xf32> -> vector<2x8x8xf32>
    "tpu.trace_stop"() : () -> ()
    %465 = vector.shape_cast %464 : vector<2x8x8xf32> to vector<16x8xf32>
    %466 = arith.truncf %465 : vector<16x8xf32> to vector<16x8xbf16>
    %c1_321 = arith.constant 1 : index
    %c2_322 = arith.constant 2 : index
    %c0_323 = arith.constant 0 : index
    %c0_324 = arith.constant 0 : index
    %467 = vector.load %arg10[%c1_321, %c2_322, %c0_323, %c0_324] : memref<2x4x8x32xbf16, #tpu.memory_space<vmem>>, vector<1x1x8x32xbf16>
    %468 = vector.shape_cast %467 : vector<1x1x8x32xbf16> to vector<8x32xbf16>
    %cst_325 = arith.constant dense<0.000000e+00> : vector<16x32xf32>
    %469 = tpu.matmul %466, %468, %cst_325 {dimension_numbers = #tpu.dot_dimension_numbers<[1], [0], [0], [1], [0, 0, 1, 1], [], []>} : vector<16x8xbf16>, vector<8x32xbf16>, vector<16x32xf32> -> vector<16x32xf32>
    %470 = arith.addf %423, %469 : vector<16x32xf32>
    %c1_326 = arith.constant 1 : index
    %c3_327 = arith.constant 3 : index
    %c0_328 = arith.constant 0 : index
    %c0_329 = arith.constant 0 : index
    %471 = vector.load %arg4[%c1_326, %c3_327, %c0_328, %c0_329] : memref<2x4x32x8xbf16, #tpu.memory_space<vmem>>, vector<1x1x32x8xbf16>
    %472 = vector.shape_cast %471 : vector<1x1x32x8xbf16> to vector<32x8xbf16>
    %cst_330 = arith.constant dense<0.000000e+00> : vector<16x8xf32>
    %473 = tpu.matmul %328, %472, %cst_330 {dimension_numbers = #tpu.dot_dimension_numbers<[1], [0], [0], [1], [0, 0, 1, 1], [], []>} : vector<16x32xbf16>, vector<32x8xbf16>, vector<16x8xf32> -> vector<16x8xf32>
    %c1_331 = arith.constant 1 : index
    %c3_332 = arith.constant 3 : index
    %c0_333 = arith.constant 0 : index
    %c0_334 = arith.constant 0 : index
    %474 = vector.load %arg7[%c1_331, %c3_332, %c0_333, %c0_334] : memref<2x4x1x8xf32, #tpu.memory_space<vmem>>, vector<1x1x1x8xf32>
    %475 = vector.shape_cast %474 : vector<1x1x1x8xf32> to vector<1x8xf32>
    %476 = vector.broadcast %475 : vector<1x8xf32> to vector<16x8xf32>
    %477 = arith.addf %473, %476 : vector<16x8xf32>
    %478 = vector.shape_cast %477 : vector<16x8xf32> to vector<2x8x8xf32>
    %c1_335 = arith.constant 1 : index
    %c3_336 = arith.constant 3 : index
    %c0_337 = arith.constant 0 : index
    %c0_338 = arith.constant 0 : index
    %479 = vector.load %arg5[%c1_335, %c3_336, %c0_337, %c0_338] : memref<2x4x32x8xbf16, #tpu.memory_space<vmem>>, vector<1x1x32x8xbf16>
    %480 = vector.shape_cast %479 : vector<1x1x32x8xbf16> to vector<32x8xbf16>
    %cst_339 = arith.constant dense<0.000000e+00> : vector<16x8xf32>
    %481 = tpu.matmul %328, %480, %cst_339 {dimension_numbers = #tpu.dot_dimension_numbers<[1], [0], [0], [1], [0, 0, 1, 1], [], []>} : vector<16x32xbf16>, vector<32x8xbf16>, vector<16x8xf32> -> vector<16x8xf32>
    %c1_340 = arith.constant 1 : index
    %c3_341 = arith.constant 3 : index
    %c0_342 = arith.constant 0 : index
    %c0_343 = arith.constant 0 : index
    %482 = vector.load %arg8[%c1_340, %c3_341, %c0_342, %c0_343] : memref<2x4x1x8xf32, #tpu.memory_space<vmem>>, vector<1x1x1x8xf32>
    %483 = vector.shape_cast %482 : vector<1x1x1x8xf32> to vector<1x8xf32>
    %484 = vector.broadcast %483 : vector<1x8xf32> to vector<16x8xf32>
    %485 = arith.addf %481, %484 : vector<16x8xf32>
    %486 = vector.shape_cast %485 : vector<16x8xf32> to vector<2x8x8xf32>
    %c1_344 = arith.constant 1 : index
    %c3_345 = arith.constant 3 : index
    %c0_346 = arith.constant 0 : index
    %c0_347 = arith.constant 0 : index
    %487 = vector.load %arg6[%c1_344, %c3_345, %c0_346, %c0_347] : memref<2x4x32x8xbf16, #tpu.memory_space<vmem>>, vector<1x1x32x8xbf16>
    %488 = vector.shape_cast %487 : vector<1x1x32x8xbf16> to vector<32x8xbf16>
    %cst_348 = arith.constant dense<0.000000e+00> : vector<16x8xf32>
    %489 = tpu.matmul %328, %488, %cst_348 {dimension_numbers = #tpu.dot_dimension_numbers<[1], [0], [0], [1], [0, 0, 1, 1], [], []>} : vector<16x32xbf16>, vector<32x8xbf16>, vector<16x8xf32> -> vector<16x8xf32>
    %c1_349 = arith.constant 1 : index
    %c3_350 = arith.constant 3 : index
    %c0_351 = arith.constant 0 : index
    %c0_352 = arith.constant 0 : index
    %490 = vector.load %arg9[%c1_349, %c3_350, %c0_351, %c0_352] : memref<2x4x1x8xf32, #tpu.memory_space<vmem>>, vector<1x1x1x8xf32>
    %491 = vector.shape_cast %490 : vector<1x1x1x8xf32> to vector<1x8xf32>
    %492 = vector.broadcast %491 : vector<1x8xf32> to vector<16x8xf32>
    %493 = arith.addf %489, %492 : vector<16x8xf32>
    %494 = vector.shape_cast %493 : vector<16x8xf32> to vector<2x8x8xf32>
    %495 = arith.truncf %478 : vector<2x8x8xf32> to vector<2x8x8xbf16>
    %496 = arith.truncf %486 : vector<2x8x8xf32> to vector<2x8x8xbf16>
    "tpu.trace_start"() <{level = 10 : i32, message = "bqd,bkd->bqk"}> : () -> ()
    %cst_353 = arith.constant dense<0.000000e+00> : vector<2x8x8xf32>
    %497 = tpu.matmul %495, %496, %cst_353 {dimension_numbers = #tpu.dot_dimension_numbers<[2], [2], [1], [1], [0, 0, 0, 1, 1, 1], [0], [0]>} : vector<2x8x8xbf16>, vector<2x8x8xbf16>, vector<2x8x8xf32> -> vector<2x8x8xf32>
    "tpu.trace_stop"() : () -> ()
    %498 = arith.addf %497, %3 : vector<2x8x8xf32>
    %cst_354 = arith.constant dense<0xFF800000> : vector<2x8xf32>
    %499 = vector.multi_reduction <maximumf>, %498, %cst_354 [2] : vector<2x8x8xf32> to vector<2x8xf32>
    %500 = vector.shape_cast %499 : vector<2x8xf32> to vector<2x8x1xf32>
    %501 = vector.broadcast %500 : vector<2x8x1xf32> to vector<2x8x8xf32>
    %502 = arith.subf %498, %501 : vector<2x8x8xf32>
    %503 = math.exp %502 : vector<2x8x8xf32>
    %cst_355 = arith.constant dense<0.000000e+00> : vector<2x8xf32>
    %504 = vector.multi_reduction <add>, %503, %cst_355 [2] : vector<2x8x8xf32> to vector<2x8xf32>
    %505 = vector.shape_cast %504 : vector<2x8xf32> to vector<2x8x1xf32>
    %506 = tpu.reciprocal %505 {approx = true} : vector<2x8x1xf32> -> vector<2x8x1xf32>
    %507 = vector.broadcast %506 : vector<2x8x1xf32> to vector<2x8x8xf32>
    %508 = arith.mulf %503, %507 : vector<2x8x8xf32>
    %509 = arith.truncf %508 : vector<2x8x8xf32> to vector<2x8x8xbf16>
    %510 = arith.truncf %494 : vector<2x8x8xf32> to vector<2x8x8xbf16>
    "tpu.trace_start"() <{level = 10 : i32, message = "bqk,bkd->bqd"}> : () -> ()
    %cst_356 = arith.constant dense<0.000000e+00> : vector<2x8x8xf32>
    %511 = tpu.matmul %509, %510, %cst_356 {dimension_numbers = #tpu.dot_dimension_numbers<[2], [1], [1], [2], [0, 0, 0, 1, 1, 2], [0], [0]>} : vector<2x8x8xbf16>, vector<2x8x8xbf16>, vector<2x8x8xf32> -> vector<2x8x8xf32>
    "tpu.trace_stop"() : () -> ()
    %512 = vector.shape_cast %511 : vector<2x8x8xf32> to vector<16x8xf32>
    %513 = arith.truncf %512 : vector<16x8xf32> to vector<16x8xbf16>
    %c1_357 = arith.constant 1 : index
    %c3_358 = arith.constant 3 : index
    %c0_359 = arith.constant 0 : index
    %c0_360 = arith.constant 0 : index
    %514 = vector.load %arg10[%c1_357, %c3_358, %c0_359, %c0_360] : memref<2x4x8x32xbf16, #tpu.memory_space<vmem>>, vector<1x1x8x32xbf16>
    %515 = vector.shape_cast %514 : vector<1x1x8x32xbf16> to vector<8x32xbf16>
    %cst_361 = arith.constant dense<0.000000e+00> : vector<16x32xf32>
    %516 = tpu.matmul %513, %515, %cst_361 {dimension_numbers = #tpu.dot_dimension_numbers<[1], [0], [0], [1], [0, 0, 1, 1], [], []>} : vector<16x8xbf16>, vector<8x32xbf16>, vector<16x32xf32> -> vector<16x32xf32>
    %517 = arith.addf %470, %516 : vector<16x32xf32>
    %518 = arith.addf %327, %517 : vector<16x32xf32>
    %c1_362 = arith.constant 1 : index
    %c0_363 = arith.constant 0 : index
    %c0_364 = arith.constant 0 : index
    %519 = vector.load %arg11[%c1_362, %c0_363, %c0_364] : memref<2x1x32xf32, #tpu.memory_space<vmem>>, vector<1x1x32xf32>
    %520 = vector.shape_cast %519 : vector<1x1x32xf32> to vector<1x32xf32>
    %521 = vector.broadcast %520 : vector<1x32xf32> to vector<16x32xf32>
    %522 = arith.addf %518, %521 : vector<16x32xf32>
    %c1_365 = arith.constant 1 : index
    %c0_366 = arith.constant 0 : index
    %c0_367 = arith.constant 0 : index
    %523 = vector.load %arg20[%c1_365, %c0_366, %c0_367] : memref<2x1x32xf32, #tpu.memory_space<vmem>>, vector<1x1x32xf32>
    %524 = vector.shape_cast %523 : vector<1x1x32xf32> to vector<1x32xf32>
    %c1_368 = arith.constant 1 : index
    %c0_369 = arith.constant 0 : index
    %c0_370 = arith.constant 0 : index
    %525 = vector.load %arg21[%c1_368, %c0_369, %c0_370] : memref<2x1x32xf32, #tpu.memory_space<vmem>>, vector<1x1x32xf32>
    %526 = vector.shape_cast %525 : vector<1x1x32xf32> to vector<1x32xf32>
    %cst_371 = arith.constant dense<0.000000e+00> : vector<16xf32>
    %527 = vector.multi_reduction <add>, %522, %cst_371 [1] : vector<16x32xf32> to vector<16xf32>
    %528 = vector.shape_cast %527 : vector<16xf32> to vector<16x1xf32>
    %cst_372 = arith.constant 3.200000e+01 : f32
    %529 = vector.broadcast %cst_372 : f32 to vector<16x1xf32>
    %530 = arith.divf %528, %529 : vector<16x1xf32>
    %531 = vector.broadcast %530 : vector<16x1xf32> to vector<16x32xf32>
    %532 = arith.subf %522, %531 : vector<16x32xf32>
    %533 = arith.mulf %532, %532 : vector<16x32xf32>
    %cst_373 = arith.constant dense<0.000000e+00> : vector<16xf32>
    %534 = vector.multi_reduction <add>, %533, %cst_373 [1] : vector<16x32xf32> to vector<16xf32>
    %535 = vector.shape_cast %534 : vector<16xf32> to vector<16x1xf32>
    %cst_374 = arith.constant 3.200000e+01 : f32
    %536 = vector.broadcast %cst_374 : f32 to vector<16x1xf32>
    %537 = arith.divf %535, %536 : vector<16x1xf32>
    %538 = vector.broadcast %530 : vector<16x1xf32> to vector<16x32xf32>
    %539 = arith.subf %522, %538 : vector<16x32xf32>
    %cst_375 = arith.constant 9.99999974E-6 : f32
    %540 = vector.broadcast %cst_375 : f32 to vector<16x1xf32>
    %541 = arith.addf %537, %540 : vector<16x1xf32>
    %542 = math.rsqrt %541 : vector<16x1xf32>
    %543 = vector.broadcast %542 : vector<16x1xf32> to vector<16x32xf32>
    %544 = arith.mulf %539, %543 : vector<16x32xf32>
    %545 = vector.broadcast %524 : vector<1x32xf32> to vector<16x32xf32>
    %546 = arith.mulf %544, %545 : vector<16x32xf32>
    %547 = vector.broadcast %526 : vector<1x32xf32> to vector<16x32xf32>
    %548 = arith.addf %546, %547 : vector<16x32xf32>
    %c1_376 = arith.constant 1 : index
    %c0_377 = arith.constant 0 : index
    %c0_378 = arith.constant 0 : index
    %549 = vector.load %arg12[%c1_376, %c0_377, %c0_378] : memref<2x32x32xbf16, #tpu.memory_space<vmem>>, vector<1x32x32xbf16>
    %550 = vector.shape_cast %549 : vector<1x32x32xbf16> to vector<32x32xbf16>
    %cst_379 = arith.constant dense<0.000000e+00> : vector<2x32xf32>
    %551 = tpu.matmul %2, %550, %cst_379 {dimension_numbers = #tpu.dot_dimension_numbers<[1], [0], [0], [1], [0, 0, 1, 1], [], []>} : vector<2x32xbf16>, vector<32x32xbf16>, vector<2x32xf32> -> vector<2x32xf32>
    %c1_380 = arith.constant 1 : index
    %c0_381 = arith.constant 0 : index
    %c0_382 = arith.constant 0 : index
    %552 = vector.load %arg13[%c1_380, %c0_381, %c0_382] : memref<2x1x32xf32, #tpu.memory_space<vmem>>, vector<1x1x32xf32>
    %553 = vector.shape_cast %552 : vector<1x1x32xf32> to vector<1x32xf32>
    %554 = vector.broadcast %553 : vector<1x32xf32> to vector<2x32xf32>
    %555 = arith.addf %551, %554 : vector<2x32xf32>
    %556 = arith.truncf %555 : vector<2x32xf32> to vector<2x32xbf16>
    %c1_383 = arith.constant 1 : index
    %c0_384 = arith.constant 0 : index
    %c0_385 = arith.constant 0 : index
    %557 = vector.load %arg14[%c1_383, %c0_384, %c0_385] : memref<2x32x32xbf16, #tpu.memory_space<vmem>>, vector<1x32x32xbf16>
    %558 = vector.shape_cast %557 : vector<1x32x32xbf16> to vector<32x32xbf16>
    %cst_386 = arith.constant dense<0.000000e+00> : vector<2x32xf32>
    %559 = tpu.matmul %556, %558, %cst_386 {dimension_numbers = #tpu.dot_dimension_numbers<[1], [0], [0], [1], [0, 0, 1, 1], [], []>} : vector<2x32xbf16>, vector<32x32xbf16>, vector<2x32xf32> -> vector<2x32xf32>
    %c1_387 = arith.constant 1 : index
    %c0_388 = arith.constant 0 : index
    %c0_389 = arith.constant 0 : index
    %560 = vector.load %arg15[%c1_387, %c0_388, %c0_389] : memref<2x1x32xf32, #tpu.memory_space<vmem>>, vector<1x1x32xf32>
    %561 = vector.shape_cast %560 : vector<1x1x32xf32> to vector<1x32xf32>
    %562 = vector.broadcast %561 : vector<1x32xf32> to vector<2x32xf32>
    %563 = arith.addf %559, %562 : vector<2x32xf32>
    %564 = vector.shape_cast %563 : vector<2x32xf32> to vector<2x1x32xf32>
    %565 = vector.shape_cast %564 : vector<2x1x32xf32> to vector<2x1x32xf32>
    %566 = vector.broadcast %565 : vector<2x1x32xf32> to vector<2x8x32xf32>
    %567 = vector.shape_cast %566 : vector<2x8x32xf32> to vector<16x32xf32>
    %568 = arith.addf %548, %567 : vector<16x32xf32>
    %c1_390 = arith.constant 1 : index
    %c0_391 = arith.constant 0 : index
    %c0_392 = arith.constant 0 : index
    %569 = vector.load %arg22[%c1_390, %c0_391, %c0_392] : memref<2x1x32xf32, #tpu.memory_space<vmem>>, vector<1x1x32xf32>
    %570 = vector.shape_cast %569 : vector<1x1x32xf32> to vector<1x32xf32>
    %c1_393 = arith.constant 1 : index
    %c0_394 = arith.constant 0 : index
    %c0_395 = arith.constant 0 : index
    %571 = vector.load %arg23[%c1_393, %c0_394, %c0_395] : memref<2x1x32xf32, #tpu.memory_space<vmem>>, vector<1x1x32xf32>
    %572 = vector.shape_cast %571 : vector<1x1x32xf32> to vector<1x32xf32>
    %cst_396 = arith.constant dense<0.000000e+00> : vector<16xf32>
    %573 = vector.multi_reduction <add>, %568, %cst_396 [1] : vector<16x32xf32> to vector<16xf32>
    %574 = vector.shape_cast %573 : vector<16xf32> to vector<16x1xf32>
    %cst_397 = arith.constant 3.200000e+01 : f32
    %575 = vector.broadcast %cst_397 : f32 to vector<16x1xf32>
    %576 = arith.divf %574, %575 : vector<16x1xf32>
    %577 = vector.broadcast %576 : vector<16x1xf32> to vector<16x32xf32>
    %578 = arith.subf %568, %577 : vector<16x32xf32>
    %579 = arith.mulf %578, %578 : vector<16x32xf32>
    %cst_398 = arith.constant dense<0.000000e+00> : vector<16xf32>
    %580 = vector.multi_reduction <add>, %579, %cst_398 [1] : vector<16x32xf32> to vector<16xf32>
    %581 = vector.shape_cast %580 : vector<16xf32> to vector<16x1xf32>
    %cst_399 = arith.constant 3.200000e+01 : f32
    %582 = vector.broadcast %cst_399 : f32 to vector<16x1xf32>
    %583 = arith.divf %581, %582 : vector<16x1xf32>
    %584 = vector.broadcast %576 : vector<16x1xf32> to vector<16x32xf32>
    %585 = arith.subf %568, %584 : vector<16x32xf32>
    %cst_400 = arith.constant 9.99999974E-6 : f32
    %586 = vector.broadcast %cst_400 : f32 to vector<16x1xf32>
    %587 = arith.addf %583, %586 : vector<16x1xf32>
    %588 = math.rsqrt %587 : vector<16x1xf32>
    %589 = vector.broadcast %588 : vector<16x1xf32> to vector<16x32xf32>
    %590 = arith.mulf %585, %589 : vector<16x32xf32>
    %591 = vector.broadcast %570 : vector<1x32xf32> to vector<16x32xf32>
    %592 = arith.mulf %590, %591 : vector<16x32xf32>
    %593 = vector.broadcast %572 : vector<1x32xf32> to vector<16x32xf32>
    %594 = arith.addf %592, %593 : vector<16x32xf32>
    %595 = arith.truncf %594 : vector<16x32xf32> to vector<16x32xbf16>
    %c1_401 = arith.constant 1 : index
    %c0_402 = arith.constant 0 : index
    %c0_403 = arith.constant 0 : index
    %596 = vector.load %arg16[%c1_401, %c0_402, %c0_403] : memref<2x32x64xbf16, #tpu.memory_space<vmem>>, vector<1x32x64xbf16>
    %597 = vector.shape_cast %596 : vector<1x32x64xbf16> to vector<32x64xbf16>
    %cst_404 = arith.constant dense<0.000000e+00> : vector<16x64xf32>
    %598 = tpu.matmul %595, %597, %cst_404 {dimension_numbers = #tpu.dot_dimension_numbers<[1], [0], [0], [1], [0, 0, 1, 1], [], []>} : vector<16x32xbf16>, vector<32x64xbf16>, vector<16x64xf32> -> vector<16x64xf32>
    %c1_405 = arith.constant 1 : index
    %c0_406 = arith.constant 0 : index
    %c0_407 = arith.constant 0 : index
    %599 = vector.load %arg17[%c1_405, %c0_406, %c0_407] : memref<2x1x64xf32, #tpu.memory_space<vmem>>, vector<1x1x64xf32>
    %600 = vector.shape_cast %599 : vector<1x1x64xf32> to vector<1x64xf32>
    %601 = vector.broadcast %600 : vector<1x64xf32> to vector<16x64xf32>
    %602 = arith.addf %598, %601 : vector<16x64xf32>
    %cst_408 = arith.constant 5.000000e-01 : f32
    %603 = vector.broadcast %cst_408 : f32 to vector<16x64xf32>
    %604 = arith.mulf %603, %602 : vector<16x64xf32>
    %cst_409 = arith.constant 4.471500e-02 : f32
    %605 = vector.broadcast %cst_409 : f32 to vector<16x64xf32>
    %606 = arith.mulf %605, %602 : vector<16x64xf32>
    %607 = arith.mulf %606, %602 : vector<16x64xf32>
    %608 = arith.mulf %607, %602 : vector<16x64xf32>
    %609 = arith.addf %602, %608 : vector<16x64xf32>
    %cst_410 = arith.constant 0.797884583 : f32
    %610 = vector.broadcast %cst_410 : f32 to vector<16x64xf32>
    %611 = arith.mulf %610, %609 : vector<16x64xf32>
    %612 = math.tanh %611 : vector<16x64xf32>
    %cst_411 = arith.constant 1.000000e+00 : f32
    %613 = vector.broadcast %cst_411 : f32 to vector<16x64xf32>
    %614 = arith.addf %613, %612 : vector<16x64xf32>
    %615 = arith.mulf %604, %614 : vector<16x64xf32>
    %616 = arith.truncf %615 : vector<16x64xf32> to vector<16x64xbf16>
    %c1_412 = arith.constant 1 : index
    %c0_413 = arith.constant 0 : index
    %c0_414 = arith.constant 0 : index
    %617 = vector.load %arg18[%c1_412, %c0_413, %c0_414] : memref<2x64x32xbf16, #tpu.memory_space<vmem>>, vector<1x64x32xbf16>
    %618 = vector.shape_cast %617 : vector<1x64x32xbf16> to vector<64x32xbf16>
    %cst_415 = arith.constant dense<0.000000e+00> : vector<16x32xf32>
    %619 = tpu.matmul %616, %618, %cst_415 {dimension_numbers = #tpu.dot_dimension_numbers<[1], [0], [0], [1], [0, 0, 1, 1], [], []>} : vector<16x64xbf16>, vector<64x32xbf16>, vector<16x32xf32> -> vector<16x32xf32>
    %c1_416 = arith.constant 1 : index
    %c0_417 = arith.constant 0 : index
    %c0_418 = arith.constant 0 : index
    %620 = vector.load %arg19[%c1_416, %c0_417, %c0_418] : memref<2x1x32xf32, #tpu.memory_space<vmem>>, vector<1x1x32xf32>
    %621 = vector.shape_cast %620 : vector<1x1x32xf32> to vector<1x32xf32>
    %622 = vector.broadcast %621 : vector<1x32xf32> to vector<16x32xf32>
    %623 = arith.addf %619, %622 : vector<16x32xf32>
    %624 = arith.addf %594, %623 : vector<16x32xf32>
    %c1_419 = arith.constant 1 : index
    %c0_420 = arith.constant 0 : index
    %c0_421 = arith.constant 0 : index
    %625 = vector.load %arg24[%c1_419, %c0_420, %c0_421] : memref<2x1x32xf32, #tpu.memory_space<vmem>>, vector<1x1x32xf32>
    %626 = vector.shape_cast %625 : vector<1x1x32xf32> to vector<1x32xf32>
    %c1_422 = arith.constant 1 : index
    %c0_423 = arith.constant 0 : index
    %c0_424 = arith.constant 0 : index
    %627 = vector.load %arg25[%c1_422, %c0_423, %c0_424] : memref<2x1x32xf32, #tpu.memory_space<vmem>>, vector<1x1x32xf32>
    %628 = vector.shape_cast %627 : vector<1x1x32xf32> to vector<1x32xf32>
    %cst_425 = arith.constant dense<0.000000e+00> : vector<16xf32>
    %629 = vector.multi_reduction <add>, %624, %cst_425 [1] : vector<16x32xf32> to vector<16xf32>
    %630 = vector.shape_cast %629 : vector<16xf32> to vector<16x1xf32>
    %cst_426 = arith.constant 3.200000e+01 : f32
    %631 = vector.broadcast %cst_426 : f32 to vector<16x1xf32>
    %632 = arith.divf %630, %631 : vector<16x1xf32>
    %633 = vector.broadcast %632 : vector<16x1xf32> to vector<16x32xf32>
    %634 = arith.subf %624, %633 : vector<16x32xf32>
    %635 = arith.mulf %634, %634 : vector<16x32xf32>
    %cst_427 = arith.constant dense<0.000000e+00> : vector<16xf32>
    %636 = vector.multi_reduction <add>, %635, %cst_427 [1] : vector<16x32xf32> to vector<16xf32>
    %637 = vector.shape_cast %636 : vector<16xf32> to vector<16x1xf32>
    %cst_428 = arith.constant 3.200000e+01 : f32
    %638 = vector.broadcast %cst_428 : f32 to vector<16x1xf32>
    %639 = arith.divf %637, %638 : vector<16x1xf32>
    %640 = vector.broadcast %632 : vector<16x1xf32> to vector<16x32xf32>
    %641 = arith.subf %624, %640 : vector<16x32xf32>
    %cst_429 = arith.constant 9.99999974E-6 : f32
    %642 = vector.broadcast %cst_429 : f32 to vector<16x1xf32>
    %643 = arith.addf %639, %642 : vector<16x1xf32>
    %644 = math.rsqrt %643 : vector<16x1xf32>
    %645 = vector.broadcast %644 : vector<16x1xf32> to vector<16x32xf32>
    %646 = arith.mulf %641, %645 : vector<16x32xf32>
    %647 = vector.broadcast %626 : vector<1x32xf32> to vector<16x32xf32>
    %648 = arith.mulf %646, %647 : vector<16x32xf32>
    %649 = vector.broadcast %628 : vector<1x32xf32> to vector<16x32xf32>
    %650 = arith.addf %648, %649 : vector<16x32xf32>
    %651 = arith.truncf %650 : vector<16x32xf32> to vector<16x32xbf16>
    %c0_430 = arith.constant 0 : index
    %c0_431 = arith.constant 0 : index
    %652 = vector.load %arg26[%c0_430, %c0_431] : memref<32x128xbf16, #tpu.memory_space<vmem>>, vector<32x128xbf16>
    %cst_432 = arith.constant dense<0.000000e+00> : vector<16x128xf32>
    %653 = tpu.matmul %651, %652, %cst_432 {dimension_numbers = #tpu.dot_dimension_numbers<[1], [0], [0], [1], [0, 0, 1, 1], [], []>} : vector<16x32xbf16>, vector<32x128xbf16>, vector<16x128xf32> -> vector<16x128xf32>
    %c0_433 = arith.constant 0 : index
    %c0_434 = arith.constant 0 : index
    %654 = vector.load %arg27[%c0_433, %c0_434] : memref<1x128xf32, #tpu.memory_space<vmem>>, vector<1x128xf32>
    %655 = vector.broadcast %654 : vector<1x128xf32> to vector<16x128xf32>
    %656 = arith.addf %653, %655 : vector<16x128xf32>
    %657 = vector.broadcast %4 : vector<16x1xf32> to vector<16x128xf32>
    %658 = arith.mulf %656, %657 : vector<16x128xf32>
    %c0_435 = arith.constant 0 : index
    %c0_436 = arith.constant 0 : index
    %659 = vector.load %arg28[%c0_435, %c0_436] : memref<16x128xf32, #tpu.memory_space<vmem>>, vector<16x128xf32>
    tpu.vector_store %arg28[%c0_435, %c0_436], %658 {strides = array<i32>} : memref<16x128xf32, #tpu.memory_space<vmem>>, vector<16x128xf32>,
    return
  }
}

</mosaic_0001>

<llo_original>
// kernel: decoder_forward_pallas.1
$region0: #{decoder_forward_pallas.1}
  #allocation0 [shape = 'u32[]', space=smem, size = 0x4, offset = 0x4, fixed_abs, tag = 'smem constant byte address 0x4 - core index']
  #allocation1 [shape = 'u32[144,128]{1,0:T(1,128)}', space=vmem, size = 0x12000, scoped, tag = 'internal scratch']
  %s0 = inlined_call_operand.vmem [shape: f32[16,32], index: 0, kind: input, shape index: {}]
  %s1 = inlined_call_operand.vmem [shape: f32[2,32], index: 1, kind: input, shape index: {}]
  %s2 = inlined_call_operand.vmem [shape: f32[2,8,8], index: 2, kind: input, shape index: {}]
  %s3 = inlined_call_operand.vmem [shape: f32[16,1], index: 3, kind: input, shape index: {}]
  %s4 = inlined_call_operand.vmem [shape: bf16[2,4,32,8], index: 4, kind: input, shape index: {}]
  %s5 = inlined_call_operand.vmem [shape: bf16[2,4,32,8], index: 5, kind: input, shape index: {}]
  %s6 = inlined_call_operand.vmem [shape: bf16[2,4,32,8], index: 6, kind: input, shape index: {}]
  %s7 = inlined_call_operand.vmem [shape: f32[2,4,1,8], index: 7, kind: input, shape index: {}]
  %s8 = inlined_call_operand.vmem [shape: f32[2,4,1,8], index: 8, kind: input, shape index: {}]
  %s9 = inlined_call_operand.vmem [shape: f32[2,4,1,8], index: 9, kind: input, shape index: {}]
  %s10 = inlined_call_operand.vmem [shape: bf16[2,4,8,32], index: 10, kind: input, shape index: {}]
  %s11 = inlined_call_operand.vmem [shape: f32[2,1,32], index: 11, kind: input, shape index: {}]
  %s12 = inlined_call_operand.vmem [shape: bf16[2,32,32], index: 12, kind: input, shape index: {}]
  %s13 = inlined_call_operand.vmem [shape: f32[2,1,32], index: 13, kind: input, shape index: {}]
  %s14 = inlined_call_operand.vmem [shape: bf16[2,32,32], index: 14, kind: input, shape index: {}]
  %s15 = inlined_call_operand.vmem [shape: f32[2,1,32], index: 15, kind: input, shape index: {}]
  %s16 = inlined_call_operand.vmem [shape: bf16[2,32,64], index: 16, kind: input, shape index: {}]
  %s17 = inlined_call_operand.vmem [shape: f32[2,1,64], index: 17, kind: input, shape index: {}]
  %s18 = inlined_call_operand.vmem [shape: bf16[2,64,32], index: 18, kind: input, shape index: {}]
  %s19 = inlined_call_operand.vmem [shape: f32[2,1,32], index: 19, kind: input, shape index: {}]
  %s20 = inlined_call_operand.vmem [shape: f32[2,1,32], index: 20, kind: input, shape index: {}]
  %s21 = inlined_call_operand.vmem [shape: f32[2,1,32], index: 21, kind: input, shape index: {}]
  %s22 = inlined_call_operand.vmem [shape: f32[2,1,32], index: 22, kind: input, shape index: {}]
  %s23 = inlined_call_operand.vmem [shape: f32[2,1,32], index: 23, kind: input, shape index: {}]
  %s24 = inlined_call_operand.vmem [shape: f32[2,1,32], index: 24, kind: input, shape index: {}]
  %s25 = inlined_call_operand.vmem [shape: f32[2,1,32], index: 25, kind: input, shape index: {}]
  %s26 = inlined_call_operand.vmem [shape: bf16[32,128], index: 26, kind: input, shape index: {}]
  %s27 = inlined_call_operand.vmem [shape: f32[1,128], index: 27, kind: input, shape index: {}]
  %s28 = inlined_call_operand.vmem [shape: f32[16,128], index: 28, kind: output, shape index: {}]
  %s29 = sld [smem:[#allocation0]]
  $region122: #{decoder_forward_pallas.1} parent=0
    _
  %s31 = ssub.s32 1, %s29
  %s32 = scalar_select 0, %s31, %s29
  // Predicated region
  $region2: #{decoder_forward_pallas.1} parent=0 // pred_check
    _
  $region3: #{decoder_forward_pallas.1} parent=0 // pred_check_branch
    %34 = sbr.rel (0) target = $region5
  $region4: #{decoder_forward_pallas.1} parent=0 // pred_region
    _
  $region5: #{decoder_forward_pallas.1} parent=0 // pred_fallthru
    _
  // Predicated region
  $region6: #{decoder_forward_pallas.1} parent=0 // pred_check
    _
  $region7: #{decoder_forward_pallas.1} parent=0 // pred_check_branch
    %36 = sbr.rel (0) target = $region9
  $region8: #{decoder_forward_pallas.1} parent=0 // pred_region
    _
  $region9: #{decoder_forward_pallas.1} parent=0 // pred_fallthru
    _
  // Predicated region
  $region10: #{decoder_forward_pallas.1} parent=0 // pred_check
    _
  $region11: #{decoder_forward_pallas.1} parent=0 // pred_check_branch
    %38 = sbr.rel (0) target = $region13
  $region12: #{decoder_forward_pallas.1} parent=0 // pred_region
    _
  $region13: #{decoder_forward_pallas.1} parent=0 // pred_fallthru
    _
  // Predicated region
  $region14: #{decoder_forward_pallas.1} parent=0 // pred_check
    _
  $region15: #{decoder_forward_pallas.1} parent=0 // pred_check_branch
    %40 = sbr.rel (0) target = $region17
  $region16: #{decoder_forward_pallas.1} parent=0 // pred_region
    _
  $region17: #{decoder_forward_pallas.1} parent=0 // pred_fallthru
    _
  // Predicated region
  $region18: #{decoder_forward_pallas.1} parent=0 // pred_check
    _
  $region19: #{decoder_forward_pallas.1} parent=0 // pred_check_branch
    %42 = sbr.rel (0) target = $region21
  $region20: #{decoder_forward_pallas.1} parent=0 // pred_region
    _
  $region21: #{decoder_forward_pallas.1} parent=0 // pred_fallthru
    _
  // Predicated region
  $region22: #{decoder_forward_pallas.1} parent=0 // pred_check
    _
  $region23: #{decoder_forward_pallas.1} parent=0 // pred_check_branch
    %44 = sbr.rel (0) target = $region25
  $region24: #{decoder_forward_pallas.1} parent=0 // pred_region
    _
  $region25: #{decoder_forward_pallas.1} parent=0 // pred_fallthru
    _
  // Predicated region
  $region26: #{decoder_forward_pallas.1} parent=0 // pred_check
    _
  $region27: #{decoder_forward_pallas.1} parent=0 // pred_check_branch
    %46 = sbr.rel (0) target = $region29
  $region28: #{decoder_forward_pallas.1} parent=0 // pred_region
    _
  $region29: #{decoder_forward_pallas.1} parent=0 // pred_fallthru
    _
  // Predicated region
  $region30: #{decoder_forward_pallas.1} parent=0 // pred_check
    _
  $region31: #{decoder_forward_pallas.1} parent=0 // pred_check_branch
    %48 = sbr.rel (0) target = $region33
  $region32: #{decoder_forward_pallas.1} parent=0 // pred_region
    _
  $region33: #{decoder_forward_pallas.1} parent=0 // pred_fallthru
    _
  // Predicated region
  $region34: #{decoder_forward_pallas.1} parent=0 // pred_check
    _
  $region35: #{decoder_forward_pallas.1} parent=0 // pred_check_branch
    %50 = sbr.rel (0) target = $region37
  $region36: #{decoder_forward_pallas.1} parent=0 // pred_region
    _
  $region37: #{decoder_forward_pallas.1} parent=0 // pred_fallthru
    _
  // Predicated region
  $region38: #{decoder_forward_pallas.1} parent=0 // pred_check
    _
  $region39: #{decoder_forward_pallas.1} parent=0 // pred_check_branch
    %52 = sbr.rel (0) target = $region41
  $region40: #{decoder_forward_pallas.1} parent=0 // pred_region
    _
  $region41: #{decoder_forward_pallas.1} parent=0 // pred_fallthru
    _
  // Predicated region
  $region42: #{decoder_forward_pallas.1} parent=0 // pred_check
    _
  $region43: #{decoder_forward_pallas.1} parent=0 // pred_check_branch
    %54 = sbr.rel (0) target = $region45
  $region44: #{decoder_forward_pallas.1} parent=0 // pred_region
    _
  $region45: #{decoder_forward_pallas.1} parent=0 // pred_fallthru
    _
  // Predicated region
  $region46: #{decoder_forward_pallas.1} parent=0 // pred_check
    _
  $region47: #{decoder_forward_pallas.1} parent=0 // pred_check_branch
    %56 = sbr.rel (0) target = $region49
  $region48: #{decoder_forward_pallas.1} parent=0 // pred_region
    _
  $region49: #{decoder_forward_pallas.1} parent=0 // pred_fallthru
    _
  // Predicated region
  $region50: #{decoder_forward_pallas.1} parent=0 // pred_check
    _
  $region51: #{decoder_forward_pallas.1} parent=0 // pred_check_branch
    %58 = sbr.rel (0) target = $region53
  $region52: #{decoder_forward_pallas.1} parent=0 // pred_region
    _
  $region53: #{decoder_forward_pallas.1} parent=0 // pred_fallthru
    _
  // Predicated region
  $region54: #{decoder_forward_pallas.1} parent=0 // pred_check
    _
  $region55: #{decoder_forward_pallas.1} parent=0 // pred_check_branch
    %60 = sbr.rel (0) target = $region57
  $region56: #{decoder_forward_pallas.1} parent=0 // pred_region
    _
  $region57: #{decoder_forward_pallas.1} parent=0 // pred_fallthru
    _
  // Predicated region
  $region58: #{decoder_forward_pallas.1} parent=0 // pred_check
    _
  $region59: #{decoder_forward_pallas.1} parent=0 // pred_check_branch
    %62 = sbr.rel (0) target = $region61
  $region60: #{decoder_forward_pallas.1} parent=0 // pred_region
    _
  $region61: #{decoder_forward_pallas.1} parent=0 // pred_fallthru
    _
  // Predicated region
  $region62: #{decoder_forward_pallas.1} parent=0 // pred_check
    _
  $region63: #{decoder_forward_pallas.1} parent=0 // pred_check_branch
    %64 = sbr.rel (0) target = $region65
  $region64: #{decoder_forward_pallas.1} parent=0 // pred_region
    _
  $region65: #{decoder_forward_pallas.1} parent=0 // pred_fallthru
    _
  // Predicated region
  $region66: #{decoder_forward_pallas.1} parent=0 // pred_check
    _
  $region67: #{decoder_forward_pallas.1} parent=0 // pred_check_branch
    %66 = sbr.rel (0) target = $region69
  $region68: #{decoder_forward_pallas.1} parent=0 // pred_region
    _
  $region69: #{decoder_forward_pallas.1} parent=0 // pred_fallthru
    _
  // Predicated region
  $region70: #{decoder_forward_pallas.1} parent=0 // pred_check
    _
  $region71: #{decoder_forward_pallas.1} parent=0 // pred_check_branch
    %68 = sbr.rel (0) target = $region73
  $region72: #{decoder_forward_pallas.1} parent=0 // pred_region
    _
  $region73: #{decoder_forward_pallas.1} parent=0 // pred_fallthru
    _
  // Predicated region
  $region74: #{decoder_forward_pallas.1} parent=0 // pred_check
    _
  $region75: #{decoder_forward_pallas.1} parent=0 // pred_check_branch
    %70 = sbr.rel (0) target = $region77
  $region76: #{decoder_forward_pallas.1} parent=0 // pred_region
    _
  $region77: #{decoder_forward_pallas.1} parent=0 // pred_fallthru
    _
  // Predicated region
  $region78: #{decoder_forward_pallas.1} parent=0 // pred_check
    _
  $region79: #{decoder_forward_pallas.1} parent=0 // pred_check_branch
    %72 = sbr.rel (0) target = $region81
  $region80: #{decoder_forward_pallas.1} parent=0 // pred_region
    _
  $region81: #{decoder_forward_pallas.1} parent=0 // pred_fallthru
    _
  // Predicated region
  $region82: #{decoder_forward_pallas.1} parent=0 // pred_check
    _
  $region83: #{decoder_forward_pallas.1} parent=0 // pred_check_branch
    %74 = sbr.rel (0) target = $region85
  $region84: #{decoder_forward_pallas.1} parent=0 // pred_region
    _
  $region85: #{decoder_forward_pallas.1} parent=0 // pred_fallthru
    _
  // Predicated region
  $region86: #{decoder_forward_pallas.1} parent=0 // pred_check
    _
  $region87: #{decoder_forward_pallas.1} parent=0 // pred_check_branch
    %76 = sbr.rel (0) target = $region89
  $region88: #{decoder_forward_pallas.1} parent=0 // pred_region
    _
  $region89: #{decoder_forward_pallas.1} parent=0 // pred_fallthru
    _
  // Predicated region
  $region90: #{decoder_forward_pallas.1} parent=0 // pred_check
    _
  $region91: #{decoder_forward_pallas.1} parent=0 // pred_check_branch
    %78 = sbr.rel (0) target = $region93
  $region92: #{decoder_forward_pallas.1} parent=0 // pred_region
    _
  $region93: #{decoder_forward_pallas.1} parent=0 // pred_fallthru
    _
  // Predicated region
  $region94: #{decoder_forward_pallas.1} parent=0 // pred_check
    _
  $region95: #{decoder_forward_pallas.1} parent=0 // pred_check_branch
    %80 = sbr.rel (0) target = $region97
  $region96: #{decoder_forward_pallas.1} parent=0 // pred_region
    _
  $region97: #{decoder_forward_pallas.1} parent=0 // pred_fallthru
    _
  // Predicated region
  $region98: #{decoder_forward_pallas.1} parent=0 // pred_check
    _
  $region99: #{decoder_forward_pallas.1} parent=0 // pred_check_branch
    %82 = sbr.rel (0) target = $region101
  $region100: #{decoder_forward_pallas.1} parent=0 // pred_region
    _
  $region101: #{decoder_forward_pallas.1} parent=0 // pred_fallthru
    _
  // Predicated region
  $region102: #{decoder_forward_pallas.1} parent=0 // pred_check
    _
  $region103: #{decoder_forward_pallas.1} parent=0 // pred_check_branch
    %84 = sbr.rel (0) target = $region105
  $region104: #{decoder_forward_pallas.1} parent=0 // pred_region
    _
  $region105: #{decoder_forward_pallas.1} parent=0 // pred_fallthru
    _
  // Predicated region
  $region106: #{decoder_forward_pallas.1} parent=0 // pred_check
    _
  $region107: #{decoder_forward_pallas.1} parent=0 // pred_check_branch
    %86 = sbr.rel (0) target = $region109
  $region108: #{decoder_forward_pallas.1} parent=0 // pred_region
    _
  $region109: #{decoder_forward_pallas.1} parent=0 // pred_fallthru
    _
  // Predicated region
  $region110: #{decoder_forward_pallas.1} parent=0 // pred_check
    _
  $region111: #{decoder_forward_pallas.1} parent=0 // pred_check_branch
    %88 = sbr.rel (0) target = $region113
  $region112: #{decoder_forward_pallas.1} parent=0 // pred_region
    _
  $region113: #{decoder_forward_pallas.1} parent=0 // pred_fallthru
    _
  %v90 = vld [vmem:[%s0] sm:$0xff]
  %v91 = vld [vmem:[%s0 + $0x8] sm:$0xff]
  %v92 = vld [vmem:[%s1] sm:$0x3]
  %v93 = vpack.c.bf16 %v92, %v92
  %v94 = vld [vmem:[%s2] sm:$0xff]
  %v95 = vld [vmem:[%s2 + $0x8] sm:$0xff]
  %v96 = vld [vmem:[%s3] sm:$0xff]
  %v97 = vld [vmem:[%s3 + $0x8] sm:$0xff]
  %v98 = vpack.c.bf16 %v91, %v90
  %v99 = vld [vmem:[%s4] sm:$0xf]
  %v100 = vld [vmem:[%s4 + $0x4] sm:$0xf]
  %v101 = vld [vmem:[%s4 + $0x8] sm:$0xf]
  %v102 = vld [vmem:[%s4 + $0xc] sm:$0xf]
  %v103 = vld [vmem:[%s7] sm:$0x1]
  %v105 = vlaneseq
  %v106 = vshrl.u32 %v105, 7
  %v107 = vsub.s32 0, %v106
  %v108 = vrot.slane %v103, %v107
  %v114 = vunpack.c.l.b16 %v99
  %v115 = vunpack.c.l.b16 %v100
  %v116 = vunpack.c.l.b16 %v101
  %v117 = vunpack.c.l.b16 %v102
  %v118 = vpack.c.b16 %v115, %v114
  %v119 = vpack.c.b16 %v117, %v116
  %vm122 = vcmask 261120
  %v124 = vsel %vm122, %v98, 0
  %126 = vmatprep.subr.bf16.mxu0 0
  %127 = vmatpush1.bf16.msra.mxu0 %v118
  %128 = vmatprep.subr.bf16.mxu0 0
  %129 = vmatpush1.bf16.msra.mxu0 %v119
  %130 = vmatprep.subr.bf16.mxu0 0
  %131 = vmatpush1.bf16.msra.mxu0 0
  %132 = vmatprep.subr.bf16.mxu0 0
  %133 = vmatpush1.bf16.msra.mxu0 0
  %134 = vmatprep.subr.bf16.mxu0 0
  %135 = vmatpush1.bf16.msra.mxu0 0
  %136 = vmatprep.subr.bf16.mxu0 0
  %137 = vmatpush1.bf16.msra.mxu0 0
  %138 = vmatprep.subr.bf16.mxu0 0
  %139 = vmatpush1.bf16.msra.mxu0 0
  %140 = vmatprep.subr.bf16.mxu0 0
  %141 = vmatpush1.bf16.msra.mxu0 0
  %142 = vmatprep.subr.bf16.mxu0 0
  %143 = vmatpush1.bf16.msra.mxu0 0
  %144 = vmatprep.subr.bf16.mxu0 0
  %145 = vmatpush1.bf16.msra.mxu0 0
  %146 = vmatprep.subr.bf16.mxu0 0
  %147 = vmatpush1.bf16.msra.mxu0 0
  %148 = vmatprep.subr.bf16.mxu0 0
  %149 = vmatpush1.bf16.msra.mxu0 0
  %150 = vmatprep.subr.bf16.mxu0 0
  %151 = vmatpush1.bf16.msra.mxu0 0
  %152 = vmatprep.subr.bf16.mxu0 0
  %153 = vmatpush1.bf16.msra.mxu0 0
  %154 = vmatprep.subr.bf16.mxu0 0
  %155 = vmatpush1.bf16.msra.mxu0 0
  %156 = vmatprep.subr.bf16.mxu0 0
  %157 = vmatpush1.bf16.msra.mxu0 0
  %158 = vmatprep.mubr.bf16.mxu0 0
  %159 = vmatmul.mubr.bf16.gmra.mrb[0].mxu0 %v124
  %v160 = vpop.f32.mrb[0].mxu0
  %v161 = vadd.f32 %v108, %v160
  %v162 = vpop.f32.mrb[0].mxu0
  %v163 = vpop.f32.mrb[0].mxu0
  %v164 = vadd.f32 %v108, %v163
  %v165 = vpop.f32.mrb[0].mxu0
  %166 = vdwg.mxu0
  %v167 = vld [vmem:[%s5] sm:$0xf]
  %v168 = vld [vmem:[%s5 + $0x4] sm:$0xf]
  %v169 = vld [vmem:[%s5 + $0x8] sm:$0xf]
  %v170 = vld [vmem:[%s5 + $0xc] sm:$0xf]
  %v171 = vld [vmem:[%s8] sm:$0x1]
  %v173 = vlaneseq
  %v174 = vshrl.u32 %v173, 7
  %v175 = vsub.s32 0, %v174
  %v176 = vrot.slane %v171, %v175
  %v182 = vunpack.c.l.b16 %v167
  %v183 = vunpack.c.l.b16 %v168
  %v184 = vunpack.c.l.b16 %v169
  %v185 = vunpack.c.l.b16 %v170
  %v186 = vpack.c.b16 %v183, %v182
  %v187 = vpack.c.b16 %v185, %v184
  %190 = vmatprep.subr.bf16.mxu0 0
  %191 = vmatpush1.bf16.msra.mxu0 %v186
  %192 = vmatprep.subr.bf16.mxu0 0
  %193 = vmatpush1.bf16.msra.mxu0 %v187
  %194 = vmatprep.subr.bf16.mxu0 0
  %195 = vmatpush1.bf16.msra.mxu0 0
  %196 = vmatprep.subr.bf16.mxu0 0
  %197 = vmatpush1.bf16.msra.mxu0 0
  %198 = vmatprep.subr.bf16.mxu0 0
  %199 = vmatpush1.bf16.msra.mxu0 0
  %200 = vmatprep.subr.bf16.mxu0 0
  %201 = vmatpush1.bf16.msra.mxu0 0
  %202 = vmatprep.subr.bf16.mxu0 0
  %203 = vmatpush1.bf16.msra.mxu0 0
  %204 = vmatprep.subr.bf16.mxu0 0
  %205 = vmatpush1.bf16.msra.mxu0 0
  %206 = vmatprep.subr.bf16.mxu0 0
  %207 = vmatpush1.bf16.msra.mxu0 0
  %208 = vmatprep.subr.bf16.mxu0 0
  %209 = vmatpush1.bf16.msra.mxu0 0
  %210 = vmatprep.subr.bf16.mxu0 0
  %211 = vmatpush1.bf16.msra.mxu0 0
  %212 = vmatprep.subr.bf16.mxu0 0
  %213 = vmatpush1.bf16.msra.mxu0 0
  %214 = vmatprep.subr.bf16.mxu0 0
  %215 = vmatpush1.bf16.msra.mxu0 0
  %216 = vmatprep.subr.bf16.mxu0 0
  %217 = vmatpush1.bf16.msra.mxu0 0
  %218 = vmatprep.subr.bf16.mxu0 0
  %219 = vmatpush1.bf16.msra.mxu0 0
  %220 = vmatprep.subr.bf16.mxu0 0
  %221 = vmatpush1.bf16.msra.mxu0 0
  %222 = vmatprep.mubr.bf16.mxu0 0
  %223 = vmatmul.mubr.bf16.gmra.mrb[0].mxu0 %v124
  %v224 = vpop.f32.mrb[0].mxu0
  %v225 = vadd.f32 %v176, %v224
  %v226 = vpop.f32.mrb[0].mxu0
  %v227 = vpop.f32.mrb[0].mxu0
  %v228 = vadd.f32 %v176, %v227
  %v229 = vpop.f32.mrb[0].mxu0
  %230 = vdwg.mxu0
  %v231 = vld [vmem:[%s6] sm:$0xf]
  %v232 = vld [vmem:[%s6 + $0x4] sm:$0xf]
  %v233 = vld [vmem:[%s6 + $0x8] sm:$0xf]
  %v234 = vld [vmem:[%s6 + $0xc] sm:$0xf]
  %v235 = vld [vmem:[%s9] sm:$0x1]
  %v237 = vlaneseq
  %v238 = vshrl.u32 %v237, 7
  %v239 = vsub.s32 0, %v238
  %v240 = vrot.slane %v235, %v239
  %v246 = vunpack.c.l.b16 %v231
  %v247 = vunpack.c.l.b16 %v232
  %v248 = vunpack.c.l.b16 %v233
  %v249 = vunpack.c.l.b16 %v234
  %v250 = vpack.c.b16 %v247, %v246
  %v251 = vpack.c.b16 %v249, %v248
  %254 = vmatprep.subr.bf16.mxu0 0
  %255 = vmatpush1.bf16.msra.mxu0 %v250
  %256 = vmatprep.subr.bf16.mxu0 0
  %257 = vmatpush1.bf16.msra.mxu0 %v251
  %258 = vmatprep.subr.bf16.mxu0 0
  %259 = vmatpush1.bf16.msra.mxu0 0
  %260 = vmatprep.subr.bf16.mxu0 0
  %261 = vmatpush1.bf16.msra.mxu0 0
  %262 = vmatprep.subr.bf16.mxu0 0
  %263 = vmatpush1.bf16.msra.mxu0 0
  %264 = vmatprep.subr.bf16.mxu0 0
  %265 = vmatpush1.bf16.msra.mxu0 0
  %266 = vmatprep.subr.bf16.mxu0 0
  %267 = vmatpush1.bf16.msra.mxu0 0
  %268 = vmatprep.subr.bf16.mxu0 0
  %269 = vmatpush1.bf16.msra.mxu0 0
  %270 = vmatprep.subr.bf16.mxu0 0
  %271 = vmatpush1.bf16.msra.mxu0 0
  %272 = vmatprep.subr.bf16.mxu0 0
  %273 = vmatpush1.bf16.msra.mxu0 0
  %274 = vmatprep.subr.bf16.mxu0 0
  %275 = vmatpush1.bf16.msra.mxu0 0
  %276 = vmatprep.subr.bf16.mxu0 0
  %277 = vmatpush1.bf16.msra.mxu0 0
  %278 = vmatprep.subr.bf16.mxu0 0
  %279 = vmatpush1.bf16.msra.mxu0 0
  %280 = vmatprep.subr.bf16.mxu0 0
  %281 = vmatpush1.bf16.msra.mxu0 0
  %282 = vmatprep.subr.bf16.mxu0 0
  %283 = vmatpush1.bf16.msra.mxu0 0
  %284 = vmatprep.subr.bf16.mxu0 0
  %285 = vmatpush1.bf16.msra.mxu0 0
  %286 = vmatprep.mubr.bf16.mxu0 0
  %287 = vmatmul.mubr.bf16.gmra.mrb[0].mxu0 %v124
  %v288 = vpop.f32.mrb[0].mxu0
  %v289 = vadd.f32 %v240, %v288
  %v290 = vpop.f32.mrb[0].mxu0
  %v291 = vpop.f32.mrb[0].mxu0
  %v292 = vadd.f32 %v240, %v291
  %v293 = vpop.f32.mrb[0].mxu0
  %294 = vdwg.mxu0
  %v295 = vpack.c.bf16 %v161, %v161
  %v296 = vpack.c.bf16 %v164, %v164
  %v297 = vpack.c.bf16 %v225, %v225
  %v298 = vpack.c.bf16 %v228, %v228
  %vm299 = vcmask 64512
  %v301 = vsel %vm299, %v295, 0
  %v304 = vsel %vm299, %v297, 0
  %306 = vmatprep.subr.bf16.mxu0 0
  %307 = vmatpush1.bf16.xpose.msra.mxu0 %v304
  %308 = vmatprep.subr.bf16.mxu0 0
  %309 = vmatpush1.bf16.xpose.msra.mxu0 0
  %310 = vmatprep.subr.bf16.mxu0 0
  %311 = vmatpush1.bf16.xpose.msra.mxu0 0
  %312 = vmatprep.subr.bf16.mxu0 0
  %313 = vmatpush1.bf16.xpose.msra.mxu0 0
  %314 = vmatprep.subr.bf16.mxu0 0
  %315 = vmatpush1.bf16.xpose.msra.mxu0 0
  %316 = vmatprep.subr.bf16.mxu0 0
  %317 = vmatpush1.bf16.xpose.msra.mxu0 0
  %318 = vmatprep.subr.bf16.mxu0 0
  %319 = vmatpush1.bf16.xpose.msra.mxu0 0
  %320 = vmatprep.subr.bf16.mxu0 0
  %321 = vmatpush1.bf16.xpose.msra.mxu0 0
  %322 = vmatprep.subr.bf16.mxu0 0
  %323 = vmatpush1.bf16.xpose.msra.mxu0 0
  %324 = vmatprep.subr.bf16.mxu0 0
  %325 = vmatpush1.bf16.xpose.msra.mxu0 0
  %326 = vmatprep.subr.bf16.mxu0 0
  %327 = vmatpush1.bf16.xpose.msra.mxu0 0
  %328 = vmatprep.subr.bf16.mxu0 0
  %329 = vmatpush1.bf16.xpose.msra.mxu0 0
  %330 = vmatprep.subr.bf16.mxu0 0
  %331 = vmatpush1.bf16.xpose.msra.mxu0 0
  %332 = vmatprep.subr.bf16.mxu0 0
  %333 = vmatpush1.bf16.xpose.msra.mxu0 0
  %334 = vmatprep.subr.bf16.mxu0 0
  %335 = vmatpush1.bf16.xpose.msra.mxu0 0
  %336 = vmatprep.subr.bf16.mxu0 0
  %337 = vmatpush1.bf16.xpose.msra.mxu0 0
  %338 = vmatprep.mubr.bf16.mxu0 0
  %339 = vmatmul.mubr.bf16.gmra.mrb[0].mxu0 %v301
  %v340 = vpop.f32.mrb[0].mxu0
  %v341 = vadd.f32 %v94, %v340
  %v342 = vpop.f32.mrb[0].mxu0
  %v343 = vpop.f32.mrb[0].mxu0
  %v344 = vpop.f32.mrb[0].mxu0
  %345 = vdwg.mxu0
  %v347 = vsel %vm299, %v296, 0
  %v350 = vsel %vm299, %v298, 0
  %352 = vmatprep.subr.bf16.mxu0 0
  %353 = vmatpush1.bf16.xpose.msra.mxu0 %v350
  %354 = vmatprep.subr.bf16.mxu0 0
  %355 = vmatpush1.bf16.xpose.msra.mxu0 0
  %356 = vmatprep.subr.bf16.mxu0 0
  %357 = vmatpush1.bf16.xpose.msra.mxu0 0
  %358 = vmatprep.subr.bf16.mxu0 0
  %359 = vmatpush1.bf16.xpose.msra.mxu0 0
  %360 = vmatprep.subr.bf16.mxu0 0
  %361 = vmatpush1.bf16.xpose.msra.mxu0 0
  %362 = vmatprep.subr.bf16.mxu0 0
  %363 = vmatpush1.bf16.xpose.msra.mxu0 0
  %364 = vmatprep.subr.bf16.mxu0 0
  %365 = vmatpush1.bf16.xpose.msra.mxu0 0
  %366 = vmatprep.subr.bf16.mxu0 0
  %367 = vmatpush1.bf16.xpose.msra.mxu0 0
  %368 = vmatprep.subr.bf16.mxu0 0
  %369 = vmatpush1.bf16.xpose.msra.mxu0 0
  %370 = vmatprep.subr.bf16.mxu0 0
  %371 = vmatpush1.bf16.xpose.msra.mxu0 0
  %372 = vmatprep.subr.bf16.mxu0 0
  %373 = vmatpush1.bf16.xpose.msra.mxu0 0
  %374 = vmatprep.subr.bf16.mxu0 0
  %375 = vmatpush1.bf16.xpose.msra.mxu0 0
  %376 = vmatprep.subr.bf16.mxu0 0
  %377 = vmatpush1.bf16.xpose.msra.mxu0 0
  %378 = vmatprep.subr.bf16.mxu0 0
  %379 = vmatpush1.bf16.xpose.msra.mxu0 0
  %380 = vmatprep.subr.bf16.mxu0 0
  %381 = vmatpush1.bf16.xpose.msra.mxu0 0
  %382 = vmatprep.subr.bf16.mxu0 0
  %383 = vmatpush1.bf16.xpose.msra.mxu0 0
  %384 = vmatprep.mubr.bf16.mxu0 0
  %385 = vmatmul.mubr.bf16.gmra.mrb[0].mxu0 %v347
  %v386 = vpop.f32.mrb[0].mxu0
  %v387 = vadd.f32 %v95, %v386
  %v388 = vpop.f32.mrb[0].mxu0
  %v389 = vpop.f32.mrb[0].mxu0
  %v390 = vpop.f32.mrb[0].mxu0
  %391 = vdwg.mxu0
  %v392 = vsel %vm299, %v341, -inf
  %393 = vmax.xlane.f32.xlu0 %v392
  %v394 = vpop.xlane.xlu0 %393
  %v395 = vsel %vm299, %v387, -inf
  %396 = vmax.xlane.f32.xlu0 %v395
  %v397 = vpop.xlane.xlu0 %396
  %v398 = vsub.f32 %v341, %v394
  %v399 = vsub.f32 %v387, %v397
  %v400 = vmul.f32 %v398, 1.442695
  %v401 = vpow.pop %v400
  %v402 = vmul.f32 %v399, 1.442695
  %v403 = vpow.pop %v402
  %v404 = vsel %vm299, %v401, 0.0
  %405 = vadd.xlane.f32.xlu0 %v404
  %v406 = vpop.xlane.xlu0 %405
  %v407 = vsel %vm299, %v403, 0.0
  %408 = vadd.xlane.f32.xlu0 %v407
  %v409 = vpop.xlane.xlu0 %408
  %v410 = vrcp.pop %v406
  %v411 = vrcp.pop %v409
  %v412 = vmul.f32 %v401, %v410
  %v413 = vmul.f32 %v403, %v411
  %v414 = vpack.c.bf16 %v412, %v412
  %v415 = vpack.c.bf16 %v413, %v413
  %v416 = vpack.c.bf16 %v289, %v289
  %v417 = vpack.c.bf16 %v292, %v292
  %v419 = vsel %vm299, %v414, 0
  %vm421 = vcmask 1043456
  %v423 = vsel %vm421, %v416, 0
  %425 = vmatprep.subr.bf16.mxu0 0
  %426 = vmatpush1.bf16.msra.mxu0 %v423
  %427 = vmatprep.subr.bf16.mxu0 0
  %428 = vmatpush1.bf16.msra.mxu0 0
  %429 = vmatprep.subr.bf16.mxu0 0
  %430 = vmatpush1.bf16.msra.mxu0 0
  %431 = vmatprep.subr.bf16.mxu0 0
  %432 = vmatpush1.bf16.msra.mxu0 0
  %433 = vmatprep.subr.bf16.mxu0 0
  %434 = vmatpush1.bf16.msra.mxu0 0
  %435 = vmatprep.subr.bf16.mxu0 0
  %436 = vmatpush1.bf16.msra.mxu0 0
  %437 = vmatprep.subr.bf16.mxu0 0
  %438 = vmatpush1.bf16.msra.mxu0 0
  %439 = vmatprep.subr.bf16.mxu0 0
  %440 = vmatpush1.bf16.msra.mxu0 0
  %441 = vmatprep.subr.bf16.mxu0 0
  %442 = vmatpush1.bf16.msra.mxu0 0
  %443 = vmatprep.subr.bf16.mxu0 0
  %444 = vmatpush1.bf16.msra.mxu0 0
  %445 = vmatprep.subr.bf16.mxu0 0
  %446 = vmatpush1.bf16.msra.mxu0 0
  %447 = vmatprep.subr.bf16.mxu0 0
  %448 = vmatpush1.bf16.msra.mxu0 0
  %449 = vmatprep.subr.bf16.mxu0 0
  %450 = vmatpush1.bf16.msra.mxu0 0
  %451 = vmatprep.subr.bf16.mxu0 0
  %452 = vmatpush1.bf16.msra.mxu0 0
  %453 = vmatprep.subr.bf16.mxu0 0
  %454 = vmatpush1.bf16.msra.mxu0 0
  %455 = vmatprep.subr.bf16.mxu0 0
  %456 = vmatpush1.bf16.msra.mxu0 0
  %457 = vmatprep.mubr.bf16.mxu0 0
  %458 = vmatmul.mubr.bf16.gmra.mrb[0].mxu0 %v419
  %v459 = vpop.f32.mrb[0].mxu0
  %v460 = vadd.f32 0.0, %v459
  %v461 = vpop.f32.mrb[0].mxu0
  %v462 = vpop.f32.mrb[0].mxu0
  %v463 = vpop.f32.mrb[0].mxu0
  %464 = vdwg.mxu0
  %v466 = vsel %vm299, %v415, 0
  %v469 = vsel %vm421, %v417, 0
  %471 = vmatprep.subr.bf16.mxu0 0
  %472 = vmatpush1.bf16.msra.mxu0 %v469
  %473 = vmatprep.subr.bf16.mxu0 0
  %474 = vmatpush1.bf16.msra.mxu0 0
  %475 = vmatprep.subr.bf16.mxu0 0
  %476 = vmatpush1.bf16.msra.mxu0 0
  %477 = vmatprep.subr.bf16.mxu0 0
  %478 = vmatpush1.bf16.msra.mxu0 0
  %479 = vmatprep.subr.bf16.mxu0 0
  %480 = vmatpush1.bf16.msra.mxu0 0
  %481 = vmatprep.subr.bf16.mxu0 0
  %482 = vmatpush1.bf16.msra.mxu0 0
  %483 = vmatprep.subr.bf16.mxu0 0
  %484 = vmatpush1.bf16.msra.mxu0 0
  %485 = vmatprep.subr.bf16.mxu0 0
  %486 = vmatpush1.bf16.msra.mxu0 0
  %487 = vmatprep.subr.bf16.mxu0 0
  %488 = vmatpush1.bf16.msra.mxu0 0
  %489 = vmatprep.subr.bf16.mxu0 0
  %490 = vmatpush1.bf16.msra.mxu0 0
  %491 = vmatprep.subr.bf16.mxu0 0
  %492 = vmatpush1.bf16.msra.mxu0 0
  %493 = vmatprep.subr.bf16.mxu0 0
  %494 = vmatpush1.bf16.msra.mxu0 0
  %495 = vmatprep.subr.bf16.mxu0 0
  %496 = vmatpush1.bf16.msra.mxu0 0
  %497 = vmatprep.subr.bf16.mxu0 0
  %498 = vmatpush1.bf16.msra.mxu0 0
  %499 = vmatprep.subr.bf16.mxu0 0
  %500 = vmatpush1.bf16.msra.mxu0 0
  %501 = vmatprep.subr.bf16.mxu0 0
  %502 = vmatpush1.bf16.msra.mxu0 0
  %503 = vmatprep.mubr.bf16.mxu0 0
  %504 = vmatmul.mubr.bf16.gmra.mrb[0].mxu0 %v466
  %v505 = vpop.f32.mrb[0].mxu0
  %v506 = vadd.f32 0.0, %v505
  %v507 = vpop.f32.mrb[0].mxu0
  %v508 = vpop.f32.mrb[0].mxu0
  %v509 = vpop.f32.mrb[0].mxu0
  %510 = vdwg.mxu0
  %v511 = vpack.c.bf16 %v506, %v460
  %v512 = vld [vmem:[%s10] sm:$0xf]
  %s513 = scalar_lea.vmem %s4, 16
  %v514 = vld [vmem:[%s513] sm:$0xf]
  %v515 = vld [vmem:[%s513 + $0x4] sm:$0xf]
  %v516 = vld [vmem:[%s513 + $0x8] sm:$0xf]
  %v517 = vld [vmem:[%s513 + $0xc] sm:$0xf]
  %s518 = scalar_lea.vmem %s7, 1
  %v519 = vld [vmem:[%s518] sm:$0x1]
  %v521 = vlaneseq
  %v522 = vshrl.u32 %v521, 7
  %v523 = vsub.s32 0, %v522
  %v524 = vrot.slane %v519, %v523
  %v530 = vunpack.c.l.b16 %v514
  %v531 = vunpack.c.l.b16 %v515
  %v532 = vunpack.c.l.b16 %v516
  %v533 = vunpack.c.l.b16 %v517
  %v534 = vpack.c.b16 %v531, %v530
  %v535 = vpack.c.b16 %v533, %v532
  %538 = vmatprep.subr.bf16.mxu0 0
  %539 = vmatpush1.bf16.msra.mxu0 %v534
  %540 = vmatprep.subr.bf16.mxu0 0
  %541 = vmatpush1.bf16.msra.mxu0 %v535
  %542 = vmatprep.subr.bf16.mxu0 0
  %543 = vmatpush1.bf16.msra.mxu0 0
  %544 = vmatprep.subr.bf16.mxu0 0
  %545 = vmatpush1.bf16.msra.mxu0 0
  %546 = vmatprep.subr.bf16.mxu0 0
  %547 = vmatpush1.bf16.msra.mxu0 0
  %548 = vmatprep.subr.bf16.mxu0 0
  %549 = vmatpush1.bf16.msra.mxu0 0
  %550 = vmatprep.subr.bf16.mxu0 0
  %551 = vmatpush1.bf16.msra.mxu0 0
  %552 = vmatprep.subr.bf16.mxu0 0
  %553 = vmatpush1.bf16.msra.mxu0 0
  %554 = vmatprep.subr.bf16.mxu0 0
  %555 = vmatpush1.bf16.msra.mxu0 0
  %556 = vmatprep.subr.bf16.mxu0 0
  %557 = vmatpush1.bf16.msra.mxu0 0
  %558 = vmatprep.subr.bf16.mxu0 0
  %559 = vmatpush1.bf16.msra.mxu0 0
  %560 = vmatprep.subr.bf16.mxu0 0
  %561 = vmatpush1.bf16.msra.mxu0 0
  %562 = vmatprep.subr.bf16.mxu0 0
  %563 = vmatpush1.bf16.msra.mxu0 0
  %564 = vmatprep.subr.bf16.mxu0 0
  %565 = vmatpush1.bf16.msra.mxu0 0
  %566 = vmatprep.subr.bf16.mxu0 0
  %567 = vmatpush1.bf16.msra.mxu0 0
  %568 = vmatprep.subr.bf16.mxu0 0
  %569 = vmatpush1.bf16.msra.mxu0 0
  %570 = vmatprep.mubr.bf16.mxu0 0
  %571 = vmatmul.mubr.bf16.gmra.mrb[0].mxu0 %v124
  %v572 = vpop.f32.mrb[0].mxu0
  %v573 = vadd.f32 %v524, %v572
  %v574 = vpop.f32.mrb[0].mxu0
  %v575 = vpop.f32.mrb[0].mxu0
  %v576 = vadd.f32 %v524, %v575
  %v577 = vpop.f32.mrb[0].mxu0
  %578 = vdwg.mxu0
  %s579 = scalar_lea.vmem %s5, 16
  %v580 = vld [vmem:[%s579] sm:$0xf]
  %v581 = vld [vmem:[%s579 + $0x4] sm:$0xf]
  %v582 = vld [vmem:[%s579 + $0x8] sm:$0xf]
  %v583 = vld [vmem:[%s579 + $0xc] sm:$0xf]
  %s584 = scalar_lea.vmem %s8, 1
  %v585 = vld [vmem:[%s584] sm:$0x1]
  %v587 = vlaneseq
  %v588 = vshrl.u32 %v587, 7
  %v589 = vsub.s32 0, %v588
  %v590 = vrot.slane %v585, %v589
  %v596 = vunpack.c.l.b16 %v580
  %v597 = vunpack.c.l.b16 %v581
  %v598 = vunpack.c.l.b16 %v582
  %v599 = vunpack.c.l.b16 %v583
  %v600 = vpack.c.b16 %v597, %v596
  %v601 = vpack.c.b16 %v599, %v598
  %604 = vmatprep.subr.bf16.mxu0 0
  %605 = vmatpush1.bf16.msra.mxu0 %v600
  %606 = vmatprep.subr.bf16.mxu0 0
  %607 = vmatpush1.bf16.msra.mxu0 %v601
  %608 = vmatprep.subr.bf16.mxu0 0
  %609 = vmatpush1.bf16.msra.mxu0 0
  %610 = vmatprep.subr.bf16.mxu0 0
  %611 = vmatpush1.bf16.msra.mxu0 0
  %612 = vmatprep.subr.bf16.mxu0 0
  %613 = vmatpush1.bf16.msra.mxu0 0
  %614 = vmatprep.subr.bf16.mxu0 0
  %615 = vmatpush1.bf16.msra.mxu0 0
  %616 = vmatprep.subr.bf16.mxu0 0
  %617 = vmatpush1.bf16.msra.mxu0 0
  %618 = vmatprep.subr.bf16.mxu0 0
  %619 = vmatpush1.bf16.msra.mxu0 0
  %620 = vmatprep.subr.bf16.mxu0 0
  %621 = vmatpush1.bf16.msra.mxu0 0
  %622 = vmatprep.subr.bf16.mxu0 0
  %623 = vmatpush1.bf16.msra.mxu0 0
  %624 = vmatprep.subr.bf16.mxu0 0
  %625 = vmatpush1.bf16.msra.mxu0 0
  %626 = vmatprep.subr.bf16.mxu0 0
  %627 = vmatpush1.bf16.msra.mxu0 0
  %628 = vmatprep.subr.bf16.mxu0 0
  %629 = vmatpush1.bf16.msra.mxu0 0
  %630 = vmatprep.subr.bf16.mxu0 0
  %631 = vmatpush1.bf16.msra.mxu0 0
  %632 = vmatprep.subr.bf16.mxu0 0
  %633 = vmatpush1.bf16.msra.mxu0 0
  %634 = vmatprep.subr.bf16.mxu0 0
  %635 = vmatpush1.bf16.msra.mxu0 0
  %636 = vmatprep.mubr.bf16.mxu0 0
  %637 = vmatmul.mubr.bf16.gmra.mrb[0].mxu0 %v124
  %v638 = vpop.f32.mrb[0].mxu0
  %v639 = vadd.f32 %v590, %v638
  %v640 = vpop.f32.mrb[0].mxu0
  %v641 = vpop.f32.mrb[0].mxu0
  %v642 = vadd.f32 %v590, %v641
  %v643 = vpop.f32.mrb[0].mxu0
  %644 = vdwg.mxu0
  %s645 = scalar_lea.vmem %s6, 16
  %v646 = vld [vmem:[%s645] sm:$0xf]
  %v647 = vld [vmem:[%s645 + $0x4] sm:$0xf]
  %v648 = vld [vmem:[%s645 + $0x8] sm:$0xf]
  %v649 = vld [vmem:[%s645 + $0xc] sm:$0xf]
  %s650 = scalar_lea.vmem %s9, 1
  %v651 = vld [vmem:[%s650] sm:$0x1]
  %v653 = vlaneseq
  %v654 = vshrl.u32 %v653, 7
  %v655 = vsub.s32 0, %v654
  %v656 = vrot.slane %v651, %v655
  %v662 = vunpack.c.l.b16 %v646
  %v663 = vunpack.c.l.b16 %v647
  %v664 = vunpack.c.l.b16 %v648
  %v665 = vunpack.c.l.b16 %v649
  %v666 = vpack.c.b16 %v663, %v662
  %v667 = vpack.c.b16 %v665, %v664
  %670 = vmatprep.subr.bf16.mxu0 0
  %671 = vmatpush1.bf16.msra.mxu0 %v666
  %672 = vmatprep.subr.bf16.mxu0 0
  %673 = vmatpush1.bf16.msra.mxu0 %v667
  %674 = vmatprep.subr.bf16.mxu0 0
  %675 = vmatpush1.bf16.msra.mxu0 0
  %676 = vmatprep.subr.bf16.mxu0 0
  %677 = vmatpush1.bf16.msra.mxu0 0
  %678 = vmatprep.subr.bf16.mxu0 0
  %679 = vmatpush1.bf16.msra.mxu0 0
  %680 = vmatprep.subr.bf16.mxu0 0
  %681 = vmatpush1.bf16.msra.mxu0 0
  %682 = vmatprep.subr.bf16.mxu0 0
  %683 = vmatpush1.bf16.msra.mxu0 0
  %684 = vmatprep.subr.bf16.mxu0 0
  %685 = vmatpush1.bf16.msra.mxu0 0
  %686 = vmatprep.subr.bf16.mxu0 0
  %687 = vmatpush1.bf16.msra.mxu0 0
  %688 = vmatprep.subr.bf16.mxu0 0
  %689 = vmatpush1.bf16.msra.mxu0 0
  %690 = vmatprep.subr.bf16.mxu0 0
  %691 = vmatpush1.bf16.msra.mxu0 0
  %692 = vmatprep.subr.bf16.mxu0 0
  %693 = vmatpush1.bf16.msra.mxu0 0
  %694 = vmatprep.subr.bf16.mxu0 0
  %695 = vmatpush1.bf16.msra.mxu0 0
  %696 = vmatprep.subr.bf16.mxu0 0
  %697 = vmatpush1.bf16.msra.mxu0 0
  %698 = vmatprep.subr.bf16.mxu0 0
  %699 = vmatpush1.bf16.msra.mxu0 0
  %700 = vmatprep.subr.bf16.mxu0 0
  %701 = vmatpush1.bf16.msra.mxu0 0
  %702 = vmatprep.mubr.bf16.mxu0 0
  %703 = vmatmul.mubr.bf16.gmra.mrb[0].mxu0 %v124
  %v704 = vpop.f32.mrb[0].mxu0
  %v705 = vadd.f32 %v656, %v704
  %v706 = vpop.f32.mrb[0].mxu0
  %v707 = vpop.f32.mrb[0].mxu0
  %v708 = vadd.f32 %v656, %v707
  %v709 = vpop.f32.mrb[0].mxu0
  %710 = vdwg.mxu0
  %v711 = vpack.c.bf16 %v573, %v573
  %v712 = vpack.c.bf16 %v576, %v576
  %v713 = vpack.c.bf16 %v639, %v639
  %v714 = vpack.c.bf16 %v642, %v642
  %v716 = vsel %vm299, %v711, 0
  %v719 = vsel %vm299, %v713, 0
  %721 = vmatprep.subr.bf16.mxu0 0
  %722 = vmatpush1.bf16.xpose.msra.mxu0 %v719
  %723 = vmatprep.subr.bf16.mxu0 0
  %724 = vmatpush1.bf16.xpose.msra.mxu0 0
  %725 = vmatprep.subr.bf16.mxu0 0
  %726 = vmatpush1.bf16.xpose.msra.mxu0 0
  %727 = vmatprep.subr.bf16.mxu0 0
  %728 = vmatpush1.bf16.xpose.msra.mxu0 0
  %729 = vmatprep.subr.bf16.mxu0 0
  %730 = vmatpush1.bf16.xpose.msra.mxu0 0
  %731 = vmatprep.subr.bf16.mxu0 0
  %732 = vmatpush1.bf16.xpose.msra.mxu0 0
  %733 = vmatprep.subr.bf16.mxu0 0
  %734 = vmatpush1.bf16.xpose.msra.mxu0 0
  %735 = vmatprep.subr.bf16.mxu0 0
  %736 = vmatpush1.bf16.xpose.msra.mxu0 0
  %737 = vmatprep.subr.bf16.mxu0 0
  %738 = vmatpush1.bf16.xpose.msra.mxu0 0
  %739 = vmatprep.subr.bf16.mxu0 0
  %740 = vmatpush1.bf16.xpose.msra.mxu0 0
  %741 = vmatprep.subr.bf16.mxu0 0
  %742 = vmatpush1.bf16.xpose.msra.mxu0 0
  %743 = vmatprep.subr.bf16.mxu0 0
  %744 = vmatpush1.bf16.xpose.msra.mxu0 0
  %745 = vmatprep.subr.bf16.mxu0 0
  %746 = vmatpush1.bf16.xpose.msra.mxu0 0
  %747 = vmatprep.subr.bf16.mxu0 0
  %748 = vmatpush1.bf16.xpose.msra.mxu0 0
  %749 = vmatprep.subr.bf16.mxu0 0
  %750 = vmatpush1.bf16.xpose.msra.mxu0 0
  %751 = vmatprep.subr.bf16.mxu0 0
  %752 = vmatpush1.bf16.xpose.msra.mxu0 0
  %753 = vmatprep.mubr.bf16.mxu0 0
  %754 = vmatmul.mubr.bf16.gmra.mrb[0].mxu0 %v716
  %v755 = vpop.f32.mrb[0].mxu0
  %v756 = vadd.f32 %v94, %v755
  %v757 = vpop.f32.mrb[0].mxu0
  %v758 = vpop.f32.mrb[0].mxu0
  %v759 = vpop.f32.mrb[0].mxu0
  %760 = vdwg.mxu0
  %v762 = vsel %vm299, %v712, 0
  %v765 = vsel %vm299, %v714, 0
  %767 = vmatprep.subr.bf16.mxu0 0
  %768 = vmatpush1.bf16.xpose.msra.mxu0 %v765
  %769 = vmatprep.subr.bf16.mxu0 0
  %770 = vmatpush1.bf16.xpose.msra.mxu0 0
  %771 = vmatprep.subr.bf16.mxu0 0
  %772 = vmatpush1.bf16.xpose.msra.mxu0 0
  %773 = vmatprep.subr.bf16.mxu0 0
  %774 = vmatpush1.bf16.xpose.msra.mxu0 0
  %775 = vmatprep.subr.bf16.mxu0 0
  %776 = vmatpush1.bf16.xpose.msra.mxu0 0
  %777 = vmatprep.subr.bf16.mxu0 0
  %778 = vmatpush1.bf16.xpose.msra.mxu0 0
  %779 = vmatprep.subr.bf16.mxu0 0
  %780 = vmatpush1.bf16.xpose.msra.mxu0 0
  %781 = vmatprep.subr.bf16.mxu0 0
  %782 = vmatpush1.bf16.xpose.msra.mxu0 0
  %783 = vmatprep.subr.bf16.mxu0 0
  %784 = vmatpush1.bf16.xpose.msra.mxu0 0
  %785 = vmatprep.subr.bf16.mxu0 0
  %786 = vmatpush1.bf16.xpose.msra.mxu0 0
  %787 = vmatprep.subr.bf16.mxu0 0
  %788 = vmatpush1.bf16.xpose.msra.mxu0 0
  %789 = vmatprep.subr.bf16.mxu0 0
  %790 = vmatpush1.bf16.xpose.msra.mxu0 0
  %791 = vmatprep.subr.bf16.mxu0 0
  %792 = vmatpush1.bf16.xpose.msra.mxu0 0
  %793 = vmatprep.subr.bf16.mxu0 0
  %794 = vmatpush1.bf16.xpose.msra.mxu0 0
  %795 = vmatprep.subr.bf16.mxu0 0
  %796 = vmatpush1.bf16.xpose.msra.mxu0 0
  %797 = vmatprep.subr.bf16.mxu0 0
  %798 = vmatpush1.bf16.xpose.msra.mxu0 0
  %799 = vmatprep.mubr.bf16.mxu0 0
  %800 = vmatmul.mubr.bf16.gmra.mrb[0].mxu0 %v762
  %v801 = vpop.f32.mrb[0].mxu0
  %v802 = vadd.f32 %v95, %v801
  %v803 = vpop.f32.mrb[0].mxu0
  %v804 = vpop.f32.mrb[0].mxu0
  %v805 = vpop.f32.mrb[0].mxu0
  %806 = vdwg.mxu0
  %v807 = vsel %vm299, %v756, -inf
  %808 = vmax.xlane.f32.xlu0 %v807
  %v809 = vpop.xlane.xlu0 %808
  %v810 = vsel %vm299, %v802, -inf
  %811 = vmax.xlane.f32.xlu0 %v810
  %v812 = vpop.xlane.xlu0 %811
  %v813 = vsub.f32 %v756, %v809
  %v814 = vsub.f32 %v802, %v812
  %v815 = vmul.f32 %v813, 1.442695
  %v816 = vpow.pop %v815
  %v817 = vmul.f32 %v814, 1.442695
  %v818 = vpow.pop %v817
  %v819 = vsel %vm299, %v816, 0.0
  %820 = vadd.xlane.f32.xlu0 %v819
  %v821 = vpop.xlane.xlu0 %820
  %v822 = vsel %vm299, %v818, 0.0
  %823 = vadd.xlane.f32.xlu0 %v822
  %v824 = vpop.xlane.xlu0 %823
  %v825 = vrcp.pop %v821
  %v826 = vrcp.pop %v824
  %v827 = vmul.f32 %v816, %v825
  %v828 = vmul.f32 %v818, %v826
  %v829 = vpack.c.bf16 %v827, %v827
  %v830 = vpack.c.bf16 %v828, %v828
  %v831 = vpack.c.bf16 %v705, %v705
  %v832 = vpack.c.bf16 %v708, %v708
  %v834 = vsel %vm299, %v829, 0
  %v837 = vsel %vm421, %v831, 0
  %839 = vmatprep.subr.bf16.mxu0 0
  %840 = vmatpush1.bf16.msra.mxu0 %v837
  %841 = vmatprep.subr.bf16.mxu0 0
  %842 = vmatpush1.bf16.msra.mxu0 0
  %843 = vmatprep.subr.bf16.mxu0 0
  %844 = vmatpush1.bf16.msra.mxu0 0
  %845 = vmatprep.subr.bf16.mxu0 0
  %846 = vmatpush1.bf16.msra.mxu0 0
  %847 = vmatprep.subr.bf16.mxu0 0
  %848 = vmatpush1.bf16.msra.mxu0 0
  %849 = vmatprep.subr.bf16.mxu0 0
  %850 = vmatpush1.bf16.msra.mxu0 0
  %851 = vmatprep.subr.bf16.mxu0 0
  %852 = vmatpush1.bf16.msra.mxu0 0
  %853 = vmatprep.subr.bf16.mxu0 0
  %854 = vmatpush1.bf16.msra.mxu0 0
  %855 = vmatprep.subr.bf16.mxu0 0
  %856 = vmatpush1.bf16.msra.mxu0 0
  %857 = vmatprep.subr.bf16.mxu0 0
  %858 = vmatpush1.bf16.msra.mxu0 0
  %859 = vmatprep.subr.bf16.mxu0 0
  %860 = vmatpush1.bf16.msra.mxu0 0
  %861 = vmatprep.subr.bf16.mxu0 0
  %862 = vmatpush1.bf16.msra.mxu0 0
  %863 = vmatprep.subr.bf16.mxu0 0
  %864 = vmatpush1.bf16.msra.mxu0 0
  %865 = vmatprep.subr.bf16.mxu0 0
  %866 = vmatpush1.bf16.msra.mxu0 0
  %867 = vmatprep.subr.bf16.mxu0 0
  %868 = vmatpush1.bf16.msra.mxu0 0
  %869 = vmatprep.subr.bf16.mxu0 0
  %870 = vmatpush1.bf16.msra.mxu0 0
  %871 = vmatprep.mubr.bf16.mxu0 0
  %872 = vmatmul.mubr.bf16.gmra.mrb[0].mxu0 %v834
  %v873 = vpop.f32.mrb[0].mxu0
  %v874 = vadd.f32 0.0, %v873
  %v875 = vpop.f32.mrb[0].mxu0
  %v876 = vpop.f32.mrb[0].mxu0
  %v877 = vpop.f32.mrb[0].mxu0
  %878 = vdwg.mxu0
  %v880 = vsel %vm299, %v830, 0
  %v883 = vsel %vm421, %v832, 0
  %885 = vmatprep.subr.bf16.mxu0 0
  %886 = vmatpush1.bf16.msra.mxu0 %v883
  %887 = vmatprep.subr.bf16.mxu0 0
  %888 = vmatpush1.bf16.msra.mxu0 0
  %889 = vmatprep.subr.bf16.mxu0 0
  %890 = vmatpush1.bf16.msra.mxu0 0
  %891 = vmatprep.subr.bf16.mxu0 0
  %892 = vmatpush1.bf16.msra.mxu0 0
  %893 = vmatprep.subr.bf16.mxu0 0
  %894 = vmatpush1.bf16.msra.mxu0 0
  %895 = vmatprep.subr.bf16.mxu0 0
  %896 = vmatpush1.bf16.msra.mxu0 0
  %897 = vmatprep.subr.bf16.mxu0 0
  %898 = vmatpush1.bf16.msra.mxu0 0
  %899 = vmatprep.subr.bf16.mxu0 0
  %900 = vmatpush1.bf16.msra.mxu0 0
  %901 = vmatprep.subr.bf16.mxu0 0
  %902 = vmatpush1.bf16.msra.mxu0 0
  %903 = vmatprep.subr.bf16.mxu0 0
  %904 = vmatpush1.bf16.msra.mxu0 0
  %905 = vmatprep.subr.bf16.mxu0 0
  %906 = vmatpush1.bf16.msra.mxu0 0
  %907 = vmatprep.subr.bf16.mxu0 0
  %908 = vmatpush1.bf16.msra.mxu0 0
  %909 = vmatprep.subr.bf16.mxu0 0
  %910 = vmatpush1.bf16.msra.mxu0 0
  %911 = vmatprep.subr.bf16.mxu0 0
  %912 = vmatpush1.bf16.msra.mxu0 0
  %913 = vmatprep.subr.bf16.mxu0 0
  %914 = vmatpush1.bf16.msra.mxu0 0
  %915 = vmatprep.subr.bf16.mxu0 0
  %916 = vmatpush1.bf16.msra.mxu0 0
  %917 = vmatprep.mubr.bf16.mxu0 0
  %918 = vmatmul.mubr.bf16.gmra.mrb[0].mxu0 %v880
  %v919 = vpop.f32.mrb[0].mxu0
  %v920 = vadd.f32 0.0, %v919
  %v921 = vpop.f32.mrb[0].mxu0
  %v922 = vpop.f32.mrb[0].mxu0
  %v923 = vpop.f32.mrb[0].mxu0
  %924 = vdwg.mxu0
  %v925 = vpack.c.bf16 %v920, %v874
  %s926 = scalar_lea.vmem %s10, 4
  %v927 = vld [vmem:[%s926] sm:$0xf]
  %v929 = vsel %vm299, %v925, 0
  %v932 = vsel %vm421, %v927, 0
  %934 = vmatprep.subr.bf16.mxu0 0
  %935 = vmatpush1.bf16.msra.mxu0 %v932
  %936 = vmatprep.subr.bf16.mxu0 0
  %937 = vmatpush1.bf16.msra.mxu0 0
  %938 = vmatprep.subr.bf16.mxu0 0
  %939 = vmatpush1.bf16.msra.mxu0 0
  %940 = vmatprep.subr.bf16.mxu0 0
  %941 = vmatpush1.bf16.msra.mxu0 0
  %942 = vmatprep.subr.bf16.mxu0 0
  %943 = vmatpush1.bf16.msra.mxu0 0
  %944 = vmatprep.subr.bf16.mxu0 0
  %945 = vmatpush1.bf16.msra.mxu0 0
  %946 = vmatprep.subr.bf16.mxu0 0
  %947 = vmatpush1.bf16.msra.mxu0 0
  %948 = vmatprep.subr.bf16.mxu0 0
  %949 = vmatpush1.bf16.msra.mxu0 0
  %950 = vmatprep.subr.bf16.mxu0 0
  %951 = vmatpush1.bf16.msra.mxu0 0
  %952 = vmatprep.subr.bf16.mxu0 0
  %953 = vmatpush1.bf16.msra.mxu0 0
  %954 = vmatprep.subr.bf16.mxu0 0
  %955 = vmatpush1.bf16.msra.mxu0 0
  %956 = vmatprep.subr.bf16.mxu0 0
  %957 = vmatpush1.bf16.msra.mxu0 0
  %958 = vmatprep.subr.bf16.mxu0 0
  %959 = vmatpush1.bf16.msra.mxu0 0
  %960 = vmatprep.subr.bf16.mxu0 0
  %961 = vmatpush1.bf16.msra.mxu0 0
  %962 = vmatprep.subr.bf16.mxu0 0
  %963 = vmatpush1.bf16.msra.mxu0 0
  %964 = vmatprep.subr.bf16.mxu0 0
  %965 = vmatpush1.bf16.msra.mxu0 0
  %966 = vmatprep.mubr.bf16.mxu0 0
  %967 = vmatmul.mubr.bf16.gmra.mrb[0].mxu0 %v929
  %v968 = vpop.f32.mrb[0].mxu0
  %v969 = vadd.f32 0.0, %v968
  %v970 = vpop.f32.mrb[0].mxu0
  %v971 = vpop.f32.mrb[0].mxu0
  %v972 = vadd.f32 0.0, %v971
  %v973 = vpop.f32.mrb[0].mxu0
  %974 = vdwg.mxu0
  %v976 = vsel %vm299, %v511, 0
  %v979 = vsel %vm421, %v512, 0
  %981 = vmatprep.subr.bf16.mxu0 0
  %982 = vmatpush1.bf16.msra.mxu0 %v979
  %983 = vmatprep.subr.bf16.mxu0 0
  %984 = vmatpush1.bf16.msra.mxu0 0
  %985 = vmatprep.subr.bf16.mxu0 0
  %986 = vmatpush1.bf16.msra.mxu0 0
  %987 = vmatprep.subr.bf16.mxu0 0
  %988 = vmatpush1.bf16.msra.mxu0 0
  %989 = vmatprep.subr.bf16.mxu0 0
  %990 = vmatpush1.bf16.msra.mxu0 0
  %991 = vmatprep.subr.bf16.mxu0 0
  %992 = vmatpush1.bf16.msra.mxu0 0
  %993 = vmatprep.subr.bf16.mxu0 0
  %994 = vmatpush1.bf16.msra.mxu0 0
  %995 = vmatprep.subr.bf16.mxu0 0
  %996 = vmatpush1.bf16.msra.mxu0 0
  %997 = vmatprep.subr.bf16.mxu0 0
  %998 = vmatpush1.bf16.msra.mxu0 0
  %999 = vmatprep.subr.bf16.mxu0 0
  %1000 = vmatpush1.bf16.msra.mxu0 0
  %1001 = vmatprep.subr.bf16.mxu0 0
  %1002 = vmatpush1.bf16.msra.mxu0 0
  %1003 = vmatprep.subr.bf16.mxu0 0
  %1004 = vmatpush1.bf16.msra.mxu0 0
  %1005 = vmatprep.subr.bf16.mxu0 0
  %1006 = vmatpush1.bf16.msra.mxu0 0
  %1007 = vmatprep.subr.bf16.mxu0 0
  %1008 = vmatpush1.bf16.msra.mxu0 0
  %1009 = vmatprep.subr.bf16.mxu0 0
  %1010 = vmatpush1.bf16.msra.mxu0 0
  %1011 = vmatprep.subr.bf16.mxu0 0
  %1012 = vmatpush1.bf16.msra.mxu0 0
  %1013 = vmatprep.mubr.bf16.mxu0 0
  %1014 = vmatmul.mubr.bf16.gmra.mrb[0].mxu0 %v976
  %v1015 = vpop.f32.mrb[0].mxu0
  %v1016 = vadd.f32 %v969, %v1015
  %v1017 = vpop.f32.mrb[0].mxu0
  %v1018 = vpop.f32.mrb[0].mxu0
  %v1019 = vadd.f32 %v972, %v1018
  %v1020 = vpop.f32.mrb[0].mxu0
  %1021 = vdwg.mxu0
  %s1022 = scalar_lea.vmem %s4, 32
  %v1023 = vld [vmem:[%s1022] sm:$0xf]
  %v1024 = vld [vmem:[%s1022 + $0x4] sm:$0xf]
  %v1025 = vld [vmem:[%s1022 + $0x8] sm:$0xf]
  %v1026 = vld [vmem:[%s1022 + $0xc] sm:$0xf]
  %s1027 = scalar_lea.vmem %s7, 2
  %v1028 = vld [vmem:[%s1027] sm:$0x1]
  %v1030 = vlaneseq
  %v1031 = vshrl.u32 %v1030, 7
  %v1032 = vsub.s32 0, %v1031
  %v1033 = vrot.slane %v1028, %v1032
  %v1039 = vunpack.c.l.b16 %v1023
  %v1040 = vunpack.c.l.b16 %v1024
  %v1041 = vunpack.c.l.b16 %v1025
  %v1042 = vunpack.c.l.b16 %v1026
  %v1043 = vpack.c.b16 %v1040, %v1039
  %v1044 = vpack.c.b16 %v1042, %v1041
  %1047 = vmatprep.subr.bf16.mxu0 0
  %1048 = vmatpush1.bf16.msra.mxu0 %v1043
  %1049 = vmatprep.subr.bf16.mxu0 0
  %1050 = vmatpush1.bf16.msra.mxu0 %v1044
  %1051 = vmatprep.subr.bf16.mxu0 0
  %1052 = vmatpush1.bf16.msra.mxu0 0
  %1053 = vmatprep.subr.bf16.mxu0 0
  %1054 = vmatpush1.bf16.msra.mxu0 0
  %1055 = vmatprep.subr.bf16.mxu0 0
  %1056 = vmatpush1.bf16.msra.mxu0 0
  %1057 = vmatprep.subr.bf16.mxu0 0
  %1058 = vmatpush1.bf16.msra.mxu0 0
  %1059 = vmatprep.subr.bf16.mxu0 0
  %1060 = vmatpush1.bf16.msra.mxu0 0
  %1061 = vmatprep.subr.bf16.mxu0 0
  %1062 = vmatpush1.bf16.msra.mxu0 0
  %1063 = vmatprep.subr.bf16.mxu0 0
  %1064 = vmatpush1.bf16.msra.mxu0 0
  %1065 = vmatprep.subr.bf16.mxu0 0
  %1066 = vmatpush1.bf16.msra.mxu0 0
  %1067 = vmatprep.subr.bf16.mxu0 0
  %1068 = vmatpush1.bf16.msra.mxu0 0
  %1069 = vmatprep.subr.bf16.mxu0 0
  %1070 = vmatpush1.bf16.msra.mxu0 0
  %1071 = vmatprep.subr.bf16.mxu0 0
  %1072 = vmatpush1.bf16.msra.mxu0 0
  %1073 = vmatprep.subr.bf16.mxu0 0
  %1074 = vmatpush1.bf16.msra.mxu0 0
  %1075 = vmatprep.subr.bf16.mxu0 0
  %1076 = vmatpush1.bf16.msra.mxu0 0
  %1077 = vmatprep.subr.bf16.mxu0 0
  %1078 = vmatpush1.bf16.msra.mxu0 0
  %1079 = vmatprep.mubr.bf16.mxu0 0
  %1080 = vmatmul.mubr.bf16.gmra.mrb[0].mxu0 %v124
  %v1081 = vpop.f32.mrb[0].mxu0
  %v1082 = vadd.f32 %v1033, %v1081
  %v1083 = vpop.f32.mrb[0].mxu0
  %v1084 = vpop.f32.mrb[0].mxu0
  %v1085 = vadd.f32 %v1033, %v1084
  %v1086 = vpop.f32.mrb[0].mxu0
  %1087 = vdwg.mxu0
  %s1088 = scalar_lea.vmem %s5, 32
  %v1089 = vld [vmem:[%s1088] sm:$0xf]
  %v1090 = vld [vmem:[%s1088 + $0x4] sm:$0xf]
  %v1091 = vld [vmem:[%s1088 + $0x8] sm:$0xf]
  %v1092 = vld [vmem:[%s1088 + $0xc] sm:$0xf]
  %s1093 = scalar_lea.vmem %s8, 2
  %v1094 = vld [vmem:[%s1093] sm:$0x1]
  %v1096 = vlaneseq
  %v1097 = vshrl.u32 %v1096, 7
  %v1098 = vsub.s32 0, %v1097
  %v1099 = vrot.slane %v1094, %v1098
  %v1105 = vunpack.c.l.b16 %v1089
  %v1106 = vunpack.c.l.b16 %v1090
  %v1107 = vunpack.c.l.b16 %v1091
  %v1108 = vunpack.c.l.b16 %v1092
  %v1109 = vpack.c.b16 %v1106, %v1105
  %v1110 = vpack.c.b16 %v1108, %v1107
  %1113 = vmatprep.subr.bf16.mxu0 0
  %1114 = vmatpush1.bf16.msra.mxu0 %v1109
  %1115 = vmatprep.subr.bf16.mxu0 0
  %1116 = vmatpush1.bf16.msra.mxu0 %v1110
  %1117 = vmatprep.subr.bf16.mxu0 0
  %1118 = vmatpush1.bf16.msra.mxu0 0
  %1119 = vmatprep.subr.bf16.mxu0 0
  %1120 = vmatpush1.bf16.msra.mxu0 0
  %1121 = vmatprep.subr.bf16.mxu0 0
  %1122 = vmatpush1.bf16.msra.mxu0 0
  %1123 = vmatprep.subr.bf16.mxu0 0
  %1124 = vmatpush1.bf16.msra.mxu0 0
  %1125 = vmatprep.subr.bf16.mxu0 0
  %1126 = vmatpush1.bf16.msra.mxu0 0
  %1127 = vmatprep.subr.bf16.mxu0 0
  %1128 = vmatpush1.bf16.msra.mxu0 0
  %1129 = vmatprep.subr.bf16.mxu0 0
  %1130 = vmatpush1.bf16.msra.mxu0 0
  %1131 = vmatprep.subr.bf16.mxu0 0
  %1132 = vmatpush1.bf16.msra.mxu0 0
  %1133 = vmatprep.subr.bf16.mxu0 0
  %1134 = vmatpush1.bf16.msra.mxu0 0
  %1135 = vmatprep.subr.bf16.mxu0 0
  %1136 = vmatpush1.bf16.msra.mxu0 0
  %1137 = vmatprep.subr.bf16.mxu0 0
  %1138 = vmatpush1.bf16.msra.mxu0 0
  %1139 = vmatprep.subr.bf16.mxu0 0
  %1140 = vmatpush1.bf16.msra.mxu0 0
  %1141 = vmatprep.subr.bf16.mxu0 0
  %1142 = vmatpush1.bf16.msra.mxu0 0
  %1143 = vmatprep.subr.bf16.mxu0 0
  %1144 = vmatpush1.bf16.msra.mxu0 0
  %1145 = vmatprep.mubr.bf16.mxu0 0
  %1146 = vmatmul.mubr.bf16.gmra.mrb[0].mxu0 %v124
  %v1147 = vpop.f32.mrb[0].mxu0
  %v1148 = vadd.f32 %v1099, %v1147
  %v1149 = vpop.f32.mrb[0].mxu0
  %v1150 = vpop.f32.mrb[0].mxu0
  %v1151 = vadd.f32 %v1099, %v1150
  %v1152 = vpop.f32.mrb[0].mxu0
  %1153 = vdwg.mxu0
  %s1154 = scalar_lea.vmem %s6, 32
  %v1155 = vld [vmem:[%s1154] sm:$0xf]
  %v1156 = vld [vmem:[%s1154 + $0x4] sm:$0xf]
  %v1157 = vld [vmem:[%s1154 + $0x8] sm:$0xf]
  %v1158 = vld [vmem:[%s1154 + $0xc] sm:$0xf]
  %s1159 = scalar_lea.vmem %s9, 2
  %v1160 = vld [vmem:[%s1159] sm:$0x1]
  %v1162 = vlaneseq
  %v1163 = vshrl.u32 %v1162, 7
  %v1164 = vsub.s32 0, %v1163
  %v1165 = vrot.slane %v1160, %v1164
  %v1171 = vunpack.c.l.b16 %v1155
  %v1172 = vunpack.c.l.b16 %v1156
  %v1173 = vunpack.c.l.b16 %v1157
  %v1174 = vunpack.c.l.b16 %v1158
  %v1175 = vpack.c.b16 %v1172, %v1171
  %v1176 = vpack.c.b16 %v1174, %v1173
  %1179 = vmatprep.subr.bf16.mxu0 0
  %1180 = vmatpush1.bf16.msra.mxu0 %v1175
  %1181 = vmatprep.subr.bf16.mxu0 0
  %1182 = vmatpush1.bf16.msra.mxu0 %v1176
  %1183 = vmatprep.subr.bf16.mxu0 0
  %1184 = vmatpush1.bf16.msra.mxu0 0
  %1185 = vmatprep.subr.bf16.mxu0 0
  %1186 = vmatpush1.bf16.msra.mxu0 0
  %1187 = vmatprep.subr.bf16.mxu0 0
  %1188 = vmatpush1.bf16.msra.mxu0 0
  %1189 = vmatprep.subr.bf16.mxu0 0
  %1190 = vmatpush1.bf16.msra.mxu0 0
  %1191 = vmatprep.subr.bf16.mxu0 0
  %1192 = vmatpush1.bf16.msra.mxu0 0
  %1193 = vmatprep.subr.bf16.mxu0 0
  %1194 = vmatpush1.bf16.msra.mxu0 0
  %1195 = vmatprep.subr.bf16.mxu0 0
  %1196 = vmatpush1.bf16.msra.mxu0 0
  %1197 = vmatprep.subr.bf16.mxu0 0
  %1198 = vmatpush1.bf16.msra.mxu0 0
  %1199 = vmatprep.subr.bf16.mxu0 0
  %1200 = vmatpush1.bf16.msra.mxu0 0
  %1201 = vmatprep.subr.bf16.mxu0 0
  %1202 = vmatpush1.bf16.msra.mxu0 0
  %1203 = vmatprep.subr.bf16.mxu0 0
  %1204 = vmatpush1.bf16.msra.mxu0 0
  %1205 = vmatprep.subr.bf16.mxu0 0
  %1206 = vmatpush1.bf16.msra.mxu0 0
  %1207 = vmatprep.subr.bf16.mxu0 0
  %1208 = vmatpush1.bf16.msra.mxu0 0
  %1209 = vmatprep.subr.bf16.mxu0 0
  %1210 = vmatpush1.bf16.msra.mxu0 0
  %1211 = vmatprep.mubr.bf16.mxu0 0
  %1212 = vmatmul.mubr.bf16.gmra.mrb[0].mxu0 %v124
  %v1213 = vpop.f32.mrb[0].mxu0
  %v1214 = vadd.f32 %v1165, %v1213
  %v1215 = vpop.f32.mrb[0].mxu0
  %v1216 = vpop.f32.mrb[0].mxu0
  %v1217 = vadd.f32 %v1165, %v1216
  %v1218 = vpop.f32.mrb[0].mxu0
  %1219 = vdwg.mxu0
  %v1220 = vpack.c.bf16 %v1082, %v1082
  %v1221 = vpack.c.bf16 %v1085, %v1085
  %v1222 = vpack.c.bf16 %v1148, %v1148
  %v1223 = vpack.c.bf16 %v1151, %v1151
  %v1225 = vsel %vm299, %v1220, 0
  %v1228 = vsel %vm299, %v1222, 0
  %1230 = vmatprep.subr.bf16.mxu0 0
  %1231 = vmatpush1.bf16.xpose.msra.mxu0 %v1228
  %1232 = vmatprep.subr.bf16.mxu0 0
  %1233 = vmatpush1.bf16.xpose.msra.mxu0 0
  %1234 = vmatprep.subr.bf16.mxu0 0
  %1235 = vmatpush1.bf16.xpose.msra.mxu0 0
  %1236 = vmatprep.subr.bf16.mxu0 0
  %1237 = vmatpush1.bf16.xpose.msra.mxu0 0
  %1238 = vmatprep.subr.bf16.mxu0 0
  %1239 = vmatpush1.bf16.xpose.msra.mxu0 0
  %1240 = vmatprep.subr.bf16.mxu0 0
  %1241 = vmatpush1.bf16.xpose.msra.mxu0 0
  %1242 = vmatprep.subr.bf16.mxu0 0
  %1243 = vmatpush1.bf16.xpose.msra.mxu0 0
  %1244 = vmatprep.subr.bf16.mxu0 0
  %1245 = vmatpush1.bf16.xpose.msra.mxu0 0
  %1246 = vmatprep.subr.bf16.mxu0 0
  %1247 = vmatpush1.bf16.xpose.msra.mxu0 0
  %1248 = vmatprep.subr.bf16.mxu0 0
  %1249 = vmatpush1.bf16.xpose.msra.mxu0 0
  %1250 = vmatprep.subr.bf16.mxu0 0
  %1251 = vmatpush1.bf16.xpose.msra.mxu0 0
  %1252 = vmatprep.subr.bf16.mxu0 0
  %1253 = vmatpush1.bf16.xpose.msra.mxu0 0
  %1254 = vmatprep.subr.bf16.mxu0 0
  %1255 = vmatpush1.bf16.xpose.msra.mxu0 0
  %1256 = vmatprep.subr.bf16.mxu0 0
  %1257 = vmatpush1.bf16.xpose.msra.mxu0 0
  %1258 = vmatprep.subr.bf16.mxu0 0
  %1259 = vmatpush1.bf16.xpose.msra.mxu0 0
  %1260 = vmatprep.subr.bf16.mxu0 0
  %1261 = vmatpush1.bf16.xpose.msra.mxu0 0
  %1262 = vmatprep.mubr.bf16.mxu0 0
  %1263 = vmatmul.mubr.bf16.gmra.mrb[0].mxu0 %v1225
  %v1264 = vpop.f32.mrb[0].mxu0
  %v1265 = vadd.f32 %v94, %v1264
  %v1266 = vpop.f32.mrb[0].mxu0
  %v1267 = vpop.f32.mrb[0].mxu0
  %v1268 = vpop.f32.mrb[0].mxu0
  %1269 = vdwg.mxu0
  %v1271 = vsel %vm299, %v1221, 0
  %v1274 = vsel %vm299, %v1223, 0
  %1276 = vmatprep.subr.bf16.mxu0 0
  %1277 = vmatpush1.bf16.xpose.msra.mxu0 %v1274
  %1278 = vmatprep.subr.bf16.mxu0 0
  %1279 = vmatpush1.bf16.xpose.msra.mxu0 0
  %1280 = vmatprep.subr.bf16.mxu0 0
  %1281 = vmatpush1.bf16.xpose.msra.mxu0 0
  %1282 = vmatprep.subr.bf16.mxu0 0
  %1283 = vmatpush1.bf16.xpose.msra.mxu0 0
  %1284 = vmatprep.subr.bf16.mxu0 0
  %1285 = vmatpush1.bf16.xpose.msra.mxu0 0
  %1286 = vmatprep.subr.bf16.mxu0 0
  %1287 = vmatpush1.bf16.xpose.msra.mxu0 0
  %1288 = vmatprep.subr.bf16.mxu0 0
  %1289 = vmatpush1.bf16.xpose.msra.mxu0 0
  %1290 = vmatprep.subr.bf16.mxu0 0
  %1291 = vmatpush1.bf16.xpose.msra.mxu0 0
  %1292 = vmatprep.subr.bf16.mxu0 0
  %1293 = vmatpush1.bf16.xpose.msra.mxu0 0
  %1294 = vmatprep.subr.bf16.mxu0 0
  %1295 = vmatpush1.bf16.xpose.msra.mxu0 0
  %1296 = vmatprep.subr.bf16.mxu0 0
  %1297 = vmatpush1.bf16.xpose.msra.mxu0 0
  %1298 = vmatprep.subr.bf16.mxu0 0
  %1299 = vmatpush1.bf16.xpose.msra.mxu0 0
  %1300 = vmatprep.subr.bf16.mxu0 0
  %1301 = vmatpush1.bf16.xpose.msra.mxu0 0
  %1302 = vmatprep.subr.bf16.mxu0 0
  %1303 = vmatpush1.bf16.xpose.msra.mxu0 0
  %1304 = vmatprep.subr.bf16.mxu0 0
  %1305 = vmatpush1.bf16.xpose.msra.mxu0 0
  %1306 = vmatprep.subr.bf16.mxu0 0
  %1307 = vmatpush1.bf16.xpose.msra.mxu0 0
  %1308 = vmatprep.mubr.bf16.mxu0 0
  %1309 = vmatmul.mubr.bf16.gmra.mrb[0].mxu0 %v1271
  %v1310 = vpop.f32.mrb[0].mxu0
  %v1311 = vadd.f32 %v95, %v1310
  %v1312 = vpop.f32.mrb[0].mxu0
  %v1313 = vpop.f32.mrb[0].mxu0
  %v1314 = vpop.f32.mrb[0].mxu0
  %1315 = vdwg.mxu0
  %v1316 = vsel %vm299, %v1265, -inf
  %1317 = vmax.xlane.f32.xlu0 %v1316
  %v1318 = vpop.xlane.xlu0 %1317
  %v1319 = vsel %vm299, %v1311, -inf
  %1320 = vmax.xlane.f32.xlu0 %v1319
  %v1321 = vpop.xlane.xlu0 %1320
  %v1322 = vsub.f32 %v1265, %v1318
  %v1323 = vsub.f32 %v1311, %v1321
  %v1324 = vmul.f32 %v1322, 1.442695
  %v1325 = vpow.pop %v1324
  %v1326 = vmul.f32 %v1323, 1.442695
  %v1327 = vpow.pop %v1326
  %v1328 = vsel %vm299, %v1325, 0.0
  %1329 = vadd.xlane.f32.xlu0 %v1328
  %v1330 = vpop.xlane.xlu0 %1329
  %v1331 = vsel %vm299, %v1327, 0.0
  %1332 = vadd.xlane.f32.xlu0 %v1331
  %v1333 = vpop.xlane.xlu0 %1332
  %v1334 = vrcp.pop %v1330
  %v1335 = vrcp.pop %v1333
  %v1336 = vmul.f32 %v1325, %v1334
  %v1337 = vmul.f32 %v1327, %v1335
  %v1338 = vpack.c.bf16 %v1336, %v1336
  %v1339 = vpack.c.bf16 %v1337, %v1337
  %v1340 = vpack.c.bf16 %v1214, %v1214
  %v1341 = vpack.c.bf16 %v1217, %v1217
  %v1343 = vsel %vm299, %v1338, 0
  %v1346 = vsel %vm421, %v1340, 0
  %1348 = vmatprep.subr.bf16.mxu0 0
  %1349 = vmatpush1.bf16.msra.mxu0 %v1346
  %1350 = vmatprep.subr.bf16.mxu0 0
  %1351 = vmatpush1.bf16.msra.mxu0 0
  %1352 = vmatprep.subr.bf16.mxu0 0
  %1353 = vmatpush1.bf16.msra.mxu0 0
  %1354 = vmatprep.subr.bf16.mxu0 0
  %1355 = vmatpush1.bf16.msra.mxu0 0
  %1356 = vmatprep.subr.bf16.mxu0 0
  %1357 = vmatpush1.bf16.msra.mxu0 0
  %1358 = vmatprep.subr.bf16.mxu0 0
  %1359 = vmatpush1.bf16.msra.mxu0 0
  %1360 = vmatprep.subr.bf16.mxu0 0
  %1361 = vmatpush1.bf16.msra.mxu0 0
  %1362 = vmatprep.subr.bf16.mxu0 0
  %1363 = vmatpush1.bf16.msra.mxu0 0
  %1364 = vmatprep.subr.bf16.mxu0 0
  %1365 = vmatpush1.bf16.msra.mxu0 0
  %1366 = vmatprep.subr.bf16.mxu0 0
  %1367 = vmatpush1.bf16.msra.mxu0 0
  %1368 = vmatprep.subr.bf16.mxu0 0
  %1369 = vmatpush1.bf16.msra.mxu0 0
  %1370 = vmatprep.subr.bf16.mxu0 0
  %1371 = vmatpush1.bf16.msra.mxu0 0
  %1372 = vmatprep.subr.bf16.mxu0 0
  %1373 = vmatpush1.bf16.msra.mxu0 0
  %1374 = vmatprep.subr.bf16.mxu0 0
  %1375 = vmatpush1.bf16.msra.mxu0 0
  %1376 = vmatprep.subr.bf16.mxu0 0
  %1377 = vmatpush1.bf16.msra.mxu0 0
  %1378 = vmatprep.subr.bf16.mxu0 0
  %1379 = vmatpush1.bf16.msra.mxu0 0
  %1380 = vmatprep.mubr.bf16.mxu0 0
  %1381 = vmatmul.mubr.bf16.gmra.mrb[0].mxu0 %v1343
  %v1382 = vpop.f32.mrb[0].mxu0
  %v1383 = vadd.f32 0.0, %v1382
  %v1384 = vpop.f32.mrb[0].mxu0
  %v1385 = vpop.f32.mrb[0].mxu0
  %v1386 = vpop.f32.mrb[0].mxu0
  %1387 = vdwg.mxu0
  %v1389 = vsel %vm299, %v1339, 0
  %v1392 = vsel %vm421, %v1341, 0
  %1394 = vmatprep.subr.bf16.mxu0 0
  %1395 = vmatpush1.bf16.msra.mxu0 %v1392
  %1396 = vmatprep.subr.bf16.mxu0 0
  %1397 = vmatpush1.bf16.msra.mxu0 0
  %1398 = vmatprep.subr.bf16.mxu0 0
  %1399 = vmatpush1.bf16.msra.mxu0 0
  %1400 = vmatprep.subr.bf16.mxu0 0
  %1401 = vmatpush1.bf16.msra.mxu0 0
  %1402 = vmatprep.subr.bf16.mxu0 0
  %1403 = vmatpush1.bf16.msra.mxu0 0
  %1404 = vmatprep.subr.bf16.mxu0 0
  %1405 = vmatpush1.bf16.msra.mxu0 0
  %1406 = vmatprep.subr.bf16.mxu0 0
  %1407 = vmatpush1.bf16.msra.mxu0 0
  %1408 = vmatprep.subr.bf16.mxu0 0
  %1409 = vmatpush1.bf16.msra.mxu0 0
  %1410 = vmatprep.subr.bf16.mxu0 0
  %1411 = vmatpush1.bf16.msra.mxu0 0
  %1412 = vmatprep.subr.bf16.mxu0 0
  %1413 = vmatpush1.bf16.msra.mxu0 0
  %1414 = vmatprep.subr.bf16.mxu0 0
  %1415 = vmatpush1.bf16.msra.mxu0 0
  %1416 = vmatprep.subr.bf16.mxu0 0
  %1417 = vmatpush1.bf16.msra.mxu0 0
  %1418 = vmatprep.subr.bf16.mxu0 0
  %1419 = vmatpush1.bf16.msra.mxu0 0
  %1420 = vmatprep.subr.bf16.mxu0 0
  %1421 = vmatpush1.bf16.msra.mxu0 0
  %1422 = vmatprep.subr.bf16.mxu0 0
  %1423 = vmatpush1.bf16.msra.mxu0 0
  %1424 = vmatprep.subr.bf16.mxu0 0
  %1425 = vmatpush1.bf16.msra.mxu0 0
  %1426 = vmatprep.mubr.bf16.mxu0 0
  %1427 = vmatmul.mubr.bf16.gmra.mrb[0].mxu0 %v1389
  %v1428 = vpop.f32.mrb[0].mxu0
  %v1429 = vadd.f32 0.0, %v1428
  %v1430 = vpop.f32.mrb[0].mxu0
  %v1431 = vpop.f32.mrb[0].mxu0
  %v1432 = vpop.f32.mrb[0].mxu0
  %1433 = vdwg.mxu0
  %v1434 = vpack.c.bf16 %v1429, %v1383
  %s1435 = scalar_lea.vmem %s10, 8
  %v1436 = vld [vmem:[%s1435] sm:$0xf]
  %v1438 = vsel %vm299, %v1434, 0
  %v1441 = vsel %vm421, %v1436, 0
  %1443 = vmatprep.subr.bf16.mxu0 0
  %1444 = vmatpush1.bf16.msra.mxu0 %v1441
  %1445 = vmatprep.subr.bf16.mxu0 0
  %1446 = vmatpush1.bf16.msra.mxu0 0
  %1447 = vmatprep.subr.bf16.mxu0 0
  %1448 = vmatpush1.bf16.msra.mxu0 0
  %1449 = vmatprep.subr.bf16.mxu0 0
  %1450 = vmatpush1.bf16.msra.mxu0 0
  %1451 = vmatprep.subr.bf16.mxu0 0
  %1452 = vmatpush1.bf16.msra.mxu0 0
  %1453 = vmatprep.subr.bf16.mxu0 0
  %1454 = vmatpush1.bf16.msra.mxu0 0
  %1455 = vmatprep.subr.bf16.mxu0 0
  %1456 = vmatpush1.bf16.msra.mxu0 0
  %1457 = vmatprep.subr.bf16.mxu0 0
  %1458 = vmatpush1.bf16.msra.mxu0 0
  %1459 = vmatprep.subr.bf16.mxu0 0
  %1460 = vmatpush1.bf16.msra.mxu0 0
  %1461 = vmatprep.subr.bf16.mxu0 0
  %1462 = vmatpush1.bf16.msra.mxu0 0
  %1463 = vmatprep.subr.bf16.mxu0 0
  %1464 = vmatpush1.bf16.msra.mxu0 0
  %1465 = vmatprep.subr.bf16.mxu0 0
  %1466 = vmatpush1.bf16.msra.mxu0 0
  %1467 = vmatprep.subr.bf16.mxu0 0
  %1468 = vmatpush1.bf16.msra.mxu0 0
  %1469 = vmatprep.subr.bf16.mxu0 0
  %1470 = vmatpush1.bf16.msra.mxu0 0
  %1471 = vmatprep.subr.bf16.mxu0 0
  %1472 = vmatpush1.bf16.msra.mxu0 0
  %1473 = vmatprep.subr.bf16.mxu0 0
  %1474 = vmatpush1.bf16.msra.mxu0 0
  %1475 = vmatprep.mubr.bf16.mxu0 0
  %1476 = vmatmul.mubr.bf16.gmra.mrb[0].mxu0 %v1438
  %v1477 = vpop.f32.mrb[0].mxu0
  %v1478 = vadd.f32 0.0, %v1477
  %v1479 = vpop.f32.mrb[0].mxu0
  %v1480 = vpop.f32.mrb[0].mxu0
  %v1481 = vadd.f32 0.0, %v1480
  %v1482 = vpop.f32.mrb[0].mxu0
  %1483 = vdwg.mxu0
  %v1484 = vadd.f32 %v1016, %v1478
  %v1485 = vadd.f32 %v1019, %v1481
  %s1486 = scalar_lea.vmem %s4, 48
  %v1487 = vld [vmem:[%s1486] sm:$0xf]
  %v1488 = vld [vmem:[%s1486 + $0x4] sm:$0xf]
  %v1489 = vld [vmem:[%s1486 + $0x8] sm:$0xf]
  %v1490 = vld [vmem:[%s1486 + $0xc] sm:$0xf]
  %s1491 = scalar_lea.vmem %s7, 3
  %v1492 = vld [vmem:[%s1491] sm:$0x1]
  %v1494 = vlaneseq
  %v1495 = vshrl.u32 %v1494, 7
  %v1496 = vsub.s32 0, %v1495
  %v1497 = vrot.slane %v1492, %v1496
  %v1503 = vunpack.c.l.b16 %v1487
  %v1504 = vunpack.c.l.b16 %v1488
  %v1505 = vunpack.c.l.b16 %v1489
  %v1506 = vunpack.c.l.b16 %v1490
  %v1507 = vpack.c.b16 %v1504, %v1503
  %v1508 = vpack.c.b16 %v1506, %v1505
  %1511 = vmatprep.subr.bf16.mxu0 0
  %1512 = vmatpush1.bf16.msra.mxu0 %v1507
  %1513 = vmatprep.subr.bf16.mxu0 0
  %1514 = vmatpush1.bf16.msra.mxu0 %v1508
  %1515 = vmatprep.subr.bf16.mxu0 0
  %1516 = vmatpush1.bf16.msra.mxu0 0
  %1517 = vmatprep.subr.bf16.mxu0 0
  %1518 = vmatpush1.bf16.msra.mxu0 0
  %1519 = vmatprep.subr.bf16.mxu0 0
  %1520 = vmatpush1.bf16.msra.mxu0 0
  %1521 = vmatprep.subr.bf16.mxu0 0
  %1522 = vmatpush1.bf16.msra.mxu0 0
  %1523 = vmatprep.subr.bf16.mxu0 0
  %1524 = vmatpush1.bf16.msra.mxu0 0
  %1525 = vmatprep.subr.bf16.mxu0 0
  %1526 = vmatpush1.bf16.msra.mxu0 0
  %1527 = vmatprep.subr.bf16.mxu0 0
  %1528 = vmatpush1.bf16.msra.mxu0 0
  %1529 = vmatprep.subr.bf16.mxu0 0
  %1530 = vmatpush1.bf16.msra.mxu0 0
  %1531 = vmatprep.subr.bf16.mxu0 0
  %1532 = vmatpush1.bf16.msra.mxu0 0
  %1533 = vmatprep.subr.bf16.mxu0 0
  %1534 = vmatpush1.bf16.msra.mxu0 0
  %1535 = vmatprep.subr.bf16.mxu0 0
  %1536 = vmatpush1.bf16.msra.mxu0 0
  %1537 = vmatprep.subr.bf16.mxu0 0
  %1538 = vmatpush1.bf16.msra.mxu0 0
  %1539 = vmatprep.subr.bf16.mxu0 0
  %1540 = vmatpush1.bf16.msra.mxu0 0
  %1541 = vmatprep.subr.bf16.mxu0 0
  %1542 = vmatpush1.bf16.msra.mxu0 0
  %1543 = vmatprep.mubr.bf16.mxu0 0
  %1544 = vmatmul.mubr.bf16.gmra.mrb[0].mxu0 %v124
  %v1545 = vpop.f32.mrb[0].mxu0
  %v1546 = vadd.f32 %v1497, %v1545
  %v1547 = vpop.f32.mrb[0].mxu0
  %v1548 = vpop.f32.mrb[0].mxu0
  %v1549 = vadd.f32 %v1497, %v1548
  %v1550 = vpop.f32.mrb[0].mxu0
  %1551 = vdwg.mxu0
  %s1552 = scalar_lea.vmem %s5, 48
  %v1553 = vld [vmem:[%s1552] sm:$0xf]
  %v1554 = vld [vmem:[%s1552 + $0x4] sm:$0xf]
  %v1555 = vld [vmem:[%s1552 + $0x8] sm:$0xf]
  %v1556 = vld [vmem:[%s1552 + $0xc] sm:$0xf]
  %s1557 = scalar_lea.vmem %s8, 3
  %v1558 = vld [vmem:[%s1557] sm:$0x1]
  %v1560 = vlaneseq
  %v1561 = vshrl.u32 %v1560, 7
  %v1562 = vsub.s32 0, %v1561
  %v1563 = vrot.slane %v1558, %v1562
  %v1569 = vunpack.c.l.b16 %v1553
  %v1570 = vunpack.c.l.b16 %v1554
  %v1571 = vunpack.c.l.b16 %v1555
  %v1572 = vunpack.c.l.b16 %v1556
  %v1573 = vpack.c.b16 %v1570, %v1569
  %v1574 = vpack.c.b16 %v1572, %v1571
  %1577 = vmatprep.subr.bf16.mxu0 0
  %1578 = vmatpush1.bf16.msra.mxu0 %v1573
  %1579 = vmatprep.subr.bf16.mxu0 0
  %1580 = vmatpush1.bf16.msra.mxu0 %v1574
  %1581 = vmatprep.subr.bf16.mxu0 0
  %1582 = vmatpush1.bf16.msra.mxu0 0
  %1583 = vmatprep.subr.bf16.mxu0 0
  %1584 = vmatpush1.bf16.msra.mxu0 0
  %1585 = vmatprep.subr.bf16.mxu0 0
  %1586 = vmatpush1.bf16.msra.mxu0 0
  %1587 = vmatprep.subr.bf16.mxu0 0
  %1588 = vmatpush1.bf16.msra.mxu0 0
  %1589 = vmatprep.subr.bf16.mxu0 0
  %1590 = vmatpush1.bf16.msra.mxu0 0
  %1591 = vmatprep.subr.bf16.mxu0 0
  %1592 = vmatpush1.bf16.msra.mxu0 0
  %1593 = vmatprep.subr.bf16.mxu0 0
  %1594 = vmatpush1.bf16.msra.mxu0 0
  %1595 = vmatprep.subr.bf16.mxu0 0
  %1596 = vmatpush1.bf16.msra.mxu0 0
  %1597 = vmatprep.subr.bf16.mxu0 0
  %1598 = vmatpush1.bf16.msra.mxu0 0
  %1599 = vmatprep.subr.bf16.mxu0 0
  %1600 = vmatpush1.bf16.msra.mxu0 0
  %1601 = vmatprep.subr.bf16.mxu0 0
  %1602 = vmatpush1.bf16.msra.mxu0 0
  %1603 = vmatprep.subr.bf16.mxu0 0
  %1604 = vmatpush1.bf16.msra.mxu0 0
  %1605 = vmatprep.subr.bf16.mxu0 0
  %1606 = vmatpush1.bf16.msra.mxu0 0
  %1607 = vmatprep.subr.bf16.mxu0 0
  %1608 = vmatpush1.bf16.msra.mxu0 0
  %1609 = vmatprep.mubr.bf16.mxu0 0
  %1610 = vmatmul.mubr.bf16.gmra.mrb[0].mxu0 %v124
  %v1611 = vpop.f32.mrb[0].mxu0
  %v1612 = vadd.f32 %v1563, %v1611
  %v1613 = vpop.f32.mrb[0].mxu0
  %v1614 = vpop.f32.mrb[0].mxu0
  %v1615 = vadd.f32 %v1563, %v1614
  %v1616 = vpop.f32.mrb[0].mxu0
  %1617 = vdwg.mxu0
  %s1618 = scalar_lea.vmem %s6, 48
  %v1619 = vld [vmem:[%s1618] sm:$0xf]
  %v1620 = vld [vmem:[%s1618 + $0x4] sm:$0xf]
  %v1621 = vld [vmem:[%s1618 + $0x8] sm:$0xf]
  %v1622 = vld [vmem:[%s1618 + $0xc] sm:$0xf]
  %s1623 = scalar_lea.vmem %s9, 3
  %v1624 = vld [vmem:[%s1623] sm:$0x1]
  %v1626 = vlaneseq
  %v1627 = vshrl.u32 %v1626, 7
  %v1628 = vsub.s32 0, %v1627
  %v1629 = vrot.slane %v1624, %v1628
  %v1635 = vunpack.c.l.b16 %v1619
  %v1636 = vunpack.c.l.b16 %v1620
  %v1637 = vunpack.c.l.b16 %v1621
  %v1638 = vunpack.c.l.b16 %v1622
  %v1639 = vpack.c.b16 %v1636, %v1635
  %v1640 = vpack.c.b16 %v1638, %v1637
  %1643 = vmatprep.subr.bf16.mxu0 0
  %1644 = vmatpush1.bf16.msra.mxu0 %v1639
  %1645 = vmatprep.subr.bf16.mxu0 0
  %1646 = vmatpush1.bf16.msra.mxu0 %v1640
  %1647 = vmatprep.subr.bf16.mxu0 0
  %1648 = vmatpush1.bf16.msra.mxu0 0
  %1649 = vmatprep.subr.bf16.mxu0 0
  %1650 = vmatpush1.bf16.msra.mxu0 0
  %1651 = vmatprep.subr.bf16.mxu0 0
  %1652 = vmatpush1.bf16.msra.mxu0 0
  %1653 = vmatprep.subr.bf16.mxu0 0
  %1654 = vmatpush1.bf16.msra.mxu0 0
  %1655 = vmatprep.subr.bf16.mxu0 0
  %1656 = vmatpush1.bf16.msra.mxu0 0
  %1657 = vmatprep.subr.bf16.mxu0 0
  %1658 = vmatpush1.bf16.msra.mxu0 0
  %1659 = vmatprep.subr.bf16.mxu0 0
  %1660 = vmatpush1.bf16.msra.mxu0 0
  %1661 = vmatprep.subr.bf16.mxu0 0
  %1662 = vmatpush1.bf16.msra.mxu0 0
  %1663 = vmatprep.subr.bf16.mxu0 0
  %1664 = vmatpush1.bf16.msra.mxu0 0
  %1665 = vmatprep.subr.bf16.mxu0 0
  %1666 = vmatpush1.bf16.msra.mxu0 0
  %1667 = vmatprep.subr.bf16.mxu0 0
  %1668 = vmatpush1.bf16.msra.mxu0 0
  %1669 = vmatprep.subr.bf16.mxu0 0
  %1670 = vmatpush1.bf16.msra.mxu0 0
  %1671 = vmatprep.subr.bf16.mxu0 0
  %1672 = vmatpush1.bf16.msra.mxu0 0
  %1673 = vmatprep.subr.bf16.mxu0 0
  %1674 = vmatpush1.bf16.msra.mxu0 0
  %1675 = vmatprep.mubr.bf16.mxu0 0
  %1676 = vmatmul.mubr.bf16.gmra.mrb[0].mxu0 %v124
  %v1677 = vpop.f32.mrb[0].mxu0
  %v1678 = vadd.f32 %v1629, %v1677
  %v1679 = vpop.f32.mrb[0].mxu0
  %v1680 = vpop.f32.mrb[0].mxu0
  %v1681 = vadd.f32 %v1629, %v1680
  %v1682 = vpop.f32.mrb[0].mxu0
  %1683 = vdwg.mxu0
  %v1684 = vpack.c.bf16 %v1546, %v1546
  %v1685 = vpack.c.bf16 %v1549, %v1549
  %v1686 = vpack.c.bf16 %v1612, %v1612
  %v1687 = vpack.c.bf16 %v1615, %v1615
  %v1689 = vsel %vm299, %v1684, 0
  %v1692 = vsel %vm299, %v1686, 0
  %1694 = vmatprep.subr.bf16.mxu0 0
  %1695 = vmatpush1.bf16.xpose.msra.mxu0 %v1692
  %1696 = vmatprep.subr.bf16.mxu0 0
  %1697 = vmatpush1.bf16.xpose.msra.mxu0 0
  %1698 = vmatprep.subr.bf16.mxu0 0
  %1699 = vmatpush1.bf16.xpose.msra.mxu0 0
  %1700 = vmatprep.subr.bf16.mxu0 0
  %1701 = vmatpush1.bf16.xpose.msra.mxu0 0
  %1702 = vmatprep.subr.bf16.mxu0 0
  %1703 = vmatpush1.bf16.xpose.msra.mxu0 0
  %1704 = vmatprep.subr.bf16.mxu0 0
  %1705 = vmatpush1.bf16.xpose.msra.mxu0 0
  %1706 = vmatprep.subr.bf16.mxu0 0
  %1707 = vmatpush1.bf16.xpose.msra.mxu0 0
  %1708 = vmatprep.subr.bf16.mxu0 0
  %1709 = vmatpush1.bf16.xpose.msra.mxu0 0
  %1710 = vmatprep.subr.bf16.mxu0 0
  %1711 = vmatpush1.bf16.xpose.msra.mxu0 0
  %1712 = vmatprep.subr.bf16.mxu0 0
  %1713 = vmatpush1.bf16.xpose.msra.mxu0 0
  %1714 = vmatprep.subr.bf16.mxu0 0
  %1715 = vmatpush1.bf16.xpose.msra.mxu0 0
  %1716 = vmatprep.subr.bf16.mxu0 0
  %1717 = vmatpush1.bf16.xpose.msra.mxu0 0
  %1718 = vmatprep.subr.bf16.mxu0 0
  %1719 = vmatpush1.bf16.xpose.msra.mxu0 0
  %1720 = vmatprep.subr.bf16.mxu0 0
  %1721 = vmatpush1.bf16.xpose.msra.mxu0 0
  %1722 = vmatprep.subr.bf16.mxu0 0
  %1723 = vmatpush1.bf16.xpose.msra.mxu0 0
  %1724 = vmatprep.subr.bf16.mxu0 0
  %1725 = vmatpush1.bf16.xpose.msra.mxu0 0
  %1726 = vmatprep.mubr.bf16.mxu0 0
  %1727 = vmatmul.mubr.bf16.gmra.mrb[0].mxu0 %v1689
  %v1728 = vpop.f32.mrb[0].mxu0
  %v1729 = vadd.f32 %v94, %v1728
  %v1730 = vpop.f32.mrb[0].mxu0
  %v1731 = vpop.f32.mrb[0].mxu0
  %v1732 = vpop.f32.mrb[0].mxu0
  %1733 = vdwg.mxu0
  %v1735 = vsel %vm299, %v1685, 0
  %v1738 = vsel %vm299, %v1687, 0
  %1740 = vmatprep.subr.bf16.mxu0 0
  %1741 = vmatpush1.bf16.xpose.msra.mxu0 %v1738
  %1742 = vmatprep.subr.bf16.mxu0 0
  %1743 = vmatpush1.bf16.xpose.msra.mxu0 0
  %1744 = vmatprep.subr.bf16.mxu0 0
  %1745 = vmatpush1.bf16.xpose.msra.mxu0 0
  %1746 = vmatprep.subr.bf16.mxu0 0
  %1747 = vmatpush1.bf16.xpose.msra.mxu0 0
  %1748 = vmatprep.subr.bf16.mxu0 0
  %1749 = vmatpush1.bf16.xpose.msra.mxu0 0
  %1750 = vmatprep.subr.bf16.mxu0 0
  %1751 = vmatpush1.bf16.xpose.msra.mxu0 0
  %1752 = vmatprep.subr.bf16.mxu0 0
  %1753 = vmatpush1.bf16.xpose.msra.mxu0 0
  %1754 = vmatprep.subr.bf16.mxu0 0
  %1755 = vmatpush1.bf16.xpose.msra.mxu0 0
  %1756 = vmatprep.subr.bf16.mxu0 0
  %1757 = vmatpush1.bf16.xpose.msra.mxu0 0
  %1758 = vmatprep.subr.bf16.mxu0 0
  %1759 = vmatpush1.bf16.xpose.msra.mxu0 0
  %1760 = vmatprep.subr.bf16.mxu0 0
  %1761 = vmatpush1.bf16.xpose.msra.mxu0 0
  %1762 = vmatprep.subr.bf16.mxu0 0
  %1763 = vmatpush1.bf16.xpose.msra.mxu0 0
  %1764 = vmatprep.subr.bf16.mxu0 0
  %1765 = vmatpush1.bf16.xpose.msra.mxu0 0
  %1766 = vmatprep.subr.bf16.mxu0 0
  %1767 = vmatpush1.bf16.xpose.msra.mxu0 0
  %1768 = vmatprep.subr.bf16.mxu0 0
  %1769 = vmatpush1.bf16.xpose.msra.mxu0 0
  %1770 = vmatprep.subr.bf16.mxu0 0
  %1771 = vmatpush1.bf16.xpose.msra.mxu0 0
  %1772 = vmatprep.mubr.bf16.mxu0 0
  %1773 = vmatmul.mubr.bf16.gmra.mrb[0].mxu0 %v1735
  %v1774 = vpop.f32.mrb[0].mxu0
  %v1775 = vadd.f32 %v95, %v1774
  %v1776 = vpop.f32.mrb[0].mxu0
  %v1777 = vpop.f32.mrb[0].mxu0
  %v1778 = vpop.f32.mrb[0].mxu0
  %1779 = vdwg.mxu0
  %v1780 = vsel %vm299, %v1729, -inf
  %1781 = vmax.xlane.f32.xlu0 %v1780
  %v1782 = vpop.xlane.xlu0 %1781
  %v1783 = vsel %vm299, %v1775, -inf
  %1784 = vmax.xlane.f32.xlu0 %v1783
  %v1785 = vpop.xlane.xlu0 %1784
  %v1786 = vsub.f32 %v1729, %v1782
  %v1787 = vsub.f32 %v1775, %v1785
  %v1788 = vmul.f32 %v1786, 1.442695
  %v1789 = vpow.pop %v1788
  %v1790 = vmul.f32 %v1787, 1.442695
  %v1791 = vpow.pop %v1790
  %v1792 = vsel %vm299, %v1789, 0.0
  %1793 = vadd.xlane.f32.xlu0 %v1792
  %v1794 = vpop.xlane.xlu0 %1793
  %v1795 = vsel %vm299, %v1791, 0.0
  %1796 = vadd.xlane.f32.xlu0 %v1795
  %v1797 = vpop.xlane.xlu0 %1796
  %v1798 = vrcp.pop %v1794
  %v1799 = vrcp.pop %v1797
  %v1800 = vmul.f32 %v1789, %v1798
  %v1801 = vmul.f32 %v1791, %v1799
  %v1802 = vpack.c.bf16 %v1800, %v1800
  %v1803 = vpack.c.bf16 %v1801, %v1801
  %v1804 = vpack.c.bf16 %v1678, %v1678
  %v1805 = vpack.c.bf16 %v1681, %v1681
  %v1807 = vsel %vm299, %v1802, 0
  %v1810 = vsel %vm421, %v1804, 0
  %1812 = vmatprep.subr.bf16.mxu0 0
  %1813 = vmatpush1.bf16.msra.mxu0 %v1810
  %1814 = vmatprep.subr.bf16.mxu0 0
  %1815 = vmatpush1.bf16.msra.mxu0 0
  %1816 = vmatprep.subr.bf16.mxu0 0
  %1817 = vmatpush1.bf16.msra.mxu0 0
  %1818 = vmatprep.subr.bf16.mxu0 0
  %1819 = vmatpush1.bf16.msra.mxu0 0
  %1820 = vmatprep.subr.bf16.mxu0 0
  %1821 = vmatpush1.bf16.msra.mxu0 0
  %1822 = vmatprep.subr.bf16.mxu0 0
  %1823 = vmatpush1.bf16.msra.mxu0 0
  %1824 = vmatprep.subr.bf16.mxu0 0
  %1825 = vmatpush1.bf16.msra.mxu0 0
  %1826 = vmatprep.subr.bf16.mxu0 0
  %1827 = vmatpush1.bf16.msra.mxu0 0
  %1828 = vmatprep.subr.bf16.mxu0 0
  %1829 = vmatpush1.bf16.msra.mxu0 0
  %1830 = vmatprep.subr.bf16.mxu0 0
  %1831 = vmatpush1.bf16.msra.mxu0 0
  %1832 = vmatprep.subr.bf16.mxu0 0
  %1833 = vmatpush1.bf16.msra.mxu0 0
  %1834 = vmatprep.subr.bf16.mxu0 0
  %1835 = vmatpush1.bf16.msra.mxu0 0
  %1836 = vmatprep.subr.bf16.mxu0 0
  %1837 = vmatpush1.bf16.msra.mxu0 0
  %1838 = vmatprep.subr.bf16.mxu0 0
  %1839 = vmatpush1.bf16.msra.mxu0 0
  %1840 = vmatprep.subr.bf16.mxu0 0
  %1841 = vmatpush1.bf16.msra.mxu0 0
  %1842 = vmatprep.subr.bf16.mxu0 0
  %1843 = vmatpush1.bf16.msra.mxu0 0
  %1844 = vmatprep.mubr.bf16.mxu0 0
  %1845 = vmatmul.mubr.bf16.gmra.mrb[0].mxu0 %v1807
  %v1846 = vpop.f32.mrb[0].mxu0
  %v1847 = vadd.f32 0.0, %v1846
  %v1848 = vpop.f32.mrb[0].mxu0
  %v1849 = vpop.f32.mrb[0].mxu0
  %v1850 = vpop.f32.mrb[0].mxu0
  %1851 = vdwg.mxu0
  %v1853 = vsel %vm299, %v1803, 0
  %v1856 = vsel %vm421, %v1805, 0
  %1858 = vmatprep.subr.bf16.mxu0 0
  %1859 = vmatpush1.bf16.msra.mxu0 %v1856
  %1860 = vmatprep.subr.bf16.mxu0 0
  %1861 = vmatpush1.bf16.msra.mxu0 0
  %1862 = vmatprep.subr.bf16.mxu0 0
  %1863 = vmatpush1.bf16.msra.mxu0 0
  %1864 = vmatprep.subr.bf16.mxu0 0
  %1865 = vmatpush1.bf16.msra.mxu0 0
  %1866 = vmatprep.subr.bf16.mxu0 0
  %1867 = vmatpush1.bf16.msra.mxu0 0
  %1868 = vmatprep.subr.bf16.mxu0 0
  %1869 = vmatpush1.bf16.msra.mxu0 0
  %1870 = vmatprep.subr.bf16.mxu0 0
  %1871 = vmatpush1.bf16.msra.mxu0 0
  %1872 = vmatprep.subr.bf16.mxu0 0
  %1873 = vmatpush1.bf16.msra.mxu0 0
  %1874 = vmatprep.subr.bf16.mxu0 0
  %1875 = vmatpush1.bf16.msra.mxu0 0
  %1876 = vmatprep.subr.bf16.mxu0 0
  %1877 = vmatpush1.bf16.msra.mxu0 0
  %1878 = vmatprep.subr.bf16.mxu0 0
  %1879 = vmatpush1.bf16.msra.mxu0 0
  %1880 = vmatprep.subr.bf16.mxu0 0
  %1881 = vmatpush1.bf16.msra.mxu0 0
  %1882 = vmatprep.subr.bf16.mxu0 0
  %1883 = vmatpush1.bf16.msra.mxu0 0
  %1884 = vmatprep.subr.bf16.mxu0 0
  %1885 = vmatpush1.bf16.msra.mxu0 0
  %1886 = vmatprep.subr.bf16.mxu0 0
  %1887 = vmatpush1.bf16.msra.mxu0 0
  %1888 = vmatprep.subr.bf16.mxu0 0
  %1889 = vmatpush1.bf16.msra.mxu0 0
  %1890 = vmatprep.mubr.bf16.mxu0 0
  %1891 = vmatmul.mubr.bf16.gmra.mrb[0].mxu0 %v1853
  %v1892 = vpop.f32.mrb[0].mxu0
  %v1893 = vadd.f32 0.0, %v1892
  %v1894 = vpop.f32.mrb[0].mxu0
  %v1895 = vpop.f32.mrb[0].mxu0
  %v1896 = vpop.f32.mrb[0].mxu0
  %1897 = vdwg.mxu0
  %v1898 = vpack.c.bf16 %v1893, %v1847
  %s1899 = scalar_lea.vmem %s10, 12
  %v1900 = vld [vmem:[%s1899] sm:$0xf]
  %v1902 = vsel %vm299, %v1898, 0
  %v1905 = vsel %vm421, %v1900, 0
  %1907 = vmatprep.subr.bf16.mxu0 0
  %1908 = vmatpush1.bf16.msra.mxu0 %v1905
  %1909 = vmatprep.subr.bf16.mxu0 0
  %1910 = vmatpush1.bf16.msra.mxu0 0
  %1911 = vmatprep.subr.bf16.mxu0 0
  %1912 = vmatpush1.bf16.msra.mxu0 0
  %1913 = vmatprep.subr.bf16.mxu0 0
  %1914 = vmatpush1.bf16.msra.mxu0 0
  %1915 = vmatprep.subr.bf16.mxu0 0
  %1916 = vmatpush1.bf16.msra.mxu0 0
  %1917 = vmatprep.subr.bf16.mxu0 0
  %1918 = vmatpush1.bf16.msra.mxu0 0
  %1919 = vmatprep.subr.bf16.mxu0 0
  %1920 = vmatpush1.bf16.msra.mxu0 0
  %1921 = vmatprep.subr.bf16.mxu0 0
  %1922 = vmatpush1.bf16.msra.mxu0 0
  %1923 = vmatprep.subr.bf16.mxu0 0
  %1924 = vmatpush1.bf16.msra.mxu0 0
  %1925 = vmatprep.subr.bf16.mxu0 0
  %1926 = vmatpush1.bf16.msra.mxu0 0
  %1927 = vmatprep.subr.bf16.mxu0 0
  %1928 = vmatpush1.bf16.msra.mxu0 0
  %1929 = vmatprep.subr.bf16.mxu0 0
  %1930 = vmatpush1.bf16.msra.mxu0 0
  %1931 = vmatprep.subr.bf16.mxu0 0
  %1932 = vmatpush1.bf16.msra.mxu0 0
  %1933 = vmatprep.subr.bf16.mxu0 0
  %1934 = vmatpush1.bf16.msra.mxu0 0
  %1935 = vmatprep.subr.bf16.mxu0 0
  %1936 = vmatpush1.bf16.msra.mxu0 0
  %1937 = vmatprep.subr.bf16.mxu0 0
  %1938 = vmatpush1.bf16.msra.mxu0 0
  %1939 = vmatprep.mubr.bf16.mxu0 0
  %1940 = vmatmul.mubr.bf16.gmra.mrb[0].mxu0 %v1902
  %v1941 = vpop.f32.mrb[0].mxu0
  %v1942 = vadd.f32 0.0, %v1941
  %v1943 = vpop.f32.mrb[0].mxu0
  %v1944 = vpop.f32.mrb[0].mxu0
  %v1945 = vadd.f32 0.0, %v1944
  %v1946 = vpop.f32.mrb[0].mxu0
  %1947 = vdwg.mxu0
  %v1948 = vadd.f32 %v1484, %v1942
  %v1949 = vadd.f32 %v1485, %v1945
  %v1950 = vadd.f32 %v90, %v1948
  %v1951 = vadd.f32 %v91, %v1949
  %v1952 = vld [vmem:[%s11] sm:$0x1]
  %v1954 = vlaneseq
  %v1955 = vshrl.u32 %v1954, 7
  %v1956 = vsub.s32 0, %v1955
  %v1957 = vrot.slane %v1952, %v1956
  %v1959 = vadd.f32 %v1950, %v1957
  %v1960 = vadd.f32 %v1951, %v1957
  %v1961 = vld [vmem:[%s20] sm:$0x1]
  %v1962 = vld [vmem:[%s21] sm:$0x1]
  %v1963 = vsel %vm122, %v1959, 0.0
  %1964 = vadd.xlane.f32.xlu0 %v1963
  %v1965 = vpop.xlane.xlu0 %1964
  %v1966 = vsel %vm122, %v1960, 0.0
  %1967 = vadd.xlane.f32.xlu0 %v1966
  %v1968 = vpop.xlane.xlu0 %1967
  %v1969 = vrcp.pop 32.0
  %v1970 = vmul.f32 %v1965, %v1969
  %v1971 = vmul.f32 %v1968, %v1969
  %v1972 = vsub.f32 %v1959, %v1970
  %v1973 = vsub.f32 %v1960, %v1971
  %v1974 = vmul.f32 %v1972, %v1972
  %v1975 = vmul.f32 %v1973, %v1973
  %v1976 = vsel %vm122, %v1974, 0.0
  %1977 = vadd.xlane.f32.xlu0 %v1976
  %v1978 = vpop.xlane.xlu0 %1977
  %v1979 = vsel %vm122, %v1975, 0.0
  %1980 = vadd.xlane.f32.xlu0 %v1979
  %v1981 = vpop.xlane.xlu0 %1980
  %v1982 = vmul.f32 %v1978, %v1969
  %v1983 = vmul.f32 %v1981, %v1969
  %v1984 = vadd.f32 %v1982, 1e-05
  %v1985 = vadd.f32 %v1983, 1e-05
  %v1986 = vrsqrt.pop %v1984
  %v1987 = vrsqrt.pop %v1985
  %v1988 = vmul.f32 %v1972, %v1986
  %v1989 = vmul.f32 %v1973, %v1987
  %v1991 = vlaneseq
  %v1992 = vshrl.u32 %v1991, 7
  %v1993 = vsub.s32 0, %v1992
  %v1994 = vrot.slane %v1961, %v1993
  %v1996 = vmul.f32 %v1988, %v1994
  %v1997 = vmul.f32 %v1989, %v1994
  %v1999 = vlaneseq
  %v2000 = vshrl.u32 %v1999, 7
  %v2001 = vsub.s32 0, %v2000
  %v2002 = vrot.slane %v1962, %v2001
  %v2004 = vadd.f32 %v1996, %v2002
  %v2005 = vadd.f32 %v1997, %v2002
  %v2006 = vld [vmem:[%s12] sm:$0xf]
  %v2007 = vld [vmem:[%s12 + $0x4] sm:$0xf]
  %v2008 = vld [vmem:[%s12 + $0x8] sm:$0xf]
  %v2009 = vld [vmem:[%s12 + $0xc] sm:$0xf]
  %v2010 = vld [vmem:[%s13] sm:$0x1]
  %v2012 = vlaneseq
  %v2013 = vshrl.u32 %v2012, 7
  %v2014 = vsub.s32 0, %v2013
  %v2015 = vrot.slane %v2010, %v2014
  %v2021 = vunpack.c.l.b16 %v2006
  %v2022 = vunpack.c.l.b16 %v2007
  %v2023 = vunpack.c.l.b16 %v2008
  %v2024 = vunpack.c.l.b16 %v2009
  %v2025 = vpack.c.b16 %v2022, %v2021
  %v2026 = vpack.c.b16 %v2024, %v2023
  %v2030 = vsel %vm122, %v93, 0
  %2032 = vmatprep.subr.bf16.mxu0 0
  %2033 = vmatpush1.bf16.msra.mxu0 %v2025
  %2034 = vmatprep.subr.bf16.mxu0 0
  %2035 = vmatpush1.bf16.msra.mxu0 %v2026
  %2036 = vmatprep.subr.bf16.mxu0 0
  %2037 = vmatpush1.bf16.msra.mxu0 0
  %2038 = vmatprep.subr.bf16.mxu0 0
  %2039 = vmatpush1.bf16.msra.mxu0 0
  %2040 = vmatprep.subr.bf16.mxu0 0
  %2041 = vmatpush1.bf16.msra.mxu0 0
  %2042 = vmatprep.subr.bf16.mxu0 0
  %2043 = vmatpush1.bf16.msra.mxu0 0
  %2044 = vmatprep.subr.bf16.mxu0 0
  %2045 = vmatpush1.bf16.msra.mxu0 0
  %2046 = vmatprep.subr.bf16.mxu0 0
  %2047 = vmatpush1.bf16.msra.mxu0 0
  %2048 = vmatprep.subr.bf16.mxu0 0
  %2049 = vmatpush1.bf16.msra.mxu0 0
  %2050 = vmatprep.subr.bf16.mxu0 0
  %2051 = vmatpush1.bf16.msra.mxu0 0
  %2052 = vmatprep.subr.bf16.mxu0 0
  %2053 = vmatpush1.bf16.msra.mxu0 0
  %2054 = vmatprep.subr.bf16.mxu0 0
  %2055 = vmatpush1.bf16.msra.mxu0 0
  %2056 = vmatprep.subr.bf16.mxu0 0
  %2057 = vmatpush1.bf16.msra.mxu0 0
  %2058 = vmatprep.subr.bf16.mxu0 0
  %2059 = vmatpush1.bf16.msra.mxu0 0
  %2060 = vmatprep.subr.bf16.mxu0 0
  %2061 = vmatpush1.bf16.msra.mxu0 0
  %2062 = vmatprep.subr.bf16.mxu0 0
  %2063 = vmatpush1.bf16.msra.mxu0 0
  %2064 = vmatprep.mubr.bf16.mxu0 0
  %2065 = vmatmul.mubr.bf16.gmra.mrb[0].mxu0 %v2030
  %v2066 = vpop.f32.mrb[0].mxu0
  %v2067 = vadd.f32 %v2015, %v2066
  %v2068 = vpop.f32.mrb[0].mxu0
  %v2069 = vpop.f32.mrb[0].mxu0
  %v2070 = vpop.f32.mrb[0].mxu0
  %2071 = vdwg.mxu0
  %v2072 = vpack.c.bf16 %v2067, %v2067
  %v2073 = vld [vmem:[%s14] sm:$0xf]
  %v2074 = vld [vmem:[%s14 + $0x4] sm:$0xf]
  %v2075 = vld [vmem:[%s14 + $0x8] sm:$0xf]
  %v2076 = vld [vmem:[%s14 + $0xc] sm:$0xf]
  %v2077 = vld [vmem:[%s15] sm:$0x1]
  %v2079 = vlaneseq
  %v2080 = vshrl.u32 %v2079, 7
  %v2081 = vsub.s32 0, %v2080
  %v2082 = vrot.slane %v2077, %v2081
  %v2088 = vunpack.c.l.b16 %v2073
  %v2089 = vunpack.c.l.b16 %v2074
  %v2090 = vunpack.c.l.b16 %v2075
  %v2091 = vunpack.c.l.b16 %v2076
  %v2092 = vpack.c.b16 %v2089, %v2088
  %v2093 = vpack.c.b16 %v2091, %v2090
  %v2097 = vsel %vm122, %v2072, 0
  %2099 = vmatprep.subr.bf16.mxu0 0
  %2100 = vmatpush1.bf16.msra.mxu0 %v2092
  %2101 = vmatprep.subr.bf16.mxu0 0
  %2102 = vmatpush1.bf16.msra.mxu0 %v2093
  %2103 = vmatprep.subr.bf16.mxu0 0
  %2104 = vmatpush1.bf16.msra.mxu0 0
  %2105 = vmatprep.subr.bf16.mxu0 0
  %2106 = vmatpush1.bf16.msra.mxu0 0
  %2107 = vmatprep.subr.bf16.mxu0 0
  %2108 = vmatpush1.bf16.msra.mxu0 0
  %2109 = vmatprep.subr.bf16.mxu0 0
  %2110 = vmatpush1.bf16.msra.mxu0 0
  %2111 = vmatprep.subr.bf16.mxu0 0
  %2112 = vmatpush1.bf16.msra.mxu0 0
  %2113 = vmatprep.subr.bf16.mxu0 0
  %2114 = vmatpush1.bf16.msra.mxu0 0
  %2115 = vmatprep.subr.bf16.mxu0 0
  %2116 = vmatpush1.bf16.msra.mxu0 0
  %2117 = vmatprep.subr.bf16.mxu0 0
  %2118 = vmatpush1.bf16.msra.mxu0 0
  %2119 = vmatprep.subr.bf16.mxu0 0
  %2120 = vmatpush1.bf16.msra.mxu0 0
  %2121 = vmatprep.subr.bf16.mxu0 0
  %2122 = vmatpush1.bf16.msra.mxu0 0
  %2123 = vmatprep.subr.bf16.mxu0 0
  %2124 = vmatpush1.bf16.msra.mxu0 0
  %2125 = vmatprep.subr.bf16.mxu0 0
  %2126 = vmatpush1.bf16.msra.mxu0 0
  %2127 = vmatprep.subr.bf16.mxu0 0
  %2128 = vmatpush1.bf16.msra.mxu0 0
  %2129 = vmatprep.subr.bf16.mxu0 0
  %2130 = vmatpush1.bf16.msra.mxu0 0
  %2131 = vmatprep.mubr.bf16.mxu0 0
  %2132 = vmatmul.mubr.bf16.gmra.mrb[0].mxu0 %v2097
  %v2133 = vpop.f32.mrb[0].mxu0
  %v2134 = vadd.f32 %v2082, %v2133
  %v2135 = vpop.f32.mrb[0].mxu0
  %v2136 = vpop.f32.mrb[0].mxu0
  %v2137 = vpop.f32.mrb[0].mxu0
  %2138 = vdwg.mxu0
  %v2141 = vunpack.c.l.s4 1966171168
  %v2142 = vunpack.c.0.s8 %v2141
  %v2143 = vlaneseq
  %v2144 = vshrl.u32 %v2143, 7
  %v2145 = vsub.s32 %v2142, %v2144
  %v2146 = vrot.slane %v2134, %v2145
  %v2147 = vcombine.high %v2146, %v2146
  %v2149 = vunpack.c.l.s4 1966171168
  %v2150 = vunpack.c.0.s8 %v2149
  %v2151 = vlaneseq
  %v2152 = vshrl.u32 %v2151, 7
  %v2153 = vsub.s32 %v2150, %v2152
  %v2154 = vrot.slane %v2146, %v2153
  %v2156 = vunpack.c.l.s4 1966171168
  %v2157 = vunpack.c.0.s8 %v2156
  %v2158 = vlaneseq
  %v2159 = vshrl.u32 %v2158, 7
  %v2160 = vsub.s32 %v2157, %v2159
  %v2161 = vrot.slane %v2147, %v2160
  %v2162 = vlaneseq
  %v2163 = vshrl.u32 %v2162, 7
  %v2164 = vsub.s32 0, %v2163
  %v2165 = vrot.slane %v2154, %v2164
  %v2166 = vlaneseq
  %v2167 = vshrl.u32 %v2166, 7
  %v2168 = vsub.s32 0, %v2167
  %v2169 = vrot.slane %v2161, %v2168
  %v2172 = vadd.f32 %v2004, %v2165
  %v2173 = vadd.f32 %v2005, %v2169
  %v2174 = vld [vmem:[%s22] sm:$0x1]
  %v2175 = vld [vmem:[%s23] sm:$0x1]
  %v2176 = vsel %vm122, %v2172, 0.0
  %2177 = vadd.xlane.f32.xlu0 %v2176
  %v2178 = vpop.xlane.xlu0 %2177
  %v2179 = vsel %vm122, %v2173, 0.0
  %2180 = vadd.xlane.f32.xlu0 %v2179
  %v2181 = vpop.xlane.xlu0 %2180
  %v2182 = vmul.f32 %v2178, %v1969
  %v2183 = vmul.f32 %v2181, %v1969
  %v2184 = vsub.f32 %v2172, %v2182
  %v2185 = vsub.f32 %v2173, %v2183
  %v2186 = vmul.f32 %v2184, %v2184
  %v2187 = vmul.f32 %v2185, %v2185
  %v2188 = vsel %vm122, %v2186, 0.0
  %2189 = vadd.xlane.f32.xlu0 %v2188
  %v2190 = vpop.xlane.xlu0 %2189
  %v2191 = vsel %vm122, %v2187, 0.0
  %2192 = vadd.xlane.f32.xlu0 %v2191
  %v2193 = vpop.xlane.xlu0 %2192
  %v2194 = vmul.f32 %v2190, %v1969
  %v2195 = vmul.f32 %v2193, %v1969
  %v2196 = vadd.f32 %v2194, 1e-05
  %v2197 = vadd.f32 %v2195, 1e-05
  %v2198 = vrsqrt.pop %v2196
  %v2199 = vrsqrt.pop %v2197
  %v2200 = vmul.f32 %v2184, %v2198
  %v2201 = vmul.f32 %v2185, %v2199
  %v2203 = vlaneseq
  %v2204 = vshrl.u32 %v2203, 7
  %v2205 = vsub.s32 0, %v2204
  %v2206 = vrot.slane %v2174, %v2205
  %v2208 = vmul.f32 %v2200, %v2206
  %v2209 = vmul.f32 %v2201, %v2206
  %v2211 = vlaneseq
  %v2212 = vshrl.u32 %v2211, 7
  %v2213 = vsub.s32 0, %v2212
  %v2214 = vrot.slane %v2175, %v2213
  %v2216 = vadd.f32 %v2208, %v2214
  %v2217 = vadd.f32 %v2209, %v2214
  %v2218 = vpack.c.bf16 %v2217, %v2216
  %v2219 = vld [vmem:[%s16] sm:$0xf]
  %v2220 = vld [vmem:[%s16 + $0x4] sm:$0xf]
  %v2221 = vld [vmem:[%s16 + $0x8] sm:$0xf]
  %v2222 = vld [vmem:[%s16 + $0xc] sm:$0xf]
  %v2223 = vld [vmem:[%s17] sm:$0x1]
  %v2225 = vlaneseq
  %v2226 = vshrl.u32 %v2225, 7
  %v2227 = vsub.s32 0, %v2226
  %v2228 = vrot.slane %v2223, %v2227
  %v2234 = vunpack.c.l.b16 %v2219
  %v2235 = vunpack.c.l.b16 %v2220
  %v2236 = vunpack.c.l.b16 %v2221
  %v2237 = vunpack.c.l.b16 %v2222
  %v2238 = vpack.c.b16 %v2235, %v2234
  %v2239 = vpack.c.b16 %v2237, %v2236
  %v2243 = vsel %vm122, %v2218, 0
  %2245 = vmatprep.subr.bf16.mxu0 0
  %2246 = vmatpush1.bf16.msra.mxu0 %v2238
  %2247 = vmatprep.subr.bf16.mxu0 0
  %2248 = vmatpush1.bf16.msra.mxu0 %v2239
  %2249 = vmatprep.subr.bf16.mxu0 0
  %2250 = vmatpush1.bf16.msra.mxu0 0
  %2251 = vmatprep.subr.bf16.mxu0 0
  %2252 = vmatpush1.bf16.msra.mxu0 0
  %2253 = vmatprep.subr.bf16.mxu0 0
  %2254 = vmatpush1.bf16.msra.mxu0 0
  %2255 = vmatprep.subr.bf16.mxu0 0
  %2256 = vmatpush1.bf16.msra.mxu0 0
  %2257 = vmatprep.subr.bf16.mxu0 0
  %2258 = vmatpush1.bf16.msra.mxu0 0
  %2259 = vmatprep.subr.bf16.mxu0 0
  %2260 = vmatpush1.bf16.msra.mxu0 0
  %2261 = vmatprep.subr.bf16.mxu0 0
  %2262 = vmatpush1.bf16.msra.mxu0 0
  %2263 = vmatprep.subr.bf16.mxu0 0
  %2264 = vmatpush1.bf16.msra.mxu0 0
  %2265 = vmatprep.subr.bf16.mxu0 0
  %2266 = vmatpush1.bf16.msra.mxu0 0
  %2267 = vmatprep.subr.bf16.mxu0 0
  %2268 = vmatpush1.bf16.msra.mxu0 0
  %2269 = vmatprep.subr.bf16.mxu0 0
  %2270 = vmatpush1.bf16.msra.mxu0 0
  %2271 = vmatprep.subr.bf16.mxu0 0
  %2272 = vmatpush1.bf16.msra.mxu0 0
  %2273 = vmatprep.subr.bf16.mxu0 0
  %2274 = vmatpush1.bf16.msra.mxu0 0
  %2275 = vmatprep.subr.bf16.mxu0 0
  %2276 = vmatpush1.bf16.msra.mxu0 0
  %2277 = vmatprep.mubr.bf16.mxu0 0
  %2278 = vmatmul.mubr.bf16.gmra.mrb[0].mxu0 %v2243
  %v2279 = vpop.f32.mrb[0].mxu0
  %v2280 = vadd.f32 %v2228, %v2279
  %v2281 = vpop.f32.mrb[0].mxu0
  %v2282 = vpop.f32.mrb[0].mxu0
  %v2283 = vadd.f32 %v2228, %v2282
  %v2284 = vpop.f32.mrb[0].mxu0
  %2285 = vdwg.mxu0
  %v2286 = vmul.f32 %v2280, 0.5
  %v2287 = vmul.f32 %v2283, 0.5
  %v2288 = vmul.f32 %v2280, 0.044715
  %v2289 = vmul.f32 %v2283, 0.044715
  %v2290 = vmul.f32 %v2288, %v2280
  %v2291 = vmul.f32 %v2289, %v2283
  %v2292 = vmul.f32 %v2290, %v2280
  %v2293 = vmul.f32 %v2291, %v2283
  %v2294 = vadd.f32 %v2280, %v2292
  %v2295 = vadd.f32 %v2283, %v2293
  %v2296 = vmul.f32 %v2294, 0.7978846
  %v2297 = vmul.f32 %v2295, 0.7978846
  %v2298 = vtanh.pop %v2296
  %v2299 = vtanh.pop %v2297
  %v2300 = vadd.f32 %v2298, 1.0
  %v2301 = vadd.f32 %v2299, 1.0
  %v2302 = vmul.f32 %v2286, %v2300
  %v2303 = vmul.f32 %v2287, %v2301
  %v2304 = vpack.c.bf16 %v2303, %v2302
  %v2305 = vld [vmem:[%s18] sm:$0xf]
  %v2306 = vld [vmem:[%s18 + $0x4] sm:$0xf]
  %v2307 = vld [vmem:[%s18 + $0x8] sm:$0xf]
  %v2308 = vld [vmem:[%s18 + $0xc] sm:$0xf]
  %v2309 = vld [vmem:[%s18 + $0x10] sm:$0xf]
  %v2310 = vld [vmem:[%s18 + $0x14] sm:$0xf]
  %v2311 = vld [vmem:[%s18 + $0x18] sm:$0xf]
  %v2312 = vld [vmem:[%s18 + $0x1c] sm:$0xf]
  %v2313 = vld [vmem:[%s19] sm:$0x1]
  %v2315 = vlaneseq
  %v2316 = vshrl.u32 %v2315, 7
  %v2317 = vsub.s32 0, %v2316
  %v2318 = vrot.slane %v2313, %v2317
  %v2328 = vunpack.c.l.b16 %v2305
  %v2329 = vunpack.c.l.b16 %v2306
  %v2330 = vunpack.c.l.b16 %v2307
  %v2331 = vunpack.c.l.b16 %v2308
  %v2332 = vunpack.c.l.b16 %v2309
  %v2333 = vunpack.c.l.b16 %v2310
  %v2334 = vunpack.c.l.b16 %v2311
  %v2335 = vunpack.c.l.b16 %v2312
  %v2336 = vpack.c.b16 %v2329, %v2328
  %v2337 = vpack.c.b16 %v2331, %v2330
  %v2338 = vpack.c.b16 %v2333, %v2332
  %v2339 = vpack.c.b16 %v2335, %v2334
  %vm2344 = vcmask 523264
  %v2346 = vsel %vm2344, %v2304, 0
  %2348 = vmatprep.subr.bf16.mxu0 0
  %2349 = vmatpush1.bf16.msra.mxu0 %v2336
  %2350 = vmatprep.subr.bf16.mxu0 0
  %2351 = vmatpush1.bf16.msra.mxu0 %v2337
  %2352 = vmatprep.subr.bf16.mxu0 0
  %2353 = vmatpush1.bf16.msra.mxu0 %v2338
  %2354 = vmatprep.subr.bf16.mxu0 0
  %2355 = vmatpush1.bf16.msra.mxu0 %v2339
  %2356 = vmatprep.subr.bf16.mxu0 0
  %2357 = vmatpush1.bf16.msra.mxu0 0
  %2358 = vmatprep.subr.bf16.mxu0 0
  %2359 = vmatpush1.bf16.msra.mxu0 0
  %2360 = vmatprep.subr.bf16.mxu0 0
  %2361 = vmatpush1.bf16.msra.mxu0 0
  %2362 = vmatprep.subr.bf16.mxu0 0
  %2363 = vmatpush1.bf16.msra.mxu0 0
  %2364 = vmatprep.subr.bf16.mxu0 0
  %2365 = vmatpush1.bf16.msra.mxu0 0
  %2366 = vmatprep.subr.bf16.mxu0 0
  %2367 = vmatpush1.bf16.msra.mxu0 0
  %2368 = vmatprep.subr.bf16.mxu0 0
  %2369 = vmatpush1.bf16.msra.mxu0 0
  %2370 = vmatprep.subr.bf16.mxu0 0
  %2371 = vmatpush1.bf16.msra.mxu0 0
  %2372 = vmatprep.subr.bf16.mxu0 0
  %2373 = vmatpush1.bf16.msra.mxu0 0
  %2374 = vmatprep.subr.bf16.mxu0 0
  %2375 = vmatpush1.bf16.msra.mxu0 0
  %2376 = vmatprep.subr.bf16.mxu0 0
  %2377 = vmatpush1.bf16.msra.mxu0 0
  %2378 = vmatprep.subr.bf16.mxu0 0
  %2379 = vmatpush1.bf16.msra.mxu0 0
  %2380 = vmatprep.mubr.bf16.mxu0 0
  %2381 = vmatmul.mubr.bf16.gmra.mrb[0].mxu0 %v2346
  %v2382 = vpop.f32.mrb[0].mxu0
  %v2383 = vadd.f32 %v2318, %v2382
  %v2384 = vpop.f32.mrb[0].mxu0
  %v2385 = vpop.f32.mrb[0].mxu0
  %v2386 = vadd.f32 %v2318, %v2385
  %v2387 = vpop.f32.mrb[0].mxu0
  %2388 = vdwg.mxu0
  %v2389 = vadd.f32 %v2216, %v2383
  %v2390 = vadd.f32 %v2217, %v2386
  %v2391 = vld [vmem:[%s24] sm:$0x1]
  %v2392 = vld [vmem:[%s25] sm:$0x1]
  %v2393 = vsel %vm122, %v2389, 0.0
  %2394 = vadd.xlane.f32.xlu0 %v2393
  %v2395 = vpop.xlane.xlu0 %2394
  %v2396 = vsel %vm122, %v2390, 0.0
  %2397 = vadd.xlane.f32.xlu0 %v2396
  %v2398 = vpop.xlane.xlu0 %2397
  %v2399 = vmul.f32 %v2395, %v1969
  %v2400 = vmul.f32 %v2398, %v1969
  %v2401 = vsub.f32 %v2389, %v2399
  %v2402 = vsub.f32 %v2390, %v2400
  %v2403 = vmul.f32 %v2401, %v2401
  %v2404 = vmul.f32 %v2402, %v2402
  %v2405 = vsel %vm122, %v2403, 0.0
  %2406 = vadd.xlane.f32.xlu0 %v2405
  %v2407 = vpop.xlane.xlu0 %2406
  %v2408 = vsel %vm122, %v2404, 0.0
  %2409 = vadd.xlane.f32.xlu0 %v2408
  %v2410 = vpop.xlane.xlu0 %2409
  %v2411 = vmul.f32 %v2407, %v1969
  %v2412 = vmul.f32 %v2410, %v1969
  %v2413 = vadd.f32 %v2411, 1e-05
  %v2414 = vadd.f32 %v2412, 1e-05
  %v2415 = vrsqrt.pop %v2413
  %v2416 = vrsqrt.pop %v2414
  %v2417 = vmul.f32 %v2401, %v2415
  %v2418 = vmul.f32 %v2402, %v2416
  %v2420 = vlaneseq
  %v2421 = vshrl.u32 %v2420, 7
  %v2422 = vsub.s32 0, %v2421
  %v2423 = vrot.slane %v2391, %v2422
  %v2425 = vmul.f32 %v2417, %v2423
  %v2426 = vmul.f32 %v2418, %v2423
  %v2428 = vlaneseq
  %v2429 = vshrl.u32 %v2428, 7
  %v2430 = vsub.s32 0, %v2429
  %v2431 = vrot.slane %v2392, %v2430
  %v2433 = vadd.f32 %v2425, %v2431
  %v2434 = vadd.f32 %v2426, %v2431
  %v2435 = vpack.c.bf16 %v2434, %v2433
  %s2436 = scalar_lea.vmem %s4, 64
  %v2437 = vld [vmem:[%s2436] sm:$0xf]
  %v2438 = vld [vmem:[%s2436 + $0x4] sm:$0xf]
  %v2439 = vld [vmem:[%s2436 + $0x8] sm:$0xf]
  %v2440 = vld [vmem:[%s2436 + $0xc] sm:$0xf]
  %s2441 = scalar_lea.vmem %s7, 4
  %v2442 = vld [vmem:[%s2441] sm:$0x1]
  %v2444 = vlaneseq
  %v2445 = vshrl.u32 %v2444, 7
  %v2446 = vsub.s32 0, %v2445
  %v2447 = vrot.slane %v2442, %v2446
  %v2453 = vunpack.c.l.b16 %v2437
  %v2454 = vunpack.c.l.b16 %v2438
  %v2455 = vunpack.c.l.b16 %v2439
  %v2456 = vunpack.c.l.b16 %v2440
  %v2457 = vpack.c.b16 %v2454, %v2453
  %v2458 = vpack.c.b16 %v2456, %v2455
  %v2462 = vsel %vm122, %v2435, 0
  %2464 = vmatprep.subr.bf16.mxu0 0
  %2465 = vmatpush1.bf16.msra.mxu0 %v2457
  %2466 = vmatprep.subr.bf16.mxu0 0
  %2467 = vmatpush1.bf16.msra.mxu0 %v2458
  %2468 = vmatprep.subr.bf16.mxu0 0
  %2469 = vmatpush1.bf16.msra.mxu0 0
  %2470 = vmatprep.subr.bf16.mxu0 0
  %2471 = vmatpush1.bf16.msra.mxu0 0
  %2472 = vmatprep.subr.bf16.mxu0 0
  %2473 = vmatpush1.bf16.msra.mxu0 0
  %2474 = vmatprep.subr.bf16.mxu0 0
  %2475 = vmatpush1.bf16.msra.mxu0 0
  %2476 = vmatprep.subr.bf16.mxu0 0
  %2477 = vmatpush1.bf16.msra.mxu0 0
  %2478 = vmatprep.subr.bf16.mxu0 0
  %2479 = vmatpush1.bf16.msra.mxu0 0
  %2480 = vmatprep.subr.bf16.mxu0 0
  %2481 = vmatpush1.bf16.msra.mxu0 0
  %2482 = vmatprep.subr.bf16.mxu0 0
  %2483 = vmatpush1.bf16.msra.mxu0 0
  %2484 = vmatprep.subr.bf16.mxu0 0
  %2485 = vmatpush1.bf16.msra.mxu0 0
  %2486 = vmatprep.subr.bf16.mxu0 0
  %2487 = vmatpush1.bf16.msra.mxu0 0
  %2488 = vmatprep.subr.bf16.mxu0 0
  %2489 = vmatpush1.bf16.msra.mxu0 0
  %2490 = vmatprep.subr.bf16.mxu0 0
  %2491 = vmatpush1.bf16.msra.mxu0 0
  %2492 = vmatprep.subr.bf16.mxu0 0
  %2493 = vmatpush1.bf16.msra.mxu0 0
  %2494 = vmatprep.subr.bf16.mxu0 0
  %2495 = vmatpush1.bf16.msra.mxu0 0
  %2496 = vmatprep.mubr.bf16.mxu0 0
  %2497 = vmatmul.mubr.bf16.gmra.mrb[0].mxu0 %v2462
  %v2498 = vpop.f32.mrb[0].mxu0
  %v2499 = vadd.f32 %v2447, %v2498
  %v2500 = vpop.f32.mrb[0].mxu0
  %v2501 = vpop.f32.mrb[0].mxu0
  %v2502 = vadd.f32 %v2447, %v2501
  %v2503 = vpop.f32.mrb[0].mxu0
  %2504 = vdwg.mxu0
  %s2505 = scalar_lea.vmem %s5, 64
  %v2506 = vld [vmem:[%s2505] sm:$0xf]
  %v2507 = vld [vmem:[%s2505 + $0x4] sm:$0xf]
  %v2508 = vld [vmem:[%s2505 + $0x8] sm:$0xf]
  %v2509 = vld [vmem:[%s2505 + $0xc] sm:$0xf]
  %s2510 = scalar_lea.vmem %s8, 4
  %v2511 = vld [vmem:[%s2510] sm:$0x1]
  %v2513 = vlaneseq
  %v2514 = vshrl.u32 %v2513, 7
  %v2515 = vsub.s32 0, %v2514
  %v2516 = vrot.slane %v2511, %v2515
  %v2522 = vunpack.c.l.b16 %v2506
  %v2523 = vunpack.c.l.b16 %v2507
  %v2524 = vunpack.c.l.b16 %v2508
  %v2525 = vunpack.c.l.b16 %v2509
  %v2526 = vpack.c.b16 %v2523, %v2522
  %v2527 = vpack.c.b16 %v2525, %v2524
  %2530 = vmatprep.subr.bf16.mxu0 0
  %2531 = vmatpush1.bf16.msra.mxu0 %v2526
  %2532 = vmatprep.subr.bf16.mxu0 0
  %2533 = vmatpush1.bf16.msra.mxu0 %v2527
  %2534 = vmatprep.subr.bf16.mxu0 0
  %2535 = vmatpush1.bf16.msra.mxu0 0
  %2536 = vmatprep.subr.bf16.mxu0 0
  %2537 = vmatpush1.bf16.msra.mxu0 0
  %2538 = vmatprep.subr.bf16.mxu0 0
  %2539 = vmatpush1.bf16.msra.mxu0 0
  %2540 = vmatprep.subr.bf16.mxu0 0
  %2541 = vmatpush1.bf16.msra.mxu0 0
  %2542 = vmatprep.subr.bf16.mxu0 0
  %2543 = vmatpush1.bf16.msra.mxu0 0
  %2544 = vmatprep.subr.bf16.mxu0 0
  %2545 = vmatpush1.bf16.msra.mxu0 0
  %2546 = vmatprep.subr.bf16.mxu0 0
  %2547 = vmatpush1.bf16.msra.mxu0 0
  %2548 = vmatprep.subr.bf16.mxu0 0
  %2549 = vmatpush1.bf16.msra.mxu0 0
  %2550 = vmatprep.subr.bf16.mxu0 0
  %2551 = vmatpush1.bf16.msra.mxu0 0
  %2552 = vmatprep.subr.bf16.mxu0 0
  %2553 = vmatpush1.bf16.msra.mxu0 0
  %2554 = vmatprep.subr.bf16.mxu0 0
  %2555 = vmatpush1.bf16.msra.mxu0 0
  %2556 = vmatprep.subr.bf16.mxu0 0
  %2557 = vmatpush1.bf16.msra.mxu0 0
  %2558 = vmatprep.subr.bf16.mxu0 0
  %2559 = vmatpush1.bf16.msra.mxu0 0
  %2560 = vmatprep.subr.bf16.mxu0 0
  %2561 = vmatpush1.bf16.msra.mxu0 0
  %2562 = vmatprep.mubr.bf16.mxu0 0
  %2563 = vmatmul.mubr.bf16.gmra.mrb[0].mxu0 %v2462
  %v2564 = vpop.f32.mrb[0].mxu0
  %v2565 = vadd.f32 %v2516, %v2564
  %v2566 = vpop.f32.mrb[0].mxu0
  %v2567 = vpop.f32.mrb[0].mxu0
  %v2568 = vadd.f32 %v2516, %v2567
  %v2569 = vpop.f32.mrb[0].mxu0
  %2570 = vdwg.mxu0
  %s2571 = scalar_lea.vmem %s6, 64
  %v2572 = vld [vmem:[%s2571] sm:$0xf]
  %v2573 = vld [vmem:[%s2571 + $0x4] sm:$0xf]
  %v2574 = vld [vmem:[%s2571 + $0x8] sm:$0xf]
  %v2575 = vld [vmem:[%s2571 + $0xc] sm:$0xf]
  %s2576 = scalar_lea.vmem %s9, 4
  %v2577 = vld [vmem:[%s2576] sm:$0x1]
  %v2579 = vlaneseq
  %v2580 = vshrl.u32 %v2579, 7
  %v2581 = vsub.s32 0, %v2580
  %v2582 = vrot.slane %v2577, %v2581
  %v2588 = vunpack.c.l.b16 %v2572
  %v2589 = vunpack.c.l.b16 %v2573
  %v2590 = vunpack.c.l.b16 %v2574
  %v2591 = vunpack.c.l.b16 %v2575
  %v2592 = vpack.c.b16 %v2589, %v2588
  %v2593 = vpack.c.b16 %v2591, %v2590
  %2596 = vmatprep.subr.bf16.mxu0 0
  %2597 = vmatpush1.bf16.msra.mxu0 %v2592
  %2598 = vmatprep.subr.bf16.mxu0 0
  %2599 = vmatpush1.bf16.msra.mxu0 %v2593
  %2600 = vmatprep.subr.bf16.mxu0 0
  %2601 = vmatpush1.bf16.msra.mxu0 0
  %2602 = vmatprep.subr.bf16.mxu0 0
  %2603 = vmatpush1.bf16.msra.mxu0 0
  %2604 = vmatprep.subr.bf16.mxu0 0
  %2605 = vmatpush1.bf16.msra.mxu0 0
  %2606 = vmatprep.subr.bf16.mxu0 0
  %2607 = vmatpush1.bf16.msra.mxu0 0
  %2608 = vmatprep.subr.bf16.mxu0 0
  %2609 = vmatpush1.bf16.msra.mxu0 0
  %2610 = vmatprep.subr.bf16.mxu0 0
  %2611 = vmatpush1.bf16.msra.mxu0 0
  %2612 = vmatprep.subr.bf16.mxu0 0
  %2613 = vmatpush1.bf16.msra.mxu0 0
  %2614 = vmatprep.subr.bf16.mxu0 0
  %2615 = vmatpush1.bf16.msra.mxu0 0
  %2616 = vmatprep.subr.bf16.mxu0 0
  %2617 = vmatpush1.bf16.msra.mxu0 0
  %2618 = vmatprep.subr.bf16.mxu0 0
  %2619 = vmatpush1.bf16.msra.mxu0 0
  %2620 = vmatprep.subr.bf16.mxu0 0
  %2621 = vmatpush1.bf16.msra.mxu0 0
  %2622 = vmatprep.subr.bf16.mxu0 0
  %2623 = vmatpush1.bf16.msra.mxu0 0
  %2624 = vmatprep.subr.bf16.mxu0 0
  %2625 = vmatpush1.bf16.msra.mxu0 0
  %2626 = vmatprep.subr.bf16.mxu0 0
  %2627 = vmatpush1.bf16.msra.mxu0 0
  %2628 = vmatprep.mubr.bf16.mxu0 0
  %2629 = vmatmul.mubr.bf16.gmra.mrb[0].mxu0 %v2462
  %v2630 = vpop.f32.mrb[0].mxu0
  %v2631 = vadd.f32 %v2582, %v2630
  %v2632 = vpop.f32.mrb[0].mxu0
  %v2633 = vpop.f32.mrb[0].mxu0
  %v2634 = vadd.f32 %v2582, %v2633
  %v2635 = vpop.f32.mrb[0].mxu0
  %2636 = vdwg.mxu0
  %v2637 = vpack.c.bf16 %v2499, %v2499
  %v2638 = vpack.c.bf16 %v2502, %v2502
  %v2639 = vpack.c.bf16 %v2565, %v2565
  %v2640 = vpack.c.bf16 %v2568, %v2568
  %v2642 = vsel %vm299, %v2637, 0
  %v2645 = vsel %vm299, %v2639, 0
  %2647 = vmatprep.subr.bf16.mxu0 0
  %2648 = vmatpush1.bf16.xpose.msra.mxu0 %v2645
  %2649 = vmatprep.subr.bf16.mxu0 0
  %2650 = vmatpush1.bf16.xpose.msra.mxu0 0
  %2651 = vmatprep.subr.bf16.mxu0 0
  %2652 = vmatpush1.bf16.xpose.msra.mxu0 0
  %2653 = vmatprep.subr.bf16.mxu0 0
  %2654 = vmatpush1.bf16.xpose.msra.mxu0 0
  %2655 = vmatprep.subr.bf16.mxu0 0
  %2656 = vmatpush1.bf16.xpose.msra.mxu0 0
  %2657 = vmatprep.subr.bf16.mxu0 0
  %2658 = vmatpush1.bf16.xpose.msra.mxu0 0
  %2659 = vmatprep.subr.bf16.mxu0 0
  %2660 = vmatpush1.bf16.xpose.msra.mxu0 0
  %2661 = vmatprep.subr.bf16.mxu0 0
  %2662 = vmatpush1.bf16.xpose.msra.mxu0 0
  %2663 = vmatprep.subr.bf16.mxu0 0
  %2664 = vmatpush1.bf16.xpose.msra.mxu0 0
  %2665 = vmatprep.subr.bf16.mxu0 0
  %2666 = vmatpush1.bf16.xpose.msra.mxu0 0
  %2667 = vmatprep.subr.bf16.mxu0 0
  %2668 = vmatpush1.bf16.xpose.msra.mxu0 0
  %2669 = vmatprep.subr.bf16.mxu0 0
  %2670 = vmatpush1.bf16.xpose.msra.mxu0 0
  %2671 = vmatprep.subr.bf16.mxu0 0
  %2672 = vmatpush1.bf16.xpose.msra.mxu0 0
  %2673 = vmatprep.subr.bf16.mxu0 0
  %2674 = vmatpush1.bf16.xpose.msra.mxu0 0
  %2675 = vmatprep.subr.bf16.mxu0 0
  %2676 = vmatpush1.bf16.xpose.msra.mxu0 0
  %2677 = vmatprep.subr.bf16.mxu0 0
  %2678 = vmatpush1.bf16.xpose.msra.mxu0 0
  %2679 = vmatprep.mubr.bf16.mxu0 0
  %2680 = vmatmul.mubr.bf16.gmra.mrb[0].mxu0 %v2642
  %v2681 = vpop.f32.mrb[0].mxu0
  %v2682 = vadd.f32 %v94, %v2681
  %v2683 = vpop.f32.mrb[0].mxu0
  %v2684 = vpop.f32.mrb[0].mxu0
  %v2685 = vpop.f32.mrb[0].mxu0
  %2686 = vdwg.mxu0
  %v2688 = vsel %vm299, %v2638, 0
  %v2691 = vsel %vm299, %v2640, 0
  %2693 = vmatprep.subr.bf16.mxu0 0
  %2694 = vmatpush1.bf16.xpose.msra.mxu0 %v2691
  %2695 = vmatprep.subr.bf16.mxu0 0
  %2696 = vmatpush1.bf16.xpose.msra.mxu0 0
  %2697 = vmatprep.subr.bf16.mxu0 0
  %2698 = vmatpush1.bf16.xpose.msra.mxu0 0
  %2699 = vmatprep.subr.bf16.mxu0 0
  %2700 = vmatpush1.bf16.xpose.msra.mxu0 0
  %2701 = vmatprep.subr.bf16.mxu0 0
  %2702 = vmatpush1.bf16.xpose.msra.mxu0 0
  %2703 = vmatprep.subr.bf16.mxu0 0
  %2704 = vmatpush1.bf16.xpose.msra.mxu0 0
  %2705 = vmatprep.subr.bf16.mxu0 0
  %2706 = vmatpush1.bf16.xpose.msra.mxu0 0
  %2707 = vmatprep.subr.bf16.mxu0 0
  %2708 = vmatpush1.bf16.xpose.msra.mxu0 0
  %2709 = vmatprep.subr.bf16.mxu0 0
  %2710 = vmatpush1.bf16.xpose.msra.mxu0 0
  %2711 = vmatprep.subr.bf16.mxu0 0
  %2712 = vmatpush1.bf16.xpose.msra.mxu0 0
  %2713 = vmatprep.subr.bf16.mxu0 0
  %2714 = vmatpush1.bf16.xpose.msra.mxu0 0
  %2715 = vmatprep.subr.bf16.mxu0 0
  %2716 = vmatpush1.bf16.xpose.msra.mxu0 0
  %2717 = vmatprep.subr.bf16.mxu0 0
  %2718 = vmatpush1.bf16.xpose.msra.mxu0 0
  %2719 = vmatprep.subr.bf16.mxu0 0
  %2720 = vmatpush1.bf16.xpose.msra.mxu0 0
  %2721 = vmatprep.subr.bf16.mxu0 0
  %2722 = vmatpush1.bf16.xpose.msra.mxu0 0
  %2723 = vmatprep.subr.bf16.mxu0 0
  %2724 = vmatpush1.bf16.xpose.msra.mxu0 0
  %2725 = vmatprep.mubr.bf16.mxu0 0
  %2726 = vmatmul.mubr.bf16.gmra.mrb[0].mxu0 %v2688
  %v2727 = vpop.f32.mrb[0].mxu0
  %v2728 = vadd.f32 %v95, %v2727
  %v2729 = vpop.f32.mrb[0].mxu0
  %v2730 = vpop.f32.mrb[0].mxu0
  %v2731 = vpop.f32.mrb[0].mxu0
  %2732 = vdwg.mxu0
  %v2733 = vsel %vm299, %v2682, -inf
  %2734 = vmax.xlane.f32.xlu0 %v2733
  %v2735 = vpop.xlane.xlu0 %2734
  %v2736 = vsel %vm299, %v2728, -inf
  %2737 = vmax.xlane.f32.xlu0 %v2736
  %v2738 = vpop.xlane.xlu0 %2737
  %v2739 = vsub.f32 %v2682, %v2735
  %v2740 = vsub.f32 %v2728, %v2738
  %v2741 = vmul.f32 %v2739, 1.442695
  %v2742 = vpow.pop %v2741
  %v2743 = vmul.f32 %v2740, 1.442695
  %v2744 = vpow.pop %v2743
  %v2745 = vsel %vm299, %v2742, 0.0
  %2746 = vadd.xlane.f32.xlu0 %v2745
  %v2747 = vpop.xlane.xlu0 %2746
  %v2748 = vsel %vm299, %v2744, 0.0
  %2749 = vadd.xlane.f32.xlu0 %v2748
  %v2750 = vpop.xlane.xlu0 %2749
  %v2751 = vrcp.pop %v2747
  %v2752 = vrcp.pop %v2750
  %v2753 = vmul.f32 %v2742, %v2751
  %v2754 = vmul.f32 %v2744, %v2752
  %v2755 = vpack.c.bf16 %v2753, %v2753
  %v2756 = vpack.c.bf16 %v2754, %v2754
  %v2757 = vpack.c.bf16 %v2631, %v2631
  %v2758 = vpack.c.bf16 %v2634, %v2634
  %v2760 = vsel %vm299, %v2755, 0
  %v2763 = vsel %vm421, %v2757, 0
  %2765 = vmatprep.subr.bf16.mxu0 0
  %2766 = vmatpush1.bf16.msra.mxu0 %v2763
  %2767 = vmatprep.subr.bf16.mxu0 0
  %2768 = vmatpush1.bf16.msra.mxu0 0
  %2769 = vmatprep.subr.bf16.mxu0 0
  %2770 = vmatpush1.bf16.msra.mxu0 0
  %2771 = vmatprep.subr.bf16.mxu0 0
  %2772 = vmatpush1.bf16.msra.mxu0 0
  %2773 = vmatprep.subr.bf16.mxu0 0
  %2774 = vmatpush1.bf16.msra.mxu0 0
  %2775 = vmatprep.subr.bf16.mxu0 0
  %2776 = vmatpush1.bf16.msra.mxu0 0
  %2777 = vmatprep.subr.bf16.mxu0 0
  %2778 = vmatpush1.bf16.msra.mxu0 0
  %2779 = vmatprep.subr.bf16.mxu0 0
  %2780 = vmatpush1.bf16.msra.mxu0 0
  %2781 = vmatprep.subr.bf16.mxu0 0
  %2782 = vmatpush1.bf16.msra.mxu0 0
  %2783 = vmatprep.subr.bf16.mxu0 0
  %2784 = vmatpush1.bf16.msra.mxu0 0
  %2785 = vmatprep.subr.bf16.mxu0 0
  %2786 = vmatpush1.bf16.msra.mxu0 0
  %2787 = vmatprep.subr.bf16.mxu0 0
  %2788 = vmatpush1.bf16.msra.mxu0 0
  %2789 = vmatprep.subr.bf16.mxu0 0
  %2790 = vmatpush1.bf16.msra.mxu0 0
  %2791 = vmatprep.subr.bf16.mxu0 0
  %2792 = vmatpush1.bf16.msra.mxu0 0
  %2793 = vmatprep.subr.bf16.mxu0 0
  %2794 = vmatpush1.bf16.msra.mxu0 0
  %2795 = vmatprep.subr.bf16.mxu0 0
  %2796 = vmatpush1.bf16.msra.mxu0 0
  %2797 = vmatprep.mubr.bf16.mxu0 0
  %2798 = vmatmul.mubr.bf16.gmra.mrb[0].mxu0 %v2760
  %v2799 = vpop.f32.mrb[0].mxu0
  %v2800 = vadd.f32 0.0, %v2799
  %v2801 = vpop.f32.mrb[0].mxu0
  %v2802 = vpop.f32.mrb[0].mxu0
  %v2803 = vpop.f32.mrb[0].mxu0
  %2804 = vdwg.mxu0
  %v2806 = vsel %vm299, %v2756, 0
  %v2809 = vsel %vm421, %v2758, 0
  %2811 = vmatprep.subr.bf16.mxu0 0
  %2812 = vmatpush1.bf16.msra.mxu0 %v2809
  %2813 = vmatprep.subr.bf16.mxu0 0
  %2814 = vmatpush1.bf16.msra.mxu0 0
  %2815 = vmatprep.subr.bf16.mxu0 0
  %2816 = vmatpush1.bf16.msra.mxu0 0
  %2817 = vmatprep.subr.bf16.mxu0 0
  %2818 = vmatpush1.bf16.msra.mxu0 0
  %2819 = vmatprep.subr.bf16.mxu0 0
  %2820 = vmatpush1.bf16.msra.mxu0 0
  %2821 = vmatprep.subr.bf16.mxu0 0
  %2822 = vmatpush1.bf16.msra.mxu0 0
  %2823 = vmatprep.subr.bf16.mxu0 0
  %2824 = vmatpush1.bf16.msra.mxu0 0
  %2825 = vmatprep.subr.bf16.mxu0 0
  %2826 = vmatpush1.bf16.msra.mxu0 0
  %2827 = vmatprep.subr.bf16.mxu0 0
  %2828 = vmatpush1.bf16.msra.mxu0 0
  %2829 = vmatprep.subr.bf16.mxu0 0
  %2830 = vmatpush1.bf16.msra.mxu0 0
  %2831 = vmatprep.subr.bf16.mxu0 0
  %2832 = vmatpush1.bf16.msra.mxu0 0
  %2833 = vmatprep.subr.bf16.mxu0 0
  %2834 = vmatpush1.bf16.msra.mxu0 0
  %2835 = vmatprep.subr.bf16.mxu0 0
  %2836 = vmatpush1.bf16.msra.mxu0 0
  %2837 = vmatprep.subr.bf16.mxu0 0
  %2838 = vmatpush1.bf16.msra.mxu0 0
  %2839 = vmatprep.subr.bf16.mxu0 0
  %2840 = vmatpush1.bf16.msra.mxu0 0
  %2841 = vmatprep.subr.bf16.mxu0 0
  %2842 = vmatpush1.bf16.msra.mxu0 0
  %2843 = vmatprep.mubr.bf16.mxu0 0
  %2844 = vmatmul.mubr.bf16.gmra.mrb[0].mxu0 %v2806
  %v2845 = vpop.f32.mrb[0].mxu0
  %v2846 = vadd.f32 0.0, %v2845
  %v2847 = vpop.f32.mrb[0].mxu0
  %v2848 = vpop.f32.mrb[0].mxu0
  %v2849 = vpop.f32.mrb[0].mxu0
  %2850 = vdwg.mxu0
  %v2851 = vpack.c.bf16 %v2846, %v2800
  %s2852 = scalar_lea.vmem %s10, 16
  %v2853 = vld [vmem:[%s2852] sm:$0xf]
  %s2854 = scalar_lea.vmem %s4, 80
  %v2855 = vld [vmem:[%s2854] sm:$0xf]
  %v2856 = vld [vmem:[%s2854 + $0x4] sm:$0xf]
  %v2857 = vld [vmem:[%s2854 + $0x8] sm:$0xf]
  %v2858 = vld [vmem:[%s2854 + $0xc] sm:$0xf]
  %s2859 = scalar_lea.vmem %s7, 5
  %v2860 = vld [vmem:[%s2859] sm:$0x1]
  %v2862 = vlaneseq
  %v2863 = vshrl.u32 %v2862, 7
  %v2864 = vsub.s32 0, %v2863
  %v2865 = vrot.slane %v2860, %v2864
  %v2871 = vunpack.c.l.b16 %v2855
  %v2872 = vunpack.c.l.b16 %v2856
  %v2873 = vunpack.c.l.b16 %v2857
  %v2874 = vunpack.c.l.b16 %v2858
  %v2875 = vpack.c.b16 %v2872, %v2871
  %v2876 = vpack.c.b16 %v2874, %v2873
  %2879 = vmatprep.subr.bf16.mxu0 0
  %2880 = vmatpush1.bf16.msra.mxu0 %v2875
  %2881 = vmatprep.subr.bf16.mxu0 0
  %2882 = vmatpush1.bf16.msra.mxu0 %v2876
  %2883 = vmatprep.subr.bf16.mxu0 0
  %2884 = vmatpush1.bf16.msra.mxu0 0
  %2885 = vmatprep.subr.bf16.mxu0 0
  %2886 = vmatpush1.bf16.msra.mxu0 0
  %2887 = vmatprep.subr.bf16.mxu0 0
  %2888 = vmatpush1.bf16.msra.mxu0 0
  %2889 = vmatprep.subr.bf16.mxu0 0
  %2890 = vmatpush1.bf16.msra.mxu0 0
  %2891 = vmatprep.subr.bf16.mxu0 0
  %2892 = vmatpush1.bf16.msra.mxu0 0
  %2893 = vmatprep.subr.bf16.mxu0 0
  %2894 = vmatpush1.bf16.msra.mxu0 0
  %2895 = vmatprep.subr.bf16.mxu0 0
  %2896 = vmatpush1.bf16.msra.mxu0 0
  %2897 = vmatprep.subr.bf16.mxu0 0
  %2898 = vmatpush1.bf16.msra.mxu0 0
  %2899 = vmatprep.subr.bf16.mxu0 0
  %2900 = vmatpush1.bf16.msra.mxu0 0
  %2901 = vmatprep.subr.bf16.mxu0 0
  %2902 = vmatpush1.bf16.msra.mxu0 0
  %2903 = vmatprep.subr.bf16.mxu0 0
  %2904 = vmatpush1.bf16.msra.mxu0 0
  %2905 = vmatprep.subr.bf16.mxu0 0
  %2906 = vmatpush1.bf16.msra.mxu0 0
  %2907 = vmatprep.subr.bf16.mxu0 0
  %2908 = vmatpush1.bf16.msra.mxu0 0
  %2909 = vmatprep.subr.bf16.mxu0 0
  %2910 = vmatpush1.bf16.msra.mxu0 0
  %2911 = vmatprep.mubr.bf16.mxu0 0
  %2912 = vmatmul.mubr.bf16.gmra.mrb[0].mxu0 %v2462
  %v2913 = vpop.f32.mrb[0].mxu0
  %v2914 = vadd.f32 %v2865, %v2913
  %v2915 = vpop.f32.mrb[0].mxu0
  %v2916 = vpop.f32.mrb[0].mxu0
  %v2917 = vadd.f32 %v2865, %v2916
  %v2918 = vpop.f32.mrb[0].mxu0
  %2919 = vdwg.mxu0
  %s2920 = scalar_lea.vmem %s5, 80
  %v2921 = vld [vmem:[%s2920] sm:$0xf]
  %v2922 = vld [vmem:[%s2920 + $0x4] sm:$0xf]
  %v2923 = vld [vmem:[%s2920 + $0x8] sm:$0xf]
  %v2924 = vld [vmem:[%s2920 + $0xc] sm:$0xf]
  %s2925 = scalar_lea.vmem %s8, 5
  %v2926 = vld [vmem:[%s2925] sm:$0x1]
  %v2928 = vlaneseq
  %v2929 = vshrl.u32 %v2928, 7
  %v2930 = vsub.s32 0, %v2929
  %v2931 = vrot.slane %v2926, %v2930
  %v2937 = vunpack.c.l.b16 %v2921
  %v2938 = vunpack.c.l.b16 %v2922
  %v2939 = vunpack.c.l.b16 %v2923
  %v2940 = vunpack.c.l.b16 %v2924
  %v2941 = vpack.c.b16 %v2938, %v2937
  %v2942 = vpack.c.b16 %v2940, %v2939
  %2945 = vmatprep.subr.bf16.mxu0 0
  %2946 = vmatpush1.bf16.msra.mxu0 %v2941
  %2947 = vmatprep.subr.bf16.mxu0 0
  %2948 = vmatpush1.bf16.msra.mxu0 %v2942
  %2949 = vmatprep.subr.bf16.mxu0 0
  %2950 = vmatpush1.bf16.msra.mxu0 0
  %2951 = vmatprep.subr.bf16.mxu0 0
  %2952 = vmatpush1.bf16.msra.mxu0 0
  %2953 = vmatprep.subr.bf16.mxu0 0
  %2954 = vmatpush1.bf16.msra.mxu0 0
  %2955 = vmatprep.subr.bf16.mxu0 0
  %2956 = vmatpush1.bf16.msra.mxu0 0
  %2957 = vmatprep.subr.bf16.mxu0 0
  %2958 = vmatpush1.bf16.msra.mxu0 0
  %2959 = vmatprep.subr.bf16.mxu0 0
  %2960 = vmatpush1.bf16.msra.mxu0 0
  %2961 = vmatprep.subr.bf16.mxu0 0
  %2962 = vmatpush1.bf16.msra.mxu0 0
  %2963 = vmatprep.subr.bf16.mxu0 0
  %2964 = vmatpush1.bf16.msra.mxu0 0
  %2965 = vmatprep.subr.bf16.mxu0 0
  %2966 = vmatpush1.bf16.msra.mxu0 0
  %2967 = vmatprep.subr.bf16.mxu0 0
  %2968 = vmatpush1.bf16.msra.mxu0 0
  %2969 = vmatprep.subr.bf16.mxu0 0
  %2970 = vmatpush1.bf16.msra.mxu0 0
  %2971 = vmatprep.subr.bf16.mxu0 0
  %2972 = vmatpush1.bf16.msra.mxu0 0
  %2973 = vmatprep.subr.bf16.mxu0 0
  %2974 = vmatpush1.bf16.msra.mxu0 0
  %2975 = vmatprep.subr.bf16.mxu0 0
  %2976 = vmatpush1.bf16.msra.mxu0 0
  %2977 = vmatprep.mubr.bf16.mxu0 0
  %2978 = vmatmul.mubr.bf16.gmra.mrb[0].mxu0 %v2462
  %v2979 = vpop.f32.mrb[0].mxu0
  %v2980 = vadd.f32 %v2931, %v2979
  %v2981 = vpop.f32.mrb[0].mxu0
  %v2982 = vpop.f32.mrb[0].mxu0
  %v2983 = vadd.f32 %v2931, %v2982
  %v2984 = vpop.f32.mrb[0].mxu0
  %2985 = vdwg.mxu0
  %s2986 = scalar_lea.vmem %s6, 80
  %v2987 = vld [vmem:[%s2986] sm:$0xf]
  %v2988 = vld [vmem:[%s2986 + $0x4] sm:$0xf]
  %v2989 = vld [vmem:[%s2986 + $0x8] sm:$0xf]
  %v2990 = vld [vmem:[%s2986 + $0xc] sm:$0xf]
  %s2991 = scalar_lea.vmem %s9, 5
  %v2992 = vld [vmem:[%s2991] sm:$0x1]
  %v2994 = vlaneseq
  %v2995 = vshrl.u32 %v2994, 7
  %v2996 = vsub.s32 0, %v2995
  %v2997 = vrot.slane %v2992, %v2996
  %v3003 = vunpack.c.l.b16 %v2987
  %v3004 = vunpack.c.l.b16 %v2988
  %v3005 = vunpack.c.l.b16 %v2989
  %v3006 = vunpack.c.l.b16 %v2990
  %v3007 = vpack.c.b16 %v3004, %v3003
  %v3008 = vpack.c.b16 %v3006, %v3005
  %3011 = vmatprep.subr.bf16.mxu0 0
  %3012 = vmatpush1.bf16.msra.mxu0 %v3007
  %3013 = vmatprep.subr.bf16.mxu0 0
  %3014 = vmatpush1.bf16.msra.mxu0 %v3008
  %3015 = vmatprep.subr.bf16.mxu0 0
  %3016 = vmatpush1.bf16.msra.mxu0 0
  %3017 = vmatprep.subr.bf16.mxu0 0
  %3018 = vmatpush1.bf16.msra.mxu0 0
  %3019 = vmatprep.subr.bf16.mxu0 0
  %3020 = vmatpush1.bf16.msra.mxu0 0
  %3021 = vmatprep.subr.bf16.mxu0 0
  %3022 = vmatpush1.bf16.msra.mxu0 0
  %3023 = vmatprep.subr.bf16.mxu0 0
  %3024 = vmatpush1.bf16.msra.mxu0 0
  %3025 = vmatprep.subr.bf16.mxu0 0
  %3026 = vmatpush1.bf16.msra.mxu0 0
  %3027 = vmatprep.subr.bf16.mxu0 0
  %3028 = vmatpush1.bf16.msra.mxu0 0
  %3029 = vmatprep.subr.bf16.mxu0 0
  %3030 = vmatpush1.bf16.msra.mxu0 0
  %3031 = vmatprep.subr.bf16.mxu0 0
  %3032 = vmatpush1.bf16.msra.mxu0 0
  %3033 = vmatprep.subr.bf16.mxu0 0
  %3034 = vmatpush1.bf16.msra.mxu0 0
  %3035 = vmatprep.subr.bf16.mxu0 0
  %3036 = vmatpush1.bf16.msra.mxu0 0
  %3037 = vmatprep.subr.bf16.mxu0 0
  %3038 = vmatpush1.bf16.msra.mxu0 0
  %3039 = vmatprep.subr.bf16.mxu0 0
  %3040 = vmatpush1.bf16.msra.mxu0 0
  %3041 = vmatprep.subr.bf16.mxu0 0
  %3042 = vmatpush1.bf16.msra.mxu0 0
  %3043 = vmatprep.mubr.bf16.mxu0 0
  %3044 = vmatmul.mubr.bf16.gmra.mrb[0].mxu0 %v2462
  %v3045 = vpop.f32.mrb[0].mxu0
  %v3046 = vadd.f32 %v2997, %v3045
  %v3047 = vpop.f32.mrb[0].mxu0
  %v3048 = vpop.f32.mrb[0].mxu0
  %v3049 = vadd.f32 %v2997, %v3048
  %v3050 = vpop.f32.mrb[0].mxu0
  %3051 = vdwg.mxu0
  %v3052 = vpack.c.bf16 %v2914, %v2914
  %v3053 = vpack.c.bf16 %v2917, %v2917
  %v3054 = vpack.c.bf16 %v2980, %v2980
  %v3055 = vpack.c.bf16 %v2983, %v2983
  %v3057 = vsel %vm299, %v3052, 0
  %v3060 = vsel %vm299, %v3054, 0
  %3062 = vmatprep.subr.bf16.mxu0 0
  %3063 = vmatpush1.bf16.xpose.msra.mxu0 %v3060
  %3064 = vmatprep.subr.bf16.mxu0 0
  %3065 = vmatpush1.bf16.xpose.msra.mxu0 0
  %3066 = vmatprep.subr.bf16.mxu0 0
  %3067 = vmatpush1.bf16.xpose.msra.mxu0 0
  %3068 = vmatprep.subr.bf16.mxu0 0
  %3069 = vmatpush1.bf16.xpose.msra.mxu0 0
  %3070 = vmatprep.subr.bf16.mxu0 0
  %3071 = vmatpush1.bf16.xpose.msra.mxu0 0
  %3072 = vmatprep.subr.bf16.mxu0 0
  %3073 = vmatpush1.bf16.xpose.msra.mxu0 0
  %3074 = vmatprep.subr.bf16.mxu0 0
  %3075 = vmatpush1.bf16.xpose.msra.mxu0 0
  %3076 = vmatprep.subr.bf16.mxu0 0
  %3077 = vmatpush1.bf16.xpose.msra.mxu0 0
  %3078 = vmatprep.subr.bf16.mxu0 0
  %3079 = vmatpush1.bf16.xpose.msra.mxu0 0
  %3080 = vmatprep.subr.bf16.mxu0 0
  %3081 = vmatpush1.bf16.xpose.msra.mxu0 0
  %3082 = vmatprep.subr.bf16.mxu0 0
  %3083 = vmatpush1.bf16.xpose.msra.mxu0 0
  %3084 = vmatprep.subr.bf16.mxu0 0
  %3085 = vmatpush1.bf16.xpose.msra.mxu0 0
  %3086 = vmatprep.subr.bf16.mxu0 0
  %3087 = vmatpush1.bf16.xpose.msra.mxu0 0
  %3088 = vmatprep.subr.bf16.mxu0 0
  %3089 = vmatpush1.bf16.xpose.msra.mxu0 0
  %3090 = vmatprep.subr.bf16.mxu0 0
  %3091 = vmatpush1.bf16.xpose.msra.mxu0 0
  %3092 = vmatprep.subr.bf16.mxu0 0
  %3093 = vmatpush1.bf16.xpose.msra.mxu0 0
  %3094 = vmatprep.mubr.bf16.mxu0 0
  %3095 = vmatmul.mubr.bf16.gmra.mrb[0].mxu0 %v3057
  %v3096 = vpop.f32.mrb[0].mxu0
  %v3097 = vadd.f32 %v94, %v3096
  %v3098 = vpop.f32.mrb[0].mxu0
  %v3099 = vpop.f32.mrb[0].mxu0
  %v3100 = vpop.f32.mrb[0].mxu0
  %3101 = vdwg.mxu0
  %v3103 = vsel %vm299, %v3053, 0
  %v3106 = vsel %vm299, %v3055, 0
  %3108 = vmatprep.subr.bf16.mxu0 0
  %3109 = vmatpush1.bf16.xpose.msra.mxu0 %v3106
  %3110 = vmatprep.subr.bf16.mxu0 0
  %3111 = vmatpush1.bf16.xpose.msra.mxu0 0
  %3112 = vmatprep.subr.bf16.mxu0 0
  %3113 = vmatpush1.bf16.xpose.msra.mxu0 0
  %3114 = vmatprep.subr.bf16.mxu0 0
  %3115 = vmatpush1.bf16.xpose.msra.mxu0 0
  %3116 = vmatprep.subr.bf16.mxu0 0
  %3117 = vmatpush1.bf16.xpose.msra.mxu0 0
  %3118 = vmatprep.subr.bf16.mxu0 0
  %3119 = vmatpush1.bf16.xpose.msra.mxu0 0
  %3120 = vmatprep.subr.bf16.mxu0 0
  %3121 = vmatpush1.bf16.xpose.msra.mxu0 0
  %3122 = vmatprep.subr.bf16.mxu0 0
  %3123 = vmatpush1.bf16.xpose.msra.mxu0 0
  %3124 = vmatprep.subr.bf16.mxu0 0
  %3125 = vmatpush1.bf16.xpose.msra.mxu0 0
  %3126 = vmatprep.subr.bf16.mxu0 0
  %3127 = vmatpush1.bf16.xpose.msra.mxu0 0
  %3128 = vmatprep.subr.bf16.mxu0 0
  %3129 = vmatpush1.bf16.xpose.msra.mxu0 0
  %3130 = vmatprep.subr.bf16.mxu0 0
  %3131 = vmatpush1.bf16.xpose.msra.mxu0 0
  %3132 = vmatprep.subr.bf16.mxu0 0
  %3133 = vmatpush1.bf16.xpose.msra.mxu0 0
  %3134 = vmatprep.subr.bf16.mxu0 0
  %3135 = vmatpush1.bf16.xpose.msra.mxu0 0
  %3136 = vmatprep.subr.bf16.mxu0 0
  %3137 = vmatpush1.bf16.xpose.msra.mxu0 0
  %3138 = vmatprep.subr.bf16.mxu0 0
  %3139 = vmatpush1.bf16.xpose.msra.mxu0 0
  %3140 = vmatprep.mubr.bf16.mxu0 0
  %3141 = vmatmul.mubr.bf16.gmra.mrb[0].mxu0 %v3103
  %v3142 = vpop.f32.mrb[0].mxu0
  %v3143 = vadd.f32 %v95, %v3142
  %v3144 = vpop.f32.mrb[0].mxu0
  %v3145 = vpop.f32.mrb[0].mxu0
  %v3146 = vpop.f32.mrb[0].mxu0
  %3147 = vdwg.mxu0
  %v3148 = vsel %vm299, %v3097, -inf
  %3149 = vmax.xlane.f32.xlu0 %v3148
  %v3150 = vpop.xlane.xlu0 %3149
  %v3151 = vsel %vm299, %v3143, -inf
  %3152 = vmax.xlane.f32.xlu0 %v3151
  %v3153 = vpop.xlane.xlu0 %3152
  %v3154 = vsub.f32 %v3097, %v3150
  %v3155 = vsub.f32 %v3143, %v3153
  %v3156 = vmul.f32 %v3154, 1.442695
  %v3157 = vpow.pop %v3156
  %v3158 = vmul.f32 %v3155, 1.442695
  %v3159 = vpow.pop %v3158
  %v3160 = vsel %vm299, %v3157, 0.0
  %3161 = vadd.xlane.f32.xlu0 %v3160
  %v3162 = vpop.xlane.xlu0 %3161
  %v3163 = vsel %vm299, %v3159, 0.0
  %3164 = vadd.xlane.f32.xlu0 %v3163
  %v3165 = vpop.xlane.xlu0 %3164
  %v3166 = vrcp.pop %v3162
  %v3167 = vrcp.pop %v3165
  %v3168 = vmul.f32 %v3157, %v3166
  %v3169 = vmul.f32 %v3159, %v3167
  %v3170 = vpack.c.bf16 %v3168, %v3168
  %v3171 = vpack.c.bf16 %v3169, %v3169
  %v3172 = vpack.c.bf16 %v3046, %v3046
  %v3173 = vpack.c.bf16 %v3049, %v3049
  %v3175 = vsel %vm299, %v3170, 0
  %v3178 = vsel %vm421, %v3172, 0
  %3180 = vmatprep.subr.bf16.mxu0 0
  %3181 = vmatpush1.bf16.msra.mxu0 %v3178
  %3182 = vmatprep.subr.bf16.mxu0 0
  %3183 = vmatpush1.bf16.msra.mxu0 0
  %3184 = vmatprep.subr.bf16.mxu0 0
  %3185 = vmatpush1.bf16.msra.mxu0 0
  %3186 = vmatprep.subr.bf16.mxu0 0
  %3187 = vmatpush1.bf16.msra.mxu0 0
  %3188 = vmatprep.subr.bf16.mxu0 0
  %3189 = vmatpush1.bf16.msra.mxu0 0
  %3190 = vmatprep.subr.bf16.mxu0 0
  %3191 = vmatpush1.bf16.msra.mxu0 0
  %3192 = vmatprep.subr.bf16.mxu0 0
  %3193 = vmatpush1.bf16.msra.mxu0 0
  %3194 = vmatprep.subr.bf16.mxu0 0
  %3195 = vmatpush1.bf16.msra.mxu0 0
  %3196 = vmatprep.subr.bf16.mxu0 0
  %3197 = vmatpush1.bf16.msra.mxu0 0
  %3198 = vmatprep.subr.bf16.mxu0 0
  %3199 = vmatpush1.bf16.msra.mxu0 0
  %3200 = vmatprep.subr.bf16.mxu0 0
  %3201 = vmatpush1.bf16.msra.mxu0 0
  %3202 = vmatprep.subr.bf16.mxu0 0
  %3203 = vmatpush1.bf16.msra.mxu0 0
  %3204 = vmatprep.subr.bf16.mxu0 0
  %3205 = vmatpush1.bf16.msra.mxu0 0
  %3206 = vmatprep.subr.bf16.mxu0 0
  %3207 = vmatpush1.bf16.msra.mxu0 0
  %3208 = vmatprep.subr.bf16.mxu0 0
  %3209 = vmatpush1.bf16.msra.mxu0 0
  %3210 = vmatprep.subr.bf16.mxu0 0
  %3211 = vmatpush1.bf16.msra.mxu0 0
  %3212 = vmatprep.mubr.bf16.mxu0 0
  %3213 = vmatmul.mubr.bf16.gmra.mrb[0].mxu0 %v3175
  %v3214 = vpop.f32.mrb[0].mxu0
  %v3215 = vadd.f32 0.0, %v3214
  %v3216 = vpop.f32.mrb[0].mxu0
  %v3217 = vpop.f32.mrb[0].mxu0
  %v3218 = vpop.f32.mrb[0].mxu0
  %3219 = vdwg.mxu0
  %v3221 = vsel %vm299, %v3171, 0
  %v3224 = vsel %vm421, %v3173, 0
  %3226 = vmatprep.subr.bf16.mxu0 0
  %3227 = vmatpush1.bf16.msra.mxu0 %v3224
  %3228 = vmatprep.subr.bf16.mxu0 0
  %3229 = vmatpush1.bf16.msra.mxu0 0
  %3230 = vmatprep.subr.bf16.mxu0 0
  %3231 = vmatpush1.bf16.msra.mxu0 0
  %3232 = vmatprep.subr.bf16.mxu0 0
  %3233 = vmatpush1.bf16.msra.mxu0 0
  %3234 = vmatprep.subr.bf16.mxu0 0
  %3235 = vmatpush1.bf16.msra.mxu0 0
  %3236 = vmatprep.subr.bf16.mxu0 0
  %3237 = vmatpush1.bf16.msra.mxu0 0
  %3238 = vmatprep.subr.bf16.mxu0 0
  %3239 = vmatpush1.bf16.msra.mxu0 0
  %3240 = vmatprep.subr.bf16.mxu0 0
  %3241 = vmatpush1.bf16.msra.mxu0 0
  %3242 = vmatprep.subr.bf16.mxu0 0
  %3243 = vmatpush1.bf16.msra.mxu0 0
  %3244 = vmatprep.subr.bf16.mxu0 0
  %3245 = vmatpush1.bf16.msra.mxu0 0
  %3246 = vmatprep.subr.bf16.mxu0 0
  %3247 = vmatpush1.bf16.msra.mxu0 0
  %3248 = vmatprep.subr.bf16.mxu0 0
  %3249 = vmatpush1.bf16.msra.mxu0 0
  %3250 = vmatprep.subr.bf16.mxu0 0
  %3251 = vmatpush1.bf16.msra.mxu0 0
  %3252 = vmatprep.subr.bf16.mxu0 0
  %3253 = vmatpush1.bf16.msra.mxu0 0
  %3254 = vmatprep.subr.bf16.mxu0 0
  %3255 = vmatpush1.bf16.msra.mxu0 0
  %3256 = vmatprep.subr.bf16.mxu0 0
  %3257 = vmatpush1.bf16.msra.mxu0 0
  %3258 = vmatprep.mubr.bf16.mxu0 0
  %3259 = vmatmul.mubr.bf16.gmra.mrb[0].mxu0 %v3221
  %v3260 = vpop.f32.mrb[0].mxu0
  %v3261 = vadd.f32 0.0, %v3260
  %v3262 = vpop.f32.mrb[0].mxu0
  %v3263 = vpop.f32.mrb[0].mxu0
  %v3264 = vpop.f32.mrb[0].mxu0
  %3265 = vdwg.mxu0
  %v3266 = vpack.c.bf16 %v3261, %v3215
  %s3267 = scalar_lea.vmem %s10, 20
  %v3268 = vld [vmem:[%s3267] sm:$0xf]
  %v3270 = vsel %vm299, %v3266, 0
  %v3273 = vsel %vm421, %v3268, 0
  %3275 = vmatprep.subr.bf16.mxu0 0
  %3276 = vmatpush1.bf16.msra.mxu0 %v3273
  %3277 = vmatprep.subr.bf16.mxu0 0
  %3278 = vmatpush1.bf16.msra.mxu0 0
  %3279 = vmatprep.subr.bf16.mxu0 0
  %3280 = vmatpush1.bf16.msra.mxu0 0
  %3281 = vmatprep.subr.bf16.mxu0 0
  %3282 = vmatpush1.bf16.msra.mxu0 0
  %3283 = vmatprep.subr.bf16.mxu0 0
  %3284 = vmatpush1.bf16.msra.mxu0 0
  %3285 = vmatprep.subr.bf16.mxu0 0
  %3286 = vmatpush1.bf16.msra.mxu0 0
  %3287 = vmatprep.subr.bf16.mxu0 0
  %3288 = vmatpush1.bf16.msra.mxu0 0
  %3289 = vmatprep.subr.bf16.mxu0 0
  %3290 = vmatpush1.bf16.msra.mxu0 0
  %3291 = vmatprep.subr.bf16.mxu0 0
  %3292 = vmatpush1.bf16.msra.mxu0 0
  %3293 = vmatprep.subr.bf16.mxu0 0
  %3294 = vmatpush1.bf16.msra.mxu0 0
  %3295 = vmatprep.subr.bf16.mxu0 0
  %3296 = vmatpush1.bf16.msra.mxu0 0
  %3297 = vmatprep.subr.bf16.mxu0 0
  %3298 = vmatpush1.bf16.msra.mxu0 0
  %3299 = vmatprep.subr.bf16.mxu0 0
  %3300 = vmatpush1.bf16.msra.mxu0 0
  %3301 = vmatprep.subr.bf16.mxu0 0
  %3302 = vmatpush1.bf16.msra.mxu0 0
  %3303 = vmatprep.subr.bf16.mxu0 0
  %3304 = vmatpush1.bf16.msra.mxu0 0
  %3305 = vmatprep.subr.bf16.mxu0 0
  %3306 = vmatpush1.bf16.msra.mxu0 0
  %3307 = vmatprep.mubr.bf16.mxu0 0
  %3308 = vmatmul.mubr.bf16.gmra.mrb[0].mxu0 %v3270
  %v3309 = vpop.f32.mrb[0].mxu0
  %v3310 = vadd.f32 0.0, %v3309
  %v3311 = vpop.f32.mrb[0].mxu0
  %v3312 = vpop.f32.mrb[0].mxu0
  %v3313 = vadd.f32 0.0, %v3312
  %v3314 = vpop.f32.mrb[0].mxu0
  %3315 = vdwg.mxu0
  %v3317 = vsel %vm299, %v2851, 0
  %v3320 = vsel %vm421, %v2853, 0
  %3322 = vmatprep.subr.bf16.mxu0 0
  %3323 = vmatpush1.bf16.msra.mxu0 %v3320
  %3324 = vmatprep.subr.bf16.mxu0 0
  %3325 = vmatpush1.bf16.msra.mxu0 0
  %3326 = vmatprep.subr.bf16.mxu0 0
  %3327 = vmatpush1.bf16.msra.mxu0 0
  %3328 = vmatprep.subr.bf16.mxu0 0
  %3329 = vmatpush1.bf16.msra.mxu0 0
  %3330 = vmatprep.subr.bf16.mxu0 0
  %3331 = vmatpush1.bf16.msra.mxu0 0
  %3332 = vmatprep.subr.bf16.mxu0 0
  %3333 = vmatpush1.bf16.msra.mxu0 0
  %3334 = vmatprep.subr.bf16.mxu0 0
  %3335 = vmatpush1.bf16.msra.mxu0 0
  %3336 = vmatprep.subr.bf16.mxu0 0
  %3337 = vmatpush1.bf16.msra.mxu0 0
  %3338 = vmatprep.subr.bf16.mxu0 0
  %3339 = vmatpush1.bf16.msra.mxu0 0
  %3340 = vmatprep.subr.bf16.mxu0 0
  %3341 = vmatpush1.bf16.msra.mxu0 0
  %3342 = vmatprep.subr.bf16.mxu0 0
  %3343 = vmatpush1.bf16.msra.mxu0 0
  %3344 = vmatprep.subr.bf16.mxu0 0
  %3345 = vmatpush1.bf16.msra.mxu0 0
  %3346 = vmatprep.subr.bf16.mxu0 0
  %3347 = vmatpush1.bf16.msra.mxu0 0
  %3348 = vmatprep.subr.bf16.mxu0 0
  %3349 = vmatpush1.bf16.msra.mxu0 0
  %3350 = vmatprep.subr.bf16.mxu0 0
  %3351 = vmatpush1.bf16.msra.mxu0 0
  %3352 = vmatprep.subr.bf16.mxu0 0
  %3353 = vmatpush1.bf16.msra.mxu0 0
  %3354 = vmatprep.mubr.bf16.mxu0 0
  %3355 = vmatmul.mubr.bf16.gmra.mrb[0].mxu0 %v3317
  %v3356 = vpop.f32.mrb[0].mxu0
  %v3357 = vadd.f32 %v3310, %v3356
  %v3358 = vpop.f32.mrb[0].mxu0
  %v3359 = vpop.f32.mrb[0].mxu0
  %v3360 = vadd.f32 %v3313, %v3359
  %v3361 = vpop.f32.mrb[0].mxu0
  %3362 = vdwg.mxu0
  %s3363 = scalar_lea.vmem %s4, 96
  %v3364 = vld [vmem:[%s3363] sm:$0xf]
  %v3365 = vld [vmem:[%s3363 + $0x4] sm:$0xf]
  %v3366 = vld [vmem:[%s3363 + $0x8] sm:$0xf]
  %v3367 = vld [vmem:[%s3363 + $0xc] sm:$0xf]
  %s3368 = scalar_lea.vmem %s7, 6
  %v3369 = vld [vmem:[%s3368] sm:$0x1]
  %v3371 = vlaneseq
  %v3372 = vshrl.u32 %v3371, 7
  %v3373 = vsub.s32 0, %v3372
  %v3374 = vrot.slane %v3369, %v3373
  %v3380 = vunpack.c.l.b16 %v3364
  %v3381 = vunpack.c.l.b16 %v3365
  %v3382 = vunpack.c.l.b16 %v3366
  %v3383 = vunpack.c.l.b16 %v3367
  %v3384 = vpack.c.b16 %v3381, %v3380
  %v3385 = vpack.c.b16 %v3383, %v3382
  %3388 = vmatprep.subr.bf16.mxu0 0
  %3389 = vmatpush1.bf16.msra.mxu0 %v3384
  %3390 = vmatprep.subr.bf16.mxu0 0
  %3391 = vmatpush1.bf16.msra.mxu0 %v3385
  %3392 = vmatprep.subr.bf16.mxu0 0
  %3393 = vmatpush1.bf16.msra.mxu0 0
  %3394 = vmatprep.subr.bf16.mxu0 0
  %3395 = vmatpush1.bf16.msra.mxu0 0
  %3396 = vmatprep.subr.bf16.mxu0 0
  %3397 = vmatpush1.bf16.msra.mxu0 0
  %3398 = vmatprep.subr.bf16.mxu0 0
  %3399 = vmatpush1.bf16.msra.mxu0 0
  %3400 = vmatprep.subr.bf16.mxu0 0
  %3401 = vmatpush1.bf16.msra.mxu0 0
  %3402 = vmatprep.subr.bf16.mxu0 0
  %3403 = vmatpush1.bf16.msra.mxu0 0
  %3404 = vmatprep.subr.bf16.mxu0 0
  %3405 = vmatpush1.bf16.msra.mxu0 0
  %3406 = vmatprep.subr.bf16.mxu0 0
  %3407 = vmatpush1.bf16.msra.mxu0 0
  %3408 = vmatprep.subr.bf16.mxu0 0
  %3409 = vmatpush1.bf16.msra.mxu0 0
  %3410 = vmatprep.subr.bf16.mxu0 0
  %3411 = vmatpush1.bf16.msra.mxu0 0
  %3412 = vmatprep.subr.bf16.mxu0 0
  %3413 = vmatpush1.bf16.msra.mxu0 0
  %3414 = vmatprep.subr.bf16.mxu0 0
  %3415 = vmatpush1.bf16.msra.mxu0 0
  %3416 = vmatprep.subr.bf16.mxu0 0
  %3417 = vmatpush1.bf16.msra.mxu0 0
  %3418 = vmatprep.subr.bf16.mxu0 0
  %3419 = vmatpush1.bf16.msra.mxu0 0
  %3420 = vmatprep.mubr.bf16.mxu0 0
  %3421 = vmatmul.mubr.bf16.gmra.mrb[0].mxu0 %v2462
  %v3422 = vpop.f32.mrb[0].mxu0
  %v3423 = vadd.f32 %v3374, %v3422
  %v3424 = vpop.f32.mrb[0].mxu0
  %v3425 = vpop.f32.mrb[0].mxu0
  %v3426 = vadd.f32 %v3374, %v3425
  %v3427 = vpop.f32.mrb[0].mxu0
  %3428 = vdwg.mxu0
  %s3429 = scalar_lea.vmem %s5, 96
  %v3430 = vld [vmem:[%s3429] sm:$0xf]
  %v3431 = vld [vmem:[%s3429 + $0x4] sm:$0xf]
  %v3432 = vld [vmem:[%s3429 + $0x8] sm:$0xf]
  %v3433 = vld [vmem:[%s3429 + $0xc] sm:$0xf]
  %s3434 = scalar_lea.vmem %s8, 6
  %v3435 = vld [vmem:[%s3434] sm:$0x1]
  %v3437 = vlaneseq
  %v3438 = vshrl.u32 %v3437, 7
  %v3439 = vsub.s32 0, %v3438
  %v3440 = vrot.slane %v3435, %v3439
  %v3446 = vunpack.c.l.b16 %v3430
  %v3447 = vunpack.c.l.b16 %v3431
  %v3448 = vunpack.c.l.b16 %v3432
  %v3449 = vunpack.c.l.b16 %v3433
  %v3450 = vpack.c.b16 %v3447, %v3446
  %v3451 = vpack.c.b16 %v3449, %v3448
  %3454 = vmatprep.subr.bf16.mxu0 0
  %3455 = vmatpush1.bf16.msra.mxu0 %v3450
  %3456 = vmatprep.subr.bf16.mxu0 0
  %3457 = vmatpush1.bf16.msra.mxu0 %v3451
  %3458 = vmatprep.subr.bf16.mxu0 0
  %3459 = vmatpush1.bf16.msra.mxu0 0
  %3460 = vmatprep.subr.bf16.mxu0 0
  %3461 = vmatpush1.bf16.msra.mxu0 0
  %3462 = vmatprep.subr.bf16.mxu0 0
  %3463 = vmatpush1.bf16.msra.mxu0 0
  %3464 = vmatprep.subr.bf16.mxu0 0
  %3465 = vmatpush1.bf16.msra.mxu0 0
  %3466 = vmatprep.subr.bf16.mxu0 0
  %3467 = vmatpush1.bf16.msra.mxu0 0
  %3468 = vmatprep.subr.bf16.mxu0 0
  %3469 = vmatpush1.bf16.msra.mxu0 0
  %3470 = vmatprep.subr.bf16.mxu0 0
  %3471 = vmatpush1.bf16.msra.mxu0 0
  %3472 = vmatprep.subr.bf16.mxu0 0
  %3473 = vmatpush1.bf16.msra.mxu0 0
  %3474 = vmatprep.subr.bf16.mxu0 0
  %3475 = vmatpush1.bf16.msra.mxu0 0
  %3476 = vmatprep.subr.bf16.mxu0 0
  %3477 = vmatpush1.bf16.msra.mxu0 0
  %3478 = vmatprep.subr.bf16.mxu0 0
  %3479 = vmatpush1.bf16.msra.mxu0 0
  %3480 = vmatprep.subr.bf16.mxu0 0
  %3481 = vmatpush1.bf16.msra.mxu0 0
  %3482 = vmatprep.subr.bf16.mxu0 0
  %3483 = vmatpush1.bf16.msra.mxu0 0
  %3484 = vmatprep.subr.bf16.mxu0 0
  %3485 = vmatpush1.bf16.msra.mxu0 0
  %3486 = vmatprep.mubr.bf16.mxu0 0
  %3487 = vmatmul.mubr.bf16.gmra.mrb[0].mxu0 %v2462
  %v3488 = vpop.f32.mrb[0].mxu0
  %v3489 = vadd.f32 %v3440, %v3488
  %v3490 = vpop.f32.mrb[0].mxu0
  %v3491 = vpop.f32.mrb[0].mxu0
  %v3492 = vadd.f32 %v3440, %v3491
  %v3493 = vpop.f32.mrb[0].mxu0
  %3494 = vdwg.mxu0
  %s3495 = scalar_lea.vmem %s6, 96
  %v3496 = vld [vmem:[%s3495] sm:$0xf]
  %v3497 = vld [vmem:[%s3495 + $0x4] sm:$0xf]
  %v3498 = vld [vmem:[%s3495 + $0x8] sm:$0xf]
  %v3499 = vld [vmem:[%s3495 + $0xc] sm:$0xf]
  %s3500 = scalar_lea.vmem %s9, 6
  %v3501 = vld [vmem:[%s3500] sm:$0x1]
  %v3503 = vlaneseq
  %v3504 = vshrl.u32 %v3503, 7
  %v3505 = vsub.s32 0, %v3504
  %v3506 = vrot.slane %v3501, %v3505
  %v3512 = vunpack.c.l.b16 %v3496
  %v3513 = vunpack.c.l.b16 %v3497
  %v3514 = vunpack.c.l.b16 %v3498
  %v3515 = vunpack.c.l.b16 %v3499
  %v3516 = vpack.c.b16 %v3513, %v3512
  %v3517 = vpack.c.b16 %v3515, %v3514
  %3520 = vmatprep.subr.bf16.mxu0 0
  %3521 = vmatpush1.bf16.msra.mxu0 %v3516
  %3522 = vmatprep.subr.bf16.mxu0 0
  %3523 = vmatpush1.bf16.msra.mxu0 %v3517
  %3524 = vmatprep.subr.bf16.mxu0 0
  %3525 = vmatpush1.bf16.msra.mxu0 0
  %3526 = vmatprep.subr.bf16.mxu0 0
  %3527 = vmatpush1.bf16.msra.mxu0 0
  %3528 = vmatprep.subr.bf16.mxu0 0
  %3529 = vmatpush1.bf16.msra.mxu0 0
  %3530 = vmatprep.subr.bf16.mxu0 0
  %3531 = vmatpush1.bf16.msra.mxu0 0
  %3532 = vmatprep.subr.bf16.mxu0 0
  %3533 = vmatpush1.bf16.msra.mxu0 0
  %3534 = vmatprep.subr.bf16.mxu0 0
  %3535 = vmatpush1.bf16.msra.mxu0 0
  %3536 = vmatprep.subr.bf16.mxu0 0
  %3537 = vmatpush1.bf16.msra.mxu0 0
  %3538 = vmatprep.subr.bf16.mxu0 0
  %3539 = vmatpush1.bf16.msra.mxu0 0
  %3540 = vmatprep.subr.bf16.mxu0 0
  %3541 = vmatpush1.bf16.msra.mxu0 0
  %3542 = vmatprep.subr.bf16.mxu0 0
  %3543 = vmatpush1.bf16.msra.mxu0 0
  %3544 = vmatprep.subr.bf16.mxu0 0
  %3545 = vmatpush1.bf16.msra.mxu0 0
  %3546 = vmatprep.subr.bf16.mxu0 0
  %3547 = vmatpush1.bf16.msra.mxu0 0
  %3548 = vmatprep.subr.bf16.mxu0 0
  %3549 = vmatpush1.bf16.msra.mxu0 0
  %3550 = vmatprep.subr.bf16.mxu0 0
  %3551 = vmatpush1.bf16.msra.mxu0 0
  %3552 = vmatprep.mubr.bf16.mxu0 0
  %3553 = vmatmul.mubr.bf16.gmra.mrb[0].mxu0 %v2462
  %v3554 = vpop.f32.mrb[0].mxu0
  %v3555 = vadd.f32 %v3506, %v3554
  %v3556 = vpop.f32.mrb[0].mxu0
  %v3557 = vpop.f32.mrb[0].mxu0
  %v3558 = vadd.f32 %v3506, %v3557
  %v3559 = vpop.f32.mrb[0].mxu0
  %3560 = vdwg.mxu0
  %v3561 = vpack.c.bf16 %v3423, %v3423
  %v3562 = vpack.c.bf16 %v3426, %v3426
  %v3563 = vpack.c.bf16 %v3489, %v3489
  %v3564 = vpack.c.bf16 %v3492, %v3492
  %v3566 = vsel %vm299, %v3561, 0
  %v3569 = vsel %vm299, %v3563, 0
  %3571 = vmatprep.subr.bf16.mxu0 0
  %3572 = vmatpush1.bf16.xpose.msra.mxu0 %v3569
  %3573 = vmatprep.subr.bf16.mxu0 0
  %3574 = vmatpush1.bf16.xpose.msra.mxu0 0
  %3575 = vmatprep.subr.bf16.mxu0 0
  %3576 = vmatpush1.bf16.xpose.msra.mxu0 0
  %3577 = vmatprep.subr.bf16.mxu0 0
  %3578 = vmatpush1.bf16.xpose.msra.mxu0 0
  %3579 = vmatprep.subr.bf16.mxu0 0
  %3580 = vmatpush1.bf16.xpose.msra.mxu0 0
  %3581 = vmatprep.subr.bf16.mxu0 0
  %3582 = vmatpush1.bf16.xpose.msra.mxu0 0
  %3583 = vmatprep.subr.bf16.mxu0 0
  %3584 = vmatpush1.bf16.xpose.msra.mxu0 0
  %3585 = vmatprep.subr.bf16.mxu0 0
  %3586 = vmatpush1.bf16.xpose.msra.mxu0 0
  %3587 = vmatprep.subr.bf16.mxu0 0
  %3588 = vmatpush1.bf16.xpose.msra.mxu0 0
  %3589 = vmatprep.subr.bf16.mxu0 0
  %3590 = vmatpush1.bf16.xpose.msra.mxu0 0
  %3591 = vmatprep.subr.bf16.mxu0 0
  %3592 = vmatpush1.bf16.xpose.msra.mxu0 0
  %3593 = vmatprep.subr.bf16.mxu0 0
  %3594 = vmatpush1.bf16.xpose.msra.mxu0 0
  %3595 = vmatprep.subr.bf16.mxu0 0
  %3596 = vmatpush1.bf16.xpose.msra.mxu0 0
  %3597 = vmatprep.subr.bf16.mxu0 0
  %3598 = vmatpush1.bf16.xpose.msra.mxu0 0
  %3599 = vmatprep.subr.bf16.mxu0 0
  %3600 = vmatpush1.bf16.xpose.msra.mxu0 0
  %3601 = vmatprep.subr.bf16.mxu0 0
  %3602 = vmatpush1.bf16.xpose.msra.mxu0 0
  %3603 = vmatprep.mubr.bf16.mxu0 0
  %3604 = vmatmul.mubr.bf16.gmra.mrb[0].mxu0 %v3566
  %v3605 = vpop.f32.mrb[0].mxu0
  %v3606 = vadd.f32 %v94, %v3605
  %v3607 = vpop.f32.mrb[0].mxu0
  %v3608 = vpop.f32.mrb[0].mxu0
  %v3609 = vpop.f32.mrb[0].mxu0
  %3610 = vdwg.mxu0
  %v3612 = vsel %vm299, %v3562, 0
  %v3615 = vsel %vm299, %v3564, 0
  %3617 = vmatprep.subr.bf16.mxu0 0
  %3618 = vmatpush1.bf16.xpose.msra.mxu0 %v3615
  %3619 = vmatprep.subr.bf16.mxu0 0
  %3620 = vmatpush1.bf16.xpose.msra.mxu0 0
  %3621 = vmatprep.subr.bf16.mxu0 0
  %3622 = vmatpush1.bf16.xpose.msra.mxu0 0
  %3623 = vmatprep.subr.bf16.mxu0 0
  %3624 = vmatpush1.bf16.xpose.msra.mxu0 0
  %3625 = vmatprep.subr.bf16.mxu0 0
  %3626 = vmatpush1.bf16.xpose.msra.mxu0 0
  %3627 = vmatprep.subr.bf16.mxu0 0
  %3628 = vmatpush1.bf16.xpose.msra.mxu0 0
  %3629 = vmatprep.subr.bf16.mxu0 0
  %3630 = vmatpush1.bf16.xpose.msra.mxu0 0
  %3631 = vmatprep.subr.bf16.mxu0 0
  %3632 = vmatpush1.bf16.xpose.msra.mxu0 0
  %3633 = vmatprep.subr.bf16.mxu0 0
  %3634 = vmatpush1.bf16.xpose.msra.mxu0 0
  %3635 = vmatprep.subr.bf16.mxu0 0
  %3636 = vmatpush1.bf16.xpose.msra.mxu0 0
  %3637 = vmatprep.subr.bf16.mxu0 0
  %3638 = vmatpush1.bf16.xpose.msra.mxu0 0
  %3639 = vmatprep.subr.bf16.mxu0 0
  %3640 = vmatpush1.bf16.xpose.msra.mxu0 0
  %3641 = vmatprep.subr.bf16.mxu0 0
  %3642 = vmatpush1.bf16.xpose.msra.mxu0 0
  %3643 = vmatprep.subr.bf16.mxu0 0
  %3644 = vmatpush1.bf16.xpose.msra.mxu0 0
  %3645 = vmatprep.subr.bf16.mxu0 0
  %3646 = vmatpush1.bf16.xpose.msra.mxu0 0
  %3647 = vmatprep.subr.bf16.mxu0 0
  %3648 = vmatpush1.bf16.xpose.msra.mxu0 0
  %3649 = vmatprep.mubr.bf16.mxu0 0
  %3650 = vmatmul.mubr.bf16.gmra.mrb[0].mxu0 %v3612
  %v3651 = vpop.f32.mrb[0].mxu0
  %v3652 = vadd.f32 %v95, %v3651
  %v3653 = vpop.f32.mrb[0].mxu0
  %v3654 = vpop.f32.mrb[0].mxu0
  %v3655 = vpop.f32.mrb[0].mxu0
  %3656 = vdwg.mxu0
  %v3657 = vsel %vm299, %v3606, -inf
  %3658 = vmax.xlane.f32.xlu0 %v3657
  %v3659 = vpop.xlane.xlu0 %3658
  %v3660 = vsel %vm299, %v3652, -inf
  %3661 = vmax.xlane.f32.xlu0 %v3660
  %v3662 = vpop.xlane.xlu0 %3661
  %v3663 = vsub.f32 %v3606, %v3659
  %v3664 = vsub.f32 %v3652, %v3662
  %v3665 = vmul.f32 %v3663, 1.442695
  %v3666 = vpow.pop %v3665
  %v3667 = vmul.f32 %v3664, 1.442695
  %v3668 = vpow.pop %v3667
  %v3669 = vsel %vm299, %v3666, 0.0
  %3670 = vadd.xlane.f32.xlu0 %v3669
  %v3671 = vpop.xlane.xlu0 %3670
  %v3672 = vsel %vm299, %v3668, 0.0
  %3673 = vadd.xlane.f32.xlu0 %v3672
  %v3674 = vpop.xlane.xlu0 %3673
  %v3675 = vrcp.pop %v3671
  %v3676 = vrcp.pop %v3674
  %v3677 = vmul.f32 %v3666, %v3675
  %v3678 = vmul.f32 %v3668, %v3676
  %v3679 = vpack.c.bf16 %v3677, %v3677
  %v3680 = vpack.c.bf16 %v3678, %v3678
  %v3681 = vpack.c.bf16 %v3555, %v3555
  %v3682 = vpack.c.bf16 %v3558, %v3558
  %v3684 = vsel %vm299, %v3679, 0
  %v3687 = vsel %vm421, %v3681, 0
  %3689 = vmatprep.subr.bf16.mxu0 0
  %3690 = vmatpush1.bf16.msra.mxu0 %v3687
  %3691 = vmatprep.subr.bf16.mxu0 0
  %3692 = vmatpush1.bf16.msra.mxu0 0
  %3693 = vmatprep.subr.bf16.mxu0 0
  %3694 = vmatpush1.bf16.msra.mxu0 0
  %3695 = vmatprep.subr.bf16.mxu0 0
  %3696 = vmatpush1.bf16.msra.mxu0 0
  %3697 = vmatprep.subr.bf16.mxu0 0
  %3698 = vmatpush1.bf16.msra.mxu0 0
  %3699 = vmatprep.subr.bf16.mxu0 0
  %3700 = vmatpush1.bf16.msra.mxu0 0
  %3701 = vmatprep.subr.bf16.mxu0 0
  %3702 = vmatpush1.bf16.msra.mxu0 0
  %3703 = vmatprep.subr.bf16.mxu0 0
  %3704 = vmatpush1.bf16.msra.mxu0 0
  %3705 = vmatprep.subr.bf16.mxu0 0
  %3706 = vmatpush1.bf16.msra.mxu0 0
  %3707 = vmatprep.subr.bf16.mxu0 0
  %3708 = vmatpush1.bf16.msra.mxu0 0
  %3709 = vmatprep.subr.bf16.mxu0 0
  %3710 = vmatpush1.bf16.msra.mxu0 0
  %3711 = vmatprep.subr.bf16.mxu0 0
  %3712 = vmatpush1.bf16.msra.mxu0 0
  %3713 = vmatprep.subr.bf16.mxu0 0
  %3714 = vmatpush1.bf16.msra.mxu0 0
  %3715 = vmatprep.subr.bf16.mxu0 0
  %3716 = vmatpush1.bf16.msra.mxu0 0
  %3717 = vmatprep.subr.bf16.mxu0 0
  %3718 = vmatpush1.bf16.msra.mxu0 0
  %3719 = vmatprep.subr.bf16.mxu0 0
  %3720 = vmatpush1.bf16.msra.mxu0 0
  %3721 = vmatprep.mubr.bf16.mxu0 0
  %3722 = vmatmul.mubr.bf16.gmra.mrb[0].mxu0 %v3684
  %v3723 = vpop.f32.mrb[0].mxu0
  %v3724 = vadd.f32 0.0, %v3723
  %v3725 = vpop.f32.mrb[0].mxu0
  %v3726 = vpop.f32.mrb[0].mxu0
  %v3727 = vpop.f32.mrb[0].mxu0
  %3728 = vdwg.mxu0
  %v3730 = vsel %vm299, %v3680, 0
  %v3733 = vsel %vm421, %v3682, 0
  %3735 = vmatprep.subr.bf16.mxu0 0
  %3736 = vmatpush1.bf16.msra.mxu0 %v3733
  %3737 = vmatprep.subr.bf16.mxu0 0
  %3738 = vmatpush1.bf16.msra.mxu0 0
  %3739 = vmatprep.subr.bf16.mxu0 0
  %3740 = vmatpush1.bf16.msra.mxu0 0
  %3741 = vmatprep.subr.bf16.mxu0 0
  %3742 = vmatpush1.bf16.msra.mxu0 0
  %3743 = vmatprep.subr.bf16.mxu0 0
  %3744 = vmatpush1.bf16.msra.mxu0 0
  %3745 = vmatprep.subr.bf16.mxu0 0
  %3746 = vmatpush1.bf16.msra.mxu0 0
  %3747 = vmatprep.subr.bf16.mxu0 0
  %3748 = vmatpush1.bf16.msra.mxu0 0
  %3749 = vmatprep.subr.bf16.mxu0 0
  %3750 = vmatpush1.bf16.msra.mxu0 0
  %3751 = vmatprep.subr.bf16.mxu0 0
  %3752 = vmatpush1.bf16.msra.mxu0 0
  %3753 = vmatprep.subr.bf16.mxu0 0
  %3754 = vmatpush1.bf16.msra.mxu0 0
  %3755 = vmatprep.subr.bf16.mxu0 0
  %3756 = vmatpush1.bf16.msra.mxu0 0
  %3757 = vmatprep.subr.bf16.mxu0 0
  %3758 = vmatpush1.bf16.msra.mxu0 0
  %3759 = vmatprep.subr.bf16.mxu0 0
  %3760 = vmatpush1.bf16.msra.mxu0 0
  %3761 = vmatprep.subr.bf16.mxu0 0
  %3762 = vmatpush1.bf16.msra.mxu0 0
  %3763 = vmatprep.subr.bf16.mxu0 0
  %3764 = vmatpush1.bf16.msra.mxu0 0
  %3765 = vmatprep.subr.bf16.mxu0 0
  %3766 = vmatpush1.bf16.msra.mxu0 0
  %3767 = vmatprep.mubr.bf16.mxu0 0
  %3768 = vmatmul.mubr.bf16.gmra.mrb[0].mxu0 %v3730
  %v3769 = vpop.f32.mrb[0].mxu0
  %v3770 = vadd.f32 0.0, %v3769
  %v3771 = vpop.f32.mrb[0].mxu0
  %v3772 = vpop.f32.mrb[0].mxu0
  %v3773 = vpop.f32.mrb[0].mxu0
  %3774 = vdwg.mxu0
  %v3775 = vpack.c.bf16 %v3770, %v3724
  %s3776 = scalar_lea.vmem %s10, 24
  %v3777 = vld [vmem:[%s3776] sm:$0xf]
  %v3779 = vsel %vm299, %v3775, 0
  %v3782 = vsel %vm421, %v3777, 0
  %3784 = vmatprep.subr.bf16.mxu0 0
  %3785 = vmatpush1.bf16.msra.mxu0 %v3782
  %3786 = vmatprep.subr.bf16.mxu0 0
  %3787 = vmatpush1.bf16.msra.mxu0 0
  %3788 = vmatprep.subr.bf16.mxu0 0
  %3789 = vmatpush1.bf16.msra.mxu0 0
  %3790 = vmatprep.subr.bf16.mxu0 0
  %3791 = vmatpush1.bf16.msra.mxu0 0
  %3792 = vmatprep.subr.bf16.mxu0 0
  %3793 = vmatpush1.bf16.msra.mxu0 0
  %3794 = vmatprep.subr.bf16.mxu0 0
  %3795 = vmatpush1.bf16.msra.mxu0 0
  %3796 = vmatprep.subr.bf16.mxu0 0
  %3797 = vmatpush1.bf16.msra.mxu0 0
  %3798 = vmatprep.subr.bf16.mxu0 0
  %3799 = vmatpush1.bf16.msra.mxu0 0
  %3800 = vmatprep.subr.bf16.mxu0 0
  %3801 = vmatpush1.bf16.msra.mxu0 0
  %3802 = vmatprep.subr.bf16.mxu0 0
  %3803 = vmatpush1.bf16.msra.mxu0 0
  %3804 = vmatprep.subr.bf16.mxu0 0
  %3805 = vmatpush1.bf16.msra.mxu0 0
  %3806 = vmatprep.subr.bf16.mxu0 0
  %3807 = vmatpush1.bf16.msra.mxu0 0
  %3808 = vmatprep.subr.bf16.mxu0 0
  %3809 = vmatpush1.bf16.msra.mxu0 0
  %3810 = vmatprep.subr.bf16.mxu0 0
  %3811 = vmatpush1.bf16.msra.mxu0 0
  %3812 = vmatprep.subr.bf16.mxu0 0
  %3813 = vmatpush1.bf16.msra.mxu0 0
  %3814 = vmatprep.subr.bf16.mxu0 0
  %3815 = vmatpush1.bf16.msra.mxu0 0
  %3816 = vmatprep.mubr.bf16.mxu0 0
  %3817 = vmatmul.mubr.bf16.gmra.mrb[0].mxu0 %v3779
  %v3818 = vpop.f32.mrb[0].mxu0
  %v3819 = vadd.f32 0.0, %v3818
  %v3820 = vpop.f32.mrb[0].mxu0
  %v3821 = vpop.f32.mrb[0].mxu0
  %v3822 = vadd.f32 0.0, %v3821
  %v3823 = vpop.f32.mrb[0].mxu0
  %3824 = vdwg.mxu0
  %v3825 = vadd.f32 %v3357, %v3819
  %v3826 = vadd.f32 %v3360, %v3822
  %s3827 = scalar_lea.vmem %s4, 112
  %v3828 = vld [vmem:[%s3827] sm:$0xf]
  %v3829 = vld [vmem:[%s3827 + $0x4] sm:$0xf]
  %v3830 = vld [vmem:[%s3827 + $0x8] sm:$0xf]
  %v3831 = vld [vmem:[%s3827 + $0xc] sm:$0xf]
  %s3832 = scalar_lea.vmem %s7, 7
  %v3833 = vld [vmem:[%s3832] sm:$0x1]
  %v3835 = vlaneseq
  %v3836 = vshrl.u32 %v3835, 7
  %v3837 = vsub.s32 0, %v3836
  %v3838 = vrot.slane %v3833, %v3837
  %v3844 = vunpack.c.l.b16 %v3828
  %v3845 = vunpack.c.l.b16 %v3829
  %v3846 = vunpack.c.l.b16 %v3830
  %v3847 = vunpack.c.l.b16 %v3831
  %v3848 = vpack.c.b16 %v3845, %v3844
  %v3849 = vpack.c.b16 %v3847, %v3846
  %3852 = vmatprep.subr.bf16.mxu0 0
  %3853 = vmatpush1.bf16.msra.mxu0 %v3848
  %3854 = vmatprep.subr.bf16.mxu0 0
  %3855 = vmatpush1.bf16.msra.mxu0 %v3849
  %3856 = vmatprep.subr.bf16.mxu0 0
  %3857 = vmatpush1.bf16.msra.mxu0 0
  %3858 = vmatprep.subr.bf16.mxu0 0
  %3859 = vmatpush1.bf16.msra.mxu0 0
  %3860 = vmatprep.subr.bf16.mxu0 0
  %3861 = vmatpush1.bf16.msra.mxu0 0
  %3862 = vmatprep.subr.bf16.mxu0 0
  %3863 = vmatpush1.bf16.msra.mxu0 0
  %3864 = vmatprep.subr.bf16.mxu0 0
  %3865 = vmatpush1.bf16.msra.mxu0 0
  %3866 = vmatprep.subr.bf16.mxu0 0
  %3867 = vmatpush1.bf16.msra.mxu0 0
  %3868 = vmatprep.subr.bf16.mxu0 0
  %3869 = vmatpush1.bf16.msra.mxu0 0
  %3870 = vmatprep.subr.bf16.mxu0 0
  %3871 = vmatpush1.bf16.msra.mxu0 0
  %3872 = vmatprep.subr.bf16.mxu0 0
  %3873 = vmatpush1.bf16.msra.mxu0 0
  %3874 = vmatprep.subr.bf16.mxu0 0
  %3875 = vmatpush1.bf16.msra.mxu0 0
  %3876 = vmatprep.subr.bf16.mxu0 0
  %3877 = vmatpush1.bf16.msra.mxu0 0
  %3878 = vmatprep.subr.bf16.mxu0 0
  %3879 = vmatpush1.bf16.msra.mxu0 0
  %3880 = vmatprep.subr.bf16.mxu0 0
  %3881 = vmatpush1.bf16.msra.mxu0 0
  %3882 = vmatprep.subr.bf16.mxu0 0
  %3883 = vmatpush1.bf16.msra.mxu0 0
  %3884 = vmatprep.mubr.bf16.mxu0 0
  %3885 = vmatmul.mubr.bf16.gmra.mrb[0].mxu0 %v2462
  %v3886 = vpop.f32.mrb[0].mxu0
  %v3887 = vadd.f32 %v3838, %v3886
  %v3888 = vpop.f32.mrb[0].mxu0
  %v3889 = vpop.f32.mrb[0].mxu0
  %v3890 = vadd.f32 %v3838, %v3889
  %v3891 = vpop.f32.mrb[0].mxu0
  %3892 = vdwg.mxu0
  %s3893 = scalar_lea.vmem %s5, 112
  %v3894 = vld [vmem:[%s3893] sm:$0xf]
  %v3895 = vld [vmem:[%s3893 + $0x4] sm:$0xf]
  %v3896 = vld [vmem:[%s3893 + $0x8] sm:$0xf]
  %v3897 = vld [vmem:[%s3893 + $0xc] sm:$0xf]
  %s3898 = scalar_lea.vmem %s8, 7
  %v3899 = vld [vmem:[%s3898] sm:$0x1]
  %v3901 = vlaneseq
  %v3902 = vshrl.u32 %v3901, 7
  %v3903 = vsub.s32 0, %v3902
  %v3904 = vrot.slane %v3899, %v3903
  %v3910 = vunpack.c.l.b16 %v3894
  %v3911 = vunpack.c.l.b16 %v3895
  %v3912 = vunpack.c.l.b16 %v3896
  %v3913 = vunpack.c.l.b16 %v3897
  %v3914 = vpack.c.b16 %v3911, %v3910
  %v3915 = vpack.c.b16 %v3913, %v3912
  %3918 = vmatprep.subr.bf16.mxu0 0
  %3919 = vmatpush1.bf16.msra.mxu0 %v3914
  %3920 = vmatprep.subr.bf16.mxu0 0
  %3921 = vmatpush1.bf16.msra.mxu0 %v3915
  %3922 = vmatprep.subr.bf16.mxu0 0
  %3923 = vmatpush1.bf16.msra.mxu0 0
  %3924 = vmatprep.subr.bf16.mxu0 0
  %3925 = vmatpush1.bf16.msra.mxu0 0
  %3926 = vmatprep.subr.bf16.mxu0 0
  %3927 = vmatpush1.bf16.msra.mxu0 0
  %3928 = vmatprep.subr.bf16.mxu0 0
  %3929 = vmatpush1.bf16.msra.mxu0 0
  %3930 = vmatprep.subr.bf16.mxu0 0
  %3931 = vmatpush1.bf16.msra.mxu0 0
  %3932 = vmatprep.subr.bf16.mxu0 0
  %3933 = vmatpush1.bf16.msra.mxu0 0
  %3934 = vmatprep.subr.bf16.mxu0 0
  %3935 = vmatpush1.bf16.msra.mxu0 0
  %3936 = vmatprep.subr.bf16.mxu0 0
  %3937 = vmatpush1.bf16.msra.mxu0 0
  %3938 = vmatprep.subr.bf16.mxu0 0
  %3939 = vmatpush1.bf16.msra.mxu0 0
  %3940 = vmatprep.subr.bf16.mxu0 0
  %3941 = vmatpush1.bf16.msra.mxu0 0
  %3942 = vmatprep.subr.bf16.mxu0 0
  %3943 = vmatpush1.bf16.msra.mxu0 0
  %3944 = vmatprep.subr.bf16.mxu0 0
  %3945 = vmatpush1.bf16.msra.mxu0 0
  %3946 = vmatprep.subr.bf16.mxu0 0
  %3947 = vmatpush1.bf16.msra.mxu0 0
  %3948 = vmatprep.subr.bf16.mxu0 0
  %3949 = vmatpush1.bf16.msra.mxu0 0
  %3950 = vmatprep.mubr.bf16.mxu0 0
  %3951 = vmatmul.mubr.bf16.gmra.mrb[0].mxu0 %v2462
  %v3952 = vpop.f32.mrb[0].mxu0
  %v3953 = vadd.f32 %v3904, %v3952
  %v3954 = vpop.f32.mrb[0].mxu0
  %v3955 = vpop.f32.mrb[0].mxu0
  %v3956 = vadd.f32 %v3904, %v3955
  %v3957 = vpop.f32.mrb[0].mxu0
  %3958 = vdwg.mxu0
  %s3959 = scalar_lea.vmem %s6, 112
  %v3960 = vld [vmem:[%s3959] sm:$0xf]
  %v3961 = vld [vmem:[%s3959 + $0x4] sm:$0xf]
  %v3962 = vld [vmem:[%s3959 + $0x8] sm:$0xf]
  %v3963 = vld [vmem:[%s3959 + $0xc] sm:$0xf]
  %s3964 = scalar_lea.vmem %s9, 7
  %v3965 = vld [vmem:[%s3964] sm:$0x1]
  %v3967 = vlaneseq
  %v3968 = vshrl.u32 %v3967, 7
  %v3969 = vsub.s32 0, %v3968
  %v3970 = vrot.slane %v3965, %v3969
  %v3976 = vunpack.c.l.b16 %v3960
  %v3977 = vunpack.c.l.b16 %v3961
  %v3978 = vunpack.c.l.b16 %v3962
  %v3979 = vunpack.c.l.b16 %v3963
  %v3980 = vpack.c.b16 %v3977, %v3976
  %v3981 = vpack.c.b16 %v3979, %v3978
  %3984 = vmatprep.subr.bf16.mxu0 0
  %3985 = vmatpush1.bf16.msra.mxu0 %v3980
  %3986 = vmatprep.subr.bf16.mxu0 0
  %3987 = vmatpush1.bf16.msra.mxu0 %v3981
  %3988 = vmatprep.subr.bf16.mxu0 0
  %3989 = vmatpush1.bf16.msra.mxu0 0
  %3990 = vmatprep.subr.bf16.mxu0 0
  %3991 = vmatpush1.bf16.msra.mxu0 0
  %3992 = vmatprep.subr.bf16.mxu0 0
  %3993 = vmatpush1.bf16.msra.mxu0 0
  %3994 = vmatprep.subr.bf16.mxu0 0
  %3995 = vmatpush1.bf16.msra.mxu0 0
  %3996 = vmatprep.subr.bf16.mxu0 0
  %3997 = vmatpush1.bf16.msra.mxu0 0
  %3998 = vmatprep.subr.bf16.mxu0 0
  %3999 = vmatpush1.bf16.msra.mxu0 0
  %4000 = vmatprep.subr.bf16.mxu0 0
  %4001 = vmatpush1.bf16.msra.mxu0 0
  %4002 = vmatprep.subr.bf16.mxu0 0
  %4003 = vmatpush1.bf16.msra.mxu0 0
  %4004 = vmatprep.subr.bf16.mxu0 0
  %4005 = vmatpush1.bf16.msra.mxu0 0
  %4006 = vmatprep.subr.bf16.mxu0 0
  %4007 = vmatpush1.bf16.msra.mxu0 0
  %4008 = vmatprep.subr.bf16.mxu0 0
  %4009 = vmatpush1.bf16.msra.mxu0 0
  %4010 = vmatprep.subr.bf16.mxu0 0
  %4011 = vmatpush1.bf16.msra.mxu0 0
  %4012 = vmatprep.subr.bf16.mxu0 0
  %4013 = vmatpush1.bf16.msra.mxu0 0
  %4014 = vmatprep.subr.bf16.mxu0 0
  %4015 = vmatpush1.bf16.msra.mxu0 0
  %4016 = vmatprep.mubr.bf16.mxu0 0
  %4017 = vmatmul.mubr.bf16.gmra.mrb[0].mxu0 %v2462
  %v4018 = vpop.f32.mrb[0].mxu0
  %v4019 = vadd.f32 %v3970, %v4018
  %v4020 = vpop.f32.mrb[0].mxu0
  %v4021 = vpop.f32.mrb[0].mxu0
  %v4022 = vadd.f32 %v3970, %v4021
  %v4023 = vpop.f32.mrb[0].mxu0
  %4024 = vdwg.mxu0
  %v4025 = vpack.c.bf16 %v3887, %v3887
  %v4026 = vpack.c.bf16 %v3890, %v3890
  %v4027 = vpack.c.bf16 %v3953, %v3953
  %v4028 = vpack.c.bf16 %v3956, %v3956
  %v4030 = vsel %vm299, %v4025, 0
  %v4033 = vsel %vm299, %v4027, 0
  %4035 = vmatprep.subr.bf16.mxu0 0
  %4036 = vmatpush1.bf16.xpose.msra.mxu0 %v4033
  %4037 = vmatprep.subr.bf16.mxu0 0
  %4038 = vmatpush1.bf16.xpose.msra.mxu0 0
  %4039 = vmatprep.subr.bf16.mxu0 0
  %4040 = vmatpush1.bf16.xpose.msra.mxu0 0
  %4041 = vmatprep.subr.bf16.mxu0 0
  %4042 = vmatpush1.bf16.xpose.msra.mxu0 0
  %4043 = vmatprep.subr.bf16.mxu0 0
  %4044 = vmatpush1.bf16.xpose.msra.mxu0 0
  %4045 = vmatprep.subr.bf16.mxu0 0
  %4046 = vmatpush1.bf16.xpose.msra.mxu0 0
  %4047 = vmatprep.subr.bf16.mxu0 0
  %4048 = vmatpush1.bf16.xpose.msra.mxu0 0
  %4049 = vmatprep.subr.bf16.mxu0 0
  %4050 = vmatpush1.bf16.xpose.msra.mxu0 0
  %4051 = vmatprep.subr.bf16.mxu0 0
  %4052 = vmatpush1.bf16.xpose.msra.mxu0 0
  %4053 = vmatprep.subr.bf16.mxu0 0
  %4054 = vmatpush1.bf16.xpose.msra.mxu0 0
  %4055 = vmatprep.subr.bf16.mxu0 0
  %4056 = vmatpush1.bf16.xpose.msra.mxu0 0
  %4057 = vmatprep.subr.bf16.mxu0 0
  %4058 = vmatpush1.bf16.xpose.msra.mxu0 0
  %4059 = vmatprep.subr.bf16.mxu0 0
  %4060 = vmatpush1.bf16.xpose.msra.mxu0 0
  %4061 = vmatprep.subr.bf16.mxu0 0
  %4062 = vmatpush1.bf16.xpose.msra.mxu0 0
  %4063 = vmatprep.subr.bf16.mxu0 0
  %4064 = vmatpush1.bf16.xpose.msra.mxu0 0
  %4065 = vmatprep.subr.bf16.mxu0 0
  %4066 = vmatpush1.bf16.xpose.msra.mxu0 0
  %4067 = vmatprep.mubr.bf16.mxu0 0
  %4068 = vmatmul.mubr.bf16.gmra.mrb[0].mxu0 %v4030
  %v4069 = vpop.f32.mrb[0].mxu0
  %v4070 = vadd.f32 %v94, %v4069
  %v4071 = vpop.f32.mrb[0].mxu0
  %v4072 = vpop.f32.mrb[0].mxu0
  %v4073 = vpop.f32.mrb[0].mxu0
  %4074 = vdwg.mxu0
  %v4076 = vsel %vm299, %v4026, 0
  %v4079 = vsel %vm299, %v4028, 0
  %4081 = vmatprep.subr.bf16.mxu0 0
  %4082 = vmatpush1.bf16.xpose.msra.mxu0 %v4079
  %4083 = vmatprep.subr.bf16.mxu0 0
  %4084 = vmatpush1.bf16.xpose.msra.mxu0 0
  %4085 = vmatprep.subr.bf16.mxu0 0
  %4086 = vmatpush1.bf16.xpose.msra.mxu0 0
  %4087 = vmatprep.subr.bf16.mxu0 0
  %4088 = vmatpush1.bf16.xpose.msra.mxu0 0
  %4089 = vmatprep.subr.bf16.mxu0 0
  %4090 = vmatpush1.bf16.xpose.msra.mxu0 0
  %4091 = vmatprep.subr.bf16.mxu0 0
  %4092 = vmatpush1.bf16.xpose.msra.mxu0 0
  %4093 = vmatprep.subr.bf16.mxu0 0
  %4094 = vmatpush1.bf16.xpose.msra.mxu0 0
  %4095 = vmatprep.subr.bf16.mxu0 0
  %4096 = vmatpush1.bf16.xpose.msra.mxu0 0
  %4097 = vmatprep.subr.bf16.mxu0 0
  %4098 = vmatpush1.bf16.xpose.msra.mxu0 0
  %4099 = vmatprep.subr.bf16.mxu0 0
  %4100 = vmatpush1.bf16.xpose.msra.mxu0 0
  %4101 = vmatprep.subr.bf16.mxu0 0
  %4102 = vmatpush1.bf16.xpose.msra.mxu0 0
  %4103 = vmatprep.subr.bf16.mxu0 0
  %4104 = vmatpush1.bf16.xpose.msra.mxu0 0
  %4105 = vmatprep.subr.bf16.mxu0 0
  %4106 = vmatpush1.bf16.xpose.msra.mxu0 0
  %4107 = vmatprep.subr.bf16.mxu0 0
  %4108 = vmatpush1.bf16.xpose.msra.mxu0 0
  %4109 = vmatprep.subr.bf16.mxu0 0
  %4110 = vmatpush1.bf16.xpose.msra.mxu0 0
  %4111 = vmatprep.subr.bf16.mxu0 0
  %4112 = vmatpush1.bf16.xpose.msra.mxu0 0
  %4113 = vmatprep.mubr.bf16.mxu0 0
  %4114 = vmatmul.mubr.bf16.gmra.mrb[0].mxu0 %v4076
  %v4115 = vpop.f32.mrb[0].mxu0
  %v4116 = vadd.f32 %v95, %v4115
  %v4117 = vpop.f32.mrb[0].mxu0
  %v4118 = vpop.f32.mrb[0].mxu0
  %v4119 = vpop.f32.mrb[0].mxu0
  %4120 = vdwg.mxu0
  %v4121 = vsel %vm299, %v4070, -inf
  %4122 = vmax.xlane.f32.xlu0 %v4121
  %v4123 = vpop.xlane.xlu0 %4122
  %v4124 = vsel %vm299, %v4116, -inf
  %4125 = vmax.xlane.f32.xlu0 %v4124
  %v4126 = vpop.xlane.xlu0 %4125
  %v4127 = vsub.f32 %v4070, %v4123
  %v4128 = vsub.f32 %v4116, %v4126
  %v4129 = vmul.f32 %v4127, 1.442695
  %v4130 = vpow.pop %v4129
  %v4131 = vmul.f32 %v4128, 1.442695
  %v4132 = vpow.pop %v4131
  %v4133 = vsel %vm299, %v4130, 0.0
  %4134 = vadd.xlane.f32.xlu0 %v4133
  %v4135 = vpop.xlane.xlu0 %4134
  %v4136 = vsel %vm299, %v4132, 0.0
  %4137 = vadd.xlane.f32.xlu0 %v4136
  %v4138 = vpop.xlane.xlu0 %4137
  %v4139 = vrcp.pop %v4135
  %v4140 = vrcp.pop %v4138
  %v4141 = vmul.f32 %v4130, %v4139
  %v4142 = vmul.f32 %v4132, %v4140
  %v4143 = vpack.c.bf16 %v4141, %v4141
  %v4144 = vpack.c.bf16 %v4142, %v4142
  %v4145 = vpack.c.bf16 %v4019, %v4019
  %v4146 = vpack.c.bf16 %v4022, %v4022
  %v4148 = vsel %vm299, %v4143, 0
  %v4151 = vsel %vm421, %v4145, 0
  %4153 = vmatprep.subr.bf16.mxu0 0
  %4154 = vmatpush1.bf16.msra.mxu0 %v4151
  %4155 = vmatprep.subr.bf16.mxu0 0
  %4156 = vmatpush1.bf16.msra.mxu0 0
  %4157 = vmatprep.subr.bf16.mxu0 0
  %4158 = vmatpush1.bf16.msra.mxu0 0
  %4159 = vmatprep.subr.bf16.mxu0 0
  %4160 = vmatpush1.bf16.msra.mxu0 0
  %4161 = vmatprep.subr.bf16.mxu0 0
  %4162 = vmatpush1.bf16.msra.mxu0 0
  %4163 = vmatprep.subr.bf16.mxu0 0
  %4164 = vmatpush1.bf16.msra.mxu0 0
  %4165 = vmatprep.subr.bf16.mxu0 0
  %4166 = vmatpush1.bf16.msra.mxu0 0
  %4167 = vmatprep.subr.bf16.mxu0 0
  %4168 = vmatpush1.bf16.msra.mxu0 0
  %4169 = vmatprep.subr.bf16.mxu0 0
  %4170 = vmatpush1.bf16.msra.mxu0 0
  %4171 = vmatprep.subr.bf16.mxu0 0
  %4172 = vmatpush1.bf16.msra.mxu0 0
  %4173 = vmatprep.subr.bf16.mxu0 0
  %4174 = vmatpush1.bf16.msra.mxu0 0
  %4175 = vmatprep.subr.bf16.mxu0 0
  %4176 = vmatpush1.bf16.msra.mxu0 0
  %4177 = vmatprep.subr.bf16.mxu0 0
  %4178 = vmatpush1.bf16.msra.mxu0 0
  %4179 = vmatprep.subr.bf16.mxu0 0
  %4180 = vmatpush1.bf16.msra.mxu0 0
  %4181 = vmatprep.subr.bf16.mxu0 0
  %4182 = vmatpush1.bf16.msra.mxu0 0
  %4183 = vmatprep.subr.bf16.mxu0 0
  %4184 = vmatpush1.bf16.msra.mxu0 0
  %4185 = vmatprep.mubr.bf16.mxu0 0
  %4186 = vmatmul.mubr.bf16.gmra.mrb[0].mxu0 %v4148
  %v4187 = vpop.f32.mrb[0].mxu0
  %v4188 = vadd.f32 0.0, %v4187
  %v4189 = vpop.f32.mrb[0].mxu0
  %v4190 = vpop.f32.mrb[0].mxu0
  %v4191 = vpop.f32.mrb[0].mxu0
  %4192 = vdwg.mxu0
  %v4194 = vsel %vm299, %v4144, 0
  %v4197 = vsel %vm421, %v4146, 0
  %4199 = vmatprep.subr.bf16.mxu0 0
  %4200 = vmatpush1.bf16.msra.mxu0 %v4197
  %4201 = vmatprep.subr.bf16.mxu0 0
  %4202 = vmatpush1.bf16.msra.mxu0 0
  %4203 = vmatprep.subr.bf16.mxu0 0
  %4204 = vmatpush1.bf16.msra.mxu0 0
  %4205 = vmatprep.subr.bf16.mxu0 0
  %4206 = vmatpush1.bf16.msra.mxu0 0
  %4207 = vmatprep.subr.bf16.mxu0 0
  %4208 = vmatpush1.bf16.msra.mxu0 0
  %4209 = vmatprep.subr.bf16.mxu0 0
  %4210 = vmatpush1.bf16.msra.mxu0 0
  %4211 = vmatprep.subr.bf16.mxu0 0
  %4212 = vmatpush1.bf16.msra.mxu0 0
  %4213 = vmatprep.subr.bf16.mxu0 0
  %4214 = vmatpush1.bf16.msra.mxu0 0
  %4215 = vmatprep.subr.bf16.mxu0 0
  %4216 = vmatpush1.bf16.msra.mxu0 0
  %4217 = vmatprep.subr.bf16.mxu0 0
  %4218 = vmatpush1.bf16.msra.mxu0 0
  %4219 = vmatprep.subr.bf16.mxu0 0
  %4220 = vmatpush1.bf16.msra.mxu0 0
  %4221 = vmatprep.subr.bf16.mxu0 0
  %4222 = vmatpush1.bf16.msra.mxu0 0
  %4223 = vmatprep.subr.bf16.mxu0 0
  %4224 = vmatpush1.bf16.msra.mxu0 0
  %4225 = vmatprep.subr.bf16.mxu0 0
  %4226 = vmatpush1.bf16.msra.mxu0 0
  %4227 = vmatprep.subr.bf16.mxu0 0
  %4228 = vmatpush1.bf16.msra.mxu0 0
  %4229 = vmatprep.subr.bf16.mxu0 0
  %4230 = vmatpush1.bf16.msra.mxu0 0
  %4231 = vmatprep.mubr.bf16.mxu0 0
  %4232 = vmatmul.mubr.bf16.gmra.mrb[0].mxu0 %v4194
  %v4233 = vpop.f32.mrb[0].mxu0
  %v4234 = vadd.f32 0.0, %v4233
  %v4235 = vpop.f32.mrb[0].mxu0
  %v4236 = vpop.f32.mrb[0].mxu0
  %v4237 = vpop.f32.mrb[0].mxu0
  %4238 = vdwg.mxu0
  %v4239 = vpack.c.bf16 %v4234, %v4188
  %s4240 = scalar_lea.vmem %s10, 28
  %v4241 = vld [vmem:[%s4240] sm:$0xf]
  %v4243 = vsel %vm299, %v4239, 0
  %v4246 = vsel %vm421, %v4241, 0
  %4248 = vmatprep.subr.bf16.mxu0 0
  %4249 = vmatpush1.bf16.msra.mxu0 %v4246
  %4250 = vmatprep.subr.bf16.mxu0 0
  %4251 = vmatpush1.bf16.msra.mxu0 0
  %4252 = vmatprep.subr.bf16.mxu0 0
  %4253 = vmatpush1.bf16.msra.mxu0 0
  %4254 = vmatprep.subr.bf16.mxu0 0
  %4255 = vmatpush1.bf16.msra.mxu0 0
  %4256 = vmatprep.subr.bf16.mxu0 0
  %4257 = vmatpush1.bf16.msra.mxu0 0
  %4258 = vmatprep.subr.bf16.mxu0 0
  %4259 = vmatpush1.bf16.msra.mxu0 0
  %4260 = vmatprep.subr.bf16.mxu0 0
  %4261 = vmatpush1.bf16.msra.mxu0 0
  %4262 = vmatprep.subr.bf16.mxu0 0
  %4263 = vmatpush1.bf16.msra.mxu0 0
  %4264 = vmatprep.subr.bf16.mxu0 0
  %4265 = vmatpush1.bf16.msra.mxu0 0
  %4266 = vmatprep.subr.bf16.mxu0 0
  %4267 = vmatpush1.bf16.msra.mxu0 0
  %4268 = vmatprep.subr.bf16.mxu0 0
  %4269 = vmatpush1.bf16.msra.mxu0 0
  %4270 = vmatprep.subr.bf16.mxu0 0
  %4271 = vmatpush1.bf16.msra.mxu0 0
  %4272 = vmatprep.subr.bf16.mxu0 0
  %4273 = vmatpush1.bf16.msra.mxu0 0
  %4274 = vmatprep.subr.bf16.mxu0 0
  %4275 = vmatpush1.bf16.msra.mxu0 0
  %4276 = vmatprep.subr.bf16.mxu0 0
  %4277 = vmatpush1.bf16.msra.mxu0 0
  %4278 = vmatprep.subr.bf16.mxu0 0
  %4279 = vmatpush1.bf16.msra.mxu0 0
  %4280 = vmatprep.mubr.bf16.mxu0 0
  %4281 = vmatmul.mubr.bf16.gmra.mrb[0].mxu0 %v4243
  %v4282 = vpop.f32.mrb[0].mxu0
  %v4283 = vadd.f32 0.0, %v4282
  %v4284 = vpop.f32.mrb[0].mxu0
  %v4285 = vpop.f32.mrb[0].mxu0
  %v4286 = vadd.f32 0.0, %v4285
  %v4287 = vpop.f32.mrb[0].mxu0
  %4288 = vdwg.mxu0
  %v4289 = vadd.f32 %v3825, %v4283
  %v4290 = vadd.f32 %v3826, %v4286
  %v4291 = vadd.f32 %v2433, %v4289
  %v4292 = vadd.f32 %v2434, %v4290
  %s4293 = scalar_lea.vmem %s11, 1
  %v4294 = vld [vmem:[%s4293] sm:$0x1]
  %v4296 = vlaneseq
  %v4297 = vshrl.u32 %v4296, 7
  %v4298 = vsub.s32 0, %v4297
  %v4299 = vrot.slane %v4294, %v4298
  %v4301 = vadd.f32 %v4291, %v4299
  %v4302 = vadd.f32 %v4292, %v4299
  %s4303 = scalar_lea.vmem %s20, 1
  %v4304 = vld [vmem:[%s4303] sm:$0x1]
  %s4305 = scalar_lea.vmem %s21, 1
  %v4306 = vld [vmem:[%s4305] sm:$0x1]
  %v4307 = vsel %vm122, %v4301, 0.0
  %4308 = vadd.xlane.f32.xlu0 %v4307
  %v4309 = vpop.xlane.xlu0 %4308
  %v4310 = vsel %vm122, %v4302, 0.0
  %4311 = vadd.xlane.f32.xlu0 %v4310
  %v4312 = vpop.xlane.xlu0 %4311
  %v4313 = vmul.f32 %v4309, %v1969
  %v4314 = vmul.f32 %v4312, %v1969
  %v4315 = vsub.f32 %v4301, %v4313
  %v4316 = vsub.f32 %v4302, %v4314
  %v4317 = vmul.f32 %v4315, %v4315
  %v4318 = vmul.f32 %v4316, %v4316
  %v4319 = vsel %vm122, %v4317, 0.0
  %4320 = vadd.xlane.f32.xlu0 %v4319
  %v4321 = vpop.xlane.xlu0 %4320
  %v4322 = vsel %vm122, %v4318, 0.0
  %4323 = vadd.xlane.f32.xlu0 %v4322
  %v4324 = vpop.xlane.xlu0 %4323
  %v4325 = vmul.f32 %v4321, %v1969
  %v4326 = vmul.f32 %v4324, %v1969
  %v4327 = vadd.f32 %v4325, 1e-05
  %v4328 = vadd.f32 %v4326, 1e-05
  %v4329 = vrsqrt.pop %v4327
  %v4330 = vrsqrt.pop %v4328
  %v4331 = vmul.f32 %v4315, %v4329
  %v4332 = vmul.f32 %v4316, %v4330
  %v4334 = vlaneseq
  %v4335 = vshrl.u32 %v4334, 7
  %v4336 = vsub.s32 0, %v4335
  %v4337 = vrot.slane %v4304, %v4336
  %v4339 = vmul.f32 %v4331, %v4337
  %v4340 = vmul.f32 %v4332, %v4337
  %v4342 = vlaneseq
  %v4343 = vshrl.u32 %v4342, 7
  %v4344 = vsub.s32 0, %v4343
  %v4345 = vrot.slane %v4306, %v4344
  %v4347 = vadd.f32 %v4339, %v4345
  %v4348 = vadd.f32 %v4340, %v4345
  %s4349 = scalar_lea.vmem %s12, 16
  %v4350 = vld [vmem:[%s4349] sm:$0xf]
  %v4351 = vld [vmem:[%s4349 + $0x4] sm:$0xf]
  %v4352 = vld [vmem:[%s4349 + $0x8] sm:$0xf]
  %v4353 = vld [vmem:[%s4349 + $0xc] sm:$0xf]
  %s4354 = scalar_lea.vmem %s13, 1
  %v4355 = vld [vmem:[%s4354] sm:$0x1]
  %v4357 = vlaneseq
  %v4358 = vshrl.u32 %v4357, 7
  %v4359 = vsub.s32 0, %v4358
  %v4360 = vrot.slane %v4355, %v4359
  %v4366 = vunpack.c.l.b16 %v4350
  %v4367 = vunpack.c.l.b16 %v4351
  %v4368 = vunpack.c.l.b16 %v4352
  %v4369 = vunpack.c.l.b16 %v4353
  %v4370 = vpack.c.b16 %v4367, %v4366
  %v4371 = vpack.c.b16 %v4369, %v4368
  %4374 = vmatprep.subr.bf16.mxu0 0
  %4375 = vmatpush1.bf16.msra.mxu0 %v4370
  %4376 = vmatprep.subr.bf16.mxu0 0
  %4377 = vmatpush1.bf16.msra.mxu0 %v4371
  %4378 = vmatprep.subr.bf16.mxu0 0
  %4379 = vmatpush1.bf16.msra.mxu0 0
  %4380 = vmatprep.subr.bf16.mxu0 0
  %4381 = vmatpush1.bf16.msra.mxu0 0
  %4382 = vmatprep.subr.bf16.mxu0 0
  %4383 = vmatpush1.bf16.msra.mxu0 0
  %4384 = vmatprep.subr.bf16.mxu0 0
  %4385 = vmatpush1.bf16.msra.mxu0 0
  %4386 = vmatprep.subr.bf16.mxu0 0
  %4387 = vmatpush1.bf16.msra.mxu0 0
  %4388 = vmatprep.subr.bf16.mxu0 0
  %4389 = vmatpush1.bf16.msra.mxu0 0
  %4390 = vmatprep.subr.bf16.mxu0 0
  %4391 = vmatpush1.bf16.msra.mxu0 0
  %4392 = vmatprep.subr.bf16.mxu0 0
  %4393 = vmatpush1.bf16.msra.mxu0 0
  %4394 = vmatprep.subr.bf16.mxu0 0
  %4395 = vmatpush1.bf16.msra.mxu0 0
  %4396 = vmatprep.subr.bf16.mxu0 0
  %4397 = vmatpush1.bf16.msra.mxu0 0
  %4398 = vmatprep.subr.bf16.mxu0 0
  %4399 = vmatpush1.bf16.msra.mxu0 0
  %4400 = vmatprep.subr.bf16.mxu0 0
  %4401 = vmatpush1.bf16.msra.mxu0 0
  %4402 = vmatprep.subr.bf16.mxu0 0
  %4403 = vmatpush1.bf16.msra.mxu0 0
  %4404 = vmatprep.subr.bf16.mxu0 0
  %4405 = vmatpush1.bf16.msra.mxu0 0
  %4406 = vmatprep.mubr.bf16.mxu0 0
  %4407 = vmatmul.mubr.bf16.gmra.mrb[0].mxu0 %v2030
  %v4408 = vpop.f32.mrb[0].mxu0
  %v4409 = vadd.f32 %v4360, %v4408
  %v4410 = vpop.f32.mrb[0].mxu0
  %v4411 = vpop.f32.mrb[0].mxu0
  %v4412 = vpop.f32.mrb[0].mxu0
  %4413 = vdwg.mxu0
  %v4414 = vpack.c.bf16 %v4409, %v4409
  %s4415 = scalar_lea.vmem %s14, 16
  %v4416 = vld [vmem:[%s4415] sm:$0xf]
  %v4417 = vld [vmem:[%s4415 + $0x4] sm:$0xf]
  %v4418 = vld [vmem:[%s4415 + $0x8] sm:$0xf]
  %v4419 = vld [vmem:[%s4415 + $0xc] sm:$0xf]
  %s4420 = scalar_lea.vmem %s15, 1
  %v4421 = vld [vmem:[%s4420] sm:$0x1]
  %v4423 = vlaneseq
  %v4424 = vshrl.u32 %v4423, 7
  %v4425 = vsub.s32 0, %v4424
  %v4426 = vrot.slane %v4421, %v4425
  %v4432 = vunpack.c.l.b16 %v4416
  %v4433 = vunpack.c.l.b16 %v4417
  %v4434 = vunpack.c.l.b16 %v4418
  %v4435 = vunpack.c.l.b16 %v4419
  %v4436 = vpack.c.b16 %v4433, %v4432
  %v4437 = vpack.c.b16 %v4435, %v4434
  %v4441 = vsel %vm122, %v4414, 0
  %4443 = vmatprep.subr.bf16.mxu0 0
  %4444 = vmatpush1.bf16.msra.mxu0 %v4436
  %4445 = vmatprep.subr.bf16.mxu0 0
  %4446 = vmatpush1.bf16.msra.mxu0 %v4437
  %4447 = vmatprep.subr.bf16.mxu0 0
  %4448 = vmatpush1.bf16.msra.mxu0 0
  %4449 = vmatprep.subr.bf16.mxu0 0
  %4450 = vmatpush1.bf16.msra.mxu0 0
  %4451 = vmatprep.subr.bf16.mxu0 0
  %4452 = vmatpush1.bf16.msra.mxu0 0
  %4453 = vmatprep.subr.bf16.mxu0 0
  %4454 = vmatpush1.bf16.msra.mxu0 0
  %4455 = vmatprep.subr.bf16.mxu0 0
  %4456 = vmatpush1.bf16.msra.mxu0 0
  %4457 = vmatprep.subr.bf16.mxu0 0
  %4458 = vmatpush1.bf16.msra.mxu0 0
  %4459 = vmatprep.subr.bf16.mxu0 0
  %4460 = vmatpush1.bf16.msra.mxu0 0
  %4461 = vmatprep.subr.bf16.mxu0 0
  %4462 = vmatpush1.bf16.msra.mxu0 0
  %4463 = vmatprep.subr.bf16.mxu0 0
  %4464 = vmatpush1.bf16.msra.mxu0 0
  %4465 = vmatprep.subr.bf16.mxu0 0
  %4466 = vmatpush1.bf16.msra.mxu0 0
  %4467 = vmatprep.subr.bf16.mxu0 0
  %4468 = vmatpush1.bf16.msra.mxu0 0
  %4469 = vmatprep.subr.bf16.mxu0 0
  %4470 = vmatpush1.bf16.msra.mxu0 0
  %4471 = vmatprep.subr.bf16.mxu0 0
  %4472 = vmatpush1.bf16.msra.mxu0 0
  %4473 = vmatprep.subr.bf16.mxu0 0
  %4474 = vmatpush1.bf16.msra.mxu0 0
  %4475 = vmatprep.mubr.bf16.mxu0 0
  %4476 = vmatmul.mubr.bf16.gmra.mrb[0].mxu0 %v4441
  %v4477 = vpop.f32.mrb[0].mxu0
  %v4478 = vadd.f32 %v4426, %v4477
  %v4479 = vpop.f32.mrb[0].mxu0
  %v4480 = vpop.f32.mrb[0].mxu0
  %v4481 = vpop.f32.mrb[0].mxu0
  %4482 = vdwg.mxu0
  %v4485 = vunpack.c.l.s4 1966171168
  %v4486 = vunpack.c.0.s8 %v4485
  %v4487 = vlaneseq
  %v4488 = vshrl.u32 %v4487, 7
  %v4489 = vsub.s32 %v4486, %v4488
  %v4490 = vrot.slane %v4478, %v4489
  %v4491 = vcombine.high %v4490, %v4490
  %v4493 = vunpack.c.l.s4 1966171168
  %v4494 = vunpack.c.0.s8 %v4493
  %v4495 = vlaneseq
  %v4496 = vshrl.u32 %v4495, 7
  %v4497 = vsub.s32 %v4494, %v4496
  %v4498 = vrot.slane %v4490, %v4497
  %v4500 = vunpack.c.l.s4 1966171168
  %v4501 = vunpack.c.0.s8 %v4500
  %v4502 = vlaneseq
  %v4503 = vshrl.u32 %v4502, 7
  %v4504 = vsub.s32 %v4501, %v4503
  %v4505 = vrot.slane %v4491, %v4504
  %v4506 = vlaneseq
  %v4507 = vshrl.u32 %v4506, 7
  %v4508 = vsub.s32 0, %v4507
  %v4509 = vrot.slane %v4498, %v4508
  %v4510 = vlaneseq
  %v4511 = vshrl.u32 %v4510, 7
  %v4512 = vsub.s32 0, %v4511
  %v4513 = vrot.slane %v4505, %v4512
  %v4516 = vadd.f32 %v4347, %v4509
  %v4517 = vadd.f32 %v4348, %v4513
  %s4518 = scalar_lea.vmem %s22, 1
  %v4519 = vld [vmem:[%s4518] sm:$0x1]
  %s4520 = scalar_lea.vmem %s23, 1
  %v4521 = vld [vmem:[%s4520] sm:$0x1]
  %v4522 = vsel %vm122, %v4516, 0.0
  %4523 = vadd.xlane.f32.xlu0 %v4522
  %v4524 = vpop.xlane.xlu0 %4523
  %v4525 = vsel %vm122, %v4517, 0.0
  %4526 = vadd.xlane.f32.xlu0 %v4525
  %v4527 = vpop.xlane.xlu0 %4526
  %v4528 = vmul.f32 %v4524, %v1969
  %v4529 = vmul.f32 %v4527, %v1969
  %v4530 = vsub.f32 %v4516, %v4528
  %v4531 = vsub.f32 %v4517, %v4529
  %v4532 = vmul.f32 %v4530, %v4530
  %v4533 = vmul.f32 %v4531, %v4531
  %v4534 = vsel %vm122, %v4532, 0.0
  %4535 = vadd.xlane.f32.xlu0 %v4534
  %v4536 = vpop.xlane.xlu0 %4535
  %v4537 = vsel %vm122, %v4533, 0.0
  %4538 = vadd.xlane.f32.xlu0 %v4537
  %v4539 = vpop.xlane.xlu0 %4538
  %v4540 = vmul.f32 %v4536, %v1969
  %v4541 = vmul.f32 %v4539, %v1969
  %v4542 = vadd.f32 %v4540, 1e-05
  %v4543 = vadd.f32 %v4541, 1e-05
  %v4544 = vrsqrt.pop %v4542
  %v4545 = vrsqrt.pop %v4543
  %v4546 = vmul.f32 %v4530, %v4544
  %v4547 = vmul.f32 %v4531, %v4545
  %v4549 = vlaneseq
  %v4550 = vshrl.u32 %v4549, 7
  %v4551 = vsub.s32 0, %v4550
  %v4552 = vrot.slane %v4519, %v4551
  %v4554 = vmul.f32 %v4546, %v4552
  %v4555 = vmul.f32 %v4547, %v4552
  %v4557 = vlaneseq
  %v4558 = vshrl.u32 %v4557, 7
  %v4559 = vsub.s32 0, %v4558
  %v4560 = vrot.slane %v4521, %v4559
  %v4562 = vadd.f32 %v4554, %v4560
  %v4563 = vadd.f32 %v4555, %v4560
  %v4564 = vpack.c.bf16 %v4563, %v4562
  %s4565 = scalar_lea.vmem %s16, 16
  %v4566 = vld [vmem:[%s4565] sm:$0xf]
  %v4567 = vld [vmem:[%s4565 + $0x4] sm:$0xf]
  %v4568 = vld [vmem:[%s4565 + $0x8] sm:$0xf]
  %v4569 = vld [vmem:[%s4565 + $0xc] sm:$0xf]
  %s4570 = scalar_lea.vmem %s17, 1
  %v4571 = vld [vmem:[%s4570] sm:$0x1]
  %v4573 = vlaneseq
  %v4574 = vshrl.u32 %v4573, 7
  %v4575 = vsub.s32 0, %v4574
  %v4576 = vrot.slane %v4571, %v4575
  %v4582 = vunpack.c.l.b16 %v4566
  %v4583 = vunpack.c.l.b16 %v4567
  %v4584 = vunpack.c.l.b16 %v4568
  %v4585 = vunpack.c.l.b16 %v4569
  %v4586 = vpack.c.b16 %v4583, %v4582
  %v4587 = vpack.c.b16 %v4585, %v4584
  %v4591 = vsel %vm122, %v4564, 0
  %4593 = vmatprep.subr.bf16.mxu0 0
  %4594 = vmatpush1.bf16.msra.mxu0 %v4586
  %4595 = vmatprep.subr.bf16.mxu0 0
  %4596 = vmatpush1.bf16.msra.mxu0 %v4587
  %4597 = vmatprep.subr.bf16.mxu0 0
  %4598 = vmatpush1.bf16.msra.mxu0 0
  %4599 = vmatprep.subr.bf16.mxu0 0
  %4600 = vmatpush1.bf16.msra.mxu0 0
  %4601 = vmatprep.subr.bf16.mxu0 0
  %4602 = vmatpush1.bf16.msra.mxu0 0
  %4603 = vmatprep.subr.bf16.mxu0 0
  %4604 = vmatpush1.bf16.msra.mxu0 0
  %4605 = vmatprep.subr.bf16.mxu0 0
  %4606 = vmatpush1.bf16.msra.mxu0 0
  %4607 = vmatprep.subr.bf16.mxu0 0
  %4608 = vmatpush1.bf16.msra.mxu0 0
  %4609 = vmatprep.subr.bf16.mxu0 0
  %4610 = vmatpush1.bf16.msra.mxu0 0
  %4611 = vmatprep.subr.bf16.mxu0 0
  %4612 = vmatpush1.bf16.msra.mxu0 0
  %4613 = vmatprep.subr.bf16.mxu0 0
  %4614 = vmatpush1.bf16.msra.mxu0 0
  %4615 = vmatprep.subr.bf16.mxu0 0
  %4616 = vmatpush1.bf16.msra.mxu0 0
  %4617 = vmatprep.subr.bf16.mxu0 0
  %4618 = vmatpush1.bf16.msra.mxu0 0
  %4619 = vmatprep.subr.bf16.mxu0 0
  %4620 = vmatpush1.bf16.msra.mxu0 0
  %4621 = vmatprep.subr.bf16.mxu0 0
  %4622 = vmatpush1.bf16.msra.mxu0 0
  %4623 = vmatprep.subr.bf16.mxu0 0
  %4624 = vmatpush1.bf16.msra.mxu0 0
  %4625 = vmatprep.mubr.bf16.mxu0 0
  %4626 = vmatmul.mubr.bf16.gmra.mrb[0].mxu0 %v4591
  %v4627 = vpop.f32.mrb[0].mxu0
  %v4628 = vadd.f32 %v4576, %v4627
  %v4629 = vpop.f32.mrb[0].mxu0
  %v4630 = vpop.f32.mrb[0].mxu0
  %v4631 = vadd.f32 %v4576, %v4630
  %v4632 = vpop.f32.mrb[0].mxu0
  %4633 = vdwg.mxu0
  %v4634 = vmul.f32 %v4628, 0.5
  %v4635 = vmul.f32 %v4631, 0.5
  %v4636 = vmul.f32 %v4628, 0.044715
  %v4637 = vmul.f32 %v4631, 0.044715
  %v4638 = vmul.f32 %v4636, %v4628
  %v4639 = vmul.f32 %v4637, %v4631
  %v4640 = vmul.f32 %v4638, %v4628
  %v4641 = vmul.f32 %v4639, %v4631
  %v4642 = vadd.f32 %v4628, %v4640
  %v4643 = vadd.f32 %v4631, %v4641
  %v4644 = vmul.f32 %v4642, 0.7978846
  %v4645 = vmul.f32 %v4643, 0.7978846
  %v4646 = vtanh.pop %v4644
  %v4647 = vtanh.pop %v4645
  %v4648 = vadd.f32 %v4646, 1.0
  %v4649 = vadd.f32 %v4647, 1.0
  %v4650 = vmul.f32 %v4634, %v4648
  %v4651 = vmul.f32 %v4635, %v4649
  %v4652 = vpack.c.bf16 %v4651, %v4650
  %s4653 = scalar_lea.vmem %s18, 32
  %v4654 = vld [vmem:[%s4653] sm:$0xf]
  %v4655 = vld [vmem:[%s4653 + $0x4] sm:$0xf]
  %v4656 = vld [vmem:[%s4653 + $0x8] sm:$0xf]
  %v4657 = vld [vmem:[%s4653 + $0xc] sm:$0xf]
  %v4658 = vld [vmem:[%s4653 + $0x10] sm:$0xf]
  %v4659 = vld [vmem:[%s4653 + $0x14] sm:$0xf]
  %v4660 = vld [vmem:[%s4653 + $0x18] sm:$0xf]
  %v4661 = vld [vmem:[%s4653 + $0x1c] sm:$0xf]
  %s4662 = scalar_lea.vmem %s19, 1
  %v4663 = vld [vmem:[%s4662] sm:$0x1]
  %v4665 = vlaneseq
  %v4666 = vshrl.u32 %v4665, 7
  %v4667 = vsub.s32 0, %v4666
  %v4668 = vrot.slane %v4663, %v4667
  %v4678 = vunpack.c.l.b16 %v4654
  %v4679 = vunpack.c.l.b16 %v4655
  %v4680 = vunpack.c.l.b16 %v4656
  %v4681 = vunpack.c.l.b16 %v4657
  %v4682 = vunpack.c.l.b16 %v4658
  %v4683 = vunpack.c.l.b16 %v4659
  %v4684 = vunpack.c.l.b16 %v4660
  %v4685 = vunpack.c.l.b16 %v4661
  %v4686 = vpack.c.b16 %v4679, %v4678
  %v4687 = vpack.c.b16 %v4681, %v4680
  %v4688 = vpack.c.b16 %v4683, %v4682
  %v4689 = vpack.c.b16 %v4685, %v4684
  %v4695 = vsel %vm2344, %v4652, 0
  %4697 = vmatprep.subr.bf16.mxu0 0
  %4698 = vmatpush1.bf16.msra.mxu0 %v4686
  %4699 = vmatprep.subr.bf16.mxu0 0
  %4700 = vmatpush1.bf16.msra.mxu0 %v4687
  %4701 = vmatprep.subr.bf16.mxu0 0
  %4702 = vmatpush1.bf16.msra.mxu0 %v4688
  %4703 = vmatprep.subr.bf16.mxu0 0
  %4704 = vmatpush1.bf16.msra.mxu0 %v4689
  %4705 = vmatprep.subr.bf16.mxu0 0
  %4706 = vmatpush1.bf16.msra.mxu0 0
  %4707 = vmatprep.subr.bf16.mxu0 0
  %4708 = vmatpush1.bf16.msra.mxu0 0
  %4709 = vmatprep.subr.bf16.mxu0 0
  %4710 = vmatpush1.bf16.msra.mxu0 0
  %4711 = vmatprep.subr.bf16.mxu0 0
  %4712 = vmatpush1.bf16.msra.mxu0 0
  %4713 = vmatprep.subr.bf16.mxu0 0
  %4714 = vmatpush1.bf16.msra.mxu0 0
  %4715 = vmatprep.subr.bf16.mxu0 0
  %4716 = vmatpush1.bf16.msra.mxu0 0
  %4717 = vmatprep.subr.bf16.mxu0 0
  %4718 = vmatpush1.bf16.msra.mxu0 0
  %4719 = vmatprep.subr.bf16.mxu0 0
  %4720 = vmatpush1.bf16.msra.mxu0 0
  %4721 = vmatprep.subr.bf16.mxu0 0
  %4722 = vmatpush1.bf16.msra.mxu0 0
  %4723 = vmatprep.subr.bf16.mxu0 0
  %4724 = vmatpush1.bf16.msra.mxu0 0
  %4725 = vmatprep.subr.bf16.mxu0 0
  %4726 = vmatpush1.bf16.msra.mxu0 0
  %4727 = vmatprep.subr.bf16.mxu0 0
  %4728 = vmatpush1.bf16.msra.mxu0 0
  %4729 = vmatprep.mubr.bf16.mxu0 0
  %4730 = vmatmul.mubr.bf16.gmra.mrb[0].mxu0 %v4695
  %v4731 = vpop.f32.mrb[0].mxu0
  %v4732 = vadd.f32 %v4668, %v4731
  %v4733 = vpop.f32.mrb[0].mxu0
  %v4734 = vpop.f32.mrb[0].mxu0
  %v4735 = vadd.f32 %v4668, %v4734
  %v4736 = vpop.f32.mrb[0].mxu0
  %4737 = vdwg.mxu0
  %v4738 = vadd.f32 %v4562, %v4732
  %v4739 = vadd.f32 %v4563, %v4735
  %s4740 = scalar_lea.vmem %s24, 1
  %v4741 = vld [vmem:[%s4740] sm:$0x1]
  %s4742 = scalar_lea.vmem %s25, 1
  %v4743 = vld [vmem:[%s4742] sm:$0x1]
  %v4744 = vsel %vm122, %v4738, 0.0
  %4745 = vadd.xlane.f32.xlu0 %v4744
  %v4746 = vpop.xlane.xlu0 %4745
  %v4747 = vsel %vm122, %v4739, 0.0
  %4748 = vadd.xlane.f32.xlu0 %v4747
  %v4749 = vpop.xlane.xlu0 %4748
  %v4750 = vmul.f32 %v4746, %v1969
  %v4751 = vmul.f32 %v4749, %v1969
  %v4752 = vsub.f32 %v4738, %v4750
  %v4753 = vsub.f32 %v4739, %v4751
  %v4754 = vmul.f32 %v4752, %v4752
  %v4755 = vmul.f32 %v4753, %v4753
  %v4756 = vsel %vm122, %v4754, 0.0
  %4757 = vadd.xlane.f32.xlu0 %v4756
  %v4758 = vpop.xlane.xlu0 %4757
  %v4759 = vsel %vm122, %v4755, 0.0
  %4760 = vadd.xlane.f32.xlu0 %v4759
  %v4761 = vpop.xlane.xlu0 %4760
  %v4762 = vmul.f32 %v4758, %v1969
  %v4763 = vmul.f32 %v4761, %v1969
  %v4764 = vadd.f32 %v4762, 1e-05
  %v4765 = vadd.f32 %v4763, 1e-05
  %v4766 = vrsqrt.pop %v4764
  %v4767 = vrsqrt.pop %v4765
  %v4768 = vmul.f32 %v4752, %v4766
  %v4769 = vmul.f32 %v4753, %v4767
  %v4771 = vlaneseq
  %v4772 = vshrl.u32 %v4771, 7
  %v4773 = vsub.s32 0, %v4772
  %v4774 = vrot.slane %v4741, %v4773
  %v4776 = vmul.f32 %v4768, %v4774
  %v4777 = vmul.f32 %v4769, %v4774
  %v4779 = vlaneseq
  %v4780 = vshrl.u32 %v4779, 7
  %v4781 = vsub.s32 0, %v4780
  %v4782 = vrot.slane %v4743, %v4781
  %v4784 = vadd.f32 %v4776, %v4782
  %v4785 = vadd.f32 %v4777, %v4782
  %v4786 = vpack.c.bf16 %v4785, %v4784
  %v4787 = vld [vmem:[%s26] sm:$0xf]
  %v4788 = vld [vmem:[%s26 + $0x4] sm:$0xf]
  %v4789 = vld [vmem:[%s26 + $0x8] sm:$0xf]
  %v4790 = vld [vmem:[%s26 + $0xc] sm:$0xf]
  %v4791 = vld [vmem:[%s27] sm:$0x1]
  %v4793 = vlaneseq
  %v4794 = vshrl.u32 %v4793, 7
  %v4795 = vsub.s32 0, %v4794
  %v4796 = vrot.slane %v4791, %v4795
  %v4802 = vunpack.c.l.b16 %v4787
  %v4803 = vunpack.c.l.b16 %v4788
  %v4804 = vunpack.c.l.b16 %v4789
  %v4805 = vunpack.c.l.b16 %v4790
  %v4806 = vpack.c.b16 %v4803, %v4802
  %v4807 = vpack.c.b16 %v4805, %v4804
  %v4811 = vsel %vm122, %v4786, 0
  %4813 = vmatprep.subr.bf16.mxu0 0
  %4814 = vmatpush1.bf16.msra.mxu0 %v4806
  %4815 = vmatprep.subr.bf16.mxu0 0
  %4816 = vmatpush1.bf16.msra.mxu0 %v4807
  %4817 = vmatprep.subr.bf16.mxu0 0
  %4818 = vmatpush1.bf16.msra.mxu0 0
  %4819 = vmatprep.subr.bf16.mxu0 0
  %4820 = vmatpush1.bf16.msra.mxu0 0
  %4821 = vmatprep.subr.bf16.mxu0 0
  %4822 = vmatpush1.bf16.msra.mxu0 0
  %4823 = vmatprep.subr.bf16.mxu0 0
  %4824 = vmatpush1.bf16.msra.mxu0 0
  %4825 = vmatprep.subr.bf16.mxu0 0
  %4826 = vmatpush1.bf16.msra.mxu0 0
  %4827 = vmatprep.subr.bf16.mxu0 0
  %4828 = vmatpush1.bf16.msra.mxu0 0
  %4829 = vmatprep.subr.bf16.mxu0 0
  %4830 = vmatpush1.bf16.msra.mxu0 0
  %4831 = vmatprep.subr.bf16.mxu0 0
  %4832 = vmatpush1.bf16.msra.mxu0 0
  %4833 = vmatprep.subr.bf16.mxu0 0
  %4834 = vmatpush1.bf16.msra.mxu0 0
  %4835 = vmatprep.subr.bf16.mxu0 0
  %4836 = vmatpush1.bf16.msra.mxu0 0
  %4837 = vmatprep.subr.bf16.mxu0 0
  %4838 = vmatpush1.bf16.msra.mxu0 0
  %4839 = vmatprep.subr.bf16.mxu0 0
  %4840 = vmatpush1.bf16.msra.mxu0 0
  %4841 = vmatprep.subr.bf16.mxu0 0
  %4842 = vmatpush1.bf16.msra.mxu0 0
  %4843 = vmatprep.subr.bf16.mxu0 0
  %4844 = vmatpush1.bf16.msra.mxu0 0
  %4845 = vmatprep.mubr.bf16.mxu0 0
  %4846 = vmatmul.mubr.bf16.gmra.mrb[0].mxu0 %v4811
  %v4847 = vpop.f32.mrb[0].mxu0
  %v4848 = vadd.f32 %v4796, %v4847
  %v4849 = vpop.f32.mrb[0].mxu0
  %v4850 = vpop.f32.mrb[0].mxu0
  %v4851 = vadd.f32 %v4796, %v4850
  %v4852 = vpop.f32.mrb[0].mxu0
  %4853 = vdwg.mxu0
  %4855 = vset.pattern.permute.xlu0 0
  %4856 = vperm.xlu0 %4855, %v96
  %v4857 = vpop.permute.xlu0 %4856
  %4860 = vset.pattern.permute.xlu0 0
  %4861 = vperm.xlu0 %4860, %v97
  %v4862 = vpop.permute.xlu0 %4861
  %v4864 = vmul.f32 %v4848, %v4857
  %v4865 = vmul.f32 %v4851, %v4862
  %4866 = vst [vmem:[%s28] sm:$0xff] %v4864
  %4867 = vst [vmem:[%s28 + $0x8] sm:$0xff] %v4865
  // Predicated region
  $region114: #{decoder_forward_pallas.1} parent=0 // pred_check
    _
  $region115: #{decoder_forward_pallas.1} parent=0 // pred_check_branch
    %4869 = sbr.rel (0) target = $region117
  $region116: #{decoder_forward_pallas.1} parent=0 // pred_region
    _
  $region117: #{decoder_forward_pallas.1} parent=0 // pred_fallthru
    _
  // Predicated region
  $region118: #{decoder_forward_pallas.1} parent=0 // pred_check
    _
  $region119: #{decoder_forward_pallas.1} parent=0 // pred_check_branch
    %4871 = sbr.rel (0) target = $region121
  $region120: #{decoder_forward_pallas.1} parent=0 // pred_region
    _
  $region121: #{decoder_forward_pallas.1} parent=0 // pred_fallthru
    _

</llo_original>
